<compile_context>
chip_gen: v7x
topology: tpu7x:2x2x1
jax: 0.10.0
libtpu: 0.0.40
codegen_flags: <defaults>
</compile_context>

<pallas_src>
import functools

import jax
import jax.numpy as jnp
from jax import lax
from jax.experimental import pallas as pl
from jax.experimental.pallas import tpu as pltpu

IN_FEATURES = 224 * 224 * 3   # 150528
H1 = 512
H2 = 512
OUT_FEATURES = 80

K_TILE = 10752                # 150528 / 10752 = 14 reduction steps
N_TILE = 256                  # 512 / 256 = 2 column blocks (megacore split)


# ---------------------------------------------------------------------------
# Kernel 1: fc1 (bf16 streamed W1, f32 accumulate) + bias + relu
# ---------------------------------------------------------------------------
def fc1_kernel(x_ref, w1_ref, b1_ref, h1_ref, acc_ref):
    k = pl.program_id(1)

    @pl.when(k == 0)
    def _():
        acc_ref[...] = jnp.zeros_like(acc_ref)

    # x: (M, K_TILE) bf16, w1: (N_TILE, K_TILE) bf16 (torch layout, contract
    # the last axes) -> (M, N_TILE) f32 partial product on the MXU.
    acc_ref[...] += lax.dot_general(
        x_ref[...], w1_ref[...],
        dimension_numbers=(((1,), (1,)), ((), ())),
        preferred_element_type=jnp.float32)

    @pl.when(k == pl.num_programs(1) - 1)
    def _():
        h1_ref[...] = jnp.maximum(acc_ref[...] + b1_ref[...], 0.0)


# ---------------------------------------------------------------------------
# Kernel 2: fc2 + relu, fc3 + sigmoid (tiny, single block)
# ---------------------------------------------------------------------------
def head_kernel(h1_ref, w2_ref, b2_ref, w3_ref, b3_ref, out_ref):
    h1 = h1_ref[...]
    h2 = lax.dot_general(h1, w2_ref[...], (((1,), (1,)), ((), ())),
                         preferred_element_type=jnp.float32)
    h2 = jnp.maximum(h2 + b2_ref[...], 0.0)
    logits = lax.dot_general(h2, w3_ref[...], (((1,), (1,)), ((), ())),
                             preferred_element_type=jnp.float32) + b3_ref[...]
    out_ref[...] = jax.nn.sigmoid(logits)


@functools.partial(jax.jit, static_argnames=())
def custom_mlp_forward(x, w1_bf16, b1, w2, b2, w3, b3):
    """x: (B, 3, 224, 224) f32; w1_bf16: (512, 150528) bf16 (torch layout)."""
    batch = x.shape[0]
    # Flatten exactly like x.view(-1, 224*224*3); stream activations as bf16.
    x2d = x.reshape(batch, IN_FEATURES).astype(jnp.bfloat16)

    # Pad batch to a multiple of 16 (bf16 sublane packing).
    m_pad = ((batch + 15) // 16) * 16
    x2d = jnp.pad(x2d, ((0, m_pad - batch), (0, 0)))

    b1r = b1.reshape(1, H1).astype(jnp.float32)
    b2r = b2.reshape(1, H2).astype(jnp.float32)
    b3r = b3.reshape(1, OUT_FEATURES).astype(jnp.float32)

    n_k = IN_FEATURES // K_TILE
    n_n = H1 // N_TILE

    # --- fc1: K-tiled, output columns split across the parallel axis -------
    h1 = pl.pallas_call(
        fc1_kernel,
        out_shape=jax.ShapeDtypeStruct((m_pad, H1), jnp.float32),
        grid_spec=pltpu.PrefetchScalarGridSpec(
            num_scalar_prefetch=0,
            grid=(n_n, n_k),
            in_specs=[
                pl.BlockSpec((m_pad, K_TILE), lambda n, k: (0, k)),   # x tile
                pl.BlockSpec((N_TILE, K_TILE), lambda n, k: (n, k)),  # W1 tile
                pl.BlockSpec((1, N_TILE), lambda n, k: (0, n)),       # b1 slice
            ],
            out_specs=pl.BlockSpec((m_pad, N_TILE), lambda n, k: (0, n)),
            scratch_shapes=[pltpu.VMEM((m_pad, N_TILE), jnp.float32)],
        ),
        compiler_params=pltpu.CompilerParams(
            dimension_semantics=("parallel", "arbitrary"),
            vmem_limit_bytes=32 * 1024 * 1024,
        ),
    )(x2d, w1_bf16, b1r)

    # --- fc2 / fc3 / sigmoid head (tiny) ------------------------------------
    out = pl.pallas_call(
        head_kernel,
        out_shape=jax.ShapeDtypeStruct((m_pad, OUT_FEATURES), jnp.float32),
        grid_spec=pltpu.PrefetchScalarGridSpec(
            num_scalar_prefetch=0,
            grid=(1,),
            in_specs=[
                pl.BlockSpec((m_pad, H1), lambda i: (0, 0)),
                pl.BlockSpec((H2, H1), lambda i: (0, 0)),             # torch layout
                pl.BlockSpec((1, H2), lambda i: (0, 0)),
                pl.BlockSpec((OUT_FEATURES, H2), lambda i: (0, 0)),   # torch layout
                pl.BlockSpec((1, OUT_FEATURES), lambda i: (0, 0)),
            ],
            out_specs=pl.BlockSpec((m_pad, OUT_FEATURES), lambda i: (0, 0)),
        ),
        compiler_params=pltpu.CompilerParams(
            dimension_semantics=("arbitrary",),
        ),
    )(h1, w2, b2r, w3, b3r)

    return out[:batch]


# ---------------------------------------------------------------------------
# Parameter init / preparation / reference
# ---------------------------------------------------------------------------
def init_params(key):
    """Deterministic init mimicking nn.Linear's uniform(-1/sqrt(fan_in), ...)."""
    ks = jax.random.split(key, 6)

    def linear(kw, kb, fan_in, fan_out):
        bound = 1.0 / jnp.sqrt(fan_in)
        w = jax.random.uniform(kw, (fan_out, fan_in), jnp.float32, -bound, bound)
        b = jax.random.uniform(kb, (fan_out,), jnp.float32, -bound, bound)
        return w, b

    w1, b1 = linear(ks[0], ks[1], IN_FEATURES, H1)
    w2, b2 = linear(ks[2], ks[3], H1, H2)
    w3, b3 = linear(ks[4], ks[5], H2, OUT_FEATURES)
    return w1, b1, w2, b2, w3, b3


def prepare_params(w1, b1, w2, b2, w3, b3):
    """One-time (outside jit) cast of the streamed fc1 weight to bf16."""
    return w1.astype(jnp.bfloat16), b1, w2, b2, w3, b3


def reference_forward(x, w1, b1, w2, b2, w3, b3):
    """Pure-JAX reference with the same bf16 quantization of x / W1."""
    x2d = x.reshape(x.shape[0], IN_FEATURES).astype(jnp.bfloat16)
    w1_bf = w1.astype(jnp.bfloat16)
    h1 = lax.dot_general(x2d, w1_bf, (((1,), (1,)), ((), ())),
                         preferred_element_type=jnp.float32)
    h1 = jnp.maximum(h1 + b1, 0.0)
    h2 = jnp.maximum(h1 @ w2.T + b2, 0.0)
    return jax.nn.sigmoid(h2 @ w3.T + b3)


if __name__ == "__main__":
    key = jax.random.PRNGKey(0)
    k_x, k_p = jax.random.split(key)

    batch = 2
    x = jax.random.normal(k_x, (batch, 3, 224, 224), dtype=jnp.float32)
    params_f32 = init_params(k_p)
    params = prepare_params(*params_f32)

    out = custom_mlp_forward(x, *params)
    out = jax.block_until_ready(out)

    ref = reference_forward(x, *params_f32)
    assert out.shape == (batch, OUT_FEATURES)
    # bf16-streamed fc1 (matching quantization in the reference); tolerance
    # covers accumulation-order / matmul-precision differences only.
    assert jnp.allclose(out, ref, atol=2e-3, rtol=2e-3), "mismatch vs reference"

    print("KERNEL_OK")
</pallas_src>

<mosaic_0001>
module attributes {stable_mosaic.version = 11 : i64} {
  func.func @fc1_kernel(%arg0: i32, %arg1: i32, %arg2: memref<16x10752xbf16, #tpu.memory_space<vmem>>, %arg3: memref<256x10752xbf16, #tpu.memory_space<vmem>>, %arg4: memref<1x256xf32, #tpu.memory_space<vmem>>, %arg5: memref<16x256xf32, #tpu.memory_space<vmem>>, %arg6: memref<16x256xf32, #tpu.memory_space<vmem>>) attributes {dimension_semantics = [#tpu.dimension_semantics<parallel>, #tpu.dimension_semantics<arbitrary>], iteration_bounds = array<i64: 2, 14>, scalar_prefetch = 0 : i64, scratch_operands = 1 : i64, tpu.core_type = #tpu.core_type<tc>, window_params = [{transform_indices = @transform_0, window_bounds = array<i64: 16, 10752>}, {transform_indices = @transform_1, window_bounds = array<i64: 256, 10752>}, {transform_indices = @transform_2, window_bounds = array<i64: 1, 256>}, {transform_indices = @transform_3, window_bounds = array<i64: 16, 256>}]} {
    %c0_i32 = arith.constant 0 : i32
    %0 = arith.cmpi eq, %arg1, %c0_i32 : i32
    %1 = arith.extui %0 : i1 to i32
    %c0_i32_0 = arith.constant 0 : i32
    %2 = arith.cmpi ne, %1, %c0_i32_0 : i32
    scf.if %2 {
      %cst_9 = arith.constant 0.000000e+00 : f32
      %12 = vector.broadcast %cst_9 : f32 to vector<16x256xf32>
      %c0_10 = arith.constant 0 : index
      %c0_11 = arith.constant 0 : index
      %13 = vector.load %arg6[%c0_10, %c0_11] : memref<16x256xf32, #tpu.memory_space<vmem>>, vector<16x256xf32>
      tpu.vector_store %arg6[%c0_10, %c0_11], %12 {strides = array<i32>} : memref<16x256xf32, #tpu.memory_space<vmem>>, vector<16x256xf32>,
    } else {
    }
    %c0 = arith.constant 0 : index
    %c0_1 = arith.constant 0 : index
    %3 = vector.load %arg6[%c0, %c0_1] : memref<16x256xf32, #tpu.memory_space<vmem>>, vector<16x256xf32>
    %c0_2 = arith.constant 0 : index
    %c0_3 = arith.constant 0 : index
    %4 = vector.load %arg2[%c0_2, %c0_3] : memref<16x10752xbf16, #tpu.memory_space<vmem>>, vector<16x10752xbf16>
    %c0_4 = arith.constant 0 : index
    %c0_5 = arith.constant 0 : index
    %5 = vector.load %arg3[%c0_4, %c0_5] : memref<256x10752xbf16, #tpu.memory_space<vmem>>, vector<256x10752xbf16>
    %cst = arith.constant dense<0.000000e+00> : vector<16x256xf32>
    %6 = tpu.matmul %4, %5, %cst {dimension_numbers = #tpu.dot_dimension_numbers<[1], [1], [0], [0], [0, 0, 1, 0], [], []>} : vector<16x10752xbf16>, vector<256x10752xbf16>, vector<16x256xf32> -> vector<16x256xf32>
    %7 = arith.addf %3, %6 : vector<16x256xf32>
    %c0_6 = arith.constant 0 : index
    %c0_7 = arith.constant 0 : index
    %8 = vector.load %arg6[%c0_6, %c0_7] : memref<16x256xf32, #tpu.memory_space<vmem>>, vector<16x256xf32>
    tpu.vector_store %arg6[%c0_6, %c0_7], %7 {strides = array<i32>} : memref<16x256xf32, #tpu.memory_space<vmem>>, vector<16x256xf32>,
    %c13_i32 = arith.constant 13 : i32
    %9 = arith.cmpi eq, %arg1, %c13_i32 : i32
    %10 = arith.extui %9 : i1 to i32
    %c0_i32_8 = arith.constant 0 : i32
    %11 = arith.cmpi ne, %10, %c0_i32_8 : i32
    scf.if %11 {
      %c0_9 = arith.constant 0 : index
      %c0_10 = arith.constant 0 : index
      %12 = vector.load %arg6[%c0_9, %c0_10] : memref<16x256xf32, #tpu.memory_space<vmem>>, vector<16x256xf32>
      %c0_11 = arith.constant 0 : index
      %c0_12 = arith.constant 0 : index
      %13 = vector.load %arg4[%c0_11, %c0_12] : memref<1x256xf32, #tpu.memory_space<vmem>>, vector<1x256xf32>
      %14 = vector.broadcast %13 : vector<1x256xf32> to vector<16x256xf32>
      %15 = arith.addf %12, %14 : vector<16x256xf32>
      %cst_13 = arith.constant 0.000000e+00 : f32
      %16 = vector.broadcast %cst_13 : f32 to vector<16x256xf32>
      %17 = arith.maximumf %15, %16 : vector<16x256xf32>
      %c0_14 = arith.constant 0 : index
      %c0_15 = arith.constant 0 : index
      %18 = vector.load %arg5[%c0_14, %c0_15] : memref<16x256xf32, #tpu.memory_space<vmem>>, vector<16x256xf32>
      tpu.vector_store %arg5[%c0_14, %c0_15], %17 {strides = array<i32>} : memref<16x256xf32, #tpu.memory_space<vmem>>, vector<16x256xf32>,
    } else {
    }
    return
  }
  func.func @transform_0(%arg0: i32, %arg1: i32) -> (i32, i32) {
    %c0_i32 = arith.constant 0 : i32
    %c0_i32_0 = arith.constant 0 : i32
    return %c0_i32, %arg1 : i32, i32
  }
  func.func @transform_1(%arg0: i32, %arg1: i32) -> (i32, i32) {
    %c0_i32 = arith.constant 0 : i32
    return %arg0, %arg1 : i32, i32
  }
  func.func @transform_2(%arg0: i32, %arg1: i32) -> (i32, i32) {
    %c0_i32 = arith.constant 0 : i32
    %c0_i32_0 = arith.constant 0 : i32
    return %c0_i32, %arg0 : i32, i32
  }
  func.func @transform_3(%arg0: i32, %arg1: i32) -> (i32, i32) {
    %c0_i32 = arith.constant 0 : i32
    %c0_i32_0 = arith.constant 0 : i32
    return %c0_i32, %arg0 : i32, i32
  }
}

module attributes {stable_mosaic.version = 11 : i64} {
  func.func @head_kernel(%arg0: i32, %arg1: memref<16x512xf32, #tpu.memory_space<vmem>>, %arg2: memref<512x512xf32, #tpu.memory_space<vmem>>, %arg3: memref<1x512xf32, #tpu.memory_space<vmem>>, %arg4: memref<80x512xf32, #tpu.memory_space<vmem>>, %arg5: memref<1x80xf32, #tpu.memory_space<vmem>>, %arg6: memref<16x80xf32, #tpu.memory_space<vmem>>) attributes {dimension_semantics = [#tpu.dimension_semantics<arbitrary>], iteration_bounds = array<i64: 1>, scalar_prefetch = 0 : i64, scratch_operands = 0 : i64, tpu.core_type = #tpu.core_type<tc>, window_params = [{pipeline_mode = #tpu.pipeline_mode<synchronous>, transform_indices = @transform_0, window_bounds = array<i64: 16, 512>}, {pipeline_mode = #tpu.pipeline_mode<synchronous>, transform_indices = @transform_1, window_bounds = array<i64: 512, 512>}, {pipeline_mode = #tpu.pipeline_mode<synchronous>, transform_indices = @transform_2, window_bounds = array<i64: 1, 512>}, {pipeline_mode = #tpu.pipeline_mode<synchronous>, transform_indices = @transform_3, window_bounds = array<i64: 80, 512>}, {pipeline_mode = #tpu.pipeline_mode<synchronous>, transform_indices = @transform_4, window_bounds = array<i64: 1, 80>}, {pipeline_mode = #tpu.pipeline_mode<synchronous>, transform_indices = @transform_5, window_bounds = array<i64: 16, 80>}]} {
    %c0 = arith.constant 0 : index
    %c0_0 = arith.constant 0 : index
    %0 = vector.load %arg1[%c0, %c0_0] : memref<16x512xf32, #tpu.memory_space<vmem>>, vector<16x512xf32>
    %c0_1 = arith.constant 0 : index
    %c0_2 = arith.constant 0 : index
    %1 = vector.load %arg2[%c0_1, %c0_2] : memref<512x512xf32, #tpu.memory_space<vmem>>, vector<512x512xf32>
    %cst = arith.constant dense<0.000000e+00> : vector<16x512xf32>
    %2 = tpu.matmul %0, %1, %cst {dimension_numbers = #tpu.dot_dimension_numbers<[1], [1], [0], [0], [0, 0, 1, 0], [], []>} : vector<16x512xf32>, vector<512x512xf32>, vector<16x512xf32> -> vector<16x512xf32>
    %c0_3 = arith.constant 0 : index
    %c0_4 = arith.constant 0 : index
    %3 = vector.load %arg3[%c0_3, %c0_4] : memref<1x512xf32, #tpu.memory_space<vmem>>, vector<1x512xf32>
    %4 = vector.broadcast %3 : vector<1x512xf32> to vector<16x512xf32>
    %5 = arith.addf %2, %4 : vector<16x512xf32>
    %cst_5 = arith.constant 0.000000e+00 : f32
    %6 = vector.broadcast %cst_5 : f32 to vector<16x512xf32>
    %7 = arith.maximumf %5, %6 : vector<16x512xf32>
    %c0_6 = arith.constant 0 : index
    %c0_7 = arith.constant 0 : index
    %8 = vector.load %arg4[%c0_6, %c0_7] : memref<80x512xf32, #tpu.memory_space<vmem>>, vector<80x512xf32>
    %cst_8 = arith.constant dense<0.000000e+00> : vector<16x80xf32>
    %9 = tpu.matmul %7, %8, %cst_8 {dimension_numbers = #tpu.dot_dimension_numbers<[1], [1], [0], [0], [0, 0, 1, 0], [], []>} : vector<16x512xf32>, vector<80x512xf32>, vector<16x80xf32> -> vector<16x80xf32>
    %c0_9 = arith.constant 0 : index
    %c0_10 = arith.constant 0 : index
    %10 = vector.load %arg5[%c0_9, %c0_10] : memref<1x80xf32, #tpu.memory_space<vmem>>, vector<1x80xf32>
    %11 = vector.broadcast %10 : vector<1x80xf32> to vector<16x80xf32>
    %12 = arith.addf %9, %11 : vector<16x80xf32>
    %13 = arith.negf %12 : vector<16x80xf32>
    %14 = math.exp %13 : vector<16x80xf32>
    %cst_11 = arith.constant 1.000000e+00 : f32
    %15 = vector.broadcast %cst_11 : f32 to vector<16x80xf32>
    %16 = arith.addf %15, %14 : vector<16x80xf32>
    %17 = arith.divf %15, %16 : vector<16x80xf32>
    %c0_12 = arith.constant 0 : index
    %c0_13 = arith.constant 0 : index
    %18 = vector.load %arg6[%c0_12, %c0_13] : memref<16x80xf32, #tpu.memory_space<vmem>>, vector<16x80xf32>
    tpu.vector_store %arg6[%c0_12, %c0_13], %17 {strides = array<i32>} : memref<16x80xf32, #tpu.memory_space<vmem>>, vector<16x80xf32>,
    return
  }
  func.func @transform_0(%arg0: i32) -> (i32, i32) {
    %c0_i32 = arith.constant 0 : i32
    %c0_i32_0 = arith.constant 0 : i32
    %c0_i32_1 = arith.constant 0 : i32
    return %c0_i32, %c0_i32_0 : i32, i32
  }
  func.func @transform_1(%arg0: i32) -> (i32, i32) {
    %c0_i32 = arith.constant 0 : i32
    %c0_i32_0 = arith.constant 0 : i32
    %c0_i32_1 = arith.constant 0 : i32
    return %c0_i32, %c0_i32_0 : i32, i32
  }
  func.func @transform_2(%arg0: i32) -> (i32, i32) {
    %c0_i32 = arith.constant 0 : i32
    %c0_i32_0 = arith.constant 0 : i32
    %c0_i32_1 = arith.constant 0 : i32
    return %c0_i32, %c0_i32_0 : i32, i32
  }
  func.func @transform_3(%arg0: i32) -> (i32, i32) {
    %c0_i32 = arith.constant 0 : i32
    %c0_i32_0 = arith.constant 0 : i32
    %c0_i32_1 = arith.constant 0 : i32
    return %c0_i32, %c0_i32_0 : i32, i32
  }
  func.func @transform_4(%arg0: i32) -> (i32, i32) {
    %c0_i32 = arith.constant 0 : i32
    %c0_i32_0 = arith.constant 0 : i32
    %c0_i32_1 = arith.constant 0 : i32
    return %c0_i32, %c0_i32_0 : i32, i32
  }
  func.func @transform_5(%arg0: i32) -> (i32, i32) {
    %c0_i32 = arith.constant 0 : i32
    %c0_i32_0 = arith.constant 0 : i32
    %c0_i32_1 = arith.constant 0 : i32
    return %c0_i32, %c0_i32_0 : i32, i32
  }
}

</mosaic_0001>

<llo_original>
// kernel: custom_mlp_forward.3
$region0: #{custom_mlp_forward.3}
  #allocation0 [shape = 'u32[]', space=smem, size = 0x4, offset = 0x4, fixed_abs, tag = 'smem constant byte address 0x4 - core index']
  #allocation1 [shape = 'u32[144,128]{1,0:T(1,128)}', space=vmem, size = 0x12000, scoped, tag = 'internal scratch']
  %s0 = inlined_call_operand.vmem [shape: f32[16,512], index: 0, kind: input, shape index: {}]
  %s1 = inlined_call_operand.vmem [shape: f32[512,512], index: 1, kind: input, shape index: {}]
  %s2 = inlined_call_operand.vmem [shape: f32[1,512], index: 2, kind: input, shape index: {}]
  %s3 = inlined_call_operand.vmem [shape: f32[80,512], index: 3, kind: input, shape index: {}]
  %s4 = inlined_call_operand.vmem [shape: f32[1,80], index: 4, kind: input, shape index: {}]
  %s5 = inlined_call_operand.vmem [shape: f32[16,80], index: 5, kind: output, shape index: {}]
  %s6 = sld [smem:[#allocation0]]
  $region30: #{custom_mlp_forward.3} parent=0
    _
  %s8 = ssub.s32 1, %s6
  %s9 = scalar_select 0, %s8, %s6
  // Predicated region
  $region2: #{custom_mlp_forward.3} parent=0 // pred_check
    _
  $region3: #{custom_mlp_forward.3} parent=0 // pred_check_branch
    %11 = sbr.rel (0) target = $region5
  $region4: #{custom_mlp_forward.3} parent=0 // pred_region
    _
  $region5: #{custom_mlp_forward.3} parent=0 // pred_fallthru
    _
  // Predicated region
  $region6: #{custom_mlp_forward.3} parent=0 // pred_check
    _
  $region7: #{custom_mlp_forward.3} parent=0 // pred_check_branch
    %13 = sbr.rel (0) target = $region9
  $region8: #{custom_mlp_forward.3} parent=0 // pred_region
    _
  $region9: #{custom_mlp_forward.3} parent=0 // pred_fallthru
    _
  // Predicated region
  $region10: #{custom_mlp_forward.3} parent=0 // pred_check
    _
  $region11: #{custom_mlp_forward.3} parent=0 // pred_check_branch
    %15 = sbr.rel (0) target = $region13
  $region12: #{custom_mlp_forward.3} parent=0 // pred_region
    _
  $region13: #{custom_mlp_forward.3} parent=0 // pred_fallthru
    _
  // Predicated region
  $region14: #{custom_mlp_forward.3} parent=0 // pred_check
    _
  $region15: #{custom_mlp_forward.3} parent=0 // pred_check_branch
    %17 = sbr.rel (0) target = $region17
  $region16: #{custom_mlp_forward.3} parent=0 // pred_region
    _
  $region17: #{custom_mlp_forward.3} parent=0 // pred_fallthru
    _
  // Predicated region
  $region18: #{custom_mlp_forward.3} parent=0 // pred_check
    _
  $region19: #{custom_mlp_forward.3} parent=0 // pred_check_branch
    %19 = sbr.rel (0) target = $region21
  $region20: #{custom_mlp_forward.3} parent=0 // pred_region
    _
  $region21: #{custom_mlp_forward.3} parent=0 // pred_fallthru
    _
  %v20 = vld [vmem:[%s0] sm:$0xff]
  %v21 = vld [vmem:[%s0 + $0x8] sm:$0xff]
  %v22 = vld [vmem:[%s0 + $0x10] sm:$0xff]
  %v23 = vld [vmem:[%s0 + $0x18] sm:$0xff]
  %v24 = vld [vmem:[%s0 + $0x20] sm:$0xff]
  %v25 = vld [vmem:[%s0 + $0x28] sm:$0xff]
  %v26 = vld [vmem:[%s0 + $0x30] sm:$0xff]
  %v27 = vld [vmem:[%s0 + $0x38] sm:$0xff]
  %v28 = vld [vmem:[%s1] sm:$0xff]
  %v29 = vld [vmem:[%s1 + $0x8] sm:$0xff]
  %v30 = vld [vmem:[%s1 + $0x10] sm:$0xff]
  %v31 = vld [vmem:[%s1 + $0x18] sm:$0xff]
  %v32 = vld [vmem:[%s1 + $0x20] sm:$0xff]
  %v33 = vld [vmem:[%s1 + $0x28] sm:$0xff]
  %v34 = vld [vmem:[%s1 + $0x30] sm:$0xff]
  %v35 = vld [vmem:[%s1 + $0x38] sm:$0xff]
  %v36 = vld [vmem:[%s1 + $0x40] sm:$0xff]
  %v37 = vld [vmem:[%s1 + $0x48] sm:$0xff]
  %v38 = vld [vmem:[%s1 + $0x50] sm:$0xff]
  %v39 = vld [vmem:[%s1 + $0x58] sm:$0xff]
  %v40 = vld [vmem:[%s1 + $0x60] sm:$0xff]
  %v41 = vld [vmem:[%s1 + $0x68] sm:$0xff]
  %v42 = vld [vmem:[%s1 + $0x70] sm:$0xff]
  %v43 = vld [vmem:[%s1 + $0x78] sm:$0xff]
  %v44 = vld [vmem:[%s1 + $0x80] sm:$0xff]
  %v45 = vld [vmem:[%s1 + $0x88] sm:$0xff]
  %v46 = vld [vmem:[%s1 + $0x90] sm:$0xff]
  %v47 = vld [vmem:[%s1 + $0x98] sm:$0xff]
  %v48 = vld [vmem:[%s1 + $0xa0] sm:$0xff]
  %v49 = vld [vmem:[%s1 + $0xa8] sm:$0xff]
  %v50 = vld [vmem:[%s1 + $0xb0] sm:$0xff]
  %v51 = vld [vmem:[%s1 + $0xb8] sm:$0xff]
  %v52 = vld [vmem:[%s1 + $0xc0] sm:$0xff]
  %v53 = vld [vmem:[%s1 + $0xc8] sm:$0xff]
  %v54 = vld [vmem:[%s1 + $0xd0] sm:$0xff]
  %v55 = vld [vmem:[%s1 + $0xd8] sm:$0xff]
  %v56 = vld [vmem:[%s1 + $0xe0] sm:$0xff]
  %v57 = vld [vmem:[%s1 + $0xe8] sm:$0xff]
  %v58 = vld [vmem:[%s1 + $0xf0] sm:$0xff]
  %v59 = vld [vmem:[%s1 + $0xf8] sm:$0xff]
  %v60 = vld [vmem:[%s1 + $0x100] sm:$0xff]
  %v61 = vld [vmem:[%s1 + $0x108] sm:$0xff]
  %v62 = vld [vmem:[%s1 + $0x110] sm:$0xff]
  %v63 = vld [vmem:[%s1 + $0x118] sm:$0xff]
  %v64 = vld [vmem:[%s1 + $0x120] sm:$0xff]
  %v65 = vld [vmem:[%s1 + $0x128] sm:$0xff]
  %v66 = vld [vmem:[%s1 + $0x130] sm:$0xff]
  %v67 = vld [vmem:[%s1 + $0x138] sm:$0xff]
  %v68 = vld [vmem:[%s1 + $0x140] sm:$0xff]
  %v69 = vld [vmem:[%s1 + $0x148] sm:$0xff]
  %v70 = vld [vmem:[%s1 + $0x150] sm:$0xff]
  %v71 = vld [vmem:[%s1 + $0x158] sm:$0xff]
  %v72 = vld [vmem:[%s1 + $0x160] sm:$0xff]
  %v73 = vld [vmem:[%s1 + $0x168] sm:$0xff]
  %v74 = vld [vmem:[%s1 + $0x170] sm:$0xff]
  %v75 = vld [vmem:[%s1 + $0x178] sm:$0xff]
  %v76 = vld [vmem:[%s1 + $0x180] sm:$0xff]
  %v77 = vld [vmem:[%s1 + $0x188] sm:$0xff]
  %v78 = vld [vmem:[%s1 + $0x190] sm:$0xff]
  %v79 = vld [vmem:[%s1 + $0x198] sm:$0xff]
  %v80 = vld [vmem:[%s1 + $0x1a0] sm:$0xff]
  %v81 = vld [vmem:[%s1 + $0x1a8] sm:$0xff]
  %v82 = vld [vmem:[%s1 + $0x1b0] sm:$0xff]
  %v83 = vld [vmem:[%s1 + $0x1b8] sm:$0xff]
  %v84 = vld [vmem:[%s1 + $0x1c0] sm:$0xff]
  %v85 = vld [vmem:[%s1 + $0x1c8] sm:$0xff]
  %v86 = vld [vmem:[%s1 + $0x1d0] sm:$0xff]
  %v87 = vld [vmem:[%s1 + $0x1d8] sm:$0xff]
  %v88 = vld [vmem:[%s1 + $0x1e0] sm:$0xff]
  %v89 = vld [vmem:[%s1 + $0x1e8] sm:$0xff]
  %v90 = vld [vmem:[%s1 + $0x1f0] sm:$0xff]
  %v91 = vld [vmem:[%s1 + $0x1f8] sm:$0xff]
  %v92 = vld [vmem:[%s1 + $0x200] sm:$0xff]
  %v93 = vld [vmem:[%s1 + $0x208] sm:$0xff]
  %v94 = vld [vmem:[%s1 + $0x210] sm:$0xff]
  %v95 = vld [vmem:[%s1 + $0x218] sm:$0xff]
  %v96 = vld [vmem:[%s1 + $0x220] sm:$0xff]
  %v97 = vld [vmem:[%s1 + $0x228] sm:$0xff]
  %v98 = vld [vmem:[%s1 + $0x230] sm:$0xff]
  %v99 = vld [vmem:[%s1 + $0x238] sm:$0xff]
  %v100 = vld [vmem:[%s1 + $0x240] sm:$0xff]
  %v101 = vld [vmem:[%s1 + $0x248] sm:$0xff]
  %v102 = vld [vmem:[%s1 + $0x250] sm:$0xff]
  %v103 = vld [vmem:[%s1 + $0x258] sm:$0xff]
  %v104 = vld [vmem:[%s1 + $0x260] sm:$0xff]
  %v105 = vld [vmem:[%s1 + $0x268] sm:$0xff]
  %v106 = vld [vmem:[%s1 + $0x270] sm:$0xff]
  %v107 = vld [vmem:[%s1 + $0x278] sm:$0xff]
  %v108 = vld [vmem:[%s1 + $0x280] sm:$0xff]
  %v109 = vld [vmem:[%s1 + $0x288] sm:$0xff]
  %v110 = vld [vmem:[%s1 + $0x290] sm:$0xff]
  %v111 = vld [vmem:[%s1 + $0x298] sm:$0xff]
  %v112 = vld [vmem:[%s1 + $0x2a0] sm:$0xff]
  %v113 = vld [vmem:[%s1 + $0x2a8] sm:$0xff]
  %v114 = vld [vmem:[%s1 + $0x2b0] sm:$0xff]
  %v115 = vld [vmem:[%s1 + $0x2b8] sm:$0xff]
  %v116 = vld [vmem:[%s1 + $0x2c0] sm:$0xff]
  %v117 = vld [vmem:[%s1 + $0x2c8] sm:$0xff]
  %v118 = vld [vmem:[%s1 + $0x2d0] sm:$0xff]
  %v119 = vld [vmem:[%s1 + $0x2d8] sm:$0xff]
  %v120 = vld [vmem:[%s1 + $0x2e0] sm:$0xff]
  %v121 = vld [vmem:[%s1 + $0x2e8] sm:$0xff]
  %v122 = vld [vmem:[%s1 + $0x2f0] sm:$0xff]
  %v123 = vld [vmem:[%s1 + $0x2f8] sm:$0xff]
  %v124 = vld [vmem:[%s1 + $0x300] sm:$0xff]
  %v125 = vld [vmem:[%s1 + $0x308] sm:$0xff]
  %v126 = vld [vmem:[%s1 + $0x310] sm:$0xff]
  %v127 = vld [vmem:[%s1 + $0x318] sm:$0xff]
  %v128 = vld [vmem:[%s1 + $0x320] sm:$0xff]
  %v129 = vld [vmem:[%s1 + $0x328] sm:$0xff]
  %v130 = vld [vmem:[%s1 + $0x330] sm:$0xff]
  %v131 = vld [vmem:[%s1 + $0x338] sm:$0xff]
  %v132 = vld [vmem:[%s1 + $0x340] sm:$0xff]
  %v133 = vld [vmem:[%s1 + $0x348] sm:$0xff]
  %v134 = vld [vmem:[%s1 + $0x350] sm:$0xff]
  %v135 = vld [vmem:[%s1 + $0x358] sm:$0xff]
  %v136 = vld [vmem:[%s1 + $0x360] sm:$0xff]
  %v137 = vld [vmem:[%s1 + $0x368] sm:$0xff]
  %v138 = vld [vmem:[%s1 + $0x370] sm:$0xff]
  %v139 = vld [vmem:[%s1 + $0x378] sm:$0xff]
  %v140 = vld [vmem:[%s1 + $0x380] sm:$0xff]
  %v141 = vld [vmem:[%s1 + $0x388] sm:$0xff]
  %v142 = vld [vmem:[%s1 + $0x390] sm:$0xff]
  %v143 = vld [vmem:[%s1 + $0x398] sm:$0xff]
  %v144 = vld [vmem:[%s1 + $0x3a0] sm:$0xff]
  %v145 = vld [vmem:[%s1 + $0x3a8] sm:$0xff]
  %v146 = vld [vmem:[%s1 + $0x3b0] sm:$0xff]
  %v147 = vld [vmem:[%s1 + $0x3b8] sm:$0xff]
  %v148 = vld [vmem:[%s1 + $0x3c0] sm:$0xff]
  %v149 = vld [vmem:[%s1 + $0x3c8] sm:$0xff]
  %v150 = vld [vmem:[%s1 + $0x3d0] sm:$0xff]
  %v151 = vld [vmem:[%s1 + $0x3d8] sm:$0xff]
  %v152 = vld [vmem:[%s1 + $0x3e0] sm:$0xff]
  %v153 = vld [vmem:[%s1 + $0x3e8] sm:$0xff]
  %v154 = vld [vmem:[%s1 + $0x3f0] sm:$0xff]
  %v155 = vld [vmem:[%s1 + $0x3f8] sm:$0xff]
  %v156 = vld [vmem:[%s1 + $0x400] sm:$0xff]
  %v157 = vld [vmem:[%s1 + $0x408] sm:$0xff]
  %v158 = vld [vmem:[%s1 + $0x410] sm:$0xff]
  %v159 = vld [vmem:[%s1 + $0x418] sm:$0xff]
  %v160 = vld [vmem:[%s1 + $0x420] sm:$0xff]
  %v161 = vld [vmem:[%s1 + $0x428] sm:$0xff]
  %v162 = vld [vmem:[%s1 + $0x430] sm:$0xff]
  %v163 = vld [vmem:[%s1 + $0x438] sm:$0xff]
  %v164 = vld [vmem:[%s1 + $0x440] sm:$0xff]
  %v165 = vld [vmem:[%s1 + $0x448] sm:$0xff]
  %v166 = vld [vmem:[%s1 + $0x450] sm:$0xff]
  %v167 = vld [vmem:[%s1 + $0x458] sm:$0xff]
  %v168 = vld [vmem:[%s1 + $0x460] sm:$0xff]
  %v169 = vld [vmem:[%s1 + $0x468] sm:$0xff]
  %v170 = vld [vmem:[%s1 + $0x470] sm:$0xff]
  %v171 = vld [vmem:[%s1 + $0x478] sm:$0xff]
  %v172 = vld [vmem:[%s1 + $0x480] sm:$0xff]
  %v173 = vld [vmem:[%s1 + $0x488] sm:$0xff]
  %v174 = vld [vmem:[%s1 + $0x490] sm:$0xff]
  %v175 = vld [vmem:[%s1 + $0x498] sm:$0xff]
  %v176 = vld [vmem:[%s1 + $0x4a0] sm:$0xff]
  %v177 = vld [vmem:[%s1 + $0x4a8] sm:$0xff]
  %v178 = vld [vmem:[%s1 + $0x4b0] sm:$0xff]
  %v179 = vld [vmem:[%s1 + $0x4b8] sm:$0xff]
  %v180 = vld [vmem:[%s1 + $0x4c0] sm:$0xff]
  %v181 = vld [vmem:[%s1 + $0x4c8] sm:$0xff]
  %v182 = vld [vmem:[%s1 + $0x4d0] sm:$0xff]
  %v183 = vld [vmem:[%s1 + $0x4d8] sm:$0xff]
  %v184 = vld [vmem:[%s1 + $0x4e0] sm:$0xff]
  %v185 = vld [vmem:[%s1 + $0x4e8] sm:$0xff]
  %v186 = vld [vmem:[%s1 + $0x4f0] sm:$0xff]
  %v187 = vld [vmem:[%s1 + $0x4f8] sm:$0xff]
  %v188 = vld [vmem:[%s1 + $0x500] sm:$0xff]
  %v189 = vld [vmem:[%s1 + $0x508] sm:$0xff]
  %v190 = vld [vmem:[%s1 + $0x510] sm:$0xff]
  %v191 = vld [vmem:[%s1 + $0x518] sm:$0xff]
  %v192 = vld [vmem:[%s1 + $0x520] sm:$0xff]
  %v193 = vld [vmem:[%s1 + $0x528] sm:$0xff]
  %v194 = vld [vmem:[%s1 + $0x530] sm:$0xff]
  %v195 = vld [vmem:[%s1 + $0x538] sm:$0xff]
  %v196 = vld [vmem:[%s1 + $0x540] sm:$0xff]
  %v197 = vld [vmem:[%s1 + $0x548] sm:$0xff]
  %v198 = vld [vmem:[%s1 + $0x550] sm:$0xff]
  %v199 = vld [vmem:[%s1 + $0x558] sm:$0xff]
  %v200 = vld [vmem:[%s1 + $0x560] sm:$0xff]
  %v201 = vld [vmem:[%s1 + $0x568] sm:$0xff]
  %v202 = vld [vmem:[%s1 + $0x570] sm:$0xff]
  %v203 = vld [vmem:[%s1 + $0x578] sm:$0xff]
  %v204 = vld [vmem:[%s1 + $0x580] sm:$0xff]
  %v205 = vld [vmem:[%s1 + $0x588] sm:$0xff]
  %v206 = vld [vmem:[%s1 + $0x590] sm:$0xff]
  %v207 = vld [vmem:[%s1 + $0x598] sm:$0xff]
  %v208 = vld [vmem:[%s1 + $0x5a0] sm:$0xff]
  %v209 = vld [vmem:[%s1 + $0x5a8] sm:$0xff]
  %v210 = vld [vmem:[%s1 + $0x5b0] sm:$0xff]
  %v211 = vld [vmem:[%s1 + $0x5b8] sm:$0xff]
  %v212 = vld [vmem:[%s1 + $0x5c0] sm:$0xff]
  %v213 = vld [vmem:[%s1 + $0x5c8] sm:$0xff]
  %v214 = vld [vmem:[%s1 + $0x5d0] sm:$0xff]
  %v215 = vld [vmem:[%s1 + $0x5d8] sm:$0xff]
  %v216 = vld [vmem:[%s1 + $0x5e0] sm:$0xff]
  %v217 = vld [vmem:[%s1 + $0x5e8] sm:$0xff]
  %v218 = vld [vmem:[%s1 + $0x5f0] sm:$0xff]
  %v219 = vld [vmem:[%s1 + $0x5f8] sm:$0xff]
  %v220 = vld [vmem:[%s1 + $0x600] sm:$0xff]
  %v221 = vld [vmem:[%s1 + $0x608] sm:$0xff]
  %v222 = vld [vmem:[%s1 + $0x610] sm:$0xff]
  %v223 = vld [vmem:[%s1 + $0x618] sm:$0xff]
  %v224 = vld [vmem:[%s1 + $0x620] sm:$0xff]
  %v225 = vld [vmem:[%s1 + $0x628] sm:$0xff]
  %v226 = vld [vmem:[%s1 + $0x630] sm:$0xff]
  %v227 = vld [vmem:[%s1 + $0x638] sm:$0xff]
  %v228 = vld [vmem:[%s1 + $0x640] sm:$0xff]
  %v229 = vld [vmem:[%s1 + $0x648] sm:$0xff]
  %v230 = vld [vmem:[%s1 + $0x650] sm:$0xff]
  %v231 = vld [vmem:[%s1 + $0x658] sm:$0xff]
  %v232 = vld [vmem:[%s1 + $0x660] sm:$0xff]
  %v233 = vld [vmem:[%s1 + $0x668] sm:$0xff]
  %v234 = vld [vmem:[%s1 + $0x670] sm:$0xff]
  %v235 = vld [vmem:[%s1 + $0x678] sm:$0xff]
  %v236 = vld [vmem:[%s1 + $0x680] sm:$0xff]
  %v237 = vld [vmem:[%s1 + $0x688] sm:$0xff]
  %v238 = vld [vmem:[%s1 + $0x690] sm:$0xff]
  %v239 = vld [vmem:[%s1 + $0x698] sm:$0xff]
  %v240 = vld [vmem:[%s1 + $0x6a0] sm:$0xff]
  %v241 = vld [vmem:[%s1 + $0x6a8] sm:$0xff]
  %v242 = vld [vmem:[%s1 + $0x6b0] sm:$0xff]
  %v243 = vld [vmem:[%s1 + $0x6b8] sm:$0xff]
  %v244 = vld [vmem:[%s1 + $0x6c0] sm:$0xff]
  %v245 = vld [vmem:[%s1 + $0x6c8] sm:$0xff]
  %v246 = vld [vmem:[%s1 + $0x6d0] sm:$0xff]
  %v247 = vld [vmem:[%s1 + $0x6d8] sm:$0xff]
  %v248 = vld [vmem:[%s1 + $0x6e0] sm:$0xff]
  %v249 = vld [vmem:[%s1 + $0x6e8] sm:$0xff]
  %v250 = vld [vmem:[%s1 + $0x6f0] sm:$0xff]
  %v251 = vld [vmem:[%s1 + $0x6f8] sm:$0xff]
  %v252 = vld [vmem:[%s1 + $0x700] sm:$0xff]
  %v253 = vld [vmem:[%s1 + $0x708] sm:$0xff]
  %v254 = vld [vmem:[%s1 + $0x710] sm:$0xff]
  %v255 = vld [vmem:[%s1 + $0x718] sm:$0xff]
  %v256 = vld [vmem:[%s1 + $0x720] sm:$0xff]
  %v257 = vld [vmem:[%s1 + $0x728] sm:$0xff]
  %v258 = vld [vmem:[%s1 + $0x730] sm:$0xff]
  %v259 = vld [vmem:[%s1 + $0x738] sm:$0xff]
  %v260 = vld [vmem:[%s1 + $0x740] sm:$0xff]
  %v261 = vld [vmem:[%s1 + $0x748] sm:$0xff]
  %v262 = vld [vmem:[%s1 + $0x750] sm:$0xff]
  %v263 = vld [vmem:[%s1 + $0x758] sm:$0xff]
  %v264 = vld [vmem:[%s1 + $0x760] sm:$0xff]
  %v265 = vld [vmem:[%s1 + $0x768] sm:$0xff]
  %v266 = vld [vmem:[%s1 + $0x770] sm:$0xff]
  %v267 = vld [vmem:[%s1 + $0x778] sm:$0xff]
  %v268 = vld [vmem:[%s1 + $0x780] sm:$0xff]
  %v269 = vld [vmem:[%s1 + $0x788] sm:$0xff]
  %v270 = vld [vmem:[%s1 + $0x790] sm:$0xff]
  %v271 = vld [vmem:[%s1 + $0x798] sm:$0xff]
  %v272 = vld [vmem:[%s1 + $0x7a0] sm:$0xff]
  %v273 = vld [vmem:[%s1 + $0x7a8] sm:$0xff]
  %v274 = vld [vmem:[%s1 + $0x7b0] sm:$0xff]
  %v275 = vld [vmem:[%s1 + $0x7b8] sm:$0xff]
  %v276 = vld [vmem:[%s1 + $0x7c0] sm:$0xff]
  %v277 = vld [vmem:[%s1 + $0x7c8] sm:$0xff]
  %v278 = vld [vmem:[%s1 + $0x7d0] sm:$0xff]
  %v279 = vld [vmem:[%s1 + $0x7d8] sm:$0xff]
  %v280 = vld [vmem:[%s1 + $0x7e0] sm:$0xff]
  %v281 = vld [vmem:[%s1 + $0x7e8] sm:$0xff]
  %v282 = vld [vmem:[%s1 + $0x7f0] sm:$0xff]
  %v283 = vld [vmem:[%s1 + $0x7f8] sm:$0xff]
  %v284 = vld [vmem:[%s2] sm:$0xf]
  %v286 = vlaneseq
  %v287 = vshrl.u32 %v286, 7
  %v288 = vsub.s32 0, %v287
  %v289 = vrot.slane %v284, %v288
  %v290 = vlaneseq
  %v291 = vshrl.u32 %v290, 7
  %v292 = vsub.s32 1, %v291
  %v293 = vrot.slane %v284, %v292
  %v294 = vlaneseq
  %v295 = vshrl.u32 %v294, 7
  %v296 = vsub.s32 2, %v295
  %v297 = vrot.slane %v284, %v296
  %v298 = vlaneseq
  %v299 = vshrl.u32 %v298, 7
  %v300 = vsub.s32 3, %v299
  %v301 = vrot.slane %v284, %v300
  %306 = vmatprep.subr.mxu0 %v29
  %307 = vmatpush1.xpose.msra.mxu0 %v28
  %308 = vmatprep.subr.mxu0 %v33
  %309 = vmatpush1.xpose.msra.mxu0 %v32
  %310 = vmatprep.subr.mxu0 %v37
  %311 = vmatpush1.xpose.msra.mxu0 %v36
  %312 = vmatprep.subr.mxu0 %v41
  %313 = vmatpush1.xpose.msra.mxu0 %v40
  %314 = vmatprep.subr.mxu0 %v45
  %315 = vmatpush1.xpose.msra.mxu0 %v44
  %316 = vmatprep.subr.mxu0 %v49
  %317 = vmatpush1.xpose.msra.mxu0 %v48
  %318 = vmatprep.subr.mxu0 %v53
  %319 = vmatpush1.xpose.msra.mxu0 %v52
  %320 = vmatprep.subr.mxu0 %v57
  %321 = vmatpush1.xpose.msra.mxu0 %v56
  %322 = vmatprep.subr.mxu0 %v61
  %323 = vmatpush1.xpose.msra.mxu0 %v60
  %324 = vmatprep.subr.mxu0 %v65
  %325 = vmatpush1.xpose.msra.mxu0 %v64
  %326 = vmatprep.subr.mxu0 %v69
  %327 = vmatpush1.xpose.msra.mxu0 %v68
  %328 = vmatprep.subr.mxu0 %v73
  %329 = vmatpush1.xpose.msra.mxu0 %v72
  %330 = vmatprep.subr.mxu0 %v77
  %331 = vmatpush1.xpose.msra.mxu0 %v76
  %332 = vmatprep.subr.mxu0 %v81
  %333 = vmatpush1.xpose.msra.mxu0 %v80
  %334 = vmatprep.subr.mxu0 %v85
  %335 = vmatpush1.xpose.msra.mxu0 %v84
  %336 = vmatprep.subr.mxu0 %v89
  %337 = vmatpush1.xpose.msra.mxu0 %v88
  %338 = vmatprep.subr.mxu0 %v93
  %339 = vmatpush1.xpose.msra.mxu0 %v92
  %340 = vmatprep.subr.mxu0 %v97
  %341 = vmatpush1.xpose.msra.mxu0 %v96
  %342 = vmatprep.subr.mxu0 %v101
  %343 = vmatpush1.xpose.msra.mxu0 %v100
  %344 = vmatprep.subr.mxu0 %v105
  %345 = vmatpush1.xpose.msra.mxu0 %v104
  %346 = vmatprep.subr.mxu0 %v109
  %347 = vmatpush1.xpose.msra.mxu0 %v108
  %348 = vmatprep.subr.mxu0 %v113
  %349 = vmatpush1.xpose.msra.mxu0 %v112
  %350 = vmatprep.subr.mxu0 %v117
  %351 = vmatpush1.xpose.msra.mxu0 %v116
  %352 = vmatprep.subr.mxu0 %v121
  %353 = vmatpush1.xpose.msra.mxu0 %v120
  %354 = vmatprep.subr.mxu0 %v125
  %355 = vmatpush1.xpose.msra.mxu0 %v124
  %356 = vmatprep.subr.mxu0 %v129
  %357 = vmatpush1.xpose.msra.mxu0 %v128
  %358 = vmatprep.subr.mxu0 %v133
  %359 = vmatpush1.xpose.msra.mxu0 %v132
  %360 = vmatprep.subr.mxu0 %v137
  %361 = vmatpush1.xpose.msra.mxu0 %v136
  %362 = vmatprep.subr.mxu0 %v141
  %363 = vmatpush1.xpose.msra.mxu0 %v140
  %364 = vmatprep.subr.mxu0 %v145
  %365 = vmatpush1.xpose.msra.mxu0 %v144
  %366 = vmatprep.subr.mxu0 %v149
  %367 = vmatpush1.xpose.msra.mxu0 %v148
  %368 = vmatprep.subr.mxu0 %v153
  %369 = vmatpush1.xpose.msra.mxu0 %v152
  %370 = vmatprep.mubr.f32.mxu0 %v21
  %371 = vmatmul.mubr.f32.gmra.mrb[0].mxu0 %v20
  %v372 = vpop.f32.mrb[0].mxu0
  %v373 = vadd.f32 %v289, %v372
  %v374 = vpop.f32.mrb[0].mxu0
  %v375 = vadd.f32 %v293, %v374
  %376 = vmatprep.mubr.f32.mxu0 %v25
  %377 = vmatmul.mubr.f32.gmra.mrb[0].mxu0 %v24
  %v378 = vpop.f32.mrb[0].mxu0
  %v379 = vadd.f32 %v289, %v378
  %v380 = vpop.f32.mrb[0].mxu0
  %v381 = vadd.f32 %v293, %v380
  %382 = vdwg.mxu0
  %383 = vmatprep.subr.mxu0 %v31
  %384 = vmatpush1.xpose.msra.mxu0 %v30
  %385 = vmatprep.subr.mxu0 %v35
  %386 = vmatpush1.xpose.msra.mxu0 %v34
  %387 = vmatprep.subr.mxu0 %v39
  %388 = vmatpush1.xpose.msra.mxu0 %v38
  %389 = vmatprep.subr.mxu0 %v43
  %390 = vmatpush1.xpose.msra.mxu0 %v42
  %391 = vmatprep.subr.mxu0 %v47
  %392 = vmatpush1.xpose.msra.mxu0 %v46
  %393 = vmatprep.subr.mxu0 %v51
  %394 = vmatpush1.xpose.msra.mxu0 %v50
  %395 = vmatprep.subr.mxu0 %v55
  %396 = vmatpush1.xpose.msra.mxu0 %v54
  %397 = vmatprep.subr.mxu0 %v59
  %398 = vmatpush1.xpose.msra.mxu0 %v58
  %399 = vmatprep.subr.mxu0 %v63
  %400 = vmatpush1.xpose.msra.mxu0 %v62
  %401 = vmatprep.subr.mxu0 %v67
  %402 = vmatpush1.xpose.msra.mxu0 %v66
  %403 = vmatprep.subr.mxu0 %v71
  %404 = vmatpush1.xpose.msra.mxu0 %v70
  %405 = vmatprep.subr.mxu0 %v75
  %406 = vmatpush1.xpose.msra.mxu0 %v74
  %407 = vmatprep.subr.mxu0 %v79
  %408 = vmatpush1.xpose.msra.mxu0 %v78
  %409 = vmatprep.subr.mxu0 %v83
  %410 = vmatpush1.xpose.msra.mxu0 %v82
  %411 = vmatprep.subr.mxu0 %v87
  %412 = vmatpush1.xpose.msra.mxu0 %v86
  %413 = vmatprep.subr.mxu0 %v91
  %414 = vmatpush1.xpose.msra.mxu0 %v90
  %415 = vmatprep.subr.mxu0 %v95
  %416 = vmatpush1.xpose.msra.mxu0 %v94
  %417 = vmatprep.subr.mxu0 %v99
  %418 = vmatpush1.xpose.msra.mxu0 %v98
  %419 = vmatprep.subr.mxu0 %v103
  %420 = vmatpush1.xpose.msra.mxu0 %v102
  %421 = vmatprep.subr.mxu0 %v107
  %422 = vmatpush1.xpose.msra.mxu0 %v106
  %423 = vmatprep.subr.mxu0 %v111
  %424 = vmatpush1.xpose.msra.mxu0 %v110
  %425 = vmatprep.subr.mxu0 %v115
  %426 = vmatpush1.xpose.msra.mxu0 %v114
  %427 = vmatprep.subr.mxu0 %v119
  %428 = vmatpush1.xpose.msra.mxu0 %v118
  %429 = vmatprep.subr.mxu0 %v123
  %430 = vmatpush1.xpose.msra.mxu0 %v122
  %431 = vmatprep.subr.mxu0 %v127
  %432 = vmatpush1.xpose.msra.mxu0 %v126
  %433 = vmatprep.subr.mxu0 %v131
  %434 = vmatpush1.xpose.msra.mxu0 %v130
  %435 = vmatprep.subr.mxu0 %v135
  %436 = vmatpush1.xpose.msra.mxu0 %v134
  %437 = vmatprep.subr.mxu0 %v139
  %438 = vmatpush1.xpose.msra.mxu0 %v138
  %439 = vmatprep.subr.mxu0 %v143
  %440 = vmatpush1.xpose.msra.mxu0 %v142
  %441 = vmatprep.subr.mxu0 %v147
  %442 = vmatpush1.xpose.msra.mxu0 %v146
  %443 = vmatprep.subr.mxu0 %v151
  %444 = vmatpush1.xpose.msra.mxu0 %v150
  %445 = vmatprep.subr.mxu0 %v155
  %446 = vmatpush1.xpose.msra.mxu0 %v154
  %447 = vmatprep.mubr.f32.mxu0 %v23
  %448 = vmatmul.mubr.f32.gmra.mrb[0].mxu0 %v22
  %v449 = vpop.f32.mrb[0].mxu0
  %v450 = vadd.f32 %v373, %v449
  %v451 = vpop.f32.mrb[0].mxu0
  %v452 = vadd.f32 %v375, %v451
  %453 = vmatprep.mubr.f32.mxu0 %v27
  %454 = vmatmul.mubr.f32.gmra.mrb[0].mxu0 %v26
  %v455 = vpop.f32.mrb[0].mxu0
  %v456 = vadd.f32 %v379, %v455
  %v457 = vpop.f32.mrb[0].mxu0
  %v458 = vadd.f32 %v381, %v457
  %459 = vdwg.mxu0
  %460 = vmatprep.subr.mxu0 %v157
  %461 = vmatpush1.xpose.msra.mxu0 %v156
  %462 = vmatprep.subr.mxu0 %v161
  %463 = vmatpush1.xpose.msra.mxu0 %v160
  %464 = vmatprep.subr.mxu0 %v165
  %465 = vmatpush1.xpose.msra.mxu0 %v164
  %466 = vmatprep.subr.mxu0 %v169
  %467 = vmatpush1.xpose.msra.mxu0 %v168
  %468 = vmatprep.subr.mxu0 %v173
  %469 = vmatpush1.xpose.msra.mxu0 %v172
  %470 = vmatprep.subr.mxu0 %v177
  %471 = vmatpush1.xpose.msra.mxu0 %v176
  %472 = vmatprep.subr.mxu0 %v181
  %473 = vmatpush1.xpose.msra.mxu0 %v180
  %474 = vmatprep.subr.mxu0 %v185
  %475 = vmatpush1.xpose.msra.mxu0 %v184
  %476 = vmatprep.subr.mxu0 %v189
  %477 = vmatpush1.xpose.msra.mxu0 %v188
  %478 = vmatprep.subr.mxu0 %v193
  %479 = vmatpush1.xpose.msra.mxu0 %v192
  %480 = vmatprep.subr.mxu0 %v197
  %481 = vmatpush1.xpose.msra.mxu0 %v196
  %482 = vmatprep.subr.mxu0 %v201
  %483 = vmatpush1.xpose.msra.mxu0 %v200
  %484 = vmatprep.subr.mxu0 %v205
  %485 = vmatpush1.xpose.msra.mxu0 %v204
  %486 = vmatprep.subr.mxu0 %v209
  %487 = vmatpush1.xpose.msra.mxu0 %v208
  %488 = vmatprep.subr.mxu0 %v213
  %489 = vmatpush1.xpose.msra.mxu0 %v212
  %490 = vmatprep.subr.mxu0 %v217
  %491 = vmatpush1.xpose.msra.mxu0 %v216
  %492 = vmatprep.subr.mxu0 %v221
  %493 = vmatpush1.xpose.msra.mxu0 %v220
  %494 = vmatprep.subr.mxu0 %v225
  %495 = vmatpush1.xpose.msra.mxu0 %v224
  %496 = vmatprep.subr.mxu0 %v229
  %497 = vmatpush1.xpose.msra.mxu0 %v228
  %498 = vmatprep.subr.mxu0 %v233
  %499 = vmatpush1.xpose.msra.mxu0 %v232
  %500 = vmatprep.subr.mxu0 %v237
  %501 = vmatpush1.xpose.msra.mxu0 %v236
  %502 = vmatprep.subr.mxu0 %v241
  %503 = vmatpush1.xpose.msra.mxu0 %v240
  %504 = vmatprep.subr.mxu0 %v245
  %505 = vmatpush1.xpose.msra.mxu0 %v244
  %506 = vmatprep.subr.mxu0 %v249
  %507 = vmatpush1.xpose.msra.mxu0 %v248
  %508 = vmatprep.subr.mxu0 %v253
  %509 = vmatpush1.xpose.msra.mxu0 %v252
  %510 = vmatprep.subr.mxu0 %v257
  %511 = vmatpush1.xpose.msra.mxu0 %v256
  %512 = vmatprep.subr.mxu0 %v261
  %513 = vmatpush1.xpose.msra.mxu0 %v260
  %514 = vmatprep.subr.mxu0 %v265
  %515 = vmatpush1.xpose.msra.mxu0 %v264
  %516 = vmatprep.subr.mxu0 %v269
  %517 = vmatpush1.xpose.msra.mxu0 %v268
  %518 = vmatprep.subr.mxu0 %v273
  %519 = vmatpush1.xpose.msra.mxu0 %v272
  %520 = vmatprep.subr.mxu0 %v277
  %521 = vmatpush1.xpose.msra.mxu0 %v276
  %522 = vmatprep.subr.mxu0 %v281
  %523 = vmatpush1.xpose.msra.mxu0 %v280
  %524 = vmatprep.mubr.f32.mxu0 %v21
  %525 = vmatmul.mubr.f32.gmra.mrb[0].mxu0 %v20
  %v526 = vpop.f32.mrb[0].mxu0
  %v527 = vadd.f32 %v297, %v526
  %v528 = vpop.f32.mrb[0].mxu0
  %v529 = vadd.f32 %v301, %v528
  %530 = vmatprep.mubr.f32.mxu0 %v25
  %531 = vmatmul.mubr.f32.gmra.mrb[0].mxu0 %v24
  %v532 = vpop.f32.mrb[0].mxu0
  %v533 = vadd.f32 %v297, %v532
  %v534 = vpop.f32.mrb[0].mxu0
  %v535 = vadd.f32 %v301, %v534
  %536 = vdwg.mxu0
  %537 = vmatprep.subr.mxu0 %v159
  %538 = vmatpush1.xpose.msra.mxu0 %v158
  %539 = vmatprep.subr.mxu0 %v163
  %540 = vmatpush1.xpose.msra.mxu0 %v162
  %541 = vmatprep.subr.mxu0 %v167
  %542 = vmatpush1.xpose.msra.mxu0 %v166
  %543 = vmatprep.subr.mxu0 %v171
  %544 = vmatpush1.xpose.msra.mxu0 %v170
  %545 = vmatprep.subr.mxu0 %v175
  %546 = vmatpush1.xpose.msra.mxu0 %v174
  %547 = vmatprep.subr.mxu0 %v179
  %548 = vmatpush1.xpose.msra.mxu0 %v178
  %549 = vmatprep.subr.mxu0 %v183
  %550 = vmatpush1.xpose.msra.mxu0 %v182
  %551 = vmatprep.subr.mxu0 %v187
  %552 = vmatpush1.xpose.msra.mxu0 %v186
  %553 = vmatprep.subr.mxu0 %v191
  %554 = vmatpush1.xpose.msra.mxu0 %v190
  %555 = vmatprep.subr.mxu0 %v195
  %556 = vmatpush1.xpose.msra.mxu0 %v194
  %557 = vmatprep.subr.mxu0 %v199
  %558 = vmatpush1.xpose.msra.mxu0 %v198
  %559 = vmatprep.subr.mxu0 %v203
  %560 = vmatpush1.xpose.msra.mxu0 %v202
  %561 = vmatprep.subr.mxu0 %v207
  %562 = vmatpush1.xpose.msra.mxu0 %v206
  %563 = vmatprep.subr.mxu0 %v211
  %564 = vmatpush1.xpose.msra.mxu0 %v210
  %565 = vmatprep.subr.mxu0 %v215
  %566 = vmatpush1.xpose.msra.mxu0 %v214
  %567 = vmatprep.subr.mxu0 %v219
  %568 = vmatpush1.xpose.msra.mxu0 %v218
  %569 = vmatprep.subr.mxu0 %v223
  %570 = vmatpush1.xpose.msra.mxu0 %v222
  %571 = vmatprep.subr.mxu0 %v227
  %572 = vmatpush1.xpose.msra.mxu0 %v226
  %573 = vmatprep.subr.mxu0 %v231
  %574 = vmatpush1.xpose.msra.mxu0 %v230
  %575 = vmatprep.subr.mxu0 %v235
  %576 = vmatpush1.xpose.msra.mxu0 %v234
  %577 = vmatprep.subr.mxu0 %v239
  %578 = vmatpush1.xpose.msra.mxu0 %v238
  %579 = vmatprep.subr.mxu0 %v243
  %580 = vmatpush1.xpose.msra.mxu0 %v242
  %581 = vmatprep.subr.mxu0 %v247
  %582 = vmatpush1.xpose.msra.mxu0 %v246
  %583 = vmatprep.subr.mxu0 %v251
  %584 = vmatpush1.xpose.msra.mxu0 %v250
  %585 = vmatprep.subr.mxu0 %v255
  %586 = vmatpush1.xpose.msra.mxu0 %v254
  %587 = vmatprep.subr.mxu0 %v259
  %588 = vmatpush1.xpose.msra.mxu0 %v258
  %589 = vmatprep.subr.mxu0 %v263
  %590 = vmatpush1.xpose.msra.mxu0 %v262
  %591 = vmatprep.subr.mxu0 %v267
  %592 = vmatpush1.xpose.msra.mxu0 %v266
  %593 = vmatprep.subr.mxu0 %v271
  %594 = vmatpush1.xpose.msra.mxu0 %v270
  %595 = vmatprep.subr.mxu0 %v275
  %596 = vmatpush1.xpose.msra.mxu0 %v274
  %597 = vmatprep.subr.mxu0 %v279
  %598 = vmatpush1.xpose.msra.mxu0 %v278
  %599 = vmatprep.subr.mxu0 %v283
  %600 = vmatpush1.xpose.msra.mxu0 %v282
  %601 = vmatprep.mubr.f32.mxu0 %v23
  %602 = vmatmul.mubr.f32.gmra.mrb[0].mxu0 %v22
  %v603 = vpop.f32.mrb[0].mxu0
  %v604 = vadd.f32 %v527, %v603
  %v605 = vpop.f32.mrb[0].mxu0
  %v606 = vadd.f32 %v529, %v605
  %607 = vmatprep.mubr.f32.mxu0 %v27
  %608 = vmatmul.mubr.f32.gmra.mrb[0].mxu0 %v26
  %v609 = vpop.f32.mrb[0].mxu0
  %v610 = vadd.f32 %v533, %v609
  %v611 = vpop.f32.mrb[0].mxu0
  %v612 = vadd.f32 %v535, %v611
  %613 = vdwg.mxu0
  %v614 = vmax.f32 %v450, 0.0
  %v615 = vmax.f32 %v452, 0.0
  %v616 = vmax.f32 %v604, 0.0
  %v617 = vmax.f32 %v606, 0.0
  %v618 = vmax.f32 %v456, 0.0
  %v619 = vmax.f32 %v458, 0.0
  %v620 = vmax.f32 %v610, 0.0
  %v621 = vmax.f32 %v612, 0.0
  %v622 = vld [vmem:[%s3] sm:$0xff]
  %v623 = vld [vmem:[%s3 + $0x8] sm:$0xff]
  %v624 = vld [vmem:[%s3 + $0x10] sm:$0xff]
  %v625 = vld [vmem:[%s3 + $0x18] sm:$0xff]
  %v626 = vld [vmem:[%s3 + $0x20] sm:$0xff]
  %v627 = vld [vmem:[%s3 + $0x28] sm:$0xff]
  %v628 = vld [vmem:[%s3 + $0x30] sm:$0xff]
  %v629 = vld [vmem:[%s3 + $0x38] sm:$0xff]
  %v630 = vld [vmem:[%s3 + $0x40] sm:$0xff]
  %v631 = vld [vmem:[%s3 + $0x48] sm:$0xff]
  %v632 = vld [vmem:[%s3 + $0x50] sm:$0xff]
  %v633 = vld [vmem:[%s3 + $0x58] sm:$0xff]
  %v634 = vld [vmem:[%s3 + $0x60] sm:$0xff]
  %v635 = vld [vmem:[%s3 + $0x68] sm:$0xff]
  %v636 = vld [vmem:[%s3 + $0x70] sm:$0xff]
  %v637 = vld [vmem:[%s3 + $0x78] sm:$0xff]
  %v638 = vld [vmem:[%s3 + $0x80] sm:$0xff]
  %v639 = vld [vmem:[%s3 + $0x88] sm:$0xff]
  %v640 = vld [vmem:[%s3 + $0x90] sm:$0xff]
  %v641 = vld [vmem:[%s3 + $0x98] sm:$0xff]
  %v642 = vld [vmem:[%s3 + $0xa0] sm:$0xff]
  %v643 = vld [vmem:[%s3 + $0xa8] sm:$0xff]
  %v644 = vld [vmem:[%s3 + $0xb0] sm:$0xff]
  %v645 = vld [vmem:[%s3 + $0xb8] sm:$0xff]
  %v646 = vld [vmem:[%s3 + $0xc0] sm:$0xff]
  %v647 = vld [vmem:[%s3 + $0xc8] sm:$0xff]
  %v648 = vld [vmem:[%s3 + $0xd0] sm:$0xff]
  %v649 = vld [vmem:[%s3 + $0xd8] sm:$0xff]
  %v650 = vld [vmem:[%s3 + $0xe0] sm:$0xff]
  %v651 = vld [vmem:[%s3 + $0xe8] sm:$0xff]
  %v652 = vld [vmem:[%s3 + $0xf0] sm:$0xff]
  %v653 = vld [vmem:[%s3 + $0xf8] sm:$0xff]
  %v654 = vld [vmem:[%s3 + $0x100] sm:$0xff]
  %v655 = vld [vmem:[%s3 + $0x108] sm:$0xff]
  %v656 = vld [vmem:[%s3 + $0x110] sm:$0xff]
  %v657 = vld [vmem:[%s3 + $0x118] sm:$0xff]
  %v658 = vld [vmem:[%s3 + $0x120] sm:$0xff]
  %v659 = vld [vmem:[%s3 + $0x128] sm:$0xff]
  %v660 = vld [vmem:[%s3 + $0x130] sm:$0xff]
  %v661 = vld [vmem:[%s3 + $0x138] sm:$0xff]
  %v662 = vld [vmem:[%s4] sm:$0x1]
  %v664 = vlaneseq
  %v665 = vshrl.u32 %v664, 7
  %v666 = vsub.s32 0, %v665
  %v667 = vrot.slane %v662, %v666
  %669 = vmatprep.subr.mxu0 %v623
  %670 = vmatpush1.xpose.msra.mxu0 %v622
  %671 = vmatprep.subr.mxu0 %v627
  %672 = vmatpush1.xpose.msra.mxu0 %v626
  %673 = vmatprep.subr.mxu0 %v631
  %674 = vmatpush1.xpose.msra.mxu0 %v630
  %675 = vmatprep.subr.mxu0 %v635
  %676 = vmatpush1.xpose.msra.mxu0 %v634
  %677 = vmatprep.subr.mxu0 %v639
  %678 = vmatpush1.xpose.msra.mxu0 %v638
  %679 = vmatprep.subr.mxu0 %v643
  %680 = vmatpush1.xpose.msra.mxu0 %v642
  %681 = vmatprep.subr.mxu0 %v647
  %682 = vmatpush1.xpose.msra.mxu0 %v646
  %683 = vmatprep.subr.mxu0 %v651
  %684 = vmatpush1.xpose.msra.mxu0 %v650
  %685 = vmatprep.subr.mxu0 %v655
  %686 = vmatpush1.xpose.msra.mxu0 %v654
  %687 = vmatprep.subr.mxu0 %v659
  %688 = vmatpush1.xpose.msra.mxu0 %v658
  %689 = vmatprep.subr.mxu0 0.0
  %690 = vmatpush1.xpose.msra.mxu0 0.0
  %691 = vmatprep.subr.mxu0 0.0
  %692 = vmatpush1.xpose.msra.mxu0 0.0
  %693 = vmatprep.subr.mxu0 0.0
  %694 = vmatpush1.xpose.msra.mxu0 0.0
  %695 = vmatprep.subr.mxu0 0.0
  %696 = vmatpush1.xpose.msra.mxu0 0.0
  %697 = vmatprep.subr.mxu0 0.0
  %698 = vmatpush1.xpose.msra.mxu0 0.0
  %699 = vmatprep.subr.mxu0 0.0
  %700 = vmatpush1.xpose.msra.mxu0 0.0
  %701 = vmatprep.subr.mxu0 0.0
  %702 = vmatpush1.xpose.msra.mxu0 0.0
  %703 = vmatprep.subr.mxu0 0.0
  %704 = vmatpush1.xpose.msra.mxu0 0.0
  %705 = vmatprep.subr.mxu0 0.0
  %706 = vmatpush1.xpose.msra.mxu0 0.0
  %707 = vmatprep.subr.mxu0 0.0
  %708 = vmatpush1.xpose.msra.mxu0 0.0
  %709 = vmatprep.subr.mxu0 0.0
  %710 = vmatpush1.xpose.msra.mxu0 0.0
  %711 = vmatprep.subr.mxu0 0.0
  %712 = vmatpush1.xpose.msra.mxu0 0.0
  %713 = vmatprep.subr.mxu0 0.0
  %714 = vmatpush1.xpose.msra.mxu0 0.0
  %715 = vmatprep.subr.mxu0 0.0
  %716 = vmatpush1.xpose.msra.mxu0 0.0
  %717 = vmatprep.subr.mxu0 0.0
  %718 = vmatpush1.xpose.msra.mxu0 0.0
  %719 = vmatprep.subr.mxu0 0.0
  %720 = vmatpush1.xpose.msra.mxu0 0.0
  %721 = vmatprep.subr.mxu0 0.0
  %722 = vmatpush1.xpose.msra.mxu0 0.0
  %723 = vmatprep.subr.mxu0 0.0
  %724 = vmatpush1.xpose.msra.mxu0 0.0
  %725 = vmatprep.subr.mxu0 0.0
  %726 = vmatpush1.xpose.msra.mxu0 0.0
  %727 = vmatprep.subr.mxu0 0.0
  %728 = vmatpush1.xpose.msra.mxu0 0.0
  %729 = vmatprep.subr.mxu0 0.0
  %730 = vmatpush1.xpose.msra.mxu0 0.0
  %731 = vmatprep.subr.mxu0 0.0
  %732 = vmatpush1.xpose.msra.mxu0 0.0
  %733 = vmatprep.mubr.f32.mxu0 %v615
  %734 = vmatmul.mubr.f32.gmra.mrb[0].mxu0 %v614
  %v735 = vpop.f32.mrb[0].mxu0
  %v736 = vadd.f32 %v667, %v735
  %v737 = vpop.f32.mrb[0].mxu0
  %738 = vmatprep.mubr.f32.mxu0 %v619
  %739 = vmatmul.mubr.f32.gmra.mrb[0].mxu0 %v618
  %v740 = vpop.f32.mrb[0].mxu0
  %v741 = vadd.f32 %v667, %v740
  %v742 = vpop.f32.mrb[0].mxu0
  %743 = vdwg.mxu0
  %744 = vmatprep.subr.mxu0 %v625
  %745 = vmatpush1.xpose.msra.mxu0 %v624
  %746 = vmatprep.subr.mxu0 %v629
  %747 = vmatpush1.xpose.msra.mxu0 %v628
  %748 = vmatprep.subr.mxu0 %v633
  %749 = vmatpush1.xpose.msra.mxu0 %v632
  %750 = vmatprep.subr.mxu0 %v637
  %751 = vmatpush1.xpose.msra.mxu0 %v636
  %752 = vmatprep.subr.mxu0 %v641
  %753 = vmatpush1.xpose.msra.mxu0 %v640
  %754 = vmatprep.subr.mxu0 %v645
  %755 = vmatpush1.xpose.msra.mxu0 %v644
  %756 = vmatprep.subr.mxu0 %v649
  %757 = vmatpush1.xpose.msra.mxu0 %v648
  %758 = vmatprep.subr.mxu0 %v653
  %759 = vmatpush1.xpose.msra.mxu0 %v652
  %760 = vmatprep.subr.mxu0 %v657
  %761 = vmatpush1.xpose.msra.mxu0 %v656
  %762 = vmatprep.subr.mxu0 %v661
  %763 = vmatpush1.xpose.msra.mxu0 %v660
  %764 = vmatprep.subr.mxu0 0.0
  %765 = vmatpush1.xpose.msra.mxu0 0.0
  %766 = vmatprep.subr.mxu0 0.0
  %767 = vmatpush1.xpose.msra.mxu0 0.0
  %768 = vmatprep.subr.mxu0 0.0
  %769 = vmatpush1.xpose.msra.mxu0 0.0
  %770 = vmatprep.subr.mxu0 0.0
  %771 = vmatpush1.xpose.msra.mxu0 0.0
  %772 = vmatprep.subr.mxu0 0.0
  %773 = vmatpush1.xpose.msra.mxu0 0.0
  %774 = vmatprep.subr.mxu0 0.0
  %775 = vmatpush1.xpose.msra.mxu0 0.0
  %776 = vmatprep.subr.mxu0 0.0
  %777 = vmatpush1.xpose.msra.mxu0 0.0
  %778 = vmatprep.subr.mxu0 0.0
  %779 = vmatpush1.xpose.msra.mxu0 0.0
  %780 = vmatprep.subr.mxu0 0.0
  %781 = vmatpush1.xpose.msra.mxu0 0.0
  %782 = vmatprep.subr.mxu0 0.0
  %783 = vmatpush1.xpose.msra.mxu0 0.0
  %784 = vmatprep.subr.mxu0 0.0
  %785 = vmatpush1.xpose.msra.mxu0 0.0
  %786 = vmatprep.subr.mxu0 0.0
  %787 = vmatpush1.xpose.msra.mxu0 0.0
  %788 = vmatprep.subr.mxu0 0.0
  %789 = vmatpush1.xpose.msra.mxu0 0.0
  %790 = vmatprep.subr.mxu0 0.0
  %791 = vmatpush1.xpose.msra.mxu0 0.0
  %792 = vmatprep.subr.mxu0 0.0
  %793 = vmatpush1.xpose.msra.mxu0 0.0
  %794 = vmatprep.subr.mxu0 0.0
  %795 = vmatpush1.xpose.msra.mxu0 0.0
  %796 = vmatprep.subr.mxu0 0.0
  %797 = vmatpush1.xpose.msra.mxu0 0.0
  %798 = vmatprep.subr.mxu0 0.0
  %799 = vmatpush1.xpose.msra.mxu0 0.0
  %800 = vmatprep.subr.mxu0 0.0
  %801 = vmatpush1.xpose.msra.mxu0 0.0
  %802 = vmatprep.subr.mxu0 0.0
  %803 = vmatpush1.xpose.msra.mxu0 0.0
  %804 = vmatprep.subr.mxu0 0.0
  %805 = vmatpush1.xpose.msra.mxu0 0.0
  %806 = vmatprep.subr.mxu0 0.0
  %807 = vmatpush1.xpose.msra.mxu0 0.0
  %808 = vmatprep.mubr.f32.mxu0 %v617
  %809 = vmatmul.mubr.f32.gmra.mrb[0].mxu0 %v616
  %v810 = vpop.f32.mrb[0].mxu0
  %v811 = vadd.f32 %v736, %v810
  %v812 = vpop.f32.mrb[0].mxu0
  %813 = vmatprep.mubr.f32.mxu0 %v621
  %814 = vmatmul.mubr.f32.gmra.mrb[0].mxu0 %v620
  %v815 = vpop.f32.mrb[0].mxu0
  %v816 = vadd.f32 %v741, %v815
  %v817 = vpop.f32.mrb[0].mxu0
  %818 = vdwg.mxu0
  %v819 = vxor.u32 %v811, 2147483648
  %v820 = vxor.u32 %v816, 2147483648
  %v821 = vmul.f32 %v819, 1.442695
  %v822 = vpow.pop %v821
  %v823 = vmul.f32 %v820, 1.442695
  %v824 = vpow.pop %v823
  %v825 = vadd.f32 %v822, 1.0
  %v826 = vadd.f32 %v824, 1.0
  %v827 = vrcp.pop %v825
  %v828 = vmul.f32 1.0, %v827
  %v829 = vrcp.pop %v826
  %v830 = vmul.f32 1.0, %v829
  %vm831 = vcmask 654336
  %832 = vst.msk [vmem:[%s5] sm:$0xff] %vm831, %v828
  %833 = vst.msk [vmem:[%s5 + $0x8] sm:$0xff] %vm831, %v830
  // Predicated region
  $region22: #{custom_mlp_forward.3} parent=0 // pred_check
    _
  $region23: #{custom_mlp_forward.3} parent=0 // pred_check_branch
    %835 = sbr.rel (0) target = $region25
  $region24: #{custom_mlp_forward.3} parent=0 // pred_region
    _
  $region25: #{custom_mlp_forward.3} parent=0 // pred_fallthru
    _
  // Predicated region
  $region26: #{custom_mlp_forward.3} parent=0 // pred_check
    _
  $region27: #{custom_mlp_forward.3} parent=0 // pred_check_branch
    %837 = sbr.rel (0) target = $region29
  $region28: #{custom_mlp_forward.3} parent=0 // pred_region
    _
  $region29: #{custom_mlp_forward.3} parent=0 // pred_fallthru
    _

// kernel: custom_mlp_forward.2
$region0: #{custom_mlp_forward.2}
  #allocation0 [shape = 'u32[]', space=smem, size = 0x4, offset = 0x4, fixed_abs, tag = 'smem constant byte address 0x4 - core index']
  #allocation1 [shape = 'u32[144,128]{1,0:T(1,128)}', space=vmem, size = 0x12000, scoped, tag = 'internal scratch']
  #allocation2 [shape = 'f32[16,256]{1,0:T(8,128)}', space=vmem, size = 0x4000, scoped, tag = 'scratch operand']
  %s0 = inlined_call_operand.vmem [shape: bf16[16,150528], index: 0, kind: input, shape index: {}]
  %s1 = inlined_call_operand.hbm [shape: bf16[512,150528], index: 1, kind: input, shape index: {}]
  %s2 = inlined_call_operand.vmem [shape: f32[1,512], index: 2, kind: input, shape index: {}]
  %s3 = inlined_call_operand.vmem [shape: f32[16,512], index: 3, kind: output, shape index: {}]
  %s4 = sld [smem:[#allocation0]]
  $region99: #{custom_mlp_forward.2} parent=0
    _
  %s6 = ssub.s32 1, %s4
  %s7 = scalar_select 0, %s6, %s4
  $region1: #{custom_mlp_forward.2} parent=0
    #allocation3 [shape = 'u8[688128]{0}', space=vmem, size = 0xa8000, scoped, tag = 'input window, operand 0']
    #allocation4 [shape = 'u8[11010048]{0}', space=vmem, size = 0xa80000, scoped, tag = 'input window, operand 1']
    #allocation5 [shape = 's32[2]{0}', space=sflag, size = 0x8, scoped, tag = 'scoped memory for custom_mlp_forward.2']
    #allocation6 [shape = 'u8[32768]{0}', space=vmem, size = 0x8000, scoped, tag = 'output window, operand 0']
    %8 = vsyncpa [#allocation5], 0
    %s9 = scalar_lea.sflag [#allocation5], 1
    %10 = vsyncpa %s9, 0
    loop: start=0, step=1, limit=30
    $region2: #{custom_mlp_forward.2} parent=1 // loop_pre_header
      _
    $region3: #{custom_mlp_forward.2} parent=1 // loop_header
      %s12 = sphi 0, %s16
      %p13 = scmp.ge.s32.totalorder %s12, 30
      %s19 = sphi 0, %s31
      %s20 = sphi 0, %s27
      %s21 = sphi 0, %s19
      %s22 = sphi 0, %s20
      %s23 = sphi 0, %s21
      %s24 = sphi 0, %s22
      %s34 = sphi 0, %s36
      %s37 = sphi 0, %s34
      %s38 = sphi 0, %s37
      %s54 = sphi 0, %s38
      %s62 = sphi 0, %s64
      %s65 = sphi 0, %s62
      %s66 = sphi 0, %s65
      %s82 = sphi 0, %s66
      %s88 = sphi 0, %s90
      %s91 = sphi 0, %s88
      %s92 = sphi 0, %s91
      %s108 = sphi 0, %s92
      %s114 = sphi 0, %s116
      %s117 = sphi 0, %s114
      %s118 = sphi 0, %s117
      %s134 = sphi 0, %s118
    $region4: #{custom_mlp_forward.2} parent=1 // loop_header_branch
      %15 = sbr.rel (%p13) target = $region8
    $region5: #{custom_mlp_forward.2} parent=1 // loop_body
      %s17 = ssub.s32 %s12, 1
      %s18 = ssub.s32 %s12, 2
      %s25 = sadd.s32 1, %s20
      %p26 = scmp.ge.s32.totalorder %s25, 14
      %s27 = scalar_select %p26, 0, %s25
      %s28 = sadd.s32 1, %s19
      %s29 = scalar_select %p26, %s28, %s19
      %p30 = scmp.ge.s32.totalorder %s29, 2
      %s31 = scalar_select %p30, 0, %s29
      %s32 = ssub.s32 %s20, %s27
      %p33 = scmp.eq.s32.totalorder %s32, 0
      %s35 = sadd.s32 %s34, 1
      %s36 = scalar_select %p33, %s34, %s35
      %p39 = pneg %p33
      %p40 = scmp.eq.s32.totalorder %s12, 27
      %p41 = por %p39, %p40
      %p42 = scmp.ne.s32.totalorder %s34, %s37
      %p43 = scmp.eq.s32.totalorder %s12, 0
      %p44 = por %p42, %p43
      %p45 = scmp.ne.s32.totalorder %s34, %s37
      %p46 = scmp.eq.s32.totalorder %s17, 27
      %p47 = por %p45, %p46
      %p48 = scmp.ne.s32.totalorder %s37, %s38
      %p49 = scmp.eq.s32.totalorder %s17, 0
      %p50 = por %p48, %p49
      %p51 = scmp.ne.s32.totalorder %s37, %s38
      %p52 = scmp.eq.s32.totalorder %s18, 27
      %p53 = por %p51, %p52
      %p55 = scmp.ne.s32.totalorder %s38, %s54
      %p56 = scmp.eq.s32.totalorder %s18, 0
      %p57 = por %p55, %p56
      %s58 = ssub.s32 %s19, %s31
      %s59 = ssub.s32 %s20, %s27
      %s60 = sor.u32 %s58, %s59
      %p61 = scmp.eq.s32.totalorder %s60, 0
      %s63 = sadd.s32 %s62, 1
      %s64 = scalar_select %p61, %s62, %s63
      %p67 = pneg %p61
      %p68 = scmp.eq.s32.totalorder %s12, 27
      %p69 = por %p67, %p68
      %p70 = scmp.ne.s32.totalorder %s62, %s65
      %p71 = scmp.eq.s32.totalorder %s12, 0
      %p72 = por %p70, %p71
      %p73 = scmp.ne.s32.totalorder %s62, %s65
      %p74 = scmp.eq.s32.totalorder %s17, 27
      %p75 = por %p73, %p74
      %p76 = scmp.ne.s32.totalorder %s65, %s66
      %p77 = scmp.eq.s32.totalorder %s17, 0
      %p78 = por %p76, %p77
      %p79 = scmp.ne.s32.totalorder %s65, %s66
      %p80 = scmp.eq.s32.totalorder %s18, 27
      %p81 = por %p79, %p80
      %p83 = scmp.ne.s32.totalorder %s66, %s82
      %p84 = scmp.eq.s32.totalorder %s18, 0
      %p85 = por %p83, %p84
      %s86 = ssub.s32 %s19, %s31
      %p87 = scmp.eq.s32.totalorder %s86, 0
      %s89 = sadd.s32 %s88, 1
      %s90 = scalar_select %p87, %s88, %s89
      %p93 = pneg %p87
      %p94 = scmp.eq.s32.totalorder %s12, 27
      %p95 = por %p93, %p94
      %p96 = scmp.ne.s32.totalorder %s88, %s91
      %p97 = scmp.eq.s32.totalorder %s12, 0
      %p98 = por %p96, %p97
      %p99 = scmp.ne.s32.totalorder %s88, %s91
      %p100 = scmp.eq.s32.totalorder %s17, 27
      %p101 = por %p99, %p100
      %p102 = scmp.ne.s32.totalorder %s91, %s92
      %p103 = scmp.eq.s32.totalorder %s17, 0
      %p104 = por %p102, %p103
      %p105 = scmp.ne.s32.totalorder %s91, %s92
      %p106 = scmp.eq.s32.totalorder %s18, 27
      %p107 = por %p105, %p106
      %p109 = scmp.ne.s32.totalorder %s92, %s108
      %p110 = scmp.eq.s32.totalorder %s18, 0
      %p111 = por %p109, %p110
      %s112 = ssub.s32 %s19, %s31
      %p113 = scmp.eq.s32.totalorder %s112, 0
      %s115 = sadd.s32 %s114, 1
      %s116 = scalar_select %p113, %s114, %s115
      %p119 = pneg %p113
      %p120 = scmp.eq.s32.totalorder %s12, 27
      %p121 = por %p119, %p120
      %p122 = scmp.ne.s32.totalorder %s114, %s117
      %p123 = scmp.eq.s32.totalorder %s12, 0
      %p124 = por %p122, %p123
      %p125 = scmp.ne.s32.totalorder %s114, %s117
      %p126 = scmp.eq.s32.totalorder %s17, 27
      %p127 = por %p125, %p126
      %p128 = scmp.ne.s32.totalorder %s117, %s118
      %p129 = scmp.eq.s32.totalorder %s17, 0
      %p130 = por %p128, %p129
      %p131 = scmp.ne.s32.totalorder %s117, %s118
      %p132 = scmp.eq.s32.totalorder %s18, 27
      %p133 = por %p131, %p132
      %p135 = scmp.ne.s32.totalorder %s118, %s134
      %p136 = scmp.eq.s32.totalorder %s18, 0
      %p137 = por %p135, %p136
      %p138 = scmp.le.s32.totalorder 1, %s12
      %p139 = scmp.lt.s32.totalorder %s12, 29
      %p140 = pnand %p138, %p139
      %p141 = pneg %p140
      // Predicated region
      $region9: #{custom_mlp_forward.2} parent=5 // pred_check
        _
      $region10: #{custom_mlp_forward.2} parent=5 // pred_check_branch
        %143 = sbr.rel (%p140) target = $region12
      $region11: #{custom_mlp_forward.2} parent=5 // pred_region
        %s144 = ssub.s32 %s12, 1
      $region12: #{custom_mlp_forward.2} parent=5 // pred_fallthru
        _
      %p145 = scmp.lt.s32.totalorder %s12, 28
      // Predicated region
      $region13: #{custom_mlp_forward.2} parent=5 // pred_check
        %p146 = pneg %p145
      $region14: #{custom_mlp_forward.2} parent=5 // pred_check_branch
        %148 = sbr.rel (%p146) target = $region16
      $region15: #{custom_mlp_forward.2} parent=5 // pred_region
        // Predicated region
        $region17: #{custom_mlp_forward.2} parent=15 // pred_check
          %p149 = pneg %p44
        $region18: #{custom_mlp_forward.2} parent=15 // pred_check_branch
          %151 = sbr.rel (%p149) target = $region20
        $region19: #{custom_mlp_forward.2} parent=15 // pred_region
          %s152 = sand.u32 %s34, 1
          %s153 = sand.u32 %s34, 1
          %s154 = smul.addr %s153, 672
          %s155 = scalar_lea.vmem [#allocation3], %s154
          %s156 = smul.u32 84, %s20
          %s157 = smul.addr %s156, 4
          %s158 = scalar_lea.vmem %s0, %s157
          // Predicated region
          $region21: #{custom_mlp_forward.2} parent=19 // pred_check
            _
          $region22: #{custom_mlp_forward.2} parent=19 // pred_check_branch
            %160 = sbr.rel (0) target = $region24
          $region23: #{custom_mlp_forward.2} parent=19 // pred_region
            // Predicated region
            $region25: #{custom_mlp_forward.2} parent=23 // pred_check
              _
            $region26: #{custom_mlp_forward.2} parent=23 // pred_check_branch
              %162 = sbr.rel (0) target = $region28
            $region27: #{custom_mlp_forward.2} parent=23 // pred_region
              loop: start=0, step=1, limit=1
              $region29: #{custom_mlp_forward.2} parent=27 // loop_pre_header
                _
              $region30: #{custom_mlp_forward.2} parent=27 // loop_header
                %s164 = sphi 0, %s168
                %p165 = scmp.ge.s32.totalorder %s164, 1
                %s169 = sphi %s158, %s158
                %s170 = sphi %s155, %s155
              $region31: #{custom_mlp_forward.2} parent=27 // loop_header_branch
                %167 = sbr.rel (%p165) target = $region35
              $region32: #{custom_mlp_forward.2} parent=27 // loop_body
                %v171 = vld [vmem:[%s169] sm:$0xff]
                %172 = vst [vmem:[%s170] sm:$0xff] %v171
                %v173 = vld [vmem:[%s169 + $0x8] sm:$0xff]
                %174 = vst [vmem:[%s170 + $0x8] sm:$0xff] %v173
                %v175 = vld [vmem:[%s169 + $0x10] sm:$0xff]
                %176 = vst [vmem:[%s170 + $0x10] sm:$0xff] %v175
                %v177 = vld [vmem:[%s169 + $0x18] sm:$0xff]
                %178 = vst [vmem:[%s170 + $0x18] sm:$0xff] %v177
                %v179 = vld [vmem:[%s169 + $0x20] sm:$0xff]
                %180 = vst [vmem:[%s170 + $0x20] sm:$0xff] %v179
                %v181 = vld [vmem:[%s169 + $0x28] sm:$0xff]
                %182 = vst [vmem:[%s170 + $0x28] sm:$0xff] %v181
                %v183 = vld [vmem:[%s169 + $0x30] sm:$0xff]
                %184 = vst [vmem:[%s170 + $0x30] sm:$0xff] %v183
                %v185 = vld [vmem:[%s169 + $0x38] sm:$0xff]
                %186 = vst [vmem:[%s170 + $0x38] sm:$0xff] %v185
                %v187 = vld [vmem:[%s169 + $0x40] sm:$0xff]
                %188 = vst [vmem:[%s170 + $0x40] sm:$0xff] %v187
                %v189 = vld [vmem:[%s169 + $0x48] sm:$0xff]
                %190 = vst [vmem:[%s170 + $0x48] sm:$0xff] %v189
                %v191 = vld [vmem:[%s169 + $0x50] sm:$0xff]
                %192 = vst [vmem:[%s170 + $0x50] sm:$0xff] %v191
                %v193 = vld [vmem:[%s169 + $0x58] sm:$0xff]
                %194 = vst [vmem:[%s170 + $0x58] sm:$0xff] %v193
                %v195 = vld [vmem:[%s169 + $0x60] sm:$0xff]
                %196 = vst [vmem:[%s170 + $0x60] sm:$0xff] %v195
                %v197 = vld [vmem:[%s169 + $0x68] sm:$0xff]
                %198 = vst [vmem:[%s170 + $0x68] sm:$0xff] %v197
                %v199 = vld [vmem:[%s169 + $0x70] sm:$0xff]
                %200 = vst [vmem:[%s170 + $0x70] sm:$0xff] %v199
                %v201 = vld [vmem:[%s169 + $0x78] sm:$0xff]
                %202 = vst [vmem:[%s170 + $0x78] sm:$0xff] %v201
                %v203 = vld [vmem:[%s169 + $0x80] sm:$0xff]
                %204 = vst [vmem:[%s170 + $0x80] sm:$0xff] %v203
                %v205 = vld [vmem:[%s169 + $0x88] sm:$0xff]
                %206 = vst [vmem:[%s170 + $0x88] sm:$0xff] %v205
                %v207 = vld [vmem:[%s169 + $0x90] sm:$0xff]
                %208 = vst [vmem:[%s170 + $0x90] sm:$0xff] %v207
                %v209 = vld [vmem:[%s169 + $0x98] sm:$0xff]
                %210 = vst [vmem:[%s170 + $0x98] sm:$0xff] %v209
                %v211 = vld [vmem:[%s169 + $0xa0] sm:$0xff]
                %212 = vst [vmem:[%s170 + $0xa0] sm:$0xff] %v211
                %v213 = vld [vmem:[%s169 + $0xa8] sm:$0xff]
                %214 = vst [vmem:[%s170 + $0xa8] sm:$0xff] %v213
                %v215 = vld [vmem:[%s169 + $0xb0] sm:$0xff]
                %216 = vst [vmem:[%s170 + $0xb0] sm:$0xff] %v215
                %v217 = vld [vmem:[%s169 + $0xb8] sm:$0xff]
                %218 = vst [vmem:[%s170 + $0xb8] sm:$0xff] %v217
                %v219 = vld [vmem:[%s169 + $0xc0] sm:$0xff]
                %220 = vst [vmem:[%s170 + $0xc0] sm:$0xff] %v219
                %v221 = vld [vmem:[%s169 + $0xc8] sm:$0xff]
                %222 = vst [vmem:[%s170 + $0xc8] sm:$0xff] %v221
                %v223 = vld [vmem:[%s169 + $0xd0] sm:$0xff]
                %224 = vst [vmem:[%s170 + $0xd0] sm:$0xff] %v223
                %v225 = vld [vmem:[%s169 + $0xd8] sm:$0xff]
                %226 = vst [vmem:[%s170 + $0xd8] sm:$0xff] %v225
                %v227 = vld [vmem:[%s169 + $0xe0] sm:$0xff]
                %228 = vst [vmem:[%s170 + $0xe0] sm:$0xff] %v227
                %v229 = vld [vmem:[%s169 + $0xe8] sm:$0xff]
                %230 = vst [vmem:[%s170 + $0xe8] sm:$0xff] %v229
                %v231 = vld [vmem:[%s169 + $0xf0] sm:$0xff]
                %232 = vst [vmem:[%s170 + $0xf0] sm:$0xff] %v231
                %v233 = vld [vmem:[%s169 + $0xf8] sm:$0xff]
                %234 = vst [vmem:[%s170 + $0xf8] sm:$0xff] %v233
                %v235 = vld [vmem:[%s169 + $0x100] sm:$0xff]
                %236 = vst [vmem:[%s170 + $0x100] sm:$0xff] %v235
                %v237 = vld [vmem:[%s169 + $0x108] sm:$0xff]
                %238 = vst [vmem:[%s170 + $0x108] sm:$0xff] %v237
                %v239 = vld [vmem:[%s169 + $0x110] sm:$0xff]
                %240 = vst [vmem:[%s170 + $0x110] sm:$0xff] %v239
                %v241 = vld [vmem:[%s169 + $0x118] sm:$0xff]
                %242 = vst [vmem:[%s170 + $0x118] sm:$0xff] %v241
                %v243 = vld [vmem:[%s169 + $0x120] sm:$0xff]
                %244 = vst [vmem:[%s170 + $0x120] sm:$0xff] %v243
                %v245 = vld [vmem:[%s169 + $0x128] sm:$0xff]
                %246 = vst [vmem:[%s170 + $0x128] sm:$0xff] %v245
                %v247 = vld [vmem:[%s169 + $0x130] sm:$0xff]
                %248 = vst [vmem:[%s170 + $0x130] sm:$0xff] %v247
                %v249 = vld [vmem:[%s169 + $0x138] sm:$0xff]
                %250 = vst [vmem:[%s170 + $0x138] sm:$0xff] %v249
                %v251 = vld [vmem:[%s169 + $0x140] sm:$0xff]
                %252 = vst [vmem:[%s170 + $0x140] sm:$0xff] %v251
                %v253 = vld [vmem:[%s169 + $0x148] sm:$0xff]
                %254 = vst [vmem:[%s170 + $0x148] sm:$0xff] %v253
                %v255 = vld [vmem:[%s169 + $0x1260] sm:$0xff]
                %256 = vst [vmem:[%s170 + $0x150] sm:$0xff] %v255
                %v257 = vld [vmem:[%s169 + $0x1268] sm:$0xff]
                %258 = vst [vmem:[%s170 + $0x158] sm:$0xff] %v257
                %v259 = vld [vmem:[%s169 + $0x1270] sm:$0xff]
                %260 = vst [vmem:[%s170 + $0x160] sm:$0xff] %v259
                %v261 = vld [vmem:[%s169 + $0x1278] sm:$0xff]
                %262 = vst [vmem:[%s170 + $0x168] sm:$0xff] %v261
                %v263 = vld [vmem:[%s169 + $0x1280] sm:$0xff]
                %264 = vst [vmem:[%s170 + $0x170] sm:$0xff] %v263
                %v265 = vld [vmem:[%s169 + $0x1288] sm:$0xff]
                %266 = vst [vmem:[%s170 + $0x178] sm:$0xff] %v265
                %v267 = vld [vmem:[%s169 + $0x1290] sm:$0xff]
                %268 = vst [vmem:[%s170 + $0x180] sm:$0xff] %v267
                %v269 = vld [vmem:[%s169 + $0x1298] sm:$0xff]
                %270 = vst [vmem:[%s170 + $0x188] sm:$0xff] %v269
                %v271 = vld [vmem:[%s169 + $0x12a0] sm:$0xff]
                %272 = vst [vmem:[%s170 + $0x190] sm:$0xff] %v271
                %v273 = vld [vmem:[%s169 + $0x12a8] sm:$0xff]
                %274 = vst [vmem:[%s170 + $0x198] sm:$0xff] %v273
                %v275 = vld [vmem:[%s169 + $0x12b0] sm:$0xff]
                %276 = vst [vmem:[%s170 + $0x1a0] sm:$0xff] %v275
                %v277 = vld [vmem:[%s169 + $0x12b8] sm:$0xff]
                %278 = vst [vmem:[%s170 + $0x1a8] sm:$0xff] %v277
                %v279 = vld [vmem:[%s169 + $0x12c0] sm:$0xff]
                %280 = vst [vmem:[%s170 + $0x1b0] sm:$0xff] %v279
                %v281 = vld [vmem:[%s169 + $0x12c8] sm:$0xff]
                %282 = vst [vmem:[%s170 + $0x1b8] sm:$0xff] %v281
                %v283 = vld [vmem:[%s169 + $0x12d0] sm:$0xff]
                %284 = vst [vmem:[%s170 + $0x1c0] sm:$0xff] %v283
                %v285 = vld [vmem:[%s169 + $0x12d8] sm:$0xff]
                %286 = vst [vmem:[%s170 + $0x1c8] sm:$0xff] %v285
                %v287 = vld [vmem:[%s169 + $0x12e0] sm:$0xff]
                %288 = vst [vmem:[%s170 + $0x1d0] sm:$0xff] %v287
                %v289 = vld [vmem:[%s169 + $0x12e8] sm:$0xff]
                %290 = vst [vmem:[%s170 + $0x1d8] sm:$0xff] %v289
                %v291 = vld [vmem:[%s169 + $0x12f0] sm:$0xff]
                %292 = vst [vmem:[%s170 + $0x1e0] sm:$0xff] %v291
                %v293 = vld [vmem:[%s169 + $0x12f8] sm:$0xff]
                %294 = vst [vmem:[%s170 + $0x1e8] sm:$0xff] %v293
                %v295 = vld [vmem:[%s169 + $0x1300] sm:$0xff]
                %296 = vst [vmem:[%s170 + $0x1f0] sm:$0xff] %v295
                %v297 = vld [vmem:[%s169 + $0x1308] sm:$0xff]
                %298 = vst [vmem:[%s170 + $0x1f8] sm:$0xff] %v297
                %v299 = vld [vmem:[%s169 + $0x1310] sm:$0xff]
                %300 = vst [vmem:[%s170 + $0x200] sm:$0xff] %v299
                %v301 = vld [vmem:[%s169 + $0x1318] sm:$0xff]
                %302 = vst [vmem:[%s170 + $0x208] sm:$0xff] %v301
                %v303 = vld [vmem:[%s169 + $0x1320] sm:$0xff]
                %304 = vst [vmem:[%s170 + $0x210] sm:$0xff] %v303
                %v305 = vld [vmem:[%s169 + $0x1328] sm:$0xff]
                %306 = vst [vmem:[%s170 + $0x218] sm:$0xff] %v305
                %v307 = vld [vmem:[%s169 + $0x1330] sm:$0xff]
                %308 = vst [vmem:[%s170 + $0x220] sm:$0xff] %v307
                %v309 = vld [vmem:[%s169 + $0x1338] sm:$0xff]
                %310 = vst [vmem:[%s170 + $0x228] sm:$0xff] %v309
                %v311 = vld [vmem:[%s169 + $0x1340] sm:$0xff]
                %312 = vst [vmem:[%s170 + $0x230] sm:$0xff] %v311
                %v313 = vld [vmem:[%s169 + $0x1348] sm:$0xff]
                %314 = vst [vmem:[%s170 + $0x238] sm:$0xff] %v313
                %v315 = vld [vmem:[%s169 + $0x1350] sm:$0xff]
                %316 = vst [vmem:[%s170 + $0x240] sm:$0xff] %v315
                %v317 = vld [vmem:[%s169 + $0x1358] sm:$0xff]
                %318 = vst [vmem:[%s170 + $0x248] sm:$0xff] %v317
                %v319 = vld [vmem:[%s169 + $0x1360] sm:$0xff]
                %320 = vst [vmem:[%s170 + $0x250] sm:$0xff] %v319
                %v321 = vld [vmem:[%s169 + $0x1368] sm:$0xff]
                %322 = vst [vmem:[%s170 + $0x258] sm:$0xff] %v321
                %v323 = vld [vmem:[%s169 + $0x1370] sm:$0xff]
                %324 = vst [vmem:[%s170 + $0x260] sm:$0xff] %v323
                %v325 = vld [vmem:[%s169 + $0x1378] sm:$0xff]
                %326 = vst [vmem:[%s170 + $0x268] sm:$0xff] %v325
                %v327 = vld [vmem:[%s169 + $0x1380] sm:$0xff]
                %328 = vst [vmem:[%s170 + $0x270] sm:$0xff] %v327
                %v329 = vld [vmem:[%s169 + $0x1388] sm:$0xff]
                %330 = vst [vmem:[%s170 + $0x278] sm:$0xff] %v329
                %v331 = vld [vmem:[%s169 + $0x1390] sm:$0xff]
                %332 = vst [vmem:[%s170 + $0x280] sm:$0xff] %v331
                %v333 = vld [vmem:[%s169 + $0x1398] sm:$0xff]
                %334 = vst [vmem:[%s170 + $0x288] sm:$0xff] %v333
                %v335 = vld [vmem:[%s169 + $0x13a0] sm:$0xff]
                %336 = vst [vmem:[%s170 + $0x290] sm:$0xff] %v335
                %v337 = vld [vmem:[%s169 + $0x13a8] sm:$0xff]
                %338 = vst [vmem:[%s170 + $0x298] sm:$0xff] %v337
              $region33: #{custom_mlp_forward.2} parent=27 // loop_footer
                %s168 = sadd.s32 1, %s164
              $region34: #{custom_mlp_forward.2} parent=27 // loop_footer_branch
                %163 = sbr.rel target = $region30
              $region35: #{custom_mlp_forward.2} parent=27 // loop_exit
                _
            $region28: #{custom_mlp_forward.2} parent=23 // pred_fallthru
              _
            // Predicated region
            $region36: #{custom_mlp_forward.2} parent=23 // pred_check
              _
            $region37: #{custom_mlp_forward.2} parent=23 // pred_check_branch
              %340 = sbr.rel target = $region39
            $region38: #{custom_mlp_forward.2} parent=23 // pred_region
              _
            $region39: #{custom_mlp_forward.2} parent=23 // pred_fallthru
              _
          $region24: #{custom_mlp_forward.2} parent=19 // pred_fallthru
            _
          %341 = vnop
        $region20: #{custom_mlp_forward.2} parent=15 // pred_fallthru
          _
        // Predicated region
        $region40: #{custom_mlp_forward.2} parent=15 // pred_check
          %p342 = pneg %p72
        $region41: #{custom_mlp_forward.2} parent=15 // pred_check_branch
          %344 = sbr.rel (%p342) target = $region43
        $region42: #{custom_mlp_forward.2} parent=15 // pred_region
          %s345 = sand.u32 %s62, 1
          %s346 = scalar_lea.sflag [#allocation5], %s345
          %s347 = sand.u32 %s62, 1
          %s348 = smul.addr %s347, 10752
          %s349 = scalar_lea.vmem [#allocation4], %s348
          %s350 = smul.u32 32, %s19
          %s351 = smul.u32 84, %s20
          %s353 = ssub.s32 172032, 172032
          %354 = vsyncadd %s346, %s353
          %s355 = smul.addr %s350, 1176
          %s356 = sadd.s32 %s351, %s355
          %s357 = smul.addr %s356, 64
          %s358 = scalar_lea.hbm %s1, %s357
          %s359 = sshll.u32 %s349, 4
          %s360 = int_to_ptr.vmem [resolvable:$true] %s359
          %365 = dma.hbm_to_vmem [thread:$0]  %s358, 172032, %s360, %s346, 75264, 5376, 336
        $region43: #{custom_mlp_forward.2} parent=15 // pred_fallthru
          _
        // Predicated region
        $region44: #{custom_mlp_forward.2} parent=15 // pred_check
          %p366 = pneg %p98
        $region45: #{custom_mlp_forward.2} parent=15 // pred_check_branch
          %368 = sbr.rel (%p366) target = $region47
        $region46: #{custom_mlp_forward.2} parent=15 // pred_region
          %s369 = smul.u32 2, %s19
          %p370 = scmp.lt.s32.totalorder %s369, 3
          %s371 = scalar_select %p370, %s369, 3
          %s372 = scalar_lea.vmem %s2, %s371
          %s373 = smul.u32 2, %s19
        $region47: #{custom_mlp_forward.2} parent=15 // pred_fallthru
          _
      $region16: #{custom_mlp_forward.2} parent=5 // pred_fallthru
        _
      %p374 = scmp.le.s32.totalorder 1, %s12
      %p375 = scmp.lt.s32.totalorder %s12, 29
      %p376 = pnand %p374, %p375
      %p377 = pneg %p376
      // Predicated region
      $region48: #{custom_mlp_forward.2} parent=5 // pred_check
        _
      $region49: #{custom_mlp_forward.2} parent=5 // pred_check_branch
        %379 = sbr.rel (%p376) target = $region51
      $region50: #{custom_mlp_forward.2} parent=5 // pred_region
        %s380 = ssub.s32 %s12, 1
        %s381 = sand.u32 %s37, 1
        %s382 = sand.u32 %s37, 1
        %s383 = smul.addr %s382, 672
        %s384 = scalar_lea.vmem [#allocation3], %s383
        // Predicated region
        $region52: #{custom_mlp_forward.2} parent=50 // pred_check
          %p385 = pneg %p50
        $region53: #{custom_mlp_forward.2} parent=50 // pred_check_branch
          %387 = sbr.rel (%p385) target = $region55
        $region54: #{custom_mlp_forward.2} parent=50 // pred_region
          _
        $region55: #{custom_mlp_forward.2} parent=50 // pred_fallthru
          _
        %s388 = sand.u32 %s65, 1
        %s389 = scalar_lea.sflag [#allocation5], %s388
        %s390 = sand.u32 %s65, 1
        %s391 = smul.addr %s390, 10752
        %s392 = scalar_lea.vmem [#allocation4], %s391
        // Predicated region
        $region56: #{custom_mlp_forward.2} parent=50 // pred_check
          %p393 = pneg %p78
        $region57: #{custom_mlp_forward.2} parent=50 // pred_check_branch
          %395 = sbr.rel (%p393) target = $region59
        $region58: #{custom_mlp_forward.2} parent=50 // pred_region
          %396 = dma.done %s389, 172032
        $region59: #{custom_mlp_forward.2} parent=50 // pred_fallthru
          _
        %s397 = sand.u32 %s37, 1
        %s398 = sand.u32 %s37, 1
        %s399 = smul.addr %s398, 672
        %s400 = scalar_lea.vmem [#allocation3], %s399
        %p401 = pneg %p50
        %p402 = pneg %p47
        %s403 = sand.u32 %s65, 1
        %s404 = scalar_lea.sflag [#allocation5], %s403
        %s405 = sand.u32 %s65, 1
        %s406 = smul.addr %s405, 10752
        %s407 = scalar_lea.vmem [#allocation4], %s406
        %p408 = pneg %p78
        %p409 = pneg %p75
        %s410 = smul.u32 2, %s21
        %p411 = scmp.lt.s32.totalorder %s410, 3
        %s412 = scalar_select %p411, %s410, 3
        %s413 = scalar_lea.vmem %s2, %s412
        %p414 = pneg %p104
        %p415 = pneg %p101
        %p416 = pneg %p130
        %p417 = pneg %p127
        %s418 = sand.u32 %s117, 1
        %s419 = sand.u32 %s117, 1
        %s420 = smul.addr %s419, 32
        %s421 = scalar_lea.vmem [#allocation6], %s420
        %s422 = smul.u32 84, %s22
        %s423 = smul.u32 32, %s21
        %s424 = smul.u32 84, %s22
        %s425 = smul.u32 2, %s21
        %p426 = scmp.lt.s32.totalorder %s425, 3
        %s427 = scalar_select %p426, %s425, 3
        %s428 = scalar_lea.vmem %s2, %s427
        %s429 = smul.u32 2, %s21
        %s430 = smul.u32 2, %s21
        %p431 = scmp.eq.s32.totalorder %s22, 0
        // Predicated region
        $region60: #{custom_mlp_forward.2} parent=50 // pred_check
          %p432 = pneg %p431
        $region61: #{custom_mlp_forward.2} parent=50 // pred_check_branch
          %434 = sbr.rel (%p432) target = $region63
        $region62: #{custom_mlp_forward.2} parent=50 // pred_region
          %435 = vst [vmem:[#allocation2] sm:$0xff] 0.0
          %436 = vst [vmem:[#allocation2 + $0x8] sm:$0xff] 0.0
          %437 = vst [vmem:[#allocation2 + $0x10] sm:$0xff] 0.0
          %438 = vst [vmem:[#allocation2 + $0x18] sm:$0xff] 0.0
        $region63: #{custom_mlp_forward.2} parent=50 // pred_fallthru
          _
        %v439 = vld [vmem:[#allocation2] sm:$0xff]
        %v440 = vld [vmem:[#allocation2 + $0x8] sm:$0xff]
        %v441 = vld [vmem:[#allocation2 + $0x10] sm:$0xff]
        %v442 = vld [vmem:[#allocation2 + $0x18] sm:$0xff]
        %v443 = vld [vmem:[%s384] sm:$0xff]
        %v444 = vld [vmem:[%s384 + $0x8] sm:$0xff]
        %v445 = vld [vmem:[%s384 + $0x10] sm:$0xff]
        %v446 = vld [vmem:[%s384 + $0x18] sm:$0xff]
        %v447 = vld [vmem:[%s384 + $0x20] sm:$0xff]
        %v448 = vld [vmem:[%s384 + $0x28] sm:$0xff]
        %v449 = vld [vmem:[%s384 + $0x30] sm:$0xff]
        %v450 = vld [vmem:[%s384 + $0x38] sm:$0xff]
        %v451 = vld [vmem:[%s384 + $0x40] sm:$0xff]
        %v452 = vld [vmem:[%s384 + $0x48] sm:$0xff]
        %v453 = vld [vmem:[%s384 + $0x50] sm:$0xff]
        %v454 = vld [vmem:[%s384 + $0x58] sm:$0xff]
        %v455 = vld [vmem:[%s384 + $0x60] sm:$0xff]
        %v456 = vld [vmem:[%s384 + $0x68] sm:$0xff]
        %v457 = vld [vmem:[%s384 + $0x70] sm:$0xff]
        %v458 = vld [vmem:[%s384 + $0x78] sm:$0xff]
        %v459 = vld [vmem:[%s384 + $0x80] sm:$0xff]
        %v460 = vld [vmem:[%s384 + $0x88] sm:$0xff]
        %v461 = vld [vmem:[%s384 + $0x90] sm:$0xff]
        %v462 = vld [vmem:[%s384 + $0x98] sm:$0xff]
        %v463 = vld [vmem:[%s384 + $0xa0] sm:$0xff]
        %v464 = vld [vmem:[%s384 + $0xa8] sm:$0xff]
        %v465 = vld [vmem:[%s384 + $0xb0] sm:$0xff]
        %v466 = vld [vmem:[%s384 + $0xb8] sm:$0xff]
        %v467 = vld [vmem:[%s384 + $0xc0] sm:$0xff]
        %v468 = vld [vmem:[%s384 + $0xc8] sm:$0xff]
        %v469 = vld [vmem:[%s384 + $0xd0] sm:$0xff]
        %v470 = vld [vmem:[%s384 + $0xd8] sm:$0xff]
        %v471 = vld [vmem:[%s384 + $0xe0] sm:$0xff]
        %v472 = vld [vmem:[%s384 + $0xe8] sm:$0xff]
        %v473 = vld [vmem:[%s384 + $0xf0] sm:$0xff]
        %v474 = vld [vmem:[%s384 + $0xf8] sm:$0xff]
        %v475 = vld [vmem:[%s384 + $0x100] sm:$0xff]
        %v476 = vld [vmem:[%s384 + $0x108] sm:$0xff]
        %v477 = vld [vmem:[%s384 + $0x110] sm:$0xff]
        %v478 = vld [vmem:[%s384 + $0x118] sm:$0xff]
        %v479 = vld [vmem:[%s384 + $0x120] sm:$0xff]
        %v480 = vld [vmem:[%s384 + $0x128] sm:$0xff]
        %v481 = vld [vmem:[%s384 + $0x130] sm:$0xff]
        %v482 = vld [vmem:[%s384 + $0x138] sm:$0xff]
        %v483 = vld [vmem:[%s384 + $0x140] sm:$0xff]
        %v484 = vld [vmem:[%s384 + $0x148] sm:$0xff]
        %v485 = vld [vmem:[%s384 + $0x150] sm:$0xff]
        %v486 = vld [vmem:[%s384 + $0x158] sm:$0xff]
        %v487 = vld [vmem:[%s384 + $0x160] sm:$0xff]
        %v488 = vld [vmem:[%s384 + $0x168] sm:$0xff]
        %v489 = vld [vmem:[%s384 + $0x170] sm:$0xff]
        %v490 = vld [vmem:[%s384 + $0x178] sm:$0xff]
        %v491 = vld [vmem:[%s384 + $0x180] sm:$0xff]
        %v492 = vld [vmem:[%s384 + $0x188] sm:$0xff]
        %v493 = vld [vmem:[%s384 + $0x190] sm:$0xff]
        %v494 = vld [vmem:[%s384 + $0x198] sm:$0xff]
        %v495 = vld [vmem:[%s384 + $0x1a0] sm:$0xff]
        %v496 = vld [vmem:[%s384 + $0x1a8] sm:$0xff]
        %v497 = vld [vmem:[%s384 + $0x1b0] sm:$0xff]
        %v498 = vld [vmem:[%s384 + $0x1b8] sm:$0xff]
        %v499 = vld [vmem:[%s384 + $0x1c0] sm:$0xff]
        %v500 = vld [vmem:[%s384 + $0x1c8] sm:$0xff]
        %v501 = vld [vmem:[%s384 + $0x1d0] sm:$0xff]
        %v502 = vld [vmem:[%s384 + $0x1d8] sm:$0xff]
        %v503 = vld [vmem:[%s384 + $0x1e0] sm:$0xff]
        %v504 = vld [vmem:[%s384 + $0x1e8] sm:$0xff]
        %v505 = vld [vmem:[%s384 + $0x1f0] sm:$0xff]
        %v506 = vld [vmem:[%s384 + $0x1f8] sm:$0xff]
        %v507 = vld [vmem:[%s384 + $0x200] sm:$0xff]
        %v508 = vld [vmem:[%s384 + $0x208] sm:$0xff]
        %v509 = vld [vmem:[%s384 + $0x210] sm:$0xff]
        %v510 = vld [vmem:[%s384 + $0x218] sm:$0xff]
        %v511 = vld [vmem:[%s384 + $0x220] sm:$0xff]
        %v512 = vld [vmem:[%s384 + $0x228] sm:$0xff]
        %v513 = vld [vmem:[%s384 + $0x230] sm:$0xff]
        %v514 = vld [vmem:[%s384 + $0x238] sm:$0xff]
        %v515 = vld [vmem:[%s384 + $0x240] sm:$0xff]
        %v516 = vld [vmem:[%s384 + $0x248] sm:$0xff]
        %v517 = vld [vmem:[%s384 + $0x250] sm:$0xff]
        %v518 = vld [vmem:[%s384 + $0x258] sm:$0xff]
        %v519 = vld [vmem:[%s384 + $0x260] sm:$0xff]
        %v520 = vld [vmem:[%s384 + $0x268] sm:$0xff]
        %v521 = vld [vmem:[%s384 + $0x270] sm:$0xff]
        %v522 = vld [vmem:[%s384 + $0x278] sm:$0xff]
        %v523 = vld [vmem:[%s384 + $0x280] sm:$0xff]
        %v524 = vld [vmem:[%s384 + $0x288] sm:$0xff]
        %v525 = vld [vmem:[%s384 + $0x290] sm:$0xff]
        %v526 = vld [vmem:[%s384 + $0x298] sm:$0xff]
        %v527 = vld [vmem:[%s392] sm:$0xff]
        %v528 = vld [vmem:[%s392 + $0x8] sm:$0xff]
        %v529 = vld [vmem:[%s392 + $0x10] sm:$0xff]
        %v530 = vld [vmem:[%s392 + $0x18] sm:$0xff]
        %v531 = vld [vmem:[%s392 + $0x20] sm:$0xff]
        %v532 = vld [vmem:[%s392 + $0x28] sm:$0xff]
        %v533 = vld [vmem:[%s392 + $0x30] sm:$0xff]
        %v534 = vld [vmem:[%s392 + $0x38] sm:$0xff]
        %v535 = vld [vmem:[%s392 + $0x40] sm:$0xff]
        %v536 = vld [vmem:[%s392 + $0x48] sm:$0xff]
        %v537 = vld [vmem:[%s392 + $0x50] sm:$0xff]
        %v538 = vld [vmem:[%s392 + $0x58] sm:$0xff]
        %v539 = vld [vmem:[%s392 + $0x60] sm:$0xff]
        %v540 = vld [vmem:[%s392 + $0x68] sm:$0xff]
        %v541 = vld [vmem:[%s392 + $0x70] sm:$0xff]
        %v542 = vld [vmem:[%s392 + $0x78] sm:$0xff]
        %v543 = vld [vmem:[%s392 + $0x80] sm:$0xff]
        %v544 = vld [vmem:[%s392 + $0x88] sm:$0xff]
        %v545 = vld [vmem:[%s392 + $0x90] sm:$0xff]
        %v546 = vld [vmem:[%s392 + $0x98] sm:$0xff]
        %v547 = vld [vmem:[%s392 + $0xa0] sm:$0xff]
        %v548 = vld [vmem:[%s392 + $0xa8] sm:$0xff]
        %v549 = vld [vmem:[%s392 + $0xb0] sm:$0xff]
        %v550 = vld [vmem:[%s392 + $0xb8] sm:$0xff]
        %v551 = vld [vmem:[%s392 + $0xc0] sm:$0xff]
        %v552 = vld [vmem:[%s392 + $0xc8] sm:$0xff]
        %v553 = vld [vmem:[%s392 + $0xd0] sm:$0xff]
        %v554 = vld [vmem:[%s392 + $0xd8] sm:$0xff]
        %v555 = vld [vmem:[%s392 + $0xe0] sm:$0xff]
        %v556 = vld [vmem:[%s392 + $0xe8] sm:$0xff]
        %v557 = vld [vmem:[%s392 + $0xf0] sm:$0xff]
        %v558 = vld [vmem:[%s392 + $0xf8] sm:$0xff]
        %v559 = vld [vmem:[%s392 + $0x100] sm:$0xff]
        %v560 = vld [vmem:[%s392 + $0x108] sm:$0xff]
        %v561 = vld [vmem:[%s392 + $0x110] sm:$0xff]
        %v562 = vld [vmem:[%s392 + $0x118] sm:$0xff]
        %v563 = vld [vmem:[%s392 + $0x120] sm:$0xff]
        %v564 = vld [vmem:[%s392 + $0x128] sm:$0xff]
        %v565 = vld [vmem:[%s392 + $0x130] sm:$0xff]
        %v566 = vld [vmem:[%s392 + $0x138] sm:$0xff]
        %v567 = vld [vmem:[%s392 + $0x140] sm:$0xff]
        %v568 = vld [vmem:[%s392 + $0x148] sm:$0xff]
        %v569 = vld [vmem:[%s392 + $0x150] sm:$0xff]
        %v570 = vld [vmem:[%s392 + $0x158] sm:$0xff]
        %v571 = vld [vmem:[%s392 + $0x160] sm:$0xff]
        %v572 = vld [vmem:[%s392 + $0x168] sm:$0xff]
        %v573 = vld [vmem:[%s392 + $0x170] sm:$0xff]
        %v574 = vld [vmem:[%s392 + $0x178] sm:$0xff]
        %v575 = vld [vmem:[%s392 + $0x180] sm:$0xff]
        %v576 = vld [vmem:[%s392 + $0x188] sm:$0xff]
        %v577 = vld [vmem:[%s392 + $0x190] sm:$0xff]
        %v578 = vld [vmem:[%s392 + $0x198] sm:$0xff]
        %v579 = vld [vmem:[%s392 + $0x1a0] sm:$0xff]
        %v580 = vld [vmem:[%s392 + $0x1a8] sm:$0xff]
        %v581 = vld [vmem:[%s392 + $0x1b0] sm:$0xff]
        %v582 = vld [vmem:[%s392 + $0x1b8] sm:$0xff]
        %v583 = vld [vmem:[%s392 + $0x1c0] sm:$0xff]
        %v584 = vld [vmem:[%s392 + $0x1c8] sm:$0xff]
        %v585 = vld [vmem:[%s392 + $0x1d0] sm:$0xff]
        %v586 = vld [vmem:[%s392 + $0x1d8] sm:$0xff]
        %v587 = vld [vmem:[%s392 + $0x1e0] sm:$0xff]
        %v588 = vld [vmem:[%s392 + $0x1e8] sm:$0xff]
        %v589 = vld [vmem:[%s392 + $0x1f0] sm:$0xff]
        %v590 = vld [vmem:[%s392 + $0x1f8] sm:$0xff]
        %v591 = vld [vmem:[%s392 + $0x200] sm:$0xff]
        %v592 = vld [vmem:[%s392 + $0x208] sm:$0xff]
        %v593 = vld [vmem:[%s392 + $0x210] sm:$0xff]
        %v594 = vld [vmem:[%s392 + $0x218] sm:$0xff]
        %v595 = vld [vmem:[%s392 + $0x220] sm:$0xff]
        %v596 = vld [vmem:[%s392 + $0x228] sm:$0xff]
        %v597 = vld [vmem:[%s392 + $0x230] sm:$0xff]
        %v598 = vld [vmem:[%s392 + $0x238] sm:$0xff]
        %v599 = vld [vmem:[%s392 + $0x240] sm:$0xff]
        %v600 = vld [vmem:[%s392 + $0x248] sm:$0xff]
        %v601 = vld [vmem:[%s392 + $0x250] sm:$0xff]
        %v602 = vld [vmem:[%s392 + $0x258] sm:$0xff]
        %v603 = vld [vmem:[%s392 + $0x260] sm:$0xff]
        %v604 = vld [vmem:[%s392 + $0x268] sm:$0xff]
        %v605 = vld [vmem:[%s392 + $0x270] sm:$0xff]
        %v606 = vld [vmem:[%s392 + $0x278] sm:$0xff]
        %v607 = vld [vmem:[%s392 + $0x280] sm:$0xff]
        %v608 = vld [vmem:[%s392 + $0x288] sm:$0xff]
        %v609 = vld [vmem:[%s392 + $0x290] sm:$0xff]
        %v610 = vld [vmem:[%s392 + $0x298] sm:$0xff]
        %v611 = vld [vmem:[%s392 + $0x2a0] sm:$0xff]
        %v612 = vld [vmem:[%s392 + $0x2a8] sm:$0xff]
        %v613 = vld [vmem:[%s392 + $0x2b0] sm:$0xff]
        %v614 = vld [vmem:[%s392 + $0x2b8] sm:$0xff]
        %v615 = vld [vmem:[%s392 + $0x2c0] sm:$0xff]
        %v616 = vld [vmem:[%s392 + $0x2c8] sm:$0xff]
        %v617 = vld [vmem:[%s392 + $0x2d0] sm:$0xff]
        %v618 = vld [vmem:[%s392 + $0x2d8] sm:$0xff]
        %v619 = vld [vmem:[%s392 + $0x2e0] sm:$0xff]
        %v620 = vld [vmem:[%s392 + $0x2e8] sm:$0xff]
        %v621 = vld [vmem:[%s392 + $0x2f0] sm:$0xff]
        %v622 = vld [vmem:[%s392 + $0x2f8] sm:$0xff]
        %v623 = vld [vmem:[%s392 + $0x300] sm:$0xff]
        %v624 = vld [vmem:[%s392 + $0x308] sm:$0xff]
        %v625 = vld [vmem:[%s392 + $0x310] sm:$0xff]
        %v626 = vld [vmem:[%s392 + $0x318] sm:$0xff]
        %v627 = vld [vmem:[%s392 + $0x320] sm:$0xff]
        %v628 = vld [vmem:[%s392 + $0x328] sm:$0xff]
        %v629 = vld [vmem:[%s392 + $0x330] sm:$0xff]
        %v630 = vld [vmem:[%s392 + $0x338] sm:$0xff]
        %v631 = vld [vmem:[%s392 + $0x340] sm:$0xff]
        %v632 = vld [vmem:[%s392 + $0x348] sm:$0xff]
        %v633 = vld [vmem:[%s392 + $0x350] sm:$0xff]
        %v634 = vld [vmem:[%s392 + $0x358] sm:$0xff]
        %v635 = vld [vmem:[%s392 + $0x360] sm:$0xff]
        %v636 = vld [vmem:[%s392 + $0x368] sm:$0xff]
        %v637 = vld [vmem:[%s392 + $0x370] sm:$0xff]
        %v638 = vld [vmem:[%s392 + $0x378] sm:$0xff]
        %v639 = vld [vmem:[%s392 + $0x380] sm:$0xff]
        %v640 = vld [vmem:[%s392 + $0x388] sm:$0xff]
        %v641 = vld [vmem:[%s392 + $0x390] sm:$0xff]
        %v642 = vld [vmem:[%s392 + $0x398] sm:$0xff]
        %v643 = vld [vmem:[%s392 + $0x3a0] sm:$0xff]
        %v644 = vld [vmem:[%s392 + $0x3a8] sm:$0xff]
        %v645 = vld [vmem:[%s392 + $0x3b0] sm:$0xff]
        %v646 = vld [vmem:[%s392 + $0x3b8] sm:$0xff]
        %v647 = vld [vmem:[%s392 + $0x3c0] sm:$0xff]
        %v648 = vld [vmem:[%s392 + $0x3c8] sm:$0xff]
        %v649 = vld [vmem:[%s392 + $0x3d0] sm:$0xff]
        %v650 = vld [vmem:[%s392 + $0x3d8] sm:$0xff]
        %v651 = vld [vmem:[%s392 + $0x3e0] sm:$0xff]
        %v652 = vld [vmem:[%s392 + $0x3e8] sm:$0xff]
        %v653 = vld [vmem:[%s392 + $0x3f0] sm:$0xff]
        %v654 = vld [vmem:[%s392 + $0x3f8] sm:$0xff]
        %v655 = vld [vmem:[%s392 + $0x400] sm:$0xff]
        %v656 = vld [vmem:[%s392 + $0x408] sm:$0xff]
        %v657 = vld [vmem:[%s392 + $0x410] sm:$0xff]
        %v658 = vld [vmem:[%s392 + $0x418] sm:$0xff]
        %v659 = vld [vmem:[%s392 + $0x420] sm:$0xff]
        %v660 = vld [vmem:[%s392 + $0x428] sm:$0xff]
        %v661 = vld [vmem:[%s392 + $0x430] sm:$0xff]
        %v662 = vld [vmem:[%s392 + $0x438] sm:$0xff]
        %v663 = vld [vmem:[%s392 + $0x440] sm:$0xff]
        %v664 = vld [vmem:[%s392 + $0x448] sm:$0xff]
        %v665 = vld [vmem:[%s392 + $0x450] sm:$0xff]
        %v666 = vld [vmem:[%s392 + $0x458] sm:$0xff]
        %v667 = vld [vmem:[%s392 + $0x460] sm:$0xff]
        %v668 = vld [vmem:[%s392 + $0x468] sm:$0xff]
        %v669 = vld [vmem:[%s392 + $0x470] sm:$0xff]
        %v670 = vld [vmem:[%s392 + $0x478] sm:$0xff]
        %v671 = vld [vmem:[%s392 + $0x480] sm:$0xff]
        %v672 = vld [vmem:[%s392 + $0x488] sm:$0xff]
        %v673 = vld [vmem:[%s392 + $0x490] sm:$0xff]
        %v674 = vld [vmem:[%s392 + $0x498] sm:$0xff]
        %v675 = vld [vmem:[%s392 + $0x4a0] sm:$0xff]
        %v676 = vld [vmem:[%s392 + $0x4a8] sm:$0xff]
        %v677 = vld [vmem:[%s392 + $0x4b0] sm:$0xff]
        %v678 = vld [vmem:[%s392 + $0x4b8] sm:$0xff]
        %v679 = vld [vmem:[%s392 + $0x4c0] sm:$0xff]
        %v680 = vld [vmem:[%s392 + $0x4c8] sm:$0xff]
        %v681 = vld [vmem:[%s392 + $0x4d0] sm:$0xff]
        %v682 = vld [vmem:[%s392 + $0x4d8] sm:$0xff]
        %v683 = vld [vmem:[%s392 + $0x4e0] sm:$0xff]
        %v684 = vld [vmem:[%s392 + $0x4e8] sm:$0xff]
        %v685 = vld [vmem:[%s392 + $0x4f0] sm:$0xff]
        %v686 = vld [vmem:[%s392 + $0x4f8] sm:$0xff]
        %v687 = vld [vmem:[%s392 + $0x500] sm:$0xff]
        %v688 = vld [vmem:[%s392 + $0x508] sm:$0xff]
        %v689 = vld [vmem:[%s392 + $0x510] sm:$0xff]
        %v690 = vld [vmem:[%s392 + $0x518] sm:$0xff]
        %v691 = vld [vmem:[%s392 + $0x520] sm:$0xff]
        %v692 = vld [vmem:[%s392 + $0x528] sm:$0xff]
        %v693 = vld [vmem:[%s392 + $0x530] sm:$0xff]
        %v694 = vld [vmem:[%s392 + $0x538] sm:$0xff]
        %v695 = vld [vmem:[%s392 + $0x540] sm:$0xff]
        %v696 = vld [vmem:[%s392 + $0x548] sm:$0xff]
        %v697 = vld [vmem:[%s392 + $0x550] sm:$0xff]
        %v698 = vld [vmem:[%s392 + $0x558] sm:$0xff]
        %v699 = vld [vmem:[%s392 + $0x560] sm:$0xff]
        %v700 = vld [vmem:[%s392 + $0x568] sm:$0xff]
        %v701 = vld [vmem:[%s392 + $0x570] sm:$0xff]
        %v702 = vld [vmem:[%s392 + $0x578] sm:$0xff]
        %v703 = vld [vmem:[%s392 + $0x580] sm:$0xff]
        %v704 = vld [vmem:[%s392 + $0x588] sm:$0xff]
        %v705 = vld [vmem:[%s392 + $0x590] sm:$0xff]
        %v706 = vld [vmem:[%s392 + $0x598] sm:$0xff]
        %v707 = vld [vmem:[%s392 + $0x5a0] sm:$0xff]
        %v708 = vld [vmem:[%s392 + $0x5a8] sm:$0xff]
        %v709 = vld [vmem:[%s392 + $0x5b0] sm:$0xff]
        %v710 = vld [vmem:[%s392 + $0x5b8] sm:$0xff]
        %v711 = vld [vmem:[%s392 + $0x5c0] sm:$0xff]
        %v712 = vld [vmem:[%s392 + $0x5c8] sm:$0xff]
        %v713 = vld [vmem:[%s392 + $0x5d0] sm:$0xff]
        %v714 = vld [vmem:[%s392 + $0x5d8] sm:$0xff]
        %v715 = vld [vmem:[%s392 + $0x5e0] sm:$0xff]
        %v716 = vld [vmem:[%s392 + $0x5e8] sm:$0xff]
        %v717 = vld [vmem:[%s392 + $0x5f0] sm:$0xff]
        %v718 = vld [vmem:[%s392 + $0x5f8] sm:$0xff]
        %v719 = vld [vmem:[%s392 + $0x600] sm:$0xff]
        %v720 = vld [vmem:[%s392 + $0x608] sm:$0xff]
        %v721 = vld [vmem:[%s392 + $0x610] sm:$0xff]
        %v722 = vld [vmem:[%s392 + $0x618] sm:$0xff]
        %v723 = vld [vmem:[%s392 + $0x620] sm:$0xff]
        %v724 = vld [vmem:[%s392 + $0x628] sm:$0xff]
        %v725 = vld [vmem:[%s392 + $0x630] sm:$0xff]
        %v726 = vld [vmem:[%s392 + $0x638] sm:$0xff]
        %v727 = vld [vmem:[%s392 + $0x640] sm:$0xff]
        %v728 = vld [vmem:[%s392 + $0x648] sm:$0xff]
        %v729 = vld [vmem:[%s392 + $0x650] sm:$0xff]
        %v730 = vld [vmem:[%s392 + $0x658] sm:$0xff]
        %v731 = vld [vmem:[%s392 + $0x660] sm:$0xff]
        %v732 = vld [vmem:[%s392 + $0x668] sm:$0xff]
        %v733 = vld [vmem:[%s392 + $0x670] sm:$0xff]
        %v734 = vld [vmem:[%s392 + $0x678] sm:$0xff]
        %v735 = vld [vmem:[%s392 + $0x680] sm:$0xff]
        %v736 = vld [vmem:[%s392 + $0x688] sm:$0xff]
        %v737 = vld [vmem:[%s392 + $0x690] sm:$0xff]
        %v738 = vld [vmem:[%s392 + $0x698] sm:$0xff]
        %v739 = vld [vmem:[%s392 + $0x6a0] sm:$0xff]
        %v740 = vld [vmem:[%s392 + $0x6a8] sm:$0xff]
        %v741 = vld [vmem:[%s392 + $0x6b0] sm:$0xff]
        %v742 = vld [vmem:[%s392 + $0x6b8] sm:$0xff]
        %v743 = vld [vmem:[%s392 + $0x6c0] sm:$0xff]
        %v744 = vld [vmem:[%s392 + $0x6c8] sm:$0xff]
        %v745 = vld [vmem:[%s392 + $0x6d0] sm:$0xff]
        %v746 = vld [vmem:[%s392 + $0x6d8] sm:$0xff]
        %v747 = vld [vmem:[%s392 + $0x6e0] sm:$0xff]
        %v748 = vld [vmem:[%s392 + $0x6e8] sm:$0xff]
        %v749 = vld [vmem:[%s392 + $0x6f0] sm:$0xff]
        %v750 = vld [vmem:[%s392 + $0x6f8] sm:$0xff]
        %v751 = vld [vmem:[%s392 + $0x700] sm:$0xff]
        %v752 = vld [vmem:[%s392 + $0x708] sm:$0xff]
        %v753 = vld [vmem:[%s392 + $0x710] sm:$0xff]
        %v754 = vld [vmem:[%s392 + $0x718] sm:$0xff]
        %v755 = vld [vmem:[%s392 + $0x720] sm:$0xff]
        %v756 = vld [vmem:[%s392 + $0x728] sm:$0xff]
        %v757 = vld [vmem:[%s392 + $0x730] sm:$0xff]
        %v758 = vld [vmem:[%s392 + $0x738] sm:$0xff]
        %v759 = vld [vmem:[%s392 + $0x740] sm:$0xff]
        %v760 = vld [vmem:[%s392 + $0x748] sm:$0xff]
        %v761 = vld [vmem:[%s392 + $0x750] sm:$0xff]
        %v762 = vld [vmem:[%s392 + $0x758] sm:$0xff]
        %v763 = vld [vmem:[%s392 + $0x760] sm:$0xff]
        %v764 = vld [vmem:[%s392 + $0x768] sm:$0xff]
        %v765 = vld [vmem:[%s392 + $0x770] sm:$0xff]
        %v766 = vld [vmem:[%s392 + $0x778] sm:$0xff]
        %v767 = vld [vmem:[%s392 + $0x780] sm:$0xff]
        %v768 = vld [vmem:[%s392 + $0x788] sm:$0xff]
        %v769 = vld [vmem:[%s392 + $0x790] sm:$0xff]
        %v770 = vld [vmem:[%s392 + $0x798] sm:$0xff]
        %v771 = vld [vmem:[%s392 + $0x7a0] sm:$0xff]
        %v772 = vld [vmem:[%s392 + $0x7a8] sm:$0xff]
        %v773 = vld [vmem:[%s392 + $0x7b0] sm:$0xff]
        %v774 = vld [vmem:[%s392 + $0x7b8] sm:$0xff]
        %v775 = vld [vmem:[%s392 + $0x7c0] sm:$0xff]
        %v776 = vld [vmem:[%s392 + $0x7c8] sm:$0xff]
        %v777 = vld [vmem:[%s392 + $0x7d0] sm:$0xff]
        %v778 = vld [vmem:[%s392 + $0x7d8] sm:$0xff]
        %v779 = vld [vmem:[%s392 + $0x7e0] sm:$0xff]
        %v780 = vld [vmem:[%s392 + $0x7e8] sm:$0xff]
        %v781 = vld [vmem:[%s392 + $0x7f0] sm:$0xff]
        %v782 = vld [vmem:[%s392 + $0x7f8] sm:$0xff]
        %v783 = vld [vmem:[%s392 + $0x800] sm:$0xff]
        %v784 = vld [vmem:[%s392 + $0x808] sm:$0xff]
        %v785 = vld [vmem:[%s392 + $0x810] sm:$0xff]
        %v786 = vld [vmem:[%s392 + $0x818] sm:$0xff]
        %v787 = vld [vmem:[%s392 + $0x820] sm:$0xff]
        %v788 = vld [vmem:[%s392 + $0x828] sm:$0xff]
        %v789 = vld [vmem:[%s392 + $0x830] sm:$0xff]
        %v790 = vld [vmem:[%s392 + $0x838] sm:$0xff]
        %v791 = vld [vmem:[%s392 + $0x840] sm:$0xff]
        %v792 = vld [vmem:[%s392 + $0x848] sm:$0xff]
        %v793 = vld [vmem:[%s392 + $0x850] sm:$0xff]
        %v794 = vld [vmem:[%s392 + $0x858] sm:$0xff]
        %v795 = vld [vmem:[%s392 + $0x860] sm:$0xff]
        %v796 = vld [vmem:[%s392 + $0x868] sm:$0xff]
        %v797 = vld [vmem:[%s392 + $0x870] sm:$0xff]
        %v798 = vld [vmem:[%s392 + $0x878] sm:$0xff]
        %v799 = vld [vmem:[%s392 + $0x880] sm:$0xff]
        %v800 = vld [vmem:[%s392 + $0x888] sm:$0xff]
        %v801 = vld [vmem:[%s392 + $0x890] sm:$0xff]
        %v802 = vld [vmem:[%s392 + $0x898] sm:$0xff]
        %v803 = vld [vmem:[%s392 + $0x8a0] sm:$0xff]
        %v804 = vld [vmem:[%s392 + $0x8a8] sm:$0xff]
        %v805 = vld [vmem:[%s392 + $0x8b0] sm:$0xff]
        %v806 = vld [vmem:[%s392 + $0x8b8] sm:$0xff]
        %v807 = vld [vmem:[%s392 + $0x8c0] sm:$0xff]
        %v808 = vld [vmem:[%s392 + $0x8c8] sm:$0xff]
        %v809 = vld [vmem:[%s392 + $0x8d0] sm:$0xff]
        %v810 = vld [vmem:[%s392 + $0x8d8] sm:$0xff]
        %v811 = vld [vmem:[%s392 + $0x8e0] sm:$0xff]
        %v812 = vld [vmem:[%s392 + $0x8e8] sm:$0xff]
        %v813 = vld [vmem:[%s392 + $0x8f0] sm:$0xff]
        %v814 = vld [vmem:[%s392 + $0x8f8] sm:$0xff]
        %v815 = vld [vmem:[%s392 + $0x900] sm:$0xff]
        %v816 = vld [vmem:[%s392 + $0x908] sm:$0xff]
        %v817 = vld [vmem:[%s392 + $0x910] sm:$0xff]
        %v818 = vld [vmem:[%s392 + $0x918] sm:$0xff]
        %v819 = vld [vmem:[%s392 + $0x920] sm:$0xff]
        %v820 = vld [vmem:[%s392 + $0x928] sm:$0xff]
        %v821 = vld [vmem:[%s392 + $0x930] sm:$0xff]
        %v822 = vld [vmem:[%s392 + $0x938] sm:$0xff]
        %v823 = vld [vmem:[%s392 + $0x940] sm:$0xff]
        %v824 = vld [vmem:[%s392 + $0x948] sm:$0xff]
        %v825 = vld [vmem:[%s392 + $0x950] sm:$0xff]
        %v826 = vld [vmem:[%s392 + $0x958] sm:$0xff]
        %v827 = vld [vmem:[%s392 + $0x960] sm:$0xff]
        %v828 = vld [vmem:[%s392 + $0x968] sm:$0xff]
        %v829 = vld [vmem:[%s392 + $0x970] sm:$0xff]
        %v830 = vld [vmem:[%s392 + $0x978] sm:$0xff]
        %v831 = vld [vmem:[%s392 + $0x980] sm:$0xff]
        %v832 = vld [vmem:[%s392 + $0x988] sm:$0xff]
        %v833 = vld [vmem:[%s392 + $0x990] sm:$0xff]
        %v834 = vld [vmem:[%s392 + $0x998] sm:$0xff]
        %v835 = vld [vmem:[%s392 + $0x9a0] sm:$0xff]
        %v836 = vld [vmem:[%s392 + $0x9a8] sm:$0xff]
        %v837 = vld [vmem:[%s392 + $0x9b0] sm:$0xff]
        %v838 = vld [vmem:[%s392 + $0x9b8] sm:$0xff]
        %v839 = vld [vmem:[%s392 + $0x9c0] sm:$0xff]
        %v840 = vld [vmem:[%s392 + $0x9c8] sm:$0xff]
        %v841 = vld [vmem:[%s392 + $0x9d0] sm:$0xff]
        %v842 = vld [vmem:[%s392 + $0x9d8] sm:$0xff]
        %v843 = vld [vmem:[%s392 + $0x9e0] sm:$0xff]
        %v844 = vld [vmem:[%s392 + $0x9e8] sm:$0xff]
        %v845 = vld [vmem:[%s392 + $0x9f0] sm:$0xff]
        %v846 = vld [vmem:[%s392 + $0x9f8] sm:$0xff]
        %v847 = vld [vmem:[%s392 + $0xa00] sm:$0xff]
        %v848 = vld [vmem:[%s392 + $0xa08] sm:$0xff]
        %v849 = vld [vmem:[%s392 + $0xa10] sm:$0xff]
        %v850 = vld [vmem:[%s392 + $0xa18] sm:$0xff]
        %v851 = vld [vmem:[%s392 + $0xa20] sm:$0xff]
        %v852 = vld [vmem:[%s392 + $0xa28] sm:$0xff]
        %v853 = vld [vmem:[%s392 + $0xa30] sm:$0xff]
        %v854 = vld [vmem:[%s392 + $0xa38] sm:$0xff]
        %v855 = vld [vmem:[%s392 + $0xa40] sm:$0xff]
        %v856 = vld [vmem:[%s392 + $0xa48] sm:$0xff]
        %v857 = vld [vmem:[%s392 + $0xa50] sm:$0xff]
        %v858 = vld [vmem:[%s392 + $0xa58] sm:$0xff]
        %v859 = vld [vmem:[%s392 + $0xa60] sm:$0xff]
        %v860 = vld [vmem:[%s392 + $0xa68] sm:$0xff]
        %v861 = vld [vmem:[%s392 + $0xa70] sm:$0xff]
        %v862 = vld [vmem:[%s392 + $0xa78] sm:$0xff]
        %v863 = vld [vmem:[%s392 + $0xa80] sm:$0xff]
        %v864 = vld [vmem:[%s392 + $0xa88] sm:$0xff]
        %v865 = vld [vmem:[%s392 + $0xa90] sm:$0xff]
        %v866 = vld [vmem:[%s392 + $0xa98] sm:$0xff]
        %v867 = vld [vmem:[%s392 + $0xaa0] sm:$0xff]
        %v868 = vld [vmem:[%s392 + $0xaa8] sm:$0xff]
        %v869 = vld [vmem:[%s392 + $0xab0] sm:$0xff]
        %v870 = vld [vmem:[%s392 + $0xab8] sm:$0xff]
        %v871 = vld [vmem:[%s392 + $0xac0] sm:$0xff]
        %v872 = vld [vmem:[%s392 + $0xac8] sm:$0xff]
        %v873 = vld [vmem:[%s392 + $0xad0] sm:$0xff]
        %v874 = vld [vmem:[%s392 + $0xad8] sm:$0xff]
        %v875 = vld [vmem:[%s392 + $0xae0] sm:$0xff]
        %v876 = vld [vmem:[%s392 + $0xae8] sm:$0xff]
        %v877 = vld [vmem:[%s392 + $0xaf0] sm:$0xff]
        %v878 = vld [vmem:[%s392 + $0xaf8] sm:$0xff]
        %v879 = vld [vmem:[%s392 + $0xb00] sm:$0xff]
        %v880 = vld [vmem:[%s392 + $0xb08] sm:$0xff]
        %v881 = vld [vmem:[%s392 + $0xb10] sm:$0xff]
        %v882 = vld [vmem:[%s392 + $0xb18] sm:$0xff]
        %v883 = vld [vmem:[%s392 + $0xb20] sm:$0xff]
        %v884 = vld [vmem:[%s392 + $0xb28] sm:$0xff]
        %v885 = vld [vmem:[%s392 + $0xb30] sm:$0xff]
        %v886 = vld [vmem:[%s392 + $0xb38] sm:$0xff]
        %v887 = vld [vmem:[%s392 + $0xb40] sm:$0xff]
        %v888 = vld [vmem:[%s392 + $0xb48] sm:$0xff]
        %v889 = vld [vmem:[%s392 + $0xb50] sm:$0xff]
        %v890 = vld [vmem:[%s392 + $0xb58] sm:$0xff]
        %v891 = vld [vmem:[%s392 + $0xb60] sm:$0xff]
        %v892 = vld [vmem:[%s392 + $0xb68] sm:$0xff]
        %v893 = vld [vmem:[%s392 + $0xb70] sm:$0xff]
        %v894 = vld [vmem:[%s392 + $0xb78] sm:$0xff]
        %v895 = vld [vmem:[%s392 + $0xb80] sm:$0xff]
        %v896 = vld [vmem:[%s392 + $0xb88] sm:$0xff]
        %v897 = vld [vmem:[%s392 + $0xb90] sm:$0xff]
        %v898 = vld [vmem:[%s392 + $0xb98] sm:$0xff]
        %v899 = vld [vmem:[%s392 + $0xba0] sm:$0xff]
        %v900 = vld [vmem:[%s392 + $0xba8] sm:$0xff]
        %v901 = vld [vmem:[%s392 + $0xbb0] sm:$0xff]
        %v902 = vld [vmem:[%s392 + $0xbb8] sm:$0xff]
        %v903 = vld [vmem:[%s392 + $0xbc0] sm:$0xff]
        %v904 = vld [vmem:[%s392 + $0xbc8] sm:$0xff]
        %v905 = vld [vmem:[%s392 + $0xbd0] sm:$0xff]
        %v906 = vld [vmem:[%s392 + $0xbd8] sm:$0xff]
        %v907 = vld [vmem:[%s392 + $0xbe0] sm:$0xff]
        %v908 = vld [vmem:[%s392 + $0xbe8] sm:$0xff]
        %v909 = vld [vmem:[%s392 + $0xbf0] sm:$0xff]
        %v910 = vld [vmem:[%s392 + $0xbf8] sm:$0xff]
        %v911 = vld [vmem:[%s392 + $0xc00] sm:$0xff]
        %v912 = vld [vmem:[%s392 + $0xc08] sm:$0xff]
        %v913 = vld [vmem:[%s392 + $0xc10] sm:$0xff]
        %v914 = vld [vmem:[%s392 + $0xc18] sm:$0xff]
        %v915 = vld [vmem:[%s392 + $0xc20] sm:$0xff]
        %v916 = vld [vmem:[%s392 + $0xc28] sm:$0xff]
        %v917 = vld [vmem:[%s392 + $0xc30] sm:$0xff]
        %v918 = vld [vmem:[%s392 + $0xc38] sm:$0xff]
        %v919 = vld [vmem:[%s392 + $0xc40] sm:$0xff]
        %v920 = vld [vmem:[%s392 + $0xc48] sm:$0xff]
        %v921 = vld [vmem:[%s392 + $0xc50] sm:$0xff]
        %v922 = vld [vmem:[%s392 + $0xc58] sm:$0xff]
        %v923 = vld [vmem:[%s392 + $0xc60] sm:$0xff]
        %v924 = vld [vmem:[%s392 + $0xc68] sm:$0xff]
        %v925 = vld [vmem:[%s392 + $0xc70] sm:$0xff]
        %v926 = vld [vmem:[%s392 + $0xc78] sm:$0xff]
        %v927 = vld [vmem:[%s392 + $0xc80] sm:$0xff]
        %v928 = vld [vmem:[%s392 + $0xc88] sm:$0xff]
        %v929 = vld [vmem:[%s392 + $0xc90] sm:$0xff]
        %v930 = vld [vmem:[%s392 + $0xc98] sm:$0xff]
        %v931 = vld [vmem:[%s392 + $0xca0] sm:$0xff]
        %v932 = vld [vmem:[%s392 + $0xca8] sm:$0xff]
        %v933 = vld [vmem:[%s392 + $0xcb0] sm:$0xff]
        %v934 = vld [vmem:[%s392 + $0xcb8] sm:$0xff]
        %v935 = vld [vmem:[%s392 + $0xcc0] sm:$0xff]
        %v936 = vld [vmem:[%s392 + $0xcc8] sm:$0xff]
        %v937 = vld [vmem:[%s392 + $0xcd0] sm:$0xff]
        %v938 = vld [vmem:[%s392 + $0xcd8] sm:$0xff]
        %v939 = vld [vmem:[%s392 + $0xce0] sm:$0xff]
        %v940 = vld [vmem:[%s392 + $0xce8] sm:$0xff]
        %v941 = vld [vmem:[%s392 + $0xcf0] sm:$0xff]
        %v942 = vld [vmem:[%s392 + $0xcf8] sm:$0xff]
        %v943 = vld [vmem:[%s392 + $0xd00] sm:$0xff]
        %v944 = vld [vmem:[%s392 + $0xd08] sm:$0xff]
        %v945 = vld [vmem:[%s392 + $0xd10] sm:$0xff]
        %v946 = vld [vmem:[%s392 + $0xd18] sm:$0xff]
        %v947 = vld [vmem:[%s392 + $0xd20] sm:$0xff]
        %v948 = vld [vmem:[%s392 + $0xd28] sm:$0xff]
        %v949 = vld [vmem:[%s392 + $0xd30] sm:$0xff]
        %v950 = vld [vmem:[%s392 + $0xd38] sm:$0xff]
        %v951 = vld [vmem:[%s392 + $0xd40] sm:$0xff]
        %v952 = vld [vmem:[%s392 + $0xd48] sm:$0xff]
        %v953 = vld [vmem:[%s392 + $0xd50] sm:$0xff]
        %v954 = vld [vmem:[%s392 + $0xd58] sm:$0xff]
        %v955 = vld [vmem:[%s392 + $0xd60] sm:$0xff]
        %v956 = vld [vmem:[%s392 + $0xd68] sm:$0xff]
        %v957 = vld [vmem:[%s392 + $0xd70] sm:$0xff]
        %v958 = vld [vmem:[%s392 + $0xd78] sm:$0xff]
        %v959 = vld [vmem:[%s392 + $0xd80] sm:$0xff]
        %v960 = vld [vmem:[%s392 + $0xd88] sm:$0xff]
        %v961 = vld [vmem:[%s392 + $0xd90] sm:$0xff]
        %v962 = vld [vmem:[%s392 + $0xd98] sm:$0xff]
        %v963 = vld [vmem:[%s392 + $0xda0] sm:$0xff]
        %v964 = vld [vmem:[%s392 + $0xda8] sm:$0xff]
        %v965 = vld [vmem:[%s392 + $0xdb0] sm:$0xff]
        %v966 = vld [vmem:[%s392 + $0xdb8] sm:$0xff]
        %v967 = vld [vmem:[%s392 + $0xdc0] sm:$0xff]
        %v968 = vld [vmem:[%s392 + $0xdc8] sm:$0xff]
        %v969 = vld [vmem:[%s392 + $0xdd0] sm:$0xff]
        %v970 = vld [vmem:[%s392 + $0xdd8] sm:$0xff]
        %v971 = vld [vmem:[%s392 + $0xde0] sm:$0xff]
        %v972 = vld [vmem:[%s392 + $0xde8] sm:$0xff]
        %v973 = vld [vmem:[%s392 + $0xdf0] sm:$0xff]
        %v974 = vld [vmem:[%s392 + $0xdf8] sm:$0xff]
        %v975 = vld [vmem:[%s392 + $0xe00] sm:$0xff]
        %v976 = vld [vmem:[%s392 + $0xe08] sm:$0xff]
        %v977 = vld [vmem:[%s392 + $0xe10] sm:$0xff]
        %v978 = vld [vmem:[%s392 + $0xe18] sm:$0xff]
        %v979 = vld [vmem:[%s392 + $0xe20] sm:$0xff]
        %v980 = vld [vmem:[%s392 + $0xe28] sm:$0xff]
        %v981 = vld [vmem:[%s392 + $0xe30] sm:$0xff]
        %v982 = vld [vmem:[%s392 + $0xe38] sm:$0xff]
        %v983 = vld [vmem:[%s392 + $0xe40] sm:$0xff]
        %v984 = vld [vmem:[%s392 + $0xe48] sm:$0xff]
        %v985 = vld [vmem:[%s392 + $0xe50] sm:$0xff]
        %v986 = vld [vmem:[%s392 + $0xe58] sm:$0xff]
        %v987 = vld [vmem:[%s392 + $0xe60] sm:$0xff]
        %v988 = vld [vmem:[%s392 + $0xe68] sm:$0xff]
        %v989 = vld [vmem:[%s392 + $0xe70] sm:$0xff]
        %v990 = vld [vmem:[%s392 + $0xe78] sm:$0xff]
        %v991 = vld [vmem:[%s392 + $0xe80] sm:$0xff]
        %v992 = vld [vmem:[%s392 + $0xe88] sm:$0xff]
        %v993 = vld [vmem:[%s392 + $0xe90] sm:$0xff]
        %v994 = vld [vmem:[%s392 + $0xe98] sm:$0xff]
        %v995 = vld [vmem:[%s392 + $0xea0] sm:$0xff]
        %v996 = vld [vmem:[%s392 + $0xea8] sm:$0xff]
        %v997 = vld [vmem:[%s392 + $0xeb0] sm:$0xff]
        %v998 = vld [vmem:[%s392 + $0xeb8] sm:$0xff]
        %v999 = vld [vmem:[%s392 + $0xec0] sm:$0xff]
        %v1000 = vld [vmem:[%s392 + $0xec8] sm:$0xff]
        %v1001 = vld [vmem:[%s392 + $0xed0] sm:$0xff]
        %v1002 = vld [vmem:[%s392 + $0xed8] sm:$0xff]
        %v1003 = vld [vmem:[%s392 + $0xee0] sm:$0xff]
        %v1004 = vld [vmem:[%s392 + $0xee8] sm:$0xff]
        %v1005 = vld [vmem:[%s392 + $0xef0] sm:$0xff]
        %v1006 = vld [vmem:[%s392 + $0xef8] sm:$0xff]
        %v1007 = vld [vmem:[%s392 + $0xf00] sm:$0xff]
        %v1008 = vld [vmem:[%s392 + $0xf08] sm:$0xff]
        %v1009 = vld [vmem:[%s392 + $0xf10] sm:$0xff]
        %v1010 = vld [vmem:[%s392 + $0xf18] sm:$0xff]
        %v1011 = vld [vmem:[%s392 + $0xf20] sm:$0xff]
        %v1012 = vld [vmem:[%s392 + $0xf28] sm:$0xff]
        %v1013 = vld [vmem:[%s392 + $0xf30] sm:$0xff]
        %v1014 = vld [vmem:[%s392 + $0xf38] sm:$0xff]
        %v1015 = vld [vmem:[%s392 + $0xf40] sm:$0xff]
        %v1016 = vld [vmem:[%s392 + $0xf48] sm:$0xff]
        %v1017 = vld [vmem:[%s392 + $0xf50] sm:$0xff]
        %v1018 = vld [vmem:[%s392 + $0xf58] sm:$0xff]
        %v1019 = vld [vmem:[%s392 + $0xf60] sm:$0xff]
        %v1020 = vld [vmem:[%s392 + $0xf68] sm:$0xff]
        %v1021 = vld [vmem:[%s392 + $0xf70] sm:$0xff]
        %v1022 = vld [vmem:[%s392 + $0xf78] sm:$0xff]
        %v1023 = vld [vmem:[%s392 + $0xf80] sm:$0xff]
        %v1024 = vld [vmem:[%s392 + $0xf88] sm:$0xff]
        %v1025 = vld [vmem:[%s392 + $0xf90] sm:$0xff]
        %v1026 = vld [vmem:[%s392 + $0xf98] sm:$0xff]
        %v1027 = vld [vmem:[%s392 + $0xfa0] sm:$0xff]
        %v1028 = vld [vmem:[%s392 + $0xfa8] sm:$0xff]
        %v1029 = vld [vmem:[%s392 + $0xfb0] sm:$0xff]
        %v1030 = vld [vmem:[%s392 + $0xfb8] sm:$0xff]
        %v1031 = vld [vmem:[%s392 + $0xfc0] sm:$0xff]
        %v1032 = vld [vmem:[%s392 + $0xfc8] sm:$0xff]
        %v1033 = vld [vmem:[%s392 + $0xfd0] sm:$0xff]
        %v1034 = vld [vmem:[%s392 + $0xfd8] sm:$0xff]
        %v1035 = vld [vmem:[%s392 + $0xfe0] sm:$0xff]
        %v1036 = vld [vmem:[%s392 + $0xfe8] sm:$0xff]
        %v1037 = vld [vmem:[%s392 + $0xff0] sm:$0xff]
        %v1038 = vld [vmem:[%s392 + $0xff8] sm:$0xff]
        %v1039 = vld [vmem:[%s392 + $0x1000] sm:$0xff]
        %v1040 = vld [vmem:[%s392 + $0x1008] sm:$0xff]
        %v1041 = vld [vmem:[%s392 + $0x1010] sm:$0xff]
        %v1042 = vld [vmem:[%s392 + $0x1018] sm:$0xff]
        %v1043 = vld [vmem:[%s392 + $0x1020] sm:$0xff]
        %v1044 = vld [vmem:[%s392 + $0x1028] sm:$0xff]
        %v1045 = vld [vmem:[%s392 + $0x1030] sm:$0xff]
        %v1046 = vld [vmem:[%s392 + $0x1038] sm:$0xff]
        %v1047 = vld [vmem:[%s392 + $0x1040] sm:$0xff]
        %v1048 = vld [vmem:[%s392 + $0x1048] sm:$0xff]
        %v1049 = vld [vmem:[%s392 + $0x1050] sm:$0xff]
        %v1050 = vld [vmem:[%s392 + $0x1058] sm:$0xff]
        %v1051 = vld [vmem:[%s392 + $0x1060] sm:$0xff]
        %v1052 = vld [vmem:[%s392 + $0x1068] sm:$0xff]
        %v1053 = vld [vmem:[%s392 + $0x1070] sm:$0xff]
        %v1054 = vld [vmem:[%s392 + $0x1078] sm:$0xff]
        %v1055 = vld [vmem:[%s392 + $0x1080] sm:$0xff]
        %v1056 = vld [vmem:[%s392 + $0x1088] sm:$0xff]
        %v1057 = vld [vmem:[%s392 + $0x1090] sm:$0xff]
        %v1058 = vld [vmem:[%s392 + $0x1098] sm:$0xff]
        %v1059 = vld [vmem:[%s392 + $0x10a0] sm:$0xff]
        %v1060 = vld [vmem:[%s392 + $0x10a8] sm:$0xff]
        %v1061 = vld [vmem:[%s392 + $0x10b0] sm:$0xff]
        %v1062 = vld [vmem:[%s392 + $0x10b8] sm:$0xff]
        %v1063 = vld [vmem:[%s392 + $0x10c0] sm:$0xff]
        %v1064 = vld [vmem:[%s392 + $0x10c8] sm:$0xff]
        %v1065 = vld [vmem:[%s392 + $0x10d0] sm:$0xff]
        %v1066 = vld [vmem:[%s392 + $0x10d8] sm:$0xff]
        %v1067 = vld [vmem:[%s392 + $0x10e0] sm:$0xff]
        %v1068 = vld [vmem:[%s392 + $0x10e8] sm:$0xff]
        %v1069 = vld [vmem:[%s392 + $0x10f0] sm:$0xff]
        %v1070 = vld [vmem:[%s392 + $0x10f8] sm:$0xff]
        %v1071 = vld [vmem:[%s392 + $0x1100] sm:$0xff]
        %v1072 = vld [vmem:[%s392 + $0x1108] sm:$0xff]
        %v1073 = vld [vmem:[%s392 + $0x1110] sm:$0xff]
        %v1074 = vld [vmem:[%s392 + $0x1118] sm:$0xff]
        %v1075 = vld [vmem:[%s392 + $0x1120] sm:$0xff]
        %v1076 = vld [vmem:[%s392 + $0x1128] sm:$0xff]
        %v1077 = vld [vmem:[%s392 + $0x1130] sm:$0xff]
        %v1078 = vld [vmem:[%s392 + $0x1138] sm:$0xff]
        %v1079 = vld [vmem:[%s392 + $0x1140] sm:$0xff]
        %v1080 = vld [vmem:[%s392 + $0x1148] sm:$0xff]
        %v1081 = vld [vmem:[%s392 + $0x1150] sm:$0xff]
        %v1082 = vld [vmem:[%s392 + $0x1158] sm:$0xff]
        %v1083 = vld [vmem:[%s392 + $0x1160] sm:$0xff]
        %v1084 = vld [vmem:[%s392 + $0x1168] sm:$0xff]
        %v1085 = vld [vmem:[%s392 + $0x1170] sm:$0xff]
        %v1086 = vld [vmem:[%s392 + $0x1178] sm:$0xff]
        %v1087 = vld [vmem:[%s392 + $0x1180] sm:$0xff]
        %v1088 = vld [vmem:[%s392 + $0x1188] sm:$0xff]
        %v1089 = vld [vmem:[%s392 + $0x1190] sm:$0xff]
        %v1090 = vld [vmem:[%s392 + $0x1198] sm:$0xff]
        %v1091 = vld [vmem:[%s392 + $0x11a0] sm:$0xff]
        %v1092 = vld [vmem:[%s392 + $0x11a8] sm:$0xff]
        %v1093 = vld [vmem:[%s392 + $0x11b0] sm:$0xff]
        %v1094 = vld [vmem:[%s392 + $0x11b8] sm:$0xff]
        %v1095 = vld [vmem:[%s392 + $0x11c0] sm:$0xff]
        %v1096 = vld [vmem:[%s392 + $0x11c8] sm:$0xff]
        %v1097 = vld [vmem:[%s392 + $0x11d0] sm:$0xff]
        %v1098 = vld [vmem:[%s392 + $0x11d8] sm:$0xff]
        %v1099 = vld [vmem:[%s392 + $0x11e0] sm:$0xff]
        %v1100 = vld [vmem:[%s392 + $0x11e8] sm:$0xff]
        %v1101 = vld [vmem:[%s392 + $0x11f0] sm:$0xff]
        %v1102 = vld [vmem:[%s392 + $0x11f8] sm:$0xff]
        %v1103 = vld [vmem:[%s392 + $0x1200] sm:$0xff]
        %v1104 = vld [vmem:[%s392 + $0x1208] sm:$0xff]
        %v1105 = vld [vmem:[%s392 + $0x1210] sm:$0xff]
        %v1106 = vld [vmem:[%s392 + $0x1218] sm:$0xff]
        %v1107 = vld [vmem:[%s392 + $0x1220] sm:$0xff]
        %v1108 = vld [vmem:[%s392 + $0x1228] sm:$0xff]
        %v1109 = vld [vmem:[%s392 + $0x1230] sm:$0xff]
        %v1110 = vld [vmem:[%s392 + $0x1238] sm:$0xff]
        %v1111 = vld [vmem:[%s392 + $0x1240] sm:$0xff]
        %v1112 = vld [vmem:[%s392 + $0x1248] sm:$0xff]
        %v1113 = vld [vmem:[%s392 + $0x1250] sm:$0xff]
        %v1114 = vld [vmem:[%s392 + $0x1258] sm:$0xff]
        %v1115 = vld [vmem:[%s392 + $0x1260] sm:$0xff]
        %v1116 = vld [vmem:[%s392 + $0x1268] sm:$0xff]
        %v1117 = vld [vmem:[%s392 + $0x1270] sm:$0xff]
        %v1118 = vld [vmem:[%s392 + $0x1278] sm:$0xff]
        %v1119 = vld [vmem:[%s392 + $0x1280] sm:$0xff]
        %v1120 = vld [vmem:[%s392 + $0x1288] sm:$0xff]
        %v1121 = vld [vmem:[%s392 + $0x1290] sm:$0xff]
        %v1122 = vld [vmem:[%s392 + $0x1298] sm:$0xff]
        %v1123 = vld [vmem:[%s392 + $0x12a0] sm:$0xff]
        %v1124 = vld [vmem:[%s392 + $0x12a8] sm:$0xff]
        %v1125 = vld [vmem:[%s392 + $0x12b0] sm:$0xff]
        %v1126 = vld [vmem:[%s392 + $0x12b8] sm:$0xff]
        %v1127 = vld [vmem:[%s392 + $0x12c0] sm:$0xff]
        %v1128 = vld [vmem:[%s392 + $0x12c8] sm:$0xff]
        %v1129 = vld [vmem:[%s392 + $0x12d0] sm:$0xff]
        %v1130 = vld [vmem:[%s392 + $0x12d8] sm:$0xff]
        %v1131 = vld [vmem:[%s392 + $0x12e0] sm:$0xff]
        %v1132 = vld [vmem:[%s392 + $0x12e8] sm:$0xff]
        %v1133 = vld [vmem:[%s392 + $0x12f0] sm:$0xff]
        %v1134 = vld [vmem:[%s392 + $0x12f8] sm:$0xff]
        %v1135 = vld [vmem:[%s392 + $0x1300] sm:$0xff]
        %v1136 = vld [vmem:[%s392 + $0x1308] sm:$0xff]
        %v1137 = vld [vmem:[%s392 + $0x1310] sm:$0xff]
        %v1138 = vld [vmem:[%s392 + $0x1318] sm:$0xff]
        %v1139 = vld [vmem:[%s392 + $0x1320] sm:$0xff]
        %v1140 = vld [vmem:[%s392 + $0x1328] sm:$0xff]
        %v1141 = vld [vmem:[%s392 + $0x1330] sm:$0xff]
        %v1142 = vld [vmem:[%s392 + $0x1338] sm:$0xff]
        %v1143 = vld [vmem:[%s392 + $0x1340] sm:$0xff]
        %v1144 = vld [vmem:[%s392 + $0x1348] sm:$0xff]
        %v1145 = vld [vmem:[%s392 + $0x1350] sm:$0xff]
        %v1146 = vld [vmem:[%s392 + $0x1358] sm:$0xff]
        %v1147 = vld [vmem:[%s392 + $0x1360] sm:$0xff]
        %v1148 = vld [vmem:[%s392 + $0x1368] sm:$0xff]
        %v1149 = vld [vmem:[%s392 + $0x1370] sm:$0xff]
        %v1150 = vld [vmem:[%s392 + $0x1378] sm:$0xff]
        %v1151 = vld [vmem:[%s392 + $0x1380] sm:$0xff]
        %v1152 = vld [vmem:[%s392 + $0x1388] sm:$0xff]
        %v1153 = vld [vmem:[%s392 + $0x1390] sm:$0xff]
        %v1154 = vld [vmem:[%s392 + $0x1398] sm:$0xff]
        %v1155 = vld [vmem:[%s392 + $0x13a0] sm:$0xff]
        %v1156 = vld [vmem:[%s392 + $0x13a8] sm:$0xff]
        %v1157 = vld [vmem:[%s392 + $0x13b0] sm:$0xff]
        %v1158 = vld [vmem:[%s392 + $0x13b8] sm:$0xff]
        %v1159 = vld [vmem:[%s392 + $0x13c0] sm:$0xff]
        %v1160 = vld [vmem:[%s392 + $0x13c8] sm:$0xff]
        %v1161 = vld [vmem:[%s392 + $0x13d0] sm:$0xff]
        %v1162 = vld [vmem:[%s392 + $0x13d8] sm:$0xff]
        %v1163 = vld [vmem:[%s392 + $0x13e0] sm:$0xff]
        %v1164 = vld [vmem:[%s392 + $0x13e8] sm:$0xff]
        %v1165 = vld [vmem:[%s392 + $0x13f0] sm:$0xff]
        %v1166 = vld [vmem:[%s392 + $0x13f8] sm:$0xff]
        %v1167 = vld [vmem:[%s392 + $0x1400] sm:$0xff]
        %v1168 = vld [vmem:[%s392 + $0x1408] sm:$0xff]
        %v1169 = vld [vmem:[%s392 + $0x1410] sm:$0xff]
        %v1170 = vld [vmem:[%s392 + $0x1418] sm:$0xff]
        %v1171 = vld [vmem:[%s392 + $0x1420] sm:$0xff]
        %v1172 = vld [vmem:[%s392 + $0x1428] sm:$0xff]
        %v1173 = vld [vmem:[%s392 + $0x1430] sm:$0xff]
        %v1174 = vld [vmem:[%s392 + $0x1438] sm:$0xff]
        %v1175 = vld [vmem:[%s392 + $0x1440] sm:$0xff]
        %v1176 = vld [vmem:[%s392 + $0x1448] sm:$0xff]
        %v1177 = vld [vmem:[%s392 + $0x1450] sm:$0xff]
        %v1178 = vld [vmem:[%s392 + $0x1458] sm:$0xff]
        %v1179 = vld [vmem:[%s392 + $0x1460] sm:$0xff]
        %v1180 = vld [vmem:[%s392 + $0x1468] sm:$0xff]
        %v1181 = vld [vmem:[%s392 + $0x1470] sm:$0xff]
        %v1182 = vld [vmem:[%s392 + $0x1478] sm:$0xff]
        %v1183 = vld [vmem:[%s392 + $0x1480] sm:$0xff]
        %v1184 = vld [vmem:[%s392 + $0x1488] sm:$0xff]
        %v1185 = vld [vmem:[%s392 + $0x1490] sm:$0xff]
        %v1186 = vld [vmem:[%s392 + $0x1498] sm:$0xff]
        %v1187 = vld [vmem:[%s392 + $0x14a0] sm:$0xff]
        %v1188 = vld [vmem:[%s392 + $0x14a8] sm:$0xff]
        %v1189 = vld [vmem:[%s392 + $0x14b0] sm:$0xff]
        %v1190 = vld [vmem:[%s392 + $0x14b8] sm:$0xff]
        %v1191 = vld [vmem:[%s392 + $0x14c0] sm:$0xff]
        %v1192 = vld [vmem:[%s392 + $0x14c8] sm:$0xff]
        %v1193 = vld [vmem:[%s392 + $0x14d0] sm:$0xff]
        %v1194 = vld [vmem:[%s392 + $0x14d8] sm:$0xff]
        %v1195 = vld [vmem:[%s392 + $0x14e0] sm:$0xff]
        %v1196 = vld [vmem:[%s392 + $0x14e8] sm:$0xff]
        %v1197 = vld [vmem:[%s392 + $0x14f0] sm:$0xff]
        %v1198 = vld [vmem:[%s392 + $0x14f8] sm:$0xff]
        %v1199 = vld [vmem:[%s392 + $0x1500] sm:$0xff]
        %v1200 = vld [vmem:[%s392 + $0x1508] sm:$0xff]
        %v1201 = vld [vmem:[%s392 + $0x1510] sm:$0xff]
        %v1202 = vld [vmem:[%s392 + $0x1518] sm:$0xff]
        %v1203 = vld [vmem:[%s392 + $0x1520] sm:$0xff]
        %v1204 = vld [vmem:[%s392 + $0x1528] sm:$0xff]
        %v1205 = vld [vmem:[%s392 + $0x1530] sm:$0xff]
        %v1206 = vld [vmem:[%s392 + $0x1538] sm:$0xff]
        %v1207 = vld [vmem:[%s392 + $0x1540] sm:$0xff]
        %v1208 = vld [vmem:[%s392 + $0x1548] sm:$0xff]
        %v1209 = vld [vmem:[%s392 + $0x1550] sm:$0xff]
        %v1210 = vld [vmem:[%s392 + $0x1558] sm:$0xff]
        %v1211 = vld [vmem:[%s392 + $0x1560] sm:$0xff]
        %v1212 = vld [vmem:[%s392 + $0x1568] sm:$0xff]
        %v1213 = vld [vmem:[%s392 + $0x1570] sm:$0xff]
        %v1214 = vld [vmem:[%s392 + $0x1578] sm:$0xff]
        %v1215 = vld [vmem:[%s392 + $0x1580] sm:$0xff]
        %v1216 = vld [vmem:[%s392 + $0x1588] sm:$0xff]
        %v1217 = vld [vmem:[%s392 + $0x1590] sm:$0xff]
        %v1218 = vld [vmem:[%s392 + $0x1598] sm:$0xff]
        %v1219 = vld [vmem:[%s392 + $0x15a0] sm:$0xff]
        %v1220 = vld [vmem:[%s392 + $0x15a8] sm:$0xff]
        %v1221 = vld [vmem:[%s392 + $0x15b0] sm:$0xff]
        %v1222 = vld [vmem:[%s392 + $0x15b8] sm:$0xff]
        %v1223 = vld [vmem:[%s392 + $0x15c0] sm:$0xff]
        %v1224 = vld [vmem:[%s392 + $0x15c8] sm:$0xff]
        %v1225 = vld [vmem:[%s392 + $0x15d0] sm:$0xff]
        %v1226 = vld [vmem:[%s392 + $0x15d8] sm:$0xff]
        %v1227 = vld [vmem:[%s392 + $0x15e0] sm:$0xff]
        %v1228 = vld [vmem:[%s392 + $0x15e8] sm:$0xff]
        %v1229 = vld [vmem:[%s392 + $0x15f0] sm:$0xff]
        %v1230 = vld [vmem:[%s392 + $0x15f8] sm:$0xff]
        %v1231 = vld [vmem:[%s392 + $0x1600] sm:$0xff]
        %v1232 = vld [vmem:[%s392 + $0x1608] sm:$0xff]
        %v1233 = vld [vmem:[%s392 + $0x1610] sm:$0xff]
        %v1234 = vld [vmem:[%s392 + $0x1618] sm:$0xff]
        %v1235 = vld [vmem:[%s392 + $0x1620] sm:$0xff]
        %v1236 = vld [vmem:[%s392 + $0x1628] sm:$0xff]
        %v1237 = vld [vmem:[%s392 + $0x1630] sm:$0xff]
        %v1238 = vld [vmem:[%s392 + $0x1638] sm:$0xff]
        %v1239 = vld [vmem:[%s392 + $0x1640] sm:$0xff]
        %v1240 = vld [vmem:[%s392 + $0x1648] sm:$0xff]
        %v1241 = vld [vmem:[%s392 + $0x1650] sm:$0xff]
        %v1242 = vld [vmem:[%s392 + $0x1658] sm:$0xff]
        %v1243 = vld [vmem:[%s392 + $0x1660] sm:$0xff]
        %v1244 = vld [vmem:[%s392 + $0x1668] sm:$0xff]
        %v1245 = vld [vmem:[%s392 + $0x1670] sm:$0xff]
        %v1246 = vld [vmem:[%s392 + $0x1678] sm:$0xff]
        %v1247 = vld [vmem:[%s392 + $0x1680] sm:$0xff]
        %v1248 = vld [vmem:[%s392 + $0x1688] sm:$0xff]
        %v1249 = vld [vmem:[%s392 + $0x1690] sm:$0xff]
        %v1250 = vld [vmem:[%s392 + $0x1698] sm:$0xff]
        %v1251 = vld [vmem:[%s392 + $0x16a0] sm:$0xff]
        %v1252 = vld [vmem:[%s392 + $0x16a8] sm:$0xff]
        %v1253 = vld [vmem:[%s392 + $0x16b0] sm:$0xff]
        %v1254 = vld [vmem:[%s392 + $0x16b8] sm:$0xff]
        %v1255 = vld [vmem:[%s392 + $0x16c0] sm:$0xff]
        %v1256 = vld [vmem:[%s392 + $0x16c8] sm:$0xff]
        %v1257 = vld [vmem:[%s392 + $0x16d0] sm:$0xff]
        %v1258 = vld [vmem:[%s392 + $0x16d8] sm:$0xff]
        %v1259 = vld [vmem:[%s392 + $0x16e0] sm:$0xff]
        %v1260 = vld [vmem:[%s392 + $0x16e8] sm:$0xff]
        %v1261 = vld [vmem:[%s392 + $0x16f0] sm:$0xff]
        %v1262 = vld [vmem:[%s392 + $0x16f8] sm:$0xff]
        %v1263 = vld [vmem:[%s392 + $0x1700] sm:$0xff]
        %v1264 = vld [vmem:[%s392 + $0x1708] sm:$0xff]
        %v1265 = vld [vmem:[%s392 + $0x1710] sm:$0xff]
        %v1266 = vld [vmem:[%s392 + $0x1718] sm:$0xff]
        %v1267 = vld [vmem:[%s392 + $0x1720] sm:$0xff]
        %v1268 = vld [vmem:[%s392 + $0x1728] sm:$0xff]
        %v1269 = vld [vmem:[%s392 + $0x1730] sm:$0xff]
        %v1270 = vld [vmem:[%s392 + $0x1738] sm:$0xff]
        %v1271 = vld [vmem:[%s392 + $0x1740] sm:$0xff]
        %v1272 = vld [vmem:[%s392 + $0x1748] sm:$0xff]
        %v1273 = vld [vmem:[%s392 + $0x1750] sm:$0xff]
        %v1274 = vld [vmem:[%s392 + $0x1758] sm:$0xff]
        %v1275 = vld [vmem:[%s392 + $0x1760] sm:$0xff]
        %v1276 = vld [vmem:[%s392 + $0x1768] sm:$0xff]
        %v1277 = vld [vmem:[%s392 + $0x1770] sm:$0xff]
        %v1278 = vld [vmem:[%s392 + $0x1778] sm:$0xff]
        %v1279 = vld [vmem:[%s392 + $0x1780] sm:$0xff]
        %v1280 = vld [vmem:[%s392 + $0x1788] sm:$0xff]
        %v1281 = vld [vmem:[%s392 + $0x1790] sm:$0xff]
        %v1282 = vld [vmem:[%s392 + $0x1798] sm:$0xff]
        %v1283 = vld [vmem:[%s392 + $0x17a0] sm:$0xff]
        %v1284 = vld [vmem:[%s392 + $0x17a8] sm:$0xff]
        %v1285 = vld [vmem:[%s392 + $0x17b0] sm:$0xff]
        %v1286 = vld [vmem:[%s392 + $0x17b8] sm:$0xff]
        %v1287 = vld [vmem:[%s392 + $0x17c0] sm:$0xff]
        %v1288 = vld [vmem:[%s392 + $0x17c8] sm:$0xff]
        %v1289 = vld [vmem:[%s392 + $0x17d0] sm:$0xff]
        %v1290 = vld [vmem:[%s392 + $0x17d8] sm:$0xff]
        %v1291 = vld [vmem:[%s392 + $0x17e0] sm:$0xff]
        %v1292 = vld [vmem:[%s392 + $0x17e8] sm:$0xff]
        %v1293 = vld [vmem:[%s392 + $0x17f0] sm:$0xff]
        %v1294 = vld [vmem:[%s392 + $0x17f8] sm:$0xff]
        %v1295 = vld [vmem:[%s392 + $0x1800] sm:$0xff]
        %v1296 = vld [vmem:[%s392 + $0x1808] sm:$0xff]
        %v1297 = vld [vmem:[%s392 + $0x1810] sm:$0xff]
        %v1298 = vld [vmem:[%s392 + $0x1818] sm:$0xff]
        %v1299 = vld [vmem:[%s392 + $0x1820] sm:$0xff]
        %v1300 = vld [vmem:[%s392 + $0x1828] sm:$0xff]
        %v1301 = vld [vmem:[%s392 + $0x1830] sm:$0xff]
        %v1302 = vld [vmem:[%s392 + $0x1838] sm:$0xff]
        %v1303 = vld [vmem:[%s392 + $0x1840] sm:$0xff]
        %v1304 = vld [vmem:[%s392 + $0x1848] sm:$0xff]
        %v1305 = vld [vmem:[%s392 + $0x1850] sm:$0xff]
        %v1306 = vld [vmem:[%s392 + $0x1858] sm:$0xff]
        %v1307 = vld [vmem:[%s392 + $0x1860] sm:$0xff]
        %v1308 = vld [vmem:[%s392 + $0x1868] sm:$0xff]
        %v1309 = vld [vmem:[%s392 + $0x1870] sm:$0xff]
        %v1310 = vld [vmem:[%s392 + $0x1878] sm:$0xff]
        %v1311 = vld [vmem:[%s392 + $0x1880] sm:$0xff]
        %v1312 = vld [vmem:[%s392 + $0x1888] sm:$0xff]
        %v1313 = vld [vmem:[%s392 + $0x1890] sm:$0xff]
        %v1314 = vld [vmem:[%s392 + $0x1898] sm:$0xff]
        %v1315 = vld [vmem:[%s392 + $0x18a0] sm:$0xff]
        %v1316 = vld [vmem:[%s392 + $0x18a8] sm:$0xff]
        %v1317 = vld [vmem:[%s392 + $0x18b0] sm:$0xff]
        %v1318 = vld [vmem:[%s392 + $0x18b8] sm:$0xff]
        %v1319 = vld [vmem:[%s392 + $0x18c0] sm:$0xff]
        %v1320 = vld [vmem:[%s392 + $0x18c8] sm:$0xff]
        %v1321 = vld [vmem:[%s392 + $0x18d0] sm:$0xff]
        %v1322 = vld [vmem:[%s392 + $0x18d8] sm:$0xff]
        %v1323 = vld [vmem:[%s392 + $0x18e0] sm:$0xff]
        %v1324 = vld [vmem:[%s392 + $0x18e8] sm:$0xff]
        %v1325 = vld [vmem:[%s392 + $0x18f0] sm:$0xff]
        %v1326 = vld [vmem:[%s392 + $0x18f8] sm:$0xff]
        %v1327 = vld [vmem:[%s392 + $0x1900] sm:$0xff]
        %v1328 = vld [vmem:[%s392 + $0x1908] sm:$0xff]
        %v1329 = vld [vmem:[%s392 + $0x1910] sm:$0xff]
        %v1330 = vld [vmem:[%s392 + $0x1918] sm:$0xff]
        %v1331 = vld [vmem:[%s392 + $0x1920] sm:$0xff]
        %v1332 = vld [vmem:[%s392 + $0x1928] sm:$0xff]
        %v1333 = vld [vmem:[%s392 + $0x1930] sm:$0xff]
        %v1334 = vld [vmem:[%s392 + $0x1938] sm:$0xff]
        %v1335 = vld [vmem:[%s392 + $0x1940] sm:$0xff]
        %v1336 = vld [vmem:[%s392 + $0x1948] sm:$0xff]
        %v1337 = vld [vmem:[%s392 + $0x1950] sm:$0xff]
        %v1338 = vld [vmem:[%s392 + $0x1958] sm:$0xff]
        %v1339 = vld [vmem:[%s392 + $0x1960] sm:$0xff]
        %v1340 = vld [vmem:[%s392 + $0x1968] sm:$0xff]
        %v1341 = vld [vmem:[%s392 + $0x1970] sm:$0xff]
        %v1342 = vld [vmem:[%s392 + $0x1978] sm:$0xff]
        %v1343 = vld [vmem:[%s392 + $0x1980] sm:$0xff]
        %v1344 = vld [vmem:[%s392 + $0x1988] sm:$0xff]
        %v1345 = vld [vmem:[%s392 + $0x1990] sm:$0xff]
        %v1346 = vld [vmem:[%s392 + $0x1998] sm:$0xff]
        %v1347 = vld [vmem:[%s392 + $0x19a0] sm:$0xff]
        %v1348 = vld [vmem:[%s392 + $0x19a8] sm:$0xff]
        %v1349 = vld [vmem:[%s392 + $0x19b0] sm:$0xff]
        %v1350 = vld [vmem:[%s392 + $0x19b8] sm:$0xff]
        %v1351 = vld [vmem:[%s392 + $0x19c0] sm:$0xff]
        %v1352 = vld [vmem:[%s392 + $0x19c8] sm:$0xff]
        %v1353 = vld [vmem:[%s392 + $0x19d0] sm:$0xff]
        %v1354 = vld [vmem:[%s392 + $0x19d8] sm:$0xff]
        %v1355 = vld [vmem:[%s392 + $0x19e0] sm:$0xff]
        %v1356 = vld [vmem:[%s392 + $0x19e8] sm:$0xff]
        %v1357 = vld [vmem:[%s392 + $0x19f0] sm:$0xff]
        %v1358 = vld [vmem:[%s392 + $0x19f8] sm:$0xff]
        %v1359 = vld [vmem:[%s392 + $0x1a00] sm:$0xff]
        %v1360 = vld [vmem:[%s392 + $0x1a08] sm:$0xff]
        %v1361 = vld [vmem:[%s392 + $0x1a10] sm:$0xff]
        %v1362 = vld [vmem:[%s392 + $0x1a18] sm:$0xff]
        %v1363 = vld [vmem:[%s392 + $0x1a20] sm:$0xff]
        %v1364 = vld [vmem:[%s392 + $0x1a28] sm:$0xff]
        %v1365 = vld [vmem:[%s392 + $0x1a30] sm:$0xff]
        %v1366 = vld [vmem:[%s392 + $0x1a38] sm:$0xff]
        %v1367 = vld [vmem:[%s392 + $0x1a40] sm:$0xff]
        %v1368 = vld [vmem:[%s392 + $0x1a48] sm:$0xff]
        %v1369 = vld [vmem:[%s392 + $0x1a50] sm:$0xff]
        %v1370 = vld [vmem:[%s392 + $0x1a58] sm:$0xff]
        %v1371 = vld [vmem:[%s392 + $0x1a60] sm:$0xff]
        %v1372 = vld [vmem:[%s392 + $0x1a68] sm:$0xff]
        %v1373 = vld [vmem:[%s392 + $0x1a70] sm:$0xff]
        %v1374 = vld [vmem:[%s392 + $0x1a78] sm:$0xff]
        %v1375 = vld [vmem:[%s392 + $0x1a80] sm:$0xff]
        %v1376 = vld [vmem:[%s392 + $0x1a88] sm:$0xff]
        %v1377 = vld [vmem:[%s392 + $0x1a90] sm:$0xff]
        %v1378 = vld [vmem:[%s392 + $0x1a98] sm:$0xff]
        %v1379 = vld [vmem:[%s392 + $0x1aa0] sm:$0xff]
        %v1380 = vld [vmem:[%s392 + $0x1aa8] sm:$0xff]
        %v1381 = vld [vmem:[%s392 + $0x1ab0] sm:$0xff]
        %v1382 = vld [vmem:[%s392 + $0x1ab8] sm:$0xff]
        %v1383 = vld [vmem:[%s392 + $0x1ac0] sm:$0xff]
        %v1384 = vld [vmem:[%s392 + $0x1ac8] sm:$0xff]
        %v1385 = vld [vmem:[%s392 + $0x1ad0] sm:$0xff]
        %v1386 = vld [vmem:[%s392 + $0x1ad8] sm:$0xff]
        %v1387 = vld [vmem:[%s392 + $0x1ae0] sm:$0xff]
        %v1388 = vld [vmem:[%s392 + $0x1ae8] sm:$0xff]
        %v1389 = vld [vmem:[%s392 + $0x1af0] sm:$0xff]
        %v1390 = vld [vmem:[%s392 + $0x1af8] sm:$0xff]
        %v1391 = vld [vmem:[%s392 + $0x1b00] sm:$0xff]
        %v1392 = vld [vmem:[%s392 + $0x1b08] sm:$0xff]
        %v1393 = vld [vmem:[%s392 + $0x1b10] sm:$0xff]
        %v1394 = vld [vmem:[%s392 + $0x1b18] sm:$0xff]
        %v1395 = vld [vmem:[%s392 + $0x1b20] sm:$0xff]
        %v1396 = vld [vmem:[%s392 + $0x1b28] sm:$0xff]
        %v1397 = vld [vmem:[%s392 + $0x1b30] sm:$0xff]
        %v1398 = vld [vmem:[%s392 + $0x1b38] sm:$0xff]
        %v1399 = vld [vmem:[%s392 + $0x1b40] sm:$0xff]
        %v1400 = vld [vmem:[%s392 + $0x1b48] sm:$0xff]
        %v1401 = vld [vmem:[%s392 + $0x1b50] sm:$0xff]
        %v1402 = vld [vmem:[%s392 + $0x1b58] sm:$0xff]
        %v1403 = vld [vmem:[%s392 + $0x1b60] sm:$0xff]
        %v1404 = vld [vmem:[%s392 + $0x1b68] sm:$0xff]
        %v1405 = vld [vmem:[%s392 + $0x1b70] sm:$0xff]
        %v1406 = vld [vmem:[%s392 + $0x1b78] sm:$0xff]
        %v1407 = vld [vmem:[%s392 + $0x1b80] sm:$0xff]
        %v1408 = vld [vmem:[%s392 + $0x1b88] sm:$0xff]
        %v1409 = vld [vmem:[%s392 + $0x1b90] sm:$0xff]
        %v1410 = vld [vmem:[%s392 + $0x1b98] sm:$0xff]
        %v1411 = vld [vmem:[%s392 + $0x1ba0] sm:$0xff]
        %v1412 = vld [vmem:[%s392 + $0x1ba8] sm:$0xff]
        %v1413 = vld [vmem:[%s392 + $0x1bb0] sm:$0xff]
        %v1414 = vld [vmem:[%s392 + $0x1bb8] sm:$0xff]
        %v1415 = vld [vmem:[%s392 + $0x1bc0] sm:$0xff]
        %v1416 = vld [vmem:[%s392 + $0x1bc8] sm:$0xff]
        %v1417 = vld [vmem:[%s392 + $0x1bd0] sm:$0xff]
        %v1418 = vld [vmem:[%s392 + $0x1bd8] sm:$0xff]
        %v1419 = vld [vmem:[%s392 + $0x1be0] sm:$0xff]
        %v1420 = vld [vmem:[%s392 + $0x1be8] sm:$0xff]
        %v1421 = vld [vmem:[%s392 + $0x1bf0] sm:$0xff]
        %v1422 = vld [vmem:[%s392 + $0x1bf8] sm:$0xff]
        %v1423 = vld [vmem:[%s392 + $0x1c00] sm:$0xff]
        %v1424 = vld [vmem:[%s392 + $0x1c08] sm:$0xff]
        %v1425 = vld [vmem:[%s392 + $0x1c10] sm:$0xff]
        %v1426 = vld [vmem:[%s392 + $0x1c18] sm:$0xff]
        %v1427 = vld [vmem:[%s392 + $0x1c20] sm:$0xff]
        %v1428 = vld [vmem:[%s392 + $0x1c28] sm:$0xff]
        %v1429 = vld [vmem:[%s392 + $0x1c30] sm:$0xff]
        %v1430 = vld [vmem:[%s392 + $0x1c38] sm:$0xff]
        %v1431 = vld [vmem:[%s392 + $0x1c40] sm:$0xff]
        %v1432 = vld [vmem:[%s392 + $0x1c48] sm:$0xff]
        %v1433 = vld [vmem:[%s392 + $0x1c50] sm:$0xff]
        %v1434 = vld [vmem:[%s392 + $0x1c58] sm:$0xff]
        %v1435 = vld [vmem:[%s392 + $0x1c60] sm:$0xff]
        %v1436 = vld [vmem:[%s392 + $0x1c68] sm:$0xff]
        %v1437 = vld [vmem:[%s392 + $0x1c70] sm:$0xff]
        %v1438 = vld [vmem:[%s392 + $0x1c78] sm:$0xff]
        %v1439 = vld [vmem:[%s392 + $0x1c80] sm:$0xff]
        %v1440 = vld [vmem:[%s392 + $0x1c88] sm:$0xff]
        %v1441 = vld [vmem:[%s392 + $0x1c90] sm:$0xff]
        %v1442 = vld [vmem:[%s392 + $0x1c98] sm:$0xff]
        %v1443 = vld [vmem:[%s392 + $0x1ca0] sm:$0xff]
        %v1444 = vld [vmem:[%s392 + $0x1ca8] sm:$0xff]
        %v1445 = vld [vmem:[%s392 + $0x1cb0] sm:$0xff]
        %v1446 = vld [vmem:[%s392 + $0x1cb8] sm:$0xff]
        %v1447 = vld [vmem:[%s392 + $0x1cc0] sm:$0xff]
        %v1448 = vld [vmem:[%s392 + $0x1cc8] sm:$0xff]
        %v1449 = vld [vmem:[%s392 + $0x1cd0] sm:$0xff]
        %v1450 = vld [vmem:[%s392 + $0x1cd8] sm:$0xff]
        %v1451 = vld [vmem:[%s392 + $0x1ce0] sm:$0xff]
        %v1452 = vld [vmem:[%s392 + $0x1ce8] sm:$0xff]
        %v1453 = vld [vmem:[%s392 + $0x1cf0] sm:$0xff]
        %v1454 = vld [vmem:[%s392 + $0x1cf8] sm:$0xff]
        %v1455 = vld [vmem:[%s392 + $0x1d00] sm:$0xff]
        %v1456 = vld [vmem:[%s392 + $0x1d08] sm:$0xff]
        %v1457 = vld [vmem:[%s392 + $0x1d10] sm:$0xff]
        %v1458 = vld [vmem:[%s392 + $0x1d18] sm:$0xff]
        %v1459 = vld [vmem:[%s392 + $0x1d20] sm:$0xff]
        %v1460 = vld [vmem:[%s392 + $0x1d28] sm:$0xff]
        %v1461 = vld [vmem:[%s392 + $0x1d30] sm:$0xff]
        %v1462 = vld [vmem:[%s392 + $0x1d38] sm:$0xff]
        %v1463 = vld [vmem:[%s392 + $0x1d40] sm:$0xff]
        %v1464 = vld [vmem:[%s392 + $0x1d48] sm:$0xff]
        %v1465 = vld [vmem:[%s392 + $0x1d50] sm:$0xff]
        %v1466 = vld [vmem:[%s392 + $0x1d58] sm:$0xff]
        %v1467 = vld [vmem:[%s392 + $0x1d60] sm:$0xff]
        %v1468 = vld [vmem:[%s392 + $0x1d68] sm:$0xff]
        %v1469 = vld [vmem:[%s392 + $0x1d70] sm:$0xff]
        %v1470 = vld [vmem:[%s392 + $0x1d78] sm:$0xff]
        %v1471 = vld [vmem:[%s392 + $0x1d80] sm:$0xff]
        %v1472 = vld [vmem:[%s392 + $0x1d88] sm:$0xff]
        %v1473 = vld [vmem:[%s392 + $0x1d90] sm:$0xff]
        %v1474 = vld [vmem:[%s392 + $0x1d98] sm:$0xff]
        %v1475 = vld [vmem:[%s392 + $0x1da0] sm:$0xff]
        %v1476 = vld [vmem:[%s392 + $0x1da8] sm:$0xff]
        %v1477 = vld [vmem:[%s392 + $0x1db0] sm:$0xff]
        %v1478 = vld [vmem:[%s392 + $0x1db8] sm:$0xff]
        %v1479 = vld [vmem:[%s392 + $0x1dc0] sm:$0xff]
        %v1480 = vld [vmem:[%s392 + $0x1dc8] sm:$0xff]
        %v1481 = vld [vmem:[%s392 + $0x1dd0] sm:$0xff]
        %v1482 = vld [vmem:[%s392 + $0x1dd8] sm:$0xff]
        %v1483 = vld [vmem:[%s392 + $0x1de0] sm:$0xff]
        %v1484 = vld [vmem:[%s392 + $0x1de8] sm:$0xff]
        %v1485 = vld [vmem:[%s392 + $0x1df0] sm:$0xff]
        %v1486 = vld [vmem:[%s392 + $0x1df8] sm:$0xff]
        %v1487 = vld [vmem:[%s392 + $0x1e00] sm:$0xff]
        %v1488 = vld [vmem:[%s392 + $0x1e08] sm:$0xff]
        %v1489 = vld [vmem:[%s392 + $0x1e10] sm:$0xff]
        %v1490 = vld [vmem:[%s392 + $0x1e18] sm:$0xff]
        %v1491 = vld [vmem:[%s392 + $0x1e20] sm:$0xff]
        %v1492 = vld [vmem:[%s392 + $0x1e28] sm:$0xff]
        %v1493 = vld [vmem:[%s392 + $0x1e30] sm:$0xff]
        %v1494 = vld [vmem:[%s392 + $0x1e38] sm:$0xff]
        %v1495 = vld [vmem:[%s392 + $0x1e40] sm:$0xff]
        %v1496 = vld [vmem:[%s392 + $0x1e48] sm:$0xff]
        %v1497 = vld [vmem:[%s392 + $0x1e50] sm:$0xff]
        %v1498 = vld [vmem:[%s392 + $0x1e58] sm:$0xff]
        %v1499 = vld [vmem:[%s392 + $0x1e60] sm:$0xff]
        %v1500 = vld [vmem:[%s392 + $0x1e68] sm:$0xff]
        %v1501 = vld [vmem:[%s392 + $0x1e70] sm:$0xff]
        %v1502 = vld [vmem:[%s392 + $0x1e78] sm:$0xff]
        %v1503 = vld [vmem:[%s392 + $0x1e80] sm:$0xff]
        %v1504 = vld [vmem:[%s392 + $0x1e88] sm:$0xff]
        %v1505 = vld [vmem:[%s392 + $0x1e90] sm:$0xff]
        %v1506 = vld [vmem:[%s392 + $0x1e98] sm:$0xff]
        %v1507 = vld [vmem:[%s392 + $0x1ea0] sm:$0xff]
        %v1508 = vld [vmem:[%s392 + $0x1ea8] sm:$0xff]
        %v1509 = vld [vmem:[%s392 + $0x1eb0] sm:$0xff]
        %v1510 = vld [vmem:[%s392 + $0x1eb8] sm:$0xff]
        %v1511 = vld [vmem:[%s392 + $0x1ec0] sm:$0xff]
        %v1512 = vld [vmem:[%s392 + $0x1ec8] sm:$0xff]
        %v1513 = vld [vmem:[%s392 + $0x1ed0] sm:$0xff]
        %v1514 = vld [vmem:[%s392 + $0x1ed8] sm:$0xff]
        %v1515 = vld [vmem:[%s392 + $0x1ee0] sm:$0xff]
        %v1516 = vld [vmem:[%s392 + $0x1ee8] sm:$0xff]
        %v1517 = vld [vmem:[%s392 + $0x1ef0] sm:$0xff]
        %v1518 = vld [vmem:[%s392 + $0x1ef8] sm:$0xff]
        %v1519 = vld [vmem:[%s392 + $0x1f00] sm:$0xff]
        %v1520 = vld [vmem:[%s392 + $0x1f08] sm:$0xff]
        %v1521 = vld [vmem:[%s392 + $0x1f10] sm:$0xff]
        %v1522 = vld [vmem:[%s392 + $0x1f18] sm:$0xff]
        %v1523 = vld [vmem:[%s392 + $0x1f20] sm:$0xff]
        %v1524 = vld [vmem:[%s392 + $0x1f28] sm:$0xff]
        %v1525 = vld [vmem:[%s392 + $0x1f30] sm:$0xff]
        %v1526 = vld [vmem:[%s392 + $0x1f38] sm:$0xff]
        %v1527 = vld [vmem:[%s392 + $0x1f40] sm:$0xff]
        %v1528 = vld [vmem:[%s392 + $0x1f48] sm:$0xff]
        %v1529 = vld [vmem:[%s392 + $0x1f50] sm:$0xff]
        %v1530 = vld [vmem:[%s392 + $0x1f58] sm:$0xff]
        %v1531 = vld [vmem:[%s392 + $0x1f60] sm:$0xff]
        %v1532 = vld [vmem:[%s392 + $0x1f68] sm:$0xff]
        %v1533 = vld [vmem:[%s392 + $0x1f70] sm:$0xff]
        %v1534 = vld [vmem:[%s392 + $0x1f78] sm:$0xff]
        %v1535 = vld [vmem:[%s392 + $0x1f80] sm:$0xff]
        %v1536 = vld [vmem:[%s392 + $0x1f88] sm:$0xff]
        %v1537 = vld [vmem:[%s392 + $0x1f90] sm:$0xff]
        %v1538 = vld [vmem:[%s392 + $0x1f98] sm:$0xff]
        %v1539 = vld [vmem:[%s392 + $0x1fa0] sm:$0xff]
        %v1540 = vld [vmem:[%s392 + $0x1fa8] sm:$0xff]
        %v1541 = vld [vmem:[%s392 + $0x1fb0] sm:$0xff]
        %v1542 = vld [vmem:[%s392 + $0x1fb8] sm:$0xff]
        %v1543 = vld [vmem:[%s392 + $0x1fc0] sm:$0xff]
        %v1544 = vld [vmem:[%s392 + $0x1fc8] sm:$0xff]
        %v1545 = vld [vmem:[%s392 + $0x1fd0] sm:$0xff]
        %v1546 = vld [vmem:[%s392 + $0x1fd8] sm:$0xff]
        %v1547 = vld [vmem:[%s392 + $0x1fe0] sm:$0xff]
        %v1548 = vld [vmem:[%s392 + $0x1fe8] sm:$0xff]
        %v1549 = vld [vmem:[%s392 + $0x1ff0] sm:$0xff]
        %v1550 = vld [vmem:[%s392 + $0x1ff8] sm:$0xff]
        %v1551 = vld [vmem:[%s392 + $0x2000] sm:$0xff]
        %v1552 = vld [vmem:[%s392 + $0x2008] sm:$0xff]
        %v1553 = vld [vmem:[%s392 + $0x2010] sm:$0xff]
        %v1554 = vld [vmem:[%s392 + $0x2018] sm:$0xff]
        %v1555 = vld [vmem:[%s392 + $0x2020] sm:$0xff]
        %v1556 = vld [vmem:[%s392 + $0x2028] sm:$0xff]
        %v1557 = vld [vmem:[%s392 + $0x2030] sm:$0xff]
        %v1558 = vld [vmem:[%s392 + $0x2038] sm:$0xff]
        %v1559 = vld [vmem:[%s392 + $0x2040] sm:$0xff]
        %v1560 = vld [vmem:[%s392 + $0x2048] sm:$0xff]
        %v1561 = vld [vmem:[%s392 + $0x2050] sm:$0xff]
        %v1562 = vld [vmem:[%s392 + $0x2058] sm:$0xff]
        %v1563 = vld [vmem:[%s392 + $0x2060] sm:$0xff]
        %v1564 = vld [vmem:[%s392 + $0x2068] sm:$0xff]
        %v1565 = vld [vmem:[%s392 + $0x2070] sm:$0xff]
        %v1566 = vld [vmem:[%s392 + $0x2078] sm:$0xff]
        %v1567 = vld [vmem:[%s392 + $0x2080] sm:$0xff]
        %v1568 = vld [vmem:[%s392 + $0x2088] sm:$0xff]
        %v1569 = vld [vmem:[%s392 + $0x2090] sm:$0xff]
        %v1570 = vld [vmem:[%s392 + $0x2098] sm:$0xff]
        %v1571 = vld [vmem:[%s392 + $0x20a0] sm:$0xff]
        %v1572 = vld [vmem:[%s392 + $0x20a8] sm:$0xff]
        %v1573 = vld [vmem:[%s392 + $0x20b0] sm:$0xff]
        %v1574 = vld [vmem:[%s392 + $0x20b8] sm:$0xff]
        %v1575 = vld [vmem:[%s392 + $0x20c0] sm:$0xff]
        %v1576 = vld [vmem:[%s392 + $0x20c8] sm:$0xff]
        %v1577 = vld [vmem:[%s392 + $0x20d0] sm:$0xff]
        %v1578 = vld [vmem:[%s392 + $0x20d8] sm:$0xff]
        %v1579 = vld [vmem:[%s392 + $0x20e0] sm:$0xff]
        %v1580 = vld [vmem:[%s392 + $0x20e8] sm:$0xff]
        %v1581 = vld [vmem:[%s392 + $0x20f0] sm:$0xff]
        %v1582 = vld [vmem:[%s392 + $0x20f8] sm:$0xff]
        %v1583 = vld [vmem:[%s392 + $0x2100] sm:$0xff]
        %v1584 = vld [vmem:[%s392 + $0x2108] sm:$0xff]
        %v1585 = vld [vmem:[%s392 + $0x2110] sm:$0xff]
        %v1586 = vld [vmem:[%s392 + $0x2118] sm:$0xff]
        %v1587 = vld [vmem:[%s392 + $0x2120] sm:$0xff]
        %v1588 = vld [vmem:[%s392 + $0x2128] sm:$0xff]
        %v1589 = vld [vmem:[%s392 + $0x2130] sm:$0xff]
        %v1590 = vld [vmem:[%s392 + $0x2138] sm:$0xff]
        %v1591 = vld [vmem:[%s392 + $0x2140] sm:$0xff]
        %v1592 = vld [vmem:[%s392 + $0x2148] sm:$0xff]
        %v1593 = vld [vmem:[%s392 + $0x2150] sm:$0xff]
        %v1594 = vld [vmem:[%s392 + $0x2158] sm:$0xff]
        %v1595 = vld [vmem:[%s392 + $0x2160] sm:$0xff]
        %v1596 = vld [vmem:[%s392 + $0x2168] sm:$0xff]
        %v1597 = vld [vmem:[%s392 + $0x2170] sm:$0xff]
        %v1598 = vld [vmem:[%s392 + $0x2178] sm:$0xff]
        %v1599 = vld [vmem:[%s392 + $0x2180] sm:$0xff]
        %v1600 = vld [vmem:[%s392 + $0x2188] sm:$0xff]
        %v1601 = vld [vmem:[%s392 + $0x2190] sm:$0xff]
        %v1602 = vld [vmem:[%s392 + $0x2198] sm:$0xff]
        %v1603 = vld [vmem:[%s392 + $0x21a0] sm:$0xff]
        %v1604 = vld [vmem:[%s392 + $0x21a8] sm:$0xff]
        %v1605 = vld [vmem:[%s392 + $0x21b0] sm:$0xff]
        %v1606 = vld [vmem:[%s392 + $0x21b8] sm:$0xff]
        %v1607 = vld [vmem:[%s392 + $0x21c0] sm:$0xff]
        %v1608 = vld [vmem:[%s392 + $0x21c8] sm:$0xff]
        %v1609 = vld [vmem:[%s392 + $0x21d0] sm:$0xff]
        %v1610 = vld [vmem:[%s392 + $0x21d8] sm:$0xff]
        %v1611 = vld [vmem:[%s392 + $0x21e0] sm:$0xff]
        %v1612 = vld [vmem:[%s392 + $0x21e8] sm:$0xff]
        %v1613 = vld [vmem:[%s392 + $0x21f0] sm:$0xff]
        %v1614 = vld [vmem:[%s392 + $0x21f8] sm:$0xff]
        %v1615 = vld [vmem:[%s392 + $0x2200] sm:$0xff]
        %v1616 = vld [vmem:[%s392 + $0x2208] sm:$0xff]
        %v1617 = vld [vmem:[%s392 + $0x2210] sm:$0xff]
        %v1618 = vld [vmem:[%s392 + $0x2218] sm:$0xff]
        %v1619 = vld [vmem:[%s392 + $0x2220] sm:$0xff]
        %v1620 = vld [vmem:[%s392 + $0x2228] sm:$0xff]
        %v1621 = vld [vmem:[%s392 + $0x2230] sm:$0xff]
        %v1622 = vld [vmem:[%s392 + $0x2238] sm:$0xff]
        %v1623 = vld [vmem:[%s392 + $0x2240] sm:$0xff]
        %v1624 = vld [vmem:[%s392 + $0x2248] sm:$0xff]
        %v1625 = vld [vmem:[%s392 + $0x2250] sm:$0xff]
        %v1626 = vld [vmem:[%s392 + $0x2258] sm:$0xff]
        %v1627 = vld [vmem:[%s392 + $0x2260] sm:$0xff]
        %v1628 = vld [vmem:[%s392 + $0x2268] sm:$0xff]
        %v1629 = vld [vmem:[%s392 + $0x2270] sm:$0xff]
        %v1630 = vld [vmem:[%s392 + $0x2278] sm:$0xff]
        %v1631 = vld [vmem:[%s392 + $0x2280] sm:$0xff]
        %v1632 = vld [vmem:[%s392 + $0x2288] sm:$0xff]
        %v1633 = vld [vmem:[%s392 + $0x2290] sm:$0xff]
        %v1634 = vld [vmem:[%s392 + $0x2298] sm:$0xff]
        %v1635 = vld [vmem:[%s392 + $0x22a0] sm:$0xff]
        %v1636 = vld [vmem:[%s392 + $0x22a8] sm:$0xff]
        %v1637 = vld [vmem:[%s392 + $0x22b0] sm:$0xff]
        %v1638 = vld [vmem:[%s392 + $0x22b8] sm:$0xff]
        %v1639 = vld [vmem:[%s392 + $0x22c0] sm:$0xff]
        %v1640 = vld [vmem:[%s392 + $0x22c8] sm:$0xff]
        %v1641 = vld [vmem:[%s392 + $0x22d0] sm:$0xff]
        %v1642 = vld [vmem:[%s392 + $0x22d8] sm:$0xff]
        %v1643 = vld [vmem:[%s392 + $0x22e0] sm:$0xff]
        %v1644 = vld [vmem:[%s392 + $0x22e8] sm:$0xff]
        %v1645 = vld [vmem:[%s392 + $0x22f0] sm:$0xff]
        %v1646 = vld [vmem:[%s392 + $0x22f8] sm:$0xff]
        %v1647 = vld [vmem:[%s392 + $0x2300] sm:$0xff]
        %v1648 = vld [vmem:[%s392 + $0x2308] sm:$0xff]
        %v1649 = vld [vmem:[%s392 + $0x2310] sm:$0xff]
        %v1650 = vld [vmem:[%s392 + $0x2318] sm:$0xff]
        %v1651 = vld [vmem:[%s392 + $0x2320] sm:$0xff]
        %v1652 = vld [vmem:[%s392 + $0x2328] sm:$0xff]
        %v1653 = vld [vmem:[%s392 + $0x2330] sm:$0xff]
        %v1654 = vld [vmem:[%s392 + $0x2338] sm:$0xff]
        %v1655 = vld [vmem:[%s392 + $0x2340] sm:$0xff]
        %v1656 = vld [vmem:[%s392 + $0x2348] sm:$0xff]
        %v1657 = vld [vmem:[%s392 + $0x2350] sm:$0xff]
        %v1658 = vld [vmem:[%s392 + $0x2358] sm:$0xff]
        %v1659 = vld [vmem:[%s392 + $0x2360] sm:$0xff]
        %v1660 = vld [vmem:[%s392 + $0x2368] sm:$0xff]
        %v1661 = vld [vmem:[%s392 + $0x2370] sm:$0xff]
        %v1662 = vld [vmem:[%s392 + $0x2378] sm:$0xff]
        %v1663 = vld [vmem:[%s392 + $0x2380] sm:$0xff]
        %v1664 = vld [vmem:[%s392 + $0x2388] sm:$0xff]
        %v1665 = vld [vmem:[%s392 + $0x2390] sm:$0xff]
        %v1666 = vld [vmem:[%s392 + $0x2398] sm:$0xff]
        %v1667 = vld [vmem:[%s392 + $0x23a0] sm:$0xff]
        %v1668 = vld [vmem:[%s392 + $0x23a8] sm:$0xff]
        %v1669 = vld [vmem:[%s392 + $0x23b0] sm:$0xff]
        %v1670 = vld [vmem:[%s392 + $0x23b8] sm:$0xff]
        %v1671 = vld [vmem:[%s392 + $0x23c0] sm:$0xff]
        %v1672 = vld [vmem:[%s392 + $0x23c8] sm:$0xff]
        %v1673 = vld [vmem:[%s392 + $0x23d0] sm:$0xff]
        %v1674 = vld [vmem:[%s392 + $0x23d8] sm:$0xff]
        %v1675 = vld [vmem:[%s392 + $0x23e0] sm:$0xff]
        %v1676 = vld [vmem:[%s392 + $0x23e8] sm:$0xff]
        %v1677 = vld [vmem:[%s392 + $0x23f0] sm:$0xff]
        %v1678 = vld [vmem:[%s392 + $0x23f8] sm:$0xff]
        %v1679 = vld [vmem:[%s392 + $0x2400] sm:$0xff]
        %v1680 = vld [vmem:[%s392 + $0x2408] sm:$0xff]
        %v1681 = vld [vmem:[%s392 + $0x2410] sm:$0xff]
        %v1682 = vld [vmem:[%s392 + $0x2418] sm:$0xff]
        %v1683 = vld [vmem:[%s392 + $0x2420] sm:$0xff]
        %v1684 = vld [vmem:[%s392 + $0x2428] sm:$0xff]
        %v1685 = vld [vmem:[%s392 + $0x2430] sm:$0xff]
        %v1686 = vld [vmem:[%s392 + $0x2438] sm:$0xff]
        %v1687 = vld [vmem:[%s392 + $0x2440] sm:$0xff]
        %v1688 = vld [vmem:[%s392 + $0x2448] sm:$0xff]
        %v1689 = vld [vmem:[%s392 + $0x2450] sm:$0xff]
        %v1690 = vld [vmem:[%s392 + $0x2458] sm:$0xff]
        %v1691 = vld [vmem:[%s392 + $0x2460] sm:$0xff]
        %v1692 = vld [vmem:[%s392 + $0x2468] sm:$0xff]
        %v1693 = vld [vmem:[%s392 + $0x2470] sm:$0xff]
        %v1694 = vld [vmem:[%s392 + $0x2478] sm:$0xff]
        %v1695 = vld [vmem:[%s392 + $0x2480] sm:$0xff]
        %v1696 = vld [vmem:[%s392 + $0x2488] sm:$0xff]
        %v1697 = vld [vmem:[%s392 + $0x2490] sm:$0xff]
        %v1698 = vld [vmem:[%s392 + $0x2498] sm:$0xff]
        %v1699 = vld [vmem:[%s392 + $0x24a0] sm:$0xff]
        %v1700 = vld [vmem:[%s392 + $0x24a8] sm:$0xff]
        %v1701 = vld [vmem:[%s392 + $0x24b0] sm:$0xff]
        %v1702 = vld [vmem:[%s392 + $0x24b8] sm:$0xff]
        %v1703 = vld [vmem:[%s392 + $0x24c0] sm:$0xff]
        %v1704 = vld [vmem:[%s392 + $0x24c8] sm:$0xff]
        %v1705 = vld [vmem:[%s392 + $0x24d0] sm:$0xff]
        %v1706 = vld [vmem:[%s392 + $0x24d8] sm:$0xff]
        %v1707 = vld [vmem:[%s392 + $0x24e0] sm:$0xff]
        %v1708 = vld [vmem:[%s392 + $0x24e8] sm:$0xff]
        %v1709 = vld [vmem:[%s392 + $0x24f0] sm:$0xff]
        %v1710 = vld [vmem:[%s392 + $0x24f8] sm:$0xff]
        %v1711 = vld [vmem:[%s392 + $0x2500] sm:$0xff]
        %v1712 = vld [vmem:[%s392 + $0x2508] sm:$0xff]
        %v1713 = vld [vmem:[%s392 + $0x2510] sm:$0xff]
        %v1714 = vld [vmem:[%s392 + $0x2518] sm:$0xff]
        %v1715 = vld [vmem:[%s392 + $0x2520] sm:$0xff]
        %v1716 = vld [vmem:[%s392 + $0x2528] sm:$0xff]
        %v1717 = vld [vmem:[%s392 + $0x2530] sm:$0xff]
        %v1718 = vld [vmem:[%s392 + $0x2538] sm:$0xff]
        %v1719 = vld [vmem:[%s392 + $0x2540] sm:$0xff]
        %v1720 = vld [vmem:[%s392 + $0x2548] sm:$0xff]
        %v1721 = vld [vmem:[%s392 + $0x2550] sm:$0xff]
        %v1722 = vld [vmem:[%s392 + $0x2558] sm:$0xff]
        %v1723 = vld [vmem:[%s392 + $0x2560] sm:$0xff]
        %v1724 = vld [vmem:[%s392 + $0x2568] sm:$0xff]
        %v1725 = vld [vmem:[%s392 + $0x2570] sm:$0xff]
        %v1726 = vld [vmem:[%s392 + $0x2578] sm:$0xff]
        %v1727 = vld [vmem:[%s392 + $0x2580] sm:$0xff]
        %v1728 = vld [vmem:[%s392 + $0x2588] sm:$0xff]
        %v1729 = vld [vmem:[%s392 + $0x2590] sm:$0xff]
        %v1730 = vld [vmem:[%s392 + $0x2598] sm:$0xff]
        %v1731 = vld [vmem:[%s392 + $0x25a0] sm:$0xff]
        %v1732 = vld [vmem:[%s392 + $0x25a8] sm:$0xff]
        %v1733 = vld [vmem:[%s392 + $0x25b0] sm:$0xff]
        %v1734 = vld [vmem:[%s392 + $0x25b8] sm:$0xff]
        %v1735 = vld [vmem:[%s392 + $0x25c0] sm:$0xff]
        %v1736 = vld [vmem:[%s392 + $0x25c8] sm:$0xff]
        %v1737 = vld [vmem:[%s392 + $0x25d0] sm:$0xff]
        %v1738 = vld [vmem:[%s392 + $0x25d8] sm:$0xff]
        %v1739 = vld [vmem:[%s392 + $0x25e0] sm:$0xff]
        %v1740 = vld [vmem:[%s392 + $0x25e8] sm:$0xff]
        %v1741 = vld [vmem:[%s392 + $0x25f0] sm:$0xff]
        %v1742 = vld [vmem:[%s392 + $0x25f8] sm:$0xff]
        %v1743 = vld [vmem:[%s392 + $0x2600] sm:$0xff]
        %v1744 = vld [vmem:[%s392 + $0x2608] sm:$0xff]
        %v1745 = vld [vmem:[%s392 + $0x2610] sm:$0xff]
        %v1746 = vld [vmem:[%s392 + $0x2618] sm:$0xff]
        %v1747 = vld [vmem:[%s392 + $0x2620] sm:$0xff]
        %v1748 = vld [vmem:[%s392 + $0x2628] sm:$0xff]
        %v1749 = vld [vmem:[%s392 + $0x2630] sm:$0xff]
        %v1750 = vld [vmem:[%s392 + $0x2638] sm:$0xff]
        %v1751 = vld [vmem:[%s392 + $0x2640] sm:$0xff]
        %v1752 = vld [vmem:[%s392 + $0x2648] sm:$0xff]
        %v1753 = vld [vmem:[%s392 + $0x2650] sm:$0xff]
        %v1754 = vld [vmem:[%s392 + $0x2658] sm:$0xff]
        %v1755 = vld [vmem:[%s392 + $0x2660] sm:$0xff]
        %v1756 = vld [vmem:[%s392 + $0x2668] sm:$0xff]
        %v1757 = vld [vmem:[%s392 + $0x2670] sm:$0xff]
        %v1758 = vld [vmem:[%s392 + $0x2678] sm:$0xff]
        %v1759 = vld [vmem:[%s392 + $0x2680] sm:$0xff]
        %v1760 = vld [vmem:[%s392 + $0x2688] sm:$0xff]
        %v1761 = vld [vmem:[%s392 + $0x2690] sm:$0xff]
        %v1762 = vld [vmem:[%s392 + $0x2698] sm:$0xff]
        %v1763 = vld [vmem:[%s392 + $0x26a0] sm:$0xff]
        %v1764 = vld [vmem:[%s392 + $0x26a8] sm:$0xff]
        %v1765 = vld [vmem:[%s392 + $0x26b0] sm:$0xff]
        %v1766 = vld [vmem:[%s392 + $0x26b8] sm:$0xff]
        %v1767 = vld [vmem:[%s392 + $0x26c0] sm:$0xff]
        %v1768 = vld [vmem:[%s392 + $0x26c8] sm:$0xff]
        %v1769 = vld [vmem:[%s392 + $0x26d0] sm:$0xff]
        %v1770 = vld [vmem:[%s392 + $0x26d8] sm:$0xff]
        %v1771 = vld [vmem:[%s392 + $0x26e0] sm:$0xff]
        %v1772 = vld [vmem:[%s392 + $0x26e8] sm:$0xff]
        %v1773 = vld [vmem:[%s392 + $0x26f0] sm:$0xff]
        %v1774 = vld [vmem:[%s392 + $0x26f8] sm:$0xff]
        %v1775 = vld [vmem:[%s392 + $0x2700] sm:$0xff]
        %v1776 = vld [vmem:[%s392 + $0x2708] sm:$0xff]
        %v1777 = vld [vmem:[%s392 + $0x2710] sm:$0xff]
        %v1778 = vld [vmem:[%s392 + $0x2718] sm:$0xff]
        %v1779 = vld [vmem:[%s392 + $0x2720] sm:$0xff]
        %v1780 = vld [vmem:[%s392 + $0x2728] sm:$0xff]
        %v1781 = vld [vmem:[%s392 + $0x2730] sm:$0xff]
        %v1782 = vld [vmem:[%s392 + $0x2738] sm:$0xff]
        %v1783 = vld [vmem:[%s392 + $0x2740] sm:$0xff]
        %v1784 = vld [vmem:[%s392 + $0x2748] sm:$0xff]
        %v1785 = vld [vmem:[%s392 + $0x2750] sm:$0xff]
        %v1786 = vld [vmem:[%s392 + $0x2758] sm:$0xff]
        %v1787 = vld [vmem:[%s392 + $0x2760] sm:$0xff]
        %v1788 = vld [vmem:[%s392 + $0x2768] sm:$0xff]
        %v1789 = vld [vmem:[%s392 + $0x2770] sm:$0xff]
        %v1790 = vld [vmem:[%s392 + $0x2778] sm:$0xff]
        %v1791 = vld [vmem:[%s392 + $0x2780] sm:$0xff]
        %v1792 = vld [vmem:[%s392 + $0x2788] sm:$0xff]
        %v1793 = vld [vmem:[%s392 + $0x2790] sm:$0xff]
        %v1794 = vld [vmem:[%s392 + $0x2798] sm:$0xff]
        %v1795 = vld [vmem:[%s392 + $0x27a0] sm:$0xff]
        %v1796 = vld [vmem:[%s392 + $0x27a8] sm:$0xff]
        %v1797 = vld [vmem:[%s392 + $0x27b0] sm:$0xff]
        %v1798 = vld [vmem:[%s392 + $0x27b8] sm:$0xff]
        %v1799 = vld [vmem:[%s392 + $0x27c0] sm:$0xff]
        %v1800 = vld [vmem:[%s392 + $0x27c8] sm:$0xff]
        %v1801 = vld [vmem:[%s392 + $0x27d0] sm:$0xff]
        %v1802 = vld [vmem:[%s392 + $0x27d8] sm:$0xff]
        %v1803 = vld [vmem:[%s392 + $0x27e0] sm:$0xff]
        %v1804 = vld [vmem:[%s392 + $0x27e8] sm:$0xff]
        %v1805 = vld [vmem:[%s392 + $0x27f0] sm:$0xff]
        %v1806 = vld [vmem:[%s392 + $0x27f8] sm:$0xff]
        %v1807 = vld [vmem:[%s392 + $0x2800] sm:$0xff]
        %v1808 = vld [vmem:[%s392 + $0x2808] sm:$0xff]
        %v1809 = vld [vmem:[%s392 + $0x2810] sm:$0xff]
        %v1810 = vld [vmem:[%s392 + $0x2818] sm:$0xff]
        %v1811 = vld [vmem:[%s392 + $0x2820] sm:$0xff]
        %v1812 = vld [vmem:[%s392 + $0x2828] sm:$0xff]
        %v1813 = vld [vmem:[%s392 + $0x2830] sm:$0xff]
        %v1814 = vld [vmem:[%s392 + $0x2838] sm:$0xff]
        %v1815 = vld [vmem:[%s392 + $0x2840] sm:$0xff]
        %v1816 = vld [vmem:[%s392 + $0x2848] sm:$0xff]
        %v1817 = vld [vmem:[%s392 + $0x2850] sm:$0xff]
        %v1818 = vld [vmem:[%s392 + $0x2858] sm:$0xff]
        %v1819 = vld [vmem:[%s392 + $0x2860] sm:$0xff]
        %v1820 = vld [vmem:[%s392 + $0x2868] sm:$0xff]
        %v1821 = vld [vmem:[%s392 + $0x2870] sm:$0xff]
        %v1822 = vld [vmem:[%s392 + $0x2878] sm:$0xff]
        %v1823 = vld [vmem:[%s392 + $0x2880] sm:$0xff]
        %v1824 = vld [vmem:[%s392 + $0x2888] sm:$0xff]
        %v1825 = vld [vmem:[%s392 + $0x2890] sm:$0xff]
        %v1826 = vld [vmem:[%s392 + $0x2898] sm:$0xff]
        %v1827 = vld [vmem:[%s392 + $0x28a0] sm:$0xff]
        %v1828 = vld [vmem:[%s392 + $0x28a8] sm:$0xff]
        %v1829 = vld [vmem:[%s392 + $0x28b0] sm:$0xff]
        %v1830 = vld [vmem:[%s392 + $0x28b8] sm:$0xff]
        %v1831 = vld [vmem:[%s392 + $0x28c0] sm:$0xff]
        %v1832 = vld [vmem:[%s392 + $0x28c8] sm:$0xff]
        %v1833 = vld [vmem:[%s392 + $0x28d0] sm:$0xff]
        %v1834 = vld [vmem:[%s392 + $0x28d8] sm:$0xff]
        %v1835 = vld [vmem:[%s392 + $0x28e0] sm:$0xff]
        %v1836 = vld [vmem:[%s392 + $0x28e8] sm:$0xff]
        %v1837 = vld [vmem:[%s392 + $0x28f0] sm:$0xff]
        %v1838 = vld [vmem:[%s392 + $0x28f8] sm:$0xff]
        %v1839 = vld [vmem:[%s392 + $0x2900] sm:$0xff]
        %v1840 = vld [vmem:[%s392 + $0x2908] sm:$0xff]
        %v1841 = vld [vmem:[%s392 + $0x2910] sm:$0xff]
        %v1842 = vld [vmem:[%s392 + $0x2918] sm:$0xff]
        %v1843 = vld [vmem:[%s392 + $0x2920] sm:$0xff]
        %v1844 = vld [vmem:[%s392 + $0x2928] sm:$0xff]
        %v1845 = vld [vmem:[%s392 + $0x2930] sm:$0xff]
        %v1846 = vld [vmem:[%s392 + $0x2938] sm:$0xff]
        %v1847 = vld [vmem:[%s392 + $0x2940] sm:$0xff]
        %v1848 = vld [vmem:[%s392 + $0x2948] sm:$0xff]
        %v1849 = vld [vmem:[%s392 + $0x2950] sm:$0xff]
        %v1850 = vld [vmem:[%s392 + $0x2958] sm:$0xff]
        %v1851 = vld [vmem:[%s392 + $0x2960] sm:$0xff]
        %v1852 = vld [vmem:[%s392 + $0x2968] sm:$0xff]
        %v1853 = vld [vmem:[%s392 + $0x2970] sm:$0xff]
        %v1854 = vld [vmem:[%s392 + $0x2978] sm:$0xff]
        %v1855 = vld [vmem:[%s392 + $0x2980] sm:$0xff]
        %v1856 = vld [vmem:[%s392 + $0x2988] sm:$0xff]
        %v1857 = vld [vmem:[%s392 + $0x2990] sm:$0xff]
        %v1858 = vld [vmem:[%s392 + $0x2998] sm:$0xff]
        %v1859 = vld [vmem:[%s392 + $0x29a0] sm:$0xff]
        %v1860 = vld [vmem:[%s392 + $0x29a8] sm:$0xff]
        %v1861 = vld [vmem:[%s392 + $0x29b0] sm:$0xff]
        %v1862 = vld [vmem:[%s392 + $0x29b8] sm:$0xff]
        %v1863 = vld [vmem:[%s392 + $0x29c0] sm:$0xff]
        %v1864 = vld [vmem:[%s392 + $0x29c8] sm:$0xff]
        %v1865 = vld [vmem:[%s392 + $0x29d0] sm:$0xff]
        %v1866 = vld [vmem:[%s392 + $0x29d8] sm:$0xff]
        %v1867 = vld [vmem:[%s392 + $0x29e0] sm:$0xff]
        %v1868 = vld [vmem:[%s392 + $0x29e8] sm:$0xff]
        %v1869 = vld [vmem:[%s392 + $0x29f0] sm:$0xff]
        %v1870 = vld [vmem:[%s392 + $0x29f8] sm:$0xff]
        %v1955 = vunpack.c.l.b16 %v443
        %v1956 = vunpack.c.h.b16 %v443
        %v1957 = vunpack.c.l.b16 %v444
        %v1958 = vunpack.c.h.b16 %v444
        %v1959 = vunpack.c.l.b16 %v445
        %v1960 = vunpack.c.h.b16 %v445
        %v1961 = vunpack.c.l.b16 %v446
        %v1962 = vunpack.c.h.b16 %v446
        %v1963 = vunpack.c.l.b16 %v447
        %v1964 = vunpack.c.h.b16 %v447
        %v1965 = vunpack.c.l.b16 %v448
        %v1966 = vunpack.c.h.b16 %v448
        %v1967 = vunpack.c.l.b16 %v449
        %v1968 = vunpack.c.h.b16 %v449
        %v1969 = vunpack.c.l.b16 %v450
        %v1970 = vunpack.c.h.b16 %v450
        %v1971 = vunpack.c.l.b16 %v451
        %v1972 = vunpack.c.h.b16 %v451
        %v1973 = vunpack.c.l.b16 %v452
        %v1974 = vunpack.c.h.b16 %v452
        %v1975 = vunpack.c.l.b16 %v453
        %v1976 = vunpack.c.h.b16 %v453
        %v1977 = vunpack.c.l.b16 %v454
        %v1978 = vunpack.c.h.b16 %v454
        %v1979 = vunpack.c.l.b16 %v455
        %v1980 = vunpack.c.h.b16 %v455
        %v1981 = vunpack.c.l.b16 %v456
        %v1982 = vunpack.c.h.b16 %v456
        %v1983 = vunpack.c.l.b16 %v457
        %v1984 = vunpack.c.h.b16 %v457
        %v1985 = vunpack.c.l.b16 %v458
        %v1986 = vunpack.c.h.b16 %v458
        %v1987 = vunpack.c.l.b16 %v459
        %v1988 = vunpack.c.h.b16 %v459
        %v1989 = vunpack.c.l.b16 %v460
        %v1990 = vunpack.c.h.b16 %v460
        %v1991 = vunpack.c.l.b16 %v461
        %v1992 = vunpack.c.h.b16 %v461
        %v1993 = vunpack.c.l.b16 %v462
        %v1994 = vunpack.c.h.b16 %v462
        %v1995 = vunpack.c.l.b16 %v463
        %v1996 = vunpack.c.h.b16 %v463
        %v1997 = vunpack.c.l.b16 %v464
        %v1998 = vunpack.c.h.b16 %v464
        %v1999 = vunpack.c.l.b16 %v465
        %v2000 = vunpack.c.h.b16 %v465
        %v2001 = vunpack.c.l.b16 %v466
        %v2002 = vunpack.c.h.b16 %v466
        %v2003 = vunpack.c.l.b16 %v467
        %v2004 = vunpack.c.h.b16 %v467
        %v2005 = vunpack.c.l.b16 %v468
        %v2006 = vunpack.c.h.b16 %v468
        %v2007 = vunpack.c.l.b16 %v469
        %v2008 = vunpack.c.h.b16 %v469
        %v2009 = vunpack.c.l.b16 %v470
        %v2010 = vunpack.c.h.b16 %v470
        %v2011 = vunpack.c.l.b16 %v471
        %v2012 = vunpack.c.h.b16 %v471
        %v2013 = vunpack.c.l.b16 %v472
        %v2014 = vunpack.c.h.b16 %v472
        %v2015 = vunpack.c.l.b16 %v473
        %v2016 = vunpack.c.h.b16 %v473
        %v2017 = vunpack.c.l.b16 %v474
        %v2018 = vunpack.c.h.b16 %v474
        %v2019 = vunpack.c.l.b16 %v475
        %v2020 = vunpack.c.h.b16 %v475
        %v2021 = vunpack.c.l.b16 %v476
        %v2022 = vunpack.c.h.b16 %v476
        %v2023 = vunpack.c.l.b16 %v477
        %v2024 = vunpack.c.h.b16 %v477
        %v2025 = vunpack.c.l.b16 %v478
        %v2026 = vunpack.c.h.b16 %v478
        %v2027 = vunpack.c.l.b16 %v479
        %v2028 = vunpack.c.h.b16 %v479
        %v2029 = vunpack.c.l.b16 %v480
        %v2030 = vunpack.c.h.b16 %v480
        %v2031 = vunpack.c.l.b16 %v481
        %v2032 = vunpack.c.h.b16 %v481
        %v2033 = vunpack.c.l.b16 %v482
        %v2034 = vunpack.c.h.b16 %v482
        %v2035 = vunpack.c.l.b16 %v483
        %v2036 = vunpack.c.h.b16 %v483
        %v2037 = vunpack.c.l.b16 %v484
        %v2038 = vunpack.c.h.b16 %v484
        %v2039 = vunpack.c.l.b16 %v485
        %v2040 = vunpack.c.h.b16 %v485
        %v2041 = vunpack.c.l.b16 %v486
        %v2042 = vunpack.c.h.b16 %v486
        %v2043 = vunpack.c.l.b16 %v487
        %v2044 = vunpack.c.h.b16 %v487
        %v2045 = vunpack.c.l.b16 %v488
        %v2046 = vunpack.c.h.b16 %v488
        %v2047 = vunpack.c.l.b16 %v489
        %v2048 = vunpack.c.h.b16 %v489
        %v2049 = vunpack.c.l.b16 %v490
        %v2050 = vunpack.c.h.b16 %v490
        %v2051 = vunpack.c.l.b16 %v491
        %v2052 = vunpack.c.h.b16 %v491
        %v2053 = vunpack.c.l.b16 %v492
        %v2054 = vunpack.c.h.b16 %v492
        %v2055 = vunpack.c.l.b16 %v493
        %v2056 = vunpack.c.h.b16 %v493
        %v2057 = vunpack.c.l.b16 %v494
        %v2058 = vunpack.c.h.b16 %v494
        %v2059 = vunpack.c.l.b16 %v495
        %v2060 = vunpack.c.h.b16 %v495
        %v2061 = vunpack.c.l.b16 %v496
        %v2062 = vunpack.c.h.b16 %v496
        %v2063 = vunpack.c.l.b16 %v497
        %v2064 = vunpack.c.h.b16 %v497
        %v2065 = vunpack.c.l.b16 %v498
        %v2066 = vunpack.c.h.b16 %v498
        %v2067 = vunpack.c.l.b16 %v499
        %v2068 = vunpack.c.h.b16 %v499
        %v2069 = vunpack.c.l.b16 %v500
        %v2070 = vunpack.c.h.b16 %v500
        %v2071 = vunpack.c.l.b16 %v501
        %v2072 = vunpack.c.h.b16 %v501
        %v2073 = vunpack.c.l.b16 %v502
        %v2074 = vunpack.c.h.b16 %v502
        %v2075 = vunpack.c.l.b16 %v503
        %v2076 = vunpack.c.h.b16 %v503
        %v2077 = vunpack.c.l.b16 %v504
        %v2078 = vunpack.c.h.b16 %v504
        %v2079 = vunpack.c.l.b16 %v505
        %v2080 = vunpack.c.h.b16 %v505
        %v2081 = vunpack.c.l.b16 %v506
        %v2082 = vunpack.c.h.b16 %v506
        %v2083 = vunpack.c.l.b16 %v507
        %v2084 = vunpack.c.h.b16 %v507
        %v2085 = vunpack.c.l.b16 %v508
        %v2086 = vunpack.c.h.b16 %v508
        %v2087 = vunpack.c.l.b16 %v509
        %v2088 = vunpack.c.h.b16 %v509
        %v2089 = vunpack.c.l.b16 %v510
        %v2090 = vunpack.c.h.b16 %v510
        %v2091 = vunpack.c.l.b16 %v511
        %v2092 = vunpack.c.h.b16 %v511
        %v2093 = vunpack.c.l.b16 %v512
        %v2094 = vunpack.c.h.b16 %v512
        %v2095 = vunpack.c.l.b16 %v513
        %v2096 = vunpack.c.h.b16 %v513
        %v2097 = vunpack.c.l.b16 %v514
        %v2098 = vunpack.c.h.b16 %v514
        %v2099 = vunpack.c.l.b16 %v515
        %v2100 = vunpack.c.h.b16 %v515
        %v2101 = vunpack.c.l.b16 %v516
        %v2102 = vunpack.c.h.b16 %v516
        %v2103 = vunpack.c.l.b16 %v517
        %v2104 = vunpack.c.h.b16 %v517
        %v2105 = vunpack.c.l.b16 %v518
        %v2106 = vunpack.c.h.b16 %v518
        %v2107 = vunpack.c.l.b16 %v519
        %v2108 = vunpack.c.h.b16 %v519
        %v2109 = vunpack.c.l.b16 %v520
        %v2110 = vunpack.c.h.b16 %v520
        %v2111 = vunpack.c.l.b16 %v521
        %v2112 = vunpack.c.h.b16 %v521
        %v2113 = vunpack.c.l.b16 %v522
        %v2114 = vunpack.c.h.b16 %v522
        %v2115 = vunpack.c.l.b16 %v523
        %v2116 = vunpack.c.h.b16 %v523
        %v2117 = vunpack.c.l.b16 %v524
        %v2118 = vunpack.c.h.b16 %v524
        %v2119 = vunpack.c.l.b16 %v525
        %v2120 = vunpack.c.h.b16 %v525
        %v2121 = vunpack.c.l.b16 %v526
        %v2122 = vunpack.c.h.b16 %v526
        %v2123 = vpack.c.b16 %v2039, %v1955
        %v2124 = vpack.c.b16 %v2040, %v1956
        %v2125 = vpack.c.b16 %v2041, %v1957
        %v2126 = vpack.c.b16 %v2042, %v1958
        %v2127 = vpack.c.b16 %v2043, %v1959
        %v2128 = vpack.c.b16 %v2044, %v1960
        %v2129 = vpack.c.b16 %v2045, %v1961
        %v2130 = vpack.c.b16 %v2046, %v1962
        %v2131 = vpack.c.b16 %v2047, %v1963
        %v2132 = vpack.c.b16 %v2048, %v1964
        %v2133 = vpack.c.b16 %v2049, %v1965
        %v2134 = vpack.c.b16 %v2050, %v1966
        %v2135 = vpack.c.b16 %v2051, %v1967
        %v2136 = vpack.c.b16 %v2052, %v1968
        %v2137 = vpack.c.b16 %v2053, %v1969
        %v2138 = vpack.c.b16 %v2054, %v1970
        %v2139 = vpack.c.b16 %v2055, %v1971
        %v2140 = vpack.c.b16 %v2056, %v1972
        %v2141 = vpack.c.b16 %v2057, %v1973
        %v2142 = vpack.c.b16 %v2058, %v1974
        %v2143 = vpack.c.b16 %v2059, %v1975
        %v2144 = vpack.c.b16 %v2060, %v1976
        %v2145 = vpack.c.b16 %v2061, %v1977
        %v2146 = vpack.c.b16 %v2062, %v1978
        %v2147 = vpack.c.b16 %v2063, %v1979
        %v2148 = vpack.c.b16 %v2064, %v1980
        %v2149 = vpack.c.b16 %v2065, %v1981
        %v2150 = vpack.c.b16 %v2066, %v1982
        %v2151 = vpack.c.b16 %v2067, %v1983
        %v2152 = vpack.c.b16 %v2068, %v1984
        %v2153 = vpack.c.b16 %v2069, %v1985
        %v2154 = vpack.c.b16 %v2070, %v1986
        %v2155 = vpack.c.b16 %v2071, %v1987
        %v2156 = vpack.c.b16 %v2072, %v1988
        %v2157 = vpack.c.b16 %v2073, %v1989
        %v2158 = vpack.c.b16 %v2074, %v1990
        %v2159 = vpack.c.b16 %v2075, %v1991
        %v2160 = vpack.c.b16 %v2076, %v1992
        %v2161 = vpack.c.b16 %v2077, %v1993
        %v2162 = vpack.c.b16 %v2078, %v1994
        %v2163 = vpack.c.b16 %v2079, %v1995
        %v2164 = vpack.c.b16 %v2080, %v1996
        %v2165 = vpack.c.b16 %v2081, %v1997
        %v2166 = vpack.c.b16 %v2082, %v1998
        %v2167 = vpack.c.b16 %v2083, %v1999
        %v2168 = vpack.c.b16 %v2084, %v2000
        %v2169 = vpack.c.b16 %v2085, %v2001
        %v2170 = vpack.c.b16 %v2086, %v2002
        %v2171 = vpack.c.b16 %v2087, %v2003
        %v2172 = vpack.c.b16 %v2088, %v2004
        %v2173 = vpack.c.b16 %v2089, %v2005
        %v2174 = vpack.c.b16 %v2090, %v2006
        %v2175 = vpack.c.b16 %v2091, %v2007
        %v2176 = vpack.c.b16 %v2092, %v2008
        %v2177 = vpack.c.b16 %v2093, %v2009
        %v2178 = vpack.c.b16 %v2094, %v2010
        %v2179 = vpack.c.b16 %v2095, %v2011
        %v2180 = vpack.c.b16 %v2096, %v2012
        %v2181 = vpack.c.b16 %v2097, %v2013
        %v2182 = vpack.c.b16 %v2098, %v2014
        %v2183 = vpack.c.b16 %v2099, %v2015
        %v2184 = vpack.c.b16 %v2100, %v2016
        %v2185 = vpack.c.b16 %v2101, %v2017
        %v2186 = vpack.c.b16 %v2102, %v2018
        %v2187 = vpack.c.b16 %v2103, %v2019
        %v2188 = vpack.c.b16 %v2104, %v2020
        %v2189 = vpack.c.b16 %v2105, %v2021
        %v2190 = vpack.c.b16 %v2106, %v2022
        %v2191 = vpack.c.b16 %v2107, %v2023
        %v2192 = vpack.c.b16 %v2108, %v2024
        %v2193 = vpack.c.b16 %v2109, %v2025
        %v2194 = vpack.c.b16 %v2110, %v2026
        %v2195 = vpack.c.b16 %v2111, %v2027
        %v2196 = vpack.c.b16 %v2112, %v2028
        %v2197 = vpack.c.b16 %v2113, %v2029
        %v2198 = vpack.c.b16 %v2114, %v2030
        %v2199 = vpack.c.b16 %v2115, %v2031
        %v2200 = vpack.c.b16 %v2116, %v2032
        %v2201 = vpack.c.b16 %v2117, %v2033
        %v2202 = vpack.c.b16 %v2118, %v2034
        %v2203 = vpack.c.b16 %v2119, %v2035
        %v2204 = vpack.c.b16 %v2120, %v2036
        %v2205 = vpack.c.b16 %v2121, %v2037
        %v2206 = vpack.c.b16 %v2122, %v2038
        %v3635 = vunpack.c.l.b16 %v527
        %v3636 = vunpack.c.h.b16 %v527
        %v3637 = vunpack.c.l.b16 %v528
        %v3638 = vunpack.c.h.b16 %v528
        %v3639 = vunpack.c.l.b16 %v529
        %v3640 = vunpack.c.h.b16 %v529
        %v3641 = vunpack.c.l.b16 %v530
        %v3642 = vunpack.c.h.b16 %v530
        %v3643 = vunpack.c.l.b16 %v531
        %v3644 = vunpack.c.h.b16 %v531
        %v3645 = vunpack.c.l.b16 %v532
        %v3646 = vunpack.c.h.b16 %v532
        %v3647 = vunpack.c.l.b16 %v533
        %v3648 = vunpack.c.h.b16 %v533
        %v3649 = vunpack.c.l.b16 %v534
        %v3650 = vunpack.c.h.b16 %v534
        %v3651 = vunpack.c.l.b16 %v535
        %v3652 = vunpack.c.h.b16 %v535
        %v3653 = vunpack.c.l.b16 %v536
        %v3654 = vunpack.c.h.b16 %v536
        %v3655 = vunpack.c.l.b16 %v537
        %v3656 = vunpack.c.h.b16 %v537
        %v3657 = vunpack.c.l.b16 %v538
        %v3658 = vunpack.c.h.b16 %v538
        %v3659 = vunpack.c.l.b16 %v539
        %v3660 = vunpack.c.h.b16 %v539
        %v3661 = vunpack.c.l.b16 %v540
        %v3662 = vunpack.c.h.b16 %v540
        %v3663 = vunpack.c.l.b16 %v541
        %v3664 = vunpack.c.h.b16 %v541
        %v3665 = vunpack.c.l.b16 %v542
        %v3666 = vunpack.c.h.b16 %v542
        %v3667 = vunpack.c.l.b16 %v543
        %v3668 = vunpack.c.h.b16 %v543
        %v3669 = vunpack.c.l.b16 %v544
        %v3670 = vunpack.c.h.b16 %v544
        %v3671 = vunpack.c.l.b16 %v545
        %v3672 = vunpack.c.h.b16 %v545
        %v3673 = vunpack.c.l.b16 %v546
        %v3674 = vunpack.c.h.b16 %v546
        %v3675 = vunpack.c.l.b16 %v547
        %v3676 = vunpack.c.h.b16 %v547
        %v3677 = vunpack.c.l.b16 %v548
        %v3678 = vunpack.c.h.b16 %v548
        %v3679 = vunpack.c.l.b16 %v549
        %v3680 = vunpack.c.h.b16 %v549
        %v3681 = vunpack.c.l.b16 %v550
        %v3682 = vunpack.c.h.b16 %v550
        %v3683 = vunpack.c.l.b16 %v551
        %v3684 = vunpack.c.h.b16 %v551
        %v3685 = vunpack.c.l.b16 %v552
        %v3686 = vunpack.c.h.b16 %v552
        %v3687 = vunpack.c.l.b16 %v553
        %v3688 = vunpack.c.h.b16 %v553
        %v3689 = vunpack.c.l.b16 %v554
        %v3690 = vunpack.c.h.b16 %v554
        %v3691 = vunpack.c.l.b16 %v555
        %v3692 = vunpack.c.h.b16 %v555
        %v3693 = vunpack.c.l.b16 %v556
        %v3694 = vunpack.c.h.b16 %v556
        %v3695 = vunpack.c.l.b16 %v557
        %v3696 = vunpack.c.h.b16 %v557
        %v3697 = vunpack.c.l.b16 %v558
        %v3698 = vunpack.c.h.b16 %v558
        %v3699 = vunpack.c.l.b16 %v559
        %v3700 = vunpack.c.h.b16 %v559
        %v3701 = vunpack.c.l.b16 %v560
        %v3702 = vunpack.c.h.b16 %v560
        %v3703 = vunpack.c.l.b16 %v561
        %v3704 = vunpack.c.h.b16 %v561
        %v3705 = vunpack.c.l.b16 %v562
        %v3706 = vunpack.c.h.b16 %v562
        %v3707 = vunpack.c.l.b16 %v563
        %v3708 = vunpack.c.h.b16 %v563
        %v3709 = vunpack.c.l.b16 %v564
        %v3710 = vunpack.c.h.b16 %v564
        %v3711 = vunpack.c.l.b16 %v565
        %v3712 = vunpack.c.h.b16 %v565
        %v3713 = vunpack.c.l.b16 %v566
        %v3714 = vunpack.c.h.b16 %v566
        %v3715 = vunpack.c.l.b16 %v567
        %v3716 = vunpack.c.h.b16 %v567
        %v3717 = vunpack.c.l.b16 %v568
        %v3718 = vunpack.c.h.b16 %v568
        %v3719 = vunpack.c.l.b16 %v569
        %v3720 = vunpack.c.h.b16 %v569
        %v3721 = vunpack.c.l.b16 %v570
        %v3722 = vunpack.c.h.b16 %v570
        %v3723 = vunpack.c.l.b16 %v571
        %v3724 = vunpack.c.h.b16 %v571
        %v3725 = vunpack.c.l.b16 %v572
        %v3726 = vunpack.c.h.b16 %v572
        %v3727 = vunpack.c.l.b16 %v573
        %v3728 = vunpack.c.h.b16 %v573
        %v3729 = vunpack.c.l.b16 %v574
        %v3730 = vunpack.c.h.b16 %v574
        %v3731 = vunpack.c.l.b16 %v575
        %v3732 = vunpack.c.h.b16 %v575
        %v3733 = vunpack.c.l.b16 %v576
        %v3734 = vunpack.c.h.b16 %v576
        %v3735 = vunpack.c.l.b16 %v577
        %v3736 = vunpack.c.h.b16 %v577
        %v3737 = vunpack.c.l.b16 %v578
        %v3738 = vunpack.c.h.b16 %v578
        %v3739 = vunpack.c.l.b16 %v579
        %v3740 = vunpack.c.h.b16 %v579
        %v3741 = vunpack.c.l.b16 %v580
        %v3742 = vunpack.c.h.b16 %v580
        %v3743 = vunpack.c.l.b16 %v581
        %v3744 = vunpack.c.h.b16 %v581
        %v3745 = vunpack.c.l.b16 %v582
        %v3746 = vunpack.c.h.b16 %v582
        %v3747 = vunpack.c.l.b16 %v583
        %v3748 = vunpack.c.h.b16 %v583
        %v3749 = vunpack.c.l.b16 %v584
        %v3750 = vunpack.c.h.b16 %v584
        %v3751 = vunpack.c.l.b16 %v585
        %v3752 = vunpack.c.h.b16 %v585
        %v3753 = vunpack.c.l.b16 %v586
        %v3754 = vunpack.c.h.b16 %v586
        %v3755 = vunpack.c.l.b16 %v587
        %v3756 = vunpack.c.h.b16 %v587
        %v3757 = vunpack.c.l.b16 %v588
        %v3758 = vunpack.c.h.b16 %v588
        %v3759 = vunpack.c.l.b16 %v589
        %v3760 = vunpack.c.h.b16 %v589
        %v3761 = vunpack.c.l.b16 %v590
        %v3762 = vunpack.c.h.b16 %v590
        %v3763 = vunpack.c.l.b16 %v591
        %v3764 = vunpack.c.h.b16 %v591
        %v3765 = vunpack.c.l.b16 %v592
        %v3766 = vunpack.c.h.b16 %v592
        %v3767 = vunpack.c.l.b16 %v593
        %v3768 = vunpack.c.h.b16 %v593
        %v3769 = vunpack.c.l.b16 %v594
        %v3770 = vunpack.c.h.b16 %v594
        %v3771 = vunpack.c.l.b16 %v595
        %v3772 = vunpack.c.h.b16 %v595
        %v3773 = vunpack.c.l.b16 %v596
        %v3774 = vunpack.c.h.b16 %v596
        %v3775 = vunpack.c.l.b16 %v597
        %v3776 = vunpack.c.h.b16 %v597
        %v3777 = vunpack.c.l.b16 %v598
        %v3778 = vunpack.c.h.b16 %v598
        %v3779 = vunpack.c.l.b16 %v599
        %v3780 = vunpack.c.h.b16 %v599
        %v3781 = vunpack.c.l.b16 %v600
        %v3782 = vunpack.c.h.b16 %v600
        %v3783 = vunpack.c.l.b16 %v601
        %v3784 = vunpack.c.h.b16 %v601
        %v3785 = vunpack.c.l.b16 %v602
        %v3786 = vunpack.c.h.b16 %v602
        %v3787 = vunpack.c.l.b16 %v603
        %v3788 = vunpack.c.h.b16 %v603
        %v3789 = vunpack.c.l.b16 %v604
        %v3790 = vunpack.c.h.b16 %v604
        %v3791 = vunpack.c.l.b16 %v605
        %v3792 = vunpack.c.h.b16 %v605
        %v3793 = vunpack.c.l.b16 %v606
        %v3794 = vunpack.c.h.b16 %v606
        %v3795 = vunpack.c.l.b16 %v607
        %v3796 = vunpack.c.h.b16 %v607
        %v3797 = vunpack.c.l.b16 %v608
        %v3798 = vunpack.c.h.b16 %v608
        %v3799 = vunpack.c.l.b16 %v609
        %v3800 = vunpack.c.h.b16 %v609
        %v3801 = vunpack.c.l.b16 %v610
        %v3802 = vunpack.c.h.b16 %v610
        %v3803 = vunpack.c.l.b16 %v611
        %v3804 = vunpack.c.h.b16 %v611
        %v3805 = vunpack.c.l.b16 %v612
        %v3806 = vunpack.c.h.b16 %v612
        %v3807 = vunpack.c.l.b16 %v613
        %v3808 = vunpack.c.h.b16 %v613
        %v3809 = vunpack.c.l.b16 %v614
        %v3810 = vunpack.c.h.b16 %v614
        %v3811 = vunpack.c.l.b16 %v615
        %v3812 = vunpack.c.h.b16 %v615
        %v3813 = vunpack.c.l.b16 %v616
        %v3814 = vunpack.c.h.b16 %v616
        %v3815 = vunpack.c.l.b16 %v617
        %v3816 = vunpack.c.h.b16 %v617
        %v3817 = vunpack.c.l.b16 %v618
        %v3818 = vunpack.c.h.b16 %v618
        %v3819 = vunpack.c.l.b16 %v619
        %v3820 = vunpack.c.h.b16 %v619
        %v3821 = vunpack.c.l.b16 %v620
        %v3822 = vunpack.c.h.b16 %v620
        %v3823 = vunpack.c.l.b16 %v621
        %v3824 = vunpack.c.h.b16 %v621
        %v3825 = vunpack.c.l.b16 %v622
        %v3826 = vunpack.c.h.b16 %v622
        %v3827 = vunpack.c.l.b16 %v623
        %v3828 = vunpack.c.h.b16 %v623
        %v3829 = vunpack.c.l.b16 %v624
        %v3830 = vunpack.c.h.b16 %v624
        %v3831 = vunpack.c.l.b16 %v625
        %v3832 = vunpack.c.h.b16 %v625
        %v3833 = vunpack.c.l.b16 %v626
        %v3834 = vunpack.c.h.b16 %v626
        %v3835 = vunpack.c.l.b16 %v627
        %v3836 = vunpack.c.h.b16 %v627
        %v3837 = vunpack.c.l.b16 %v628
        %v3838 = vunpack.c.h.b16 %v628
        %v3839 = vunpack.c.l.b16 %v629
        %v3840 = vunpack.c.h.b16 %v629
        %v3841 = vunpack.c.l.b16 %v630
        %v3842 = vunpack.c.h.b16 %v630
        %v3843 = vunpack.c.l.b16 %v631
        %v3844 = vunpack.c.h.b16 %v631
        %v3845 = vunpack.c.l.b16 %v632
        %v3846 = vunpack.c.h.b16 %v632
        %v3847 = vunpack.c.l.b16 %v633
        %v3848 = vunpack.c.h.b16 %v633
        %v3849 = vunpack.c.l.b16 %v634
        %v3850 = vunpack.c.h.b16 %v634
        %v3851 = vunpack.c.l.b16 %v635
        %v3852 = vunpack.c.h.b16 %v635
        %v3853 = vunpack.c.l.b16 %v636
        %v3854 = vunpack.c.h.b16 %v636
        %v3855 = vunpack.c.l.b16 %v637
        %v3856 = vunpack.c.h.b16 %v637
        %v3857 = vunpack.c.l.b16 %v638
        %v3858 = vunpack.c.h.b16 %v638
        %v3859 = vunpack.c.l.b16 %v639
        %v3860 = vunpack.c.h.b16 %v639
        %v3861 = vunpack.c.l.b16 %v640
        %v3862 = vunpack.c.h.b16 %v640
        %v3863 = vunpack.c.l.b16 %v641
        %v3864 = vunpack.c.h.b16 %v641
        %v3865 = vunpack.c.l.b16 %v642
        %v3866 = vunpack.c.h.b16 %v642
        %v3867 = vunpack.c.l.b16 %v643
        %v3868 = vunpack.c.h.b16 %v643
        %v3869 = vunpack.c.l.b16 %v644
        %v3870 = vunpack.c.h.b16 %v644
        %v3871 = vunpack.c.l.b16 %v645
        %v3872 = vunpack.c.h.b16 %v645
        %v3873 = vunpack.c.l.b16 %v646
        %v3874 = vunpack.c.h.b16 %v646
        %v3875 = vunpack.c.l.b16 %v647
        %v3876 = vunpack.c.h.b16 %v647
        %v3877 = vunpack.c.l.b16 %v648
        %v3878 = vunpack.c.h.b16 %v648
        %v3879 = vunpack.c.l.b16 %v649
        %v3880 = vunpack.c.h.b16 %v649
        %v3881 = vunpack.c.l.b16 %v650
        %v3882 = vunpack.c.h.b16 %v650
        %v3883 = vunpack.c.l.b16 %v651
        %v3884 = vunpack.c.h.b16 %v651
        %v3885 = vunpack.c.l.b16 %v652
        %v3886 = vunpack.c.h.b16 %v652
        %v3887 = vunpack.c.l.b16 %v653
        %v3888 = vunpack.c.h.b16 %v653
        %v3889 = vunpack.c.l.b16 %v654
        %v3890 = vunpack.c.h.b16 %v654
        %v3891 = vunpack.c.l.b16 %v655
        %v3892 = vunpack.c.h.b16 %v655
        %v3893 = vunpack.c.l.b16 %v656
        %v3894 = vunpack.c.h.b16 %v656
        %v3895 = vunpack.c.l.b16 %v657
        %v3896 = vunpack.c.h.b16 %v657
        %v3897 = vunpack.c.l.b16 %v658
        %v3898 = vunpack.c.h.b16 %v658
        %v3899 = vunpack.c.l.b16 %v659
        %v3900 = vunpack.c.h.b16 %v659
        %v3901 = vunpack.c.l.b16 %v660
        %v3902 = vunpack.c.h.b16 %v660
        %v3903 = vunpack.c.l.b16 %v661
        %v3904 = vunpack.c.h.b16 %v661
        %v3905 = vunpack.c.l.b16 %v662
        %v3906 = vunpack.c.h.b16 %v662
        %v3907 = vunpack.c.l.b16 %v663
        %v3908 = vunpack.c.h.b16 %v663
        %v3909 = vunpack.c.l.b16 %v664
        %v3910 = vunpack.c.h.b16 %v664
        %v3911 = vunpack.c.l.b16 %v665
        %v3912 = vunpack.c.h.b16 %v665
        %v3913 = vunpack.c.l.b16 %v666
        %v3914 = vunpack.c.h.b16 %v666
        %v3915 = vunpack.c.l.b16 %v667
        %v3916 = vunpack.c.h.b16 %v667
        %v3917 = vunpack.c.l.b16 %v668
        %v3918 = vunpack.c.h.b16 %v668
        %v3919 = vunpack.c.l.b16 %v669
        %v3920 = vunpack.c.h.b16 %v669
        %v3921 = vunpack.c.l.b16 %v670
        %v3922 = vunpack.c.h.b16 %v670
        %v3923 = vunpack.c.l.b16 %v671
        %v3924 = vunpack.c.h.b16 %v671
        %v3925 = vunpack.c.l.b16 %v672
        %v3926 = vunpack.c.h.b16 %v672
        %v3927 = vunpack.c.l.b16 %v673
        %v3928 = vunpack.c.h.b16 %v673
        %v3929 = vunpack.c.l.b16 %v674
        %v3930 = vunpack.c.h.b16 %v674
        %v3931 = vunpack.c.l.b16 %v675
        %v3932 = vunpack.c.h.b16 %v675
        %v3933 = vunpack.c.l.b16 %v676
        %v3934 = vunpack.c.h.b16 %v676
        %v3935 = vunpack.c.l.b16 %v677
        %v3936 = vunpack.c.h.b16 %v677
        %v3937 = vunpack.c.l.b16 %v678
        %v3938 = vunpack.c.h.b16 %v678
        %v3939 = vunpack.c.l.b16 %v679
        %v3940 = vunpack.c.h.b16 %v679
        %v3941 = vunpack.c.l.b16 %v680
        %v3942 = vunpack.c.h.b16 %v680
        %v3943 = vunpack.c.l.b16 %v681
        %v3944 = vunpack.c.h.b16 %v681
        %v3945 = vunpack.c.l.b16 %v682
        %v3946 = vunpack.c.h.b16 %v682
        %v3947 = vunpack.c.l.b16 %v683
        %v3948 = vunpack.c.h.b16 %v683
        %v3949 = vunpack.c.l.b16 %v684
        %v3950 = vunpack.c.h.b16 %v684
        %v3951 = vunpack.c.l.b16 %v685
        %v3952 = vunpack.c.h.b16 %v685
        %v3953 = vunpack.c.l.b16 %v686
        %v3954 = vunpack.c.h.b16 %v686
        %v3955 = vunpack.c.l.b16 %v687
        %v3956 = vunpack.c.h.b16 %v687
        %v3957 = vunpack.c.l.b16 %v688
        %v3958 = vunpack.c.h.b16 %v688
        %v3959 = vunpack.c.l.b16 %v689
        %v3960 = vunpack.c.h.b16 %v689
        %v3961 = vunpack.c.l.b16 %v690
        %v3962 = vunpack.c.h.b16 %v690
        %v3963 = vunpack.c.l.b16 %v691
        %v3964 = vunpack.c.h.b16 %v691
        %v3965 = vunpack.c.l.b16 %v692
        %v3966 = vunpack.c.h.b16 %v692
        %v3967 = vunpack.c.l.b16 %v693
        %v3968 = vunpack.c.h.b16 %v693
        %v3969 = vunpack.c.l.b16 %v694
        %v3970 = vunpack.c.h.b16 %v694
        %v3971 = vunpack.c.l.b16 %v695
        %v3972 = vunpack.c.h.b16 %v695
        %v3973 = vunpack.c.l.b16 %v696
        %v3974 = vunpack.c.h.b16 %v696
        %v3975 = vunpack.c.l.b16 %v697
        %v3976 = vunpack.c.h.b16 %v697
        %v3977 = vunpack.c.l.b16 %v698
        %v3978 = vunpack.c.h.b16 %v698
        %v3979 = vunpack.c.l.b16 %v699
        %v3980 = vunpack.c.h.b16 %v699
        %v3981 = vunpack.c.l.b16 %v700
        %v3982 = vunpack.c.h.b16 %v700
        %v3983 = vunpack.c.l.b16 %v701
        %v3984 = vunpack.c.h.b16 %v701
        %v3985 = vunpack.c.l.b16 %v702
        %v3986 = vunpack.c.h.b16 %v702
        %v3987 = vunpack.c.l.b16 %v703
        %v3988 = vunpack.c.h.b16 %v703
        %v3989 = vunpack.c.l.b16 %v704
        %v3990 = vunpack.c.h.b16 %v704
        %v3991 = vunpack.c.l.b16 %v705
        %v3992 = vunpack.c.h.b16 %v705
        %v3993 = vunpack.c.l.b16 %v706
        %v3994 = vunpack.c.h.b16 %v706
        %v3995 = vunpack.c.l.b16 %v707
        %v3996 = vunpack.c.h.b16 %v707
        %v3997 = vunpack.c.l.b16 %v708
        %v3998 = vunpack.c.h.b16 %v708
        %v3999 = vunpack.c.l.b16 %v709
        %v4000 = vunpack.c.h.b16 %v709
        %v4001 = vunpack.c.l.b16 %v710
        %v4002 = vunpack.c.h.b16 %v710
        %v4003 = vunpack.c.l.b16 %v711
        %v4004 = vunpack.c.h.b16 %v711
        %v4005 = vunpack.c.l.b16 %v712
        %v4006 = vunpack.c.h.b16 %v712
        %v4007 = vunpack.c.l.b16 %v713
        %v4008 = vunpack.c.h.b16 %v713
        %v4009 = vunpack.c.l.b16 %v714
        %v4010 = vunpack.c.h.b16 %v714
        %v4011 = vunpack.c.l.b16 %v715
        %v4012 = vunpack.c.h.b16 %v715
        %v4013 = vunpack.c.l.b16 %v716
        %v4014 = vunpack.c.h.b16 %v716
        %v4015 = vunpack.c.l.b16 %v717
        %v4016 = vunpack.c.h.b16 %v717
        %v4017 = vunpack.c.l.b16 %v718
        %v4018 = vunpack.c.h.b16 %v718
        %v4019 = vunpack.c.l.b16 %v719
        %v4020 = vunpack.c.h.b16 %v719
        %v4021 = vunpack.c.l.b16 %v720
        %v4022 = vunpack.c.h.b16 %v720
        %v4023 = vunpack.c.l.b16 %v721
        %v4024 = vunpack.c.h.b16 %v721
        %v4025 = vunpack.c.l.b16 %v722
        %v4026 = vunpack.c.h.b16 %v722
        %v4027 = vunpack.c.l.b16 %v723
        %v4028 = vunpack.c.h.b16 %v723
        %v4029 = vunpack.c.l.b16 %v724
        %v4030 = vunpack.c.h.b16 %v724
        %v4031 = vunpack.c.l.b16 %v725
        %v4032 = vunpack.c.h.b16 %v725
        %v4033 = vunpack.c.l.b16 %v726
        %v4034 = vunpack.c.h.b16 %v726
        %v4035 = vunpack.c.l.b16 %v727
        %v4036 = vunpack.c.h.b16 %v727
        %v4037 = vunpack.c.l.b16 %v728
        %v4038 = vunpack.c.h.b16 %v728
        %v4039 = vunpack.c.l.b16 %v729
        %v4040 = vunpack.c.h.b16 %v729
        %v4041 = vunpack.c.l.b16 %v730
        %v4042 = vunpack.c.h.b16 %v730
        %v4043 = vunpack.c.l.b16 %v731
        %v4044 = vunpack.c.h.b16 %v731
        %v4045 = vunpack.c.l.b16 %v732
        %v4046 = vunpack.c.h.b16 %v732
        %v4047 = vunpack.c.l.b16 %v733
        %v4048 = vunpack.c.h.b16 %v733
        %v4049 = vunpack.c.l.b16 %v734
        %v4050 = vunpack.c.h.b16 %v734
        %v4051 = vunpack.c.l.b16 %v735
        %v4052 = vunpack.c.h.b16 %v735
        %v4053 = vunpack.c.l.b16 %v736
        %v4054 = vunpack.c.h.b16 %v736
        %v4055 = vunpack.c.l.b16 %v737
        %v4056 = vunpack.c.h.b16 %v737
        %v4057 = vunpack.c.l.b16 %v738
        %v4058 = vunpack.c.h.b16 %v738
        %v4059 = vunpack.c.l.b16 %v739
        %v4060 = vunpack.c.h.b16 %v739
        %v4061 = vunpack.c.l.b16 %v740
        %v4062 = vunpack.c.h.b16 %v740
        %v4063 = vunpack.c.l.b16 %v741
        %v4064 = vunpack.c.h.b16 %v741
        %v4065 = vunpack.c.l.b16 %v742
        %v4066 = vunpack.c.h.b16 %v742
        %v4067 = vunpack.c.l.b16 %v743
        %v4068 = vunpack.c.h.b16 %v743
        %v4069 = vunpack.c.l.b16 %v744
        %v4070 = vunpack.c.h.b16 %v744
        %v4071 = vunpack.c.l.b16 %v745
        %v4072 = vunpack.c.h.b16 %v745
        %v4073 = vunpack.c.l.b16 %v746
        %v4074 = vunpack.c.h.b16 %v746
        %v4075 = vunpack.c.l.b16 %v747
        %v4076 = vunpack.c.h.b16 %v747
        %v4077 = vunpack.c.l.b16 %v748
        %v4078 = vunpack.c.h.b16 %v748
        %v4079 = vunpack.c.l.b16 %v749
        %v4080 = vunpack.c.h.b16 %v749
        %v4081 = vunpack.c.l.b16 %v750
        %v4082 = vunpack.c.h.b16 %v750
        %v4083 = vunpack.c.l.b16 %v751
        %v4084 = vunpack.c.h.b16 %v751
        %v4085 = vunpack.c.l.b16 %v752
        %v4086 = vunpack.c.h.b16 %v752
        %v4087 = vunpack.c.l.b16 %v753
        %v4088 = vunpack.c.h.b16 %v753
        %v4089 = vunpack.c.l.b16 %v754
        %v4090 = vunpack.c.h.b16 %v754
        %v4091 = vunpack.c.l.b16 %v755
        %v4092 = vunpack.c.h.b16 %v755
        %v4093 = vunpack.c.l.b16 %v756
        %v4094 = vunpack.c.h.b16 %v756
        %v4095 = vunpack.c.l.b16 %v757
        %v4096 = vunpack.c.h.b16 %v757
        %v4097 = vunpack.c.l.b16 %v758
        %v4098 = vunpack.c.h.b16 %v758
        %v4099 = vunpack.c.l.b16 %v759
        %v4100 = vunpack.c.h.b16 %v759
        %v4101 = vunpack.c.l.b16 %v760
        %v4102 = vunpack.c.h.b16 %v760
        %v4103 = vunpack.c.l.b16 %v761
        %v4104 = vunpack.c.h.b16 %v761
        %v4105 = vunpack.c.l.b16 %v762
        %v4106 = vunpack.c.h.b16 %v762
        %v4107 = vunpack.c.l.b16 %v763
        %v4108 = vunpack.c.h.b16 %v763
        %v4109 = vunpack.c.l.b16 %v764
        %v4110 = vunpack.c.h.b16 %v764
        %v4111 = vunpack.c.l.b16 %v765
        %v4112 = vunpack.c.h.b16 %v765
        %v4113 = vunpack.c.l.b16 %v766
        %v4114 = vunpack.c.h.b16 %v766
        %v4115 = vunpack.c.l.b16 %v767
        %v4116 = vunpack.c.h.b16 %v767
        %v4117 = vunpack.c.l.b16 %v768
        %v4118 = vunpack.c.h.b16 %v768
        %v4119 = vunpack.c.l.b16 %v769
        %v4120 = vunpack.c.h.b16 %v769
        %v4121 = vunpack.c.l.b16 %v770
        %v4122 = vunpack.c.h.b16 %v770
        %v4123 = vunpack.c.l.b16 %v771
        %v4124 = vunpack.c.h.b16 %v771
        %v4125 = vunpack.c.l.b16 %v772
        %v4126 = vunpack.c.h.b16 %v772
        %v4127 = vunpack.c.l.b16 %v773
        %v4128 = vunpack.c.h.b16 %v773
        %v4129 = vunpack.c.l.b16 %v774
        %v4130 = vunpack.c.h.b16 %v774
        %v4131 = vunpack.c.l.b16 %v775
        %v4132 = vunpack.c.h.b16 %v775
        %v4133 = vunpack.c.l.b16 %v776
        %v4134 = vunpack.c.h.b16 %v776
        %v4135 = vunpack.c.l.b16 %v777
        %v4136 = vunpack.c.h.b16 %v777
        %v4137 = vunpack.c.l.b16 %v778
        %v4138 = vunpack.c.h.b16 %v778
        %v4139 = vunpack.c.l.b16 %v779
        %v4140 = vunpack.c.h.b16 %v779
        %v4141 = vunpack.c.l.b16 %v780
        %v4142 = vunpack.c.h.b16 %v780
        %v4143 = vunpack.c.l.b16 %v781
        %v4144 = vunpack.c.h.b16 %v781
        %v4145 = vunpack.c.l.b16 %v782
        %v4146 = vunpack.c.h.b16 %v782
        %v4147 = vunpack.c.l.b16 %v783
        %v4148 = vunpack.c.h.b16 %v783
        %v4149 = vunpack.c.l.b16 %v784
        %v4150 = vunpack.c.h.b16 %v784
        %v4151 = vunpack.c.l.b16 %v785
        %v4152 = vunpack.c.h.b16 %v785
        %v4153 = vunpack.c.l.b16 %v786
        %v4154 = vunpack.c.h.b16 %v786
        %v4155 = vunpack.c.l.b16 %v787
        %v4156 = vunpack.c.h.b16 %v787
        %v4157 = vunpack.c.l.b16 %v788
        %v4158 = vunpack.c.h.b16 %v788
        %v4159 = vunpack.c.l.b16 %v789
        %v4160 = vunpack.c.h.b16 %v789
        %v4161 = vunpack.c.l.b16 %v790
        %v4162 = vunpack.c.h.b16 %v790
        %v4163 = vunpack.c.l.b16 %v791
        %v4164 = vunpack.c.h.b16 %v791
        %v4165 = vunpack.c.l.b16 %v792
        %v4166 = vunpack.c.h.b16 %v792
        %v4167 = vunpack.c.l.b16 %v793
        %v4168 = vunpack.c.h.b16 %v793
        %v4169 = vunpack.c.l.b16 %v794
        %v4170 = vunpack.c.h.b16 %v794
        %v4171 = vunpack.c.l.b16 %v795
        %v4172 = vunpack.c.h.b16 %v795
        %v4173 = vunpack.c.l.b16 %v796
        %v4174 = vunpack.c.h.b16 %v796
        %v4175 = vunpack.c.l.b16 %v797
        %v4176 = vunpack.c.h.b16 %v797
        %v4177 = vunpack.c.l.b16 %v798
        %v4178 = vunpack.c.h.b16 %v798
        %v4179 = vunpack.c.l.b16 %v799
        %v4180 = vunpack.c.h.b16 %v799
        %v4181 = vunpack.c.l.b16 %v800
        %v4182 = vunpack.c.h.b16 %v800
        %v4183 = vunpack.c.l.b16 %v801
        %v4184 = vunpack.c.h.b16 %v801
        %v4185 = vunpack.c.l.b16 %v802
        %v4186 = vunpack.c.h.b16 %v802
        %v4187 = vunpack.c.l.b16 %v803
        %v4188 = vunpack.c.h.b16 %v803
        %v4189 = vunpack.c.l.b16 %v804
        %v4190 = vunpack.c.h.b16 %v804
        %v4191 = vunpack.c.l.b16 %v805
        %v4192 = vunpack.c.h.b16 %v805
        %v4193 = vunpack.c.l.b16 %v806
        %v4194 = vunpack.c.h.b16 %v806
        %v4195 = vunpack.c.l.b16 %v807
        %v4196 = vunpack.c.h.b16 %v807
        %v4197 = vunpack.c.l.b16 %v808
        %v4198 = vunpack.c.h.b16 %v808
        %v4199 = vunpack.c.l.b16 %v809
        %v4200 = vunpack.c.h.b16 %v809
        %v4201 = vunpack.c.l.b16 %v810
        %v4202 = vunpack.c.h.b16 %v810
        %v4203 = vunpack.c.l.b16 %v811
        %v4204 = vunpack.c.h.b16 %v811
        %v4205 = vunpack.c.l.b16 %v812
        %v4206 = vunpack.c.h.b16 %v812
        %v4207 = vunpack.c.l.b16 %v813
        %v4208 = vunpack.c.h.b16 %v813
        %v4209 = vunpack.c.l.b16 %v814
        %v4210 = vunpack.c.h.b16 %v814
        %v4211 = vunpack.c.l.b16 %v815
        %v4212 = vunpack.c.h.b16 %v815
        %v4213 = vunpack.c.l.b16 %v816
        %v4214 = vunpack.c.h.b16 %v816
        %v4215 = vunpack.c.l.b16 %v817
        %v4216 = vunpack.c.h.b16 %v817
        %v4217 = vunpack.c.l.b16 %v818
        %v4218 = vunpack.c.h.b16 %v818
        %v4219 = vunpack.c.l.b16 %v819
        %v4220 = vunpack.c.h.b16 %v819
        %v4221 = vunpack.c.l.b16 %v820
        %v4222 = vunpack.c.h.b16 %v820
        %v4223 = vunpack.c.l.b16 %v821
        %v4224 = vunpack.c.h.b16 %v821
        %v4225 = vunpack.c.l.b16 %v822
        %v4226 = vunpack.c.h.b16 %v822
        %v4227 = vunpack.c.l.b16 %v823
        %v4228 = vunpack.c.h.b16 %v823
        %v4229 = vunpack.c.l.b16 %v824
        %v4230 = vunpack.c.h.b16 %v824
        %v4231 = vunpack.c.l.b16 %v825
        %v4232 = vunpack.c.h.b16 %v825
        %v4233 = vunpack.c.l.b16 %v826
        %v4234 = vunpack.c.h.b16 %v826
        %v4235 = vunpack.c.l.b16 %v827
        %v4236 = vunpack.c.h.b16 %v827
        %v4237 = vunpack.c.l.b16 %v828
        %v4238 = vunpack.c.h.b16 %v828
        %v4239 = vunpack.c.l.b16 %v829
        %v4240 = vunpack.c.h.b16 %v829
        %v4241 = vunpack.c.l.b16 %v830
        %v4242 = vunpack.c.h.b16 %v830
        %v4243 = vunpack.c.l.b16 %v831
        %v4244 = vunpack.c.h.b16 %v831
        %v4245 = vunpack.c.l.b16 %v832
        %v4246 = vunpack.c.h.b16 %v832
        %v4247 = vunpack.c.l.b16 %v833
        %v4248 = vunpack.c.h.b16 %v833
        %v4249 = vunpack.c.l.b16 %v834
        %v4250 = vunpack.c.h.b16 %v834
        %v4251 = vunpack.c.l.b16 %v835
        %v4252 = vunpack.c.h.b16 %v835
        %v4253 = vunpack.c.l.b16 %v836
        %v4254 = vunpack.c.h.b16 %v836
        %v4255 = vunpack.c.l.b16 %v837
        %v4256 = vunpack.c.h.b16 %v837
        %v4257 = vunpack.c.l.b16 %v838
        %v4258 = vunpack.c.h.b16 %v838
        %v4259 = vunpack.c.l.b16 %v839
        %v4260 = vunpack.c.h.b16 %v839
        %v4261 = vunpack.c.l.b16 %v840
        %v4262 = vunpack.c.h.b16 %v840
        %v4263 = vunpack.c.l.b16 %v841
        %v4264 = vunpack.c.h.b16 %v841
        %v4265 = vunpack.c.l.b16 %v842
        %v4266 = vunpack.c.h.b16 %v842
        %v4267 = vunpack.c.l.b16 %v843
        %v4268 = vunpack.c.h.b16 %v843
        %v4269 = vunpack.c.l.b16 %v844
        %v4270 = vunpack.c.h.b16 %v844
        %v4271 = vunpack.c.l.b16 %v845
        %v4272 = vunpack.c.h.b16 %v845
        %v4273 = vunpack.c.l.b16 %v846
        %v4274 = vunpack.c.h.b16 %v846
        %v4275 = vunpack.c.l.b16 %v847
        %v4276 = vunpack.c.h.b16 %v847
        %v4277 = vunpack.c.l.b16 %v848
        %v4278 = vunpack.c.h.b16 %v848
        %v4279 = vunpack.c.l.b16 %v849
        %v4280 = vunpack.c.h.b16 %v849
        %v4281 = vunpack.c.l.b16 %v850
        %v4282 = vunpack.c.h.b16 %v850
        %v4283 = vunpack.c.l.b16 %v851
        %v4284 = vunpack.c.h.b16 %v851
        %v4285 = vunpack.c.l.b16 %v852
        %v4286 = vunpack.c.h.b16 %v852
        %v4287 = vunpack.c.l.b16 %v853
        %v4288 = vunpack.c.h.b16 %v853
        %v4289 = vunpack.c.l.b16 %v854
        %v4290 = vunpack.c.h.b16 %v854
        %v4291 = vunpack.c.l.b16 %v855
        %v4292 = vunpack.c.h.b16 %v855
        %v4293 = vunpack.c.l.b16 %v856
        %v4294 = vunpack.c.h.b16 %v856
        %v4295 = vunpack.c.l.b16 %v857
        %v4296 = vunpack.c.h.b16 %v857
        %v4297 = vunpack.c.l.b16 %v858
        %v4298 = vunpack.c.h.b16 %v858
        %v4299 = vunpack.c.l.b16 %v859
        %v4300 = vunpack.c.h.b16 %v859
        %v4301 = vunpack.c.l.b16 %v860
        %v4302 = vunpack.c.h.b16 %v860
        %v4303 = vunpack.c.l.b16 %v861
        %v4304 = vunpack.c.h.b16 %v861
        %v4305 = vunpack.c.l.b16 %v862
        %v4306 = vunpack.c.h.b16 %v862
        %v4307 = vunpack.c.l.b16 %v863
        %v4308 = vunpack.c.h.b16 %v863
        %v4309 = vunpack.c.l.b16 %v864
        %v4310 = vunpack.c.h.b16 %v864
        %v4311 = vunpack.c.l.b16 %v865
        %v4312 = vunpack.c.h.b16 %v865
        %v4313 = vunpack.c.l.b16 %v866
        %v4314 = vunpack.c.h.b16 %v866
        %v4315 = vunpack.c.l.b16 %v867
        %v4316 = vunpack.c.h.b16 %v867
        %v4317 = vunpack.c.l.b16 %v868
        %v4318 = vunpack.c.h.b16 %v868
        %v4319 = vunpack.c.l.b16 %v869
        %v4320 = vunpack.c.h.b16 %v869
        %v4321 = vunpack.c.l.b16 %v870
        %v4322 = vunpack.c.h.b16 %v870
        %v4323 = vunpack.c.l.b16 %v871
        %v4324 = vunpack.c.h.b16 %v871
        %v4325 = vunpack.c.l.b16 %v872
        %v4326 = vunpack.c.h.b16 %v872
        %v4327 = vunpack.c.l.b16 %v873
        %v4328 = vunpack.c.h.b16 %v873
        %v4329 = vunpack.c.l.b16 %v874
        %v4330 = vunpack.c.h.b16 %v874
        %v4331 = vunpack.c.l.b16 %v875
        %v4332 = vunpack.c.h.b16 %v875
        %v4333 = vunpack.c.l.b16 %v876
        %v4334 = vunpack.c.h.b16 %v876
        %v4335 = vunpack.c.l.b16 %v877
        %v4336 = vunpack.c.h.b16 %v877
        %v4337 = vunpack.c.l.b16 %v878
        %v4338 = vunpack.c.h.b16 %v878
        %v4339 = vunpack.c.l.b16 %v879
        %v4340 = vunpack.c.h.b16 %v879
        %v4341 = vunpack.c.l.b16 %v880
        %v4342 = vunpack.c.h.b16 %v880
        %v4343 = vunpack.c.l.b16 %v881
        %v4344 = vunpack.c.h.b16 %v881
        %v4345 = vunpack.c.l.b16 %v882
        %v4346 = vunpack.c.h.b16 %v882
        %v4347 = vunpack.c.l.b16 %v883
        %v4348 = vunpack.c.h.b16 %v883
        %v4349 = vunpack.c.l.b16 %v884
        %v4350 = vunpack.c.h.b16 %v884
        %v4351 = vunpack.c.l.b16 %v885
        %v4352 = vunpack.c.h.b16 %v885
        %v4353 = vunpack.c.l.b16 %v886
        %v4354 = vunpack.c.h.b16 %v886
        %v4355 = vunpack.c.l.b16 %v887
        %v4356 = vunpack.c.h.b16 %v887
        %v4357 = vunpack.c.l.b16 %v888
        %v4358 = vunpack.c.h.b16 %v888
        %v4359 = vunpack.c.l.b16 %v889
        %v4360 = vunpack.c.h.b16 %v889
        %v4361 = vunpack.c.l.b16 %v890
        %v4362 = vunpack.c.h.b16 %v890
        %v4363 = vunpack.c.l.b16 %v891
        %v4364 = vunpack.c.h.b16 %v891
        %v4365 = vunpack.c.l.b16 %v892
        %v4366 = vunpack.c.h.b16 %v892
        %v4367 = vunpack.c.l.b16 %v893
        %v4368 = vunpack.c.h.b16 %v893
        %v4369 = vunpack.c.l.b16 %v894
        %v4370 = vunpack.c.h.b16 %v894
        %v4371 = vunpack.c.l.b16 %v895
        %v4372 = vunpack.c.h.b16 %v895
        %v4373 = vunpack.c.l.b16 %v896
        %v4374 = vunpack.c.h.b16 %v896
        %v4375 = vunpack.c.l.b16 %v897
        %v4376 = vunpack.c.h.b16 %v897
        %v4377 = vunpack.c.l.b16 %v898
        %v4378 = vunpack.c.h.b16 %v898
        %v4379 = vunpack.c.l.b16 %v899
        %v4380 = vunpack.c.h.b16 %v899
        %v4381 = vunpack.c.l.b16 %v900
        %v4382 = vunpack.c.h.b16 %v900
        %v4383 = vunpack.c.l.b16 %v901
        %v4384 = vunpack.c.h.b16 %v901
        %v4385 = vunpack.c.l.b16 %v902
        %v4386 = vunpack.c.h.b16 %v902
        %v4387 = vunpack.c.l.b16 %v903
        %v4388 = vunpack.c.h.b16 %v903
        %v4389 = vunpack.c.l.b16 %v904
        %v4390 = vunpack.c.h.b16 %v904
        %v4391 = vunpack.c.l.b16 %v905
        %v4392 = vunpack.c.h.b16 %v905
        %v4393 = vunpack.c.l.b16 %v906
        %v4394 = vunpack.c.h.b16 %v906
        %v4395 = vunpack.c.l.b16 %v907
        %v4396 = vunpack.c.h.b16 %v907
        %v4397 = vunpack.c.l.b16 %v908
        %v4398 = vunpack.c.h.b16 %v908
        %v4399 = vunpack.c.l.b16 %v909
        %v4400 = vunpack.c.h.b16 %v909
        %v4401 = vunpack.c.l.b16 %v910
        %v4402 = vunpack.c.h.b16 %v910
        %v4403 = vunpack.c.l.b16 %v911
        %v4404 = vunpack.c.h.b16 %v911
        %v4405 = vunpack.c.l.b16 %v912
        %v4406 = vunpack.c.h.b16 %v912
        %v4407 = vunpack.c.l.b16 %v913
        %v4408 = vunpack.c.h.b16 %v913
        %v4409 = vunpack.c.l.b16 %v914
        %v4410 = vunpack.c.h.b16 %v914
        %v4411 = vunpack.c.l.b16 %v915
        %v4412 = vunpack.c.h.b16 %v915
        %v4413 = vunpack.c.l.b16 %v916
        %v4414 = vunpack.c.h.b16 %v916
        %v4415 = vunpack.c.l.b16 %v917
        %v4416 = vunpack.c.h.b16 %v917
        %v4417 = vunpack.c.l.b16 %v918
        %v4418 = vunpack.c.h.b16 %v918
        %v4419 = vunpack.c.l.b16 %v919
        %v4420 = vunpack.c.h.b16 %v919
        %v4421 = vunpack.c.l.b16 %v920
        %v4422 = vunpack.c.h.b16 %v920
        %v4423 = vunpack.c.l.b16 %v921
        %v4424 = vunpack.c.h.b16 %v921
        %v4425 = vunpack.c.l.b16 %v922
        %v4426 = vunpack.c.h.b16 %v922
        %v4427 = vunpack.c.l.b16 %v923
        %v4428 = vunpack.c.h.b16 %v923
        %v4429 = vunpack.c.l.b16 %v924
        %v4430 = vunpack.c.h.b16 %v924
        %v4431 = vunpack.c.l.b16 %v925
        %v4432 = vunpack.c.h.b16 %v925
        %v4433 = vunpack.c.l.b16 %v926
        %v4434 = vunpack.c.h.b16 %v926
        %v4435 = vunpack.c.l.b16 %v927
        %v4436 = vunpack.c.h.b16 %v927
        %v4437 = vunpack.c.l.b16 %v928
        %v4438 = vunpack.c.h.b16 %v928
        %v4439 = vunpack.c.l.b16 %v929
        %v4440 = vunpack.c.h.b16 %v929
        %v4441 = vunpack.c.l.b16 %v930
        %v4442 = vunpack.c.h.b16 %v930
        %v4443 = vunpack.c.l.b16 %v931
        %v4444 = vunpack.c.h.b16 %v931
        %v4445 = vunpack.c.l.b16 %v932
        %v4446 = vunpack.c.h.b16 %v932
        %v4447 = vunpack.c.l.b16 %v933
        %v4448 = vunpack.c.h.b16 %v933
        %v4449 = vunpack.c.l.b16 %v934
        %v4450 = vunpack.c.h.b16 %v934
        %v4451 = vunpack.c.l.b16 %v935
        %v4452 = vunpack.c.h.b16 %v935
        %v4453 = vunpack.c.l.b16 %v936
        %v4454 = vunpack.c.h.b16 %v936
        %v4455 = vunpack.c.l.b16 %v937
        %v4456 = vunpack.c.h.b16 %v937
        %v4457 = vunpack.c.l.b16 %v938
        %v4458 = vunpack.c.h.b16 %v938
        %v4459 = vunpack.c.l.b16 %v939
        %v4460 = vunpack.c.h.b16 %v939
        %v4461 = vunpack.c.l.b16 %v940
        %v4462 = vunpack.c.h.b16 %v940
        %v4463 = vunpack.c.l.b16 %v941
        %v4464 = vunpack.c.h.b16 %v941
        %v4465 = vunpack.c.l.b16 %v942
        %v4466 = vunpack.c.h.b16 %v942
        %v4467 = vunpack.c.l.b16 %v943
        %v4468 = vunpack.c.h.b16 %v943
        %v4469 = vunpack.c.l.b16 %v944
        %v4470 = vunpack.c.h.b16 %v944
        %v4471 = vunpack.c.l.b16 %v945
        %v4472 = vunpack.c.h.b16 %v945
        %v4473 = vunpack.c.l.b16 %v946
        %v4474 = vunpack.c.h.b16 %v946
        %v4475 = vunpack.c.l.b16 %v947
        %v4476 = vunpack.c.h.b16 %v947
        %v4477 = vunpack.c.l.b16 %v948
        %v4478 = vunpack.c.h.b16 %v948
        %v4479 = vunpack.c.l.b16 %v949
        %v4480 = vunpack.c.h.b16 %v949
        %v4481 = vunpack.c.l.b16 %v950
        %v4482 = vunpack.c.h.b16 %v950
        %v4483 = vunpack.c.l.b16 %v951
        %v4484 = vunpack.c.h.b16 %v951
        %v4485 = vunpack.c.l.b16 %v952
        %v4486 = vunpack.c.h.b16 %v952
        %v4487 = vunpack.c.l.b16 %v953
        %v4488 = vunpack.c.h.b16 %v953
        %v4489 = vunpack.c.l.b16 %v954
        %v4490 = vunpack.c.h.b16 %v954
        %v4491 = vunpack.c.l.b16 %v955
        %v4492 = vunpack.c.h.b16 %v955
        %v4493 = vunpack.c.l.b16 %v956
        %v4494 = vunpack.c.h.b16 %v956
        %v4495 = vunpack.c.l.b16 %v957
        %v4496 = vunpack.c.h.b16 %v957
        %v4497 = vunpack.c.l.b16 %v958
        %v4498 = vunpack.c.h.b16 %v958
        %v4499 = vunpack.c.l.b16 %v959
        %v4500 = vunpack.c.h.b16 %v959
        %v4501 = vunpack.c.l.b16 %v960
        %v4502 = vunpack.c.h.b16 %v960
        %v4503 = vunpack.c.l.b16 %v961
        %v4504 = vunpack.c.h.b16 %v961
        %v4505 = vunpack.c.l.b16 %v962
        %v4506 = vunpack.c.h.b16 %v962
        %v4507 = vunpack.c.l.b16 %v963
        %v4508 = vunpack.c.h.b16 %v963
        %v4509 = vunpack.c.l.b16 %v964
        %v4510 = vunpack.c.h.b16 %v964
        %v4511 = vunpack.c.l.b16 %v965
        %v4512 = vunpack.c.h.b16 %v965
        %v4513 = vunpack.c.l.b16 %v966
        %v4514 = vunpack.c.h.b16 %v966
        %v4515 = vunpack.c.l.b16 %v967
        %v4516 = vunpack.c.h.b16 %v967
        %v4517 = vunpack.c.l.b16 %v968
        %v4518 = vunpack.c.h.b16 %v968
        %v4519 = vunpack.c.l.b16 %v969
        %v4520 = vunpack.c.h.b16 %v969
        %v4521 = vunpack.c.l.b16 %v970
        %v4522 = vunpack.c.h.b16 %v970
        %v4523 = vunpack.c.l.b16 %v971
        %v4524 = vunpack.c.h.b16 %v971
        %v4525 = vunpack.c.l.b16 %v972
        %v4526 = vunpack.c.h.b16 %v972
        %v4527 = vunpack.c.l.b16 %v973
        %v4528 = vunpack.c.h.b16 %v973
        %v4529 = vunpack.c.l.b16 %v974
        %v4530 = vunpack.c.h.b16 %v974
        %v4531 = vunpack.c.l.b16 %v975
        %v4532 = vunpack.c.h.b16 %v975
        %v4533 = vunpack.c.l.b16 %v976
        %v4534 = vunpack.c.h.b16 %v976
        %v4535 = vunpack.c.l.b16 %v977
        %v4536 = vunpack.c.h.b16 %v977
        %v4537 = vunpack.c.l.b16 %v978
        %v4538 = vunpack.c.h.b16 %v978
        %v4539 = vunpack.c.l.b16 %v979
        %v4540 = vunpack.c.h.b16 %v979
        %v4541 = vunpack.c.l.b16 %v980
        %v4542 = vunpack.c.h.b16 %v980
        %v4543 = vunpack.c.l.b16 %v981
        %v4544 = vunpack.c.h.b16 %v981
        %v4545 = vunpack.c.l.b16 %v982
        %v4546 = vunpack.c.h.b16 %v982
        %v4547 = vunpack.c.l.b16 %v983
        %v4548 = vunpack.c.h.b16 %v983
        %v4549 = vunpack.c.l.b16 %v984
        %v4550 = vunpack.c.h.b16 %v984
        %v4551 = vunpack.c.l.b16 %v985
        %v4552 = vunpack.c.h.b16 %v985
        %v4553 = vunpack.c.l.b16 %v986
        %v4554 = vunpack.c.h.b16 %v986
        %v4555 = vunpack.c.l.b16 %v987
        %v4556 = vunpack.c.h.b16 %v987
        %v4557 = vunpack.c.l.b16 %v988
        %v4558 = vunpack.c.h.b16 %v988
        %v4559 = vunpack.c.l.b16 %v989
        %v4560 = vunpack.c.h.b16 %v989
        %v4561 = vunpack.c.l.b16 %v990
        %v4562 = vunpack.c.h.b16 %v990
        %v4563 = vunpack.c.l.b16 %v991
        %v4564 = vunpack.c.h.b16 %v991
        %v4565 = vunpack.c.l.b16 %v992
        %v4566 = vunpack.c.h.b16 %v992
        %v4567 = vunpack.c.l.b16 %v993
        %v4568 = vunpack.c.h.b16 %v993
        %v4569 = vunpack.c.l.b16 %v994
        %v4570 = vunpack.c.h.b16 %v994
        %v4571 = vunpack.c.l.b16 %v995
        %v4572 = vunpack.c.h.b16 %v995
        %v4573 = vunpack.c.l.b16 %v996
        %v4574 = vunpack.c.h.b16 %v996
        %v4575 = vunpack.c.l.b16 %v997
        %v4576 = vunpack.c.h.b16 %v997
        %v4577 = vunpack.c.l.b16 %v998
        %v4578 = vunpack.c.h.b16 %v998
        %v4579 = vunpack.c.l.b16 %v999
        %v4580 = vunpack.c.h.b16 %v999
        %v4581 = vunpack.c.l.b16 %v1000
        %v4582 = vunpack.c.h.b16 %v1000
        %v4583 = vunpack.c.l.b16 %v1001
        %v4584 = vunpack.c.h.b16 %v1001
        %v4585 = vunpack.c.l.b16 %v1002
        %v4586 = vunpack.c.h.b16 %v1002
        %v4587 = vunpack.c.l.b16 %v1003
        %v4588 = vunpack.c.h.b16 %v1003
        %v4589 = vunpack.c.l.b16 %v1004
        %v4590 = vunpack.c.h.b16 %v1004
        %v4591 = vunpack.c.l.b16 %v1005
        %v4592 = vunpack.c.h.b16 %v1005
        %v4593 = vunpack.c.l.b16 %v1006
        %v4594 = vunpack.c.h.b16 %v1006
        %v4595 = vunpack.c.l.b16 %v1007
        %v4596 = vunpack.c.h.b16 %v1007
        %v4597 = vunpack.c.l.b16 %v1008
        %v4598 = vunpack.c.h.b16 %v1008
        %v4599 = vunpack.c.l.b16 %v1009
        %v4600 = vunpack.c.h.b16 %v1009
        %v4601 = vunpack.c.l.b16 %v1010
        %v4602 = vunpack.c.h.b16 %v1010
        %v4603 = vunpack.c.l.b16 %v1011
        %v4604 = vunpack.c.h.b16 %v1011
        %v4605 = vunpack.c.l.b16 %v1012
        %v4606 = vunpack.c.h.b16 %v1012
        %v4607 = vunpack.c.l.b16 %v1013
        %v4608 = vunpack.c.h.b16 %v1013
        %v4609 = vunpack.c.l.b16 %v1014
        %v4610 = vunpack.c.h.b16 %v1014
        %v4611 = vunpack.c.l.b16 %v1015
        %v4612 = vunpack.c.h.b16 %v1015
        %v4613 = vunpack.c.l.b16 %v1016
        %v4614 = vunpack.c.h.b16 %v1016
        %v4615 = vunpack.c.l.b16 %v1017
        %v4616 = vunpack.c.h.b16 %v1017
        %v4617 = vunpack.c.l.b16 %v1018
        %v4618 = vunpack.c.h.b16 %v1018
        %v4619 = vunpack.c.l.b16 %v1019
        %v4620 = vunpack.c.h.b16 %v1019
        %v4621 = vunpack.c.l.b16 %v1020
        %v4622 = vunpack.c.h.b16 %v1020
        %v4623 = vunpack.c.l.b16 %v1021
        %v4624 = vunpack.c.h.b16 %v1021
        %v4625 = vunpack.c.l.b16 %v1022
        %v4626 = vunpack.c.h.b16 %v1022
        %v4627 = vunpack.c.l.b16 %v1023
        %v4628 = vunpack.c.h.b16 %v1023
        %v4629 = vunpack.c.l.b16 %v1024
        %v4630 = vunpack.c.h.b16 %v1024
        %v4631 = vunpack.c.l.b16 %v1025
        %v4632 = vunpack.c.h.b16 %v1025
        %v4633 = vunpack.c.l.b16 %v1026
        %v4634 = vunpack.c.h.b16 %v1026
        %v4635 = vunpack.c.l.b16 %v1027
        %v4636 = vunpack.c.h.b16 %v1027
        %v4637 = vunpack.c.l.b16 %v1028
        %v4638 = vunpack.c.h.b16 %v1028
        %v4639 = vunpack.c.l.b16 %v1029
        %v4640 = vunpack.c.h.b16 %v1029
        %v4641 = vunpack.c.l.b16 %v1030
        %v4642 = vunpack.c.h.b16 %v1030
        %v4643 = vunpack.c.l.b16 %v1031
        %v4644 = vunpack.c.h.b16 %v1031
        %v4645 = vunpack.c.l.b16 %v1032
        %v4646 = vunpack.c.h.b16 %v1032
        %v4647 = vunpack.c.l.b16 %v1033
        %v4648 = vunpack.c.h.b16 %v1033
        %v4649 = vunpack.c.l.b16 %v1034
        %v4650 = vunpack.c.h.b16 %v1034
        %v4651 = vunpack.c.l.b16 %v1035
        %v4652 = vunpack.c.h.b16 %v1035
        %v4653 = vunpack.c.l.b16 %v1036
        %v4654 = vunpack.c.h.b16 %v1036
        %v4655 = vunpack.c.l.b16 %v1037
        %v4656 = vunpack.c.h.b16 %v1037
        %v4657 = vunpack.c.l.b16 %v1038
        %v4658 = vunpack.c.h.b16 %v1038
        %v4659 = vunpack.c.l.b16 %v1039
        %v4660 = vunpack.c.h.b16 %v1039
        %v4661 = vunpack.c.l.b16 %v1040
        %v4662 = vunpack.c.h.b16 %v1040
        %v4663 = vunpack.c.l.b16 %v1041
        %v4664 = vunpack.c.h.b16 %v1041
        %v4665 = vunpack.c.l.b16 %v1042
        %v4666 = vunpack.c.h.b16 %v1042
        %v4667 = vunpack.c.l.b16 %v1043
        %v4668 = vunpack.c.h.b16 %v1043
        %v4669 = vunpack.c.l.b16 %v1044
        %v4670 = vunpack.c.h.b16 %v1044
        %v4671 = vunpack.c.l.b16 %v1045
        %v4672 = vunpack.c.h.b16 %v1045
        %v4673 = vunpack.c.l.b16 %v1046
        %v4674 = vunpack.c.h.b16 %v1046
        %v4675 = vunpack.c.l.b16 %v1047
        %v4676 = vunpack.c.h.b16 %v1047
        %v4677 = vunpack.c.l.b16 %v1048
        %v4678 = vunpack.c.h.b16 %v1048
        %v4679 = vunpack.c.l.b16 %v1049
        %v4680 = vunpack.c.h.b16 %v1049
        %v4681 = vunpack.c.l.b16 %v1050
        %v4682 = vunpack.c.h.b16 %v1050
        %v4683 = vunpack.c.l.b16 %v1051
        %v4684 = vunpack.c.h.b16 %v1051
        %v4685 = vunpack.c.l.b16 %v1052
        %v4686 = vunpack.c.h.b16 %v1052
        %v4687 = vunpack.c.l.b16 %v1053
        %v4688 = vunpack.c.h.b16 %v1053
        %v4689 = vunpack.c.l.b16 %v1054
        %v4690 = vunpack.c.h.b16 %v1054
        %v4691 = vunpack.c.l.b16 %v1055
        %v4692 = vunpack.c.h.b16 %v1055
        %v4693 = vunpack.c.l.b16 %v1056
        %v4694 = vunpack.c.h.b16 %v1056
        %v4695 = vunpack.c.l.b16 %v1057
        %v4696 = vunpack.c.h.b16 %v1057
        %v4697 = vunpack.c.l.b16 %v1058
        %v4698 = vunpack.c.h.b16 %v1058
        %v4699 = vunpack.c.l.b16 %v1059
        %v4700 = vunpack.c.h.b16 %v1059
        %v4701 = vunpack.c.l.b16 %v1060
        %v4702 = vunpack.c.h.b16 %v1060
        %v4703 = vunpack.c.l.b16 %v1061
        %v4704 = vunpack.c.h.b16 %v1061
        %v4705 = vunpack.c.l.b16 %v1062
        %v4706 = vunpack.c.h.b16 %v1062
        %v4707 = vunpack.c.l.b16 %v1063
        %v4708 = vunpack.c.h.b16 %v1063
        %v4709 = vunpack.c.l.b16 %v1064
        %v4710 = vunpack.c.h.b16 %v1064
        %v4711 = vunpack.c.l.b16 %v1065
        %v4712 = vunpack.c.h.b16 %v1065
        %v4713 = vunpack.c.l.b16 %v1066
        %v4714 = vunpack.c.h.b16 %v1066
        %v4715 = vunpack.c.l.b16 %v1067
        %v4716 = vunpack.c.h.b16 %v1067
        %v4717 = vunpack.c.l.b16 %v1068
        %v4718 = vunpack.c.h.b16 %v1068
        %v4719 = vunpack.c.l.b16 %v1069
        %v4720 = vunpack.c.h.b16 %v1069
        %v4721 = vunpack.c.l.b16 %v1070
        %v4722 = vunpack.c.h.b16 %v1070
        %v4723 = vunpack.c.l.b16 %v1071
        %v4724 = vunpack.c.h.b16 %v1071
        %v4725 = vunpack.c.l.b16 %v1072
        %v4726 = vunpack.c.h.b16 %v1072
        %v4727 = vunpack.c.l.b16 %v1073
        %v4728 = vunpack.c.h.b16 %v1073
        %v4729 = vunpack.c.l.b16 %v1074
        %v4730 = vunpack.c.h.b16 %v1074
        %v4731 = vunpack.c.l.b16 %v1075
        %v4732 = vunpack.c.h.b16 %v1075
        %v4733 = vunpack.c.l.b16 %v1076
        %v4734 = vunpack.c.h.b16 %v1076
        %v4735 = vunpack.c.l.b16 %v1077
        %v4736 = vunpack.c.h.b16 %v1077
        %v4737 = vunpack.c.l.b16 %v1078
        %v4738 = vunpack.c.h.b16 %v1078
        %v4739 = vunpack.c.l.b16 %v1079
        %v4740 = vunpack.c.h.b16 %v1079
        %v4741 = vunpack.c.l.b16 %v1080
        %v4742 = vunpack.c.h.b16 %v1080
        %v4743 = vunpack.c.l.b16 %v1081
        %v4744 = vunpack.c.h.b16 %v1081
        %v4745 = vunpack.c.l.b16 %v1082
        %v4746 = vunpack.c.h.b16 %v1082
        %v4747 = vunpack.c.l.b16 %v1083
        %v4748 = vunpack.c.h.b16 %v1083
        %v4749 = vunpack.c.l.b16 %v1084
        %v4750 = vunpack.c.h.b16 %v1084
        %v4751 = vunpack.c.l.b16 %v1085
        %v4752 = vunpack.c.h.b16 %v1085
        %v4753 = vunpack.c.l.b16 %v1086
        %v4754 = vunpack.c.h.b16 %v1086
        %v4755 = vunpack.c.l.b16 %v1087
        %v4756 = vunpack.c.h.b16 %v1087
        %v4757 = vunpack.c.l.b16 %v1088
        %v4758 = vunpack.c.h.b16 %v1088
        %v4759 = vunpack.c.l.b16 %v1089
        %v4760 = vunpack.c.h.b16 %v1089
        %v4761 = vunpack.c.l.b16 %v1090
        %v4762 = vunpack.c.h.b16 %v1090
        %v4763 = vunpack.c.l.b16 %v1091
        %v4764 = vunpack.c.h.b16 %v1091
        %v4765 = vunpack.c.l.b16 %v1092
        %v4766 = vunpack.c.h.b16 %v1092
        %v4767 = vunpack.c.l.b16 %v1093
        %v4768 = vunpack.c.h.b16 %v1093
        %v4769 = vunpack.c.l.b16 %v1094
        %v4770 = vunpack.c.h.b16 %v1094
        %v4771 = vunpack.c.l.b16 %v1095
        %v4772 = vunpack.c.h.b16 %v1095
        %v4773 = vunpack.c.l.b16 %v1096
        %v4774 = vunpack.c.h.b16 %v1096
        %v4775 = vunpack.c.l.b16 %v1097
        %v4776 = vunpack.c.h.b16 %v1097
        %v4777 = vunpack.c.l.b16 %v1098
        %v4778 = vunpack.c.h.b16 %v1098
        %v4779 = vunpack.c.l.b16 %v1099
        %v4780 = vunpack.c.h.b16 %v1099
        %v4781 = vunpack.c.l.b16 %v1100
        %v4782 = vunpack.c.h.b16 %v1100
        %v4783 = vunpack.c.l.b16 %v1101
        %v4784 = vunpack.c.h.b16 %v1101
        %v4785 = vunpack.c.l.b16 %v1102
        %v4786 = vunpack.c.h.b16 %v1102
        %v4787 = vunpack.c.l.b16 %v1103
        %v4788 = vunpack.c.h.b16 %v1103
        %v4789 = vunpack.c.l.b16 %v1104
        %v4790 = vunpack.c.h.b16 %v1104
        %v4791 = vunpack.c.l.b16 %v1105
        %v4792 = vunpack.c.h.b16 %v1105
        %v4793 = vunpack.c.l.b16 %v1106
        %v4794 = vunpack.c.h.b16 %v1106
        %v4795 = vunpack.c.l.b16 %v1107
        %v4796 = vunpack.c.h.b16 %v1107
        %v4797 = vunpack.c.l.b16 %v1108
        %v4798 = vunpack.c.h.b16 %v1108
        %v4799 = vunpack.c.l.b16 %v1109
        %v4800 = vunpack.c.h.b16 %v1109
        %v4801 = vunpack.c.l.b16 %v1110
        %v4802 = vunpack.c.h.b16 %v1110
        %v4803 = vunpack.c.l.b16 %v1111
        %v4804 = vunpack.c.h.b16 %v1111
        %v4805 = vunpack.c.l.b16 %v1112
        %v4806 = vunpack.c.h.b16 %v1112
        %v4807 = vunpack.c.l.b16 %v1113
        %v4808 = vunpack.c.h.b16 %v1113
        %v4809 = vunpack.c.l.b16 %v1114
        %v4810 = vunpack.c.h.b16 %v1114
        %v4811 = vunpack.c.l.b16 %v1115
        %v4812 = vunpack.c.h.b16 %v1115
        %v4813 = vunpack.c.l.b16 %v1116
        %v4814 = vunpack.c.h.b16 %v1116
        %v4815 = vunpack.c.l.b16 %v1117
        %v4816 = vunpack.c.h.b16 %v1117
        %v4817 = vunpack.c.l.b16 %v1118
        %v4818 = vunpack.c.h.b16 %v1118
        %v4819 = vunpack.c.l.b16 %v1119
        %v4820 = vunpack.c.h.b16 %v1119
        %v4821 = vunpack.c.l.b16 %v1120
        %v4822 = vunpack.c.h.b16 %v1120
        %v4823 = vunpack.c.l.b16 %v1121
        %v4824 = vunpack.c.h.b16 %v1121
        %v4825 = vunpack.c.l.b16 %v1122
        %v4826 = vunpack.c.h.b16 %v1122
        %v4827 = vunpack.c.l.b16 %v1123
        %v4828 = vunpack.c.h.b16 %v1123
        %v4829 = vunpack.c.l.b16 %v1124
        %v4830 = vunpack.c.h.b16 %v1124
        %v4831 = vunpack.c.l.b16 %v1125
        %v4832 = vunpack.c.h.b16 %v1125
        %v4833 = vunpack.c.l.b16 %v1126
        %v4834 = vunpack.c.h.b16 %v1126
        %v4835 = vunpack.c.l.b16 %v1127
        %v4836 = vunpack.c.h.b16 %v1127
        %v4837 = vunpack.c.l.b16 %v1128
        %v4838 = vunpack.c.h.b16 %v1128
        %v4839 = vunpack.c.l.b16 %v1129
        %v4840 = vunpack.c.h.b16 %v1129
        %v4841 = vunpack.c.l.b16 %v1130
        %v4842 = vunpack.c.h.b16 %v1130
        %v4843 = vunpack.c.l.b16 %v1131
        %v4844 = vunpack.c.h.b16 %v1131
        %v4845 = vunpack.c.l.b16 %v1132
        %v4846 = vunpack.c.h.b16 %v1132
        %v4847 = vunpack.c.l.b16 %v1133
        %v4848 = vunpack.c.h.b16 %v1133
        %v4849 = vunpack.c.l.b16 %v1134
        %v4850 = vunpack.c.h.b16 %v1134
        %v4851 = vunpack.c.l.b16 %v1135
        %v4852 = vunpack.c.h.b16 %v1135
        %v4853 = vunpack.c.l.b16 %v1136
        %v4854 = vunpack.c.h.b16 %v1136
        %v4855 = vunpack.c.l.b16 %v1137
        %v4856 = vunpack.c.h.b16 %v1137
        %v4857 = vunpack.c.l.b16 %v1138
        %v4858 = vunpack.c.h.b16 %v1138
        %v4859 = vunpack.c.l.b16 %v1139
        %v4860 = vunpack.c.h.b16 %v1139
        %v4861 = vunpack.c.l.b16 %v1140
        %v4862 = vunpack.c.h.b16 %v1140
        %v4863 = vunpack.c.l.b16 %v1141
        %v4864 = vunpack.c.h.b16 %v1141
        %v4865 = vunpack.c.l.b16 %v1142
        %v4866 = vunpack.c.h.b16 %v1142
        %v4867 = vunpack.c.l.b16 %v1143
        %v4868 = vunpack.c.h.b16 %v1143
        %v4869 = vunpack.c.l.b16 %v1144
        %v4870 = vunpack.c.h.b16 %v1144
        %v4871 = vunpack.c.l.b16 %v1145
        %v4872 = vunpack.c.h.b16 %v1145
        %v4873 = vunpack.c.l.b16 %v1146
        %v4874 = vunpack.c.h.b16 %v1146
        %v4875 = vunpack.c.l.b16 %v1147
        %v4876 = vunpack.c.h.b16 %v1147
        %v4877 = vunpack.c.l.b16 %v1148
        %v4878 = vunpack.c.h.b16 %v1148
        %v4879 = vunpack.c.l.b16 %v1149
        %v4880 = vunpack.c.h.b16 %v1149
        %v4881 = vunpack.c.l.b16 %v1150
        %v4882 = vunpack.c.h.b16 %v1150
        %v4883 = vunpack.c.l.b16 %v1151
        %v4884 = vunpack.c.h.b16 %v1151
        %v4885 = vunpack.c.l.b16 %v1152
        %v4886 = vunpack.c.h.b16 %v1152
        %v4887 = vunpack.c.l.b16 %v1153
        %v4888 = vunpack.c.h.b16 %v1153
        %v4889 = vunpack.c.l.b16 %v1154
        %v4890 = vunpack.c.h.b16 %v1154
        %v4891 = vunpack.c.l.b16 %v1155
        %v4892 = vunpack.c.h.b16 %v1155
        %v4893 = vunpack.c.l.b16 %v1156
        %v4894 = vunpack.c.h.b16 %v1156
        %v4895 = vunpack.c.l.b16 %v1157
        %v4896 = vunpack.c.h.b16 %v1157
        %v4897 = vunpack.c.l.b16 %v1158
        %v4898 = vunpack.c.h.b16 %v1158
        %v4899 = vunpack.c.l.b16 %v1159
        %v4900 = vunpack.c.h.b16 %v1159
        %v4901 = vunpack.c.l.b16 %v1160
        %v4902 = vunpack.c.h.b16 %v1160
        %v4903 = vunpack.c.l.b16 %v1161
        %v4904 = vunpack.c.h.b16 %v1161
        %v4905 = vunpack.c.l.b16 %v1162
        %v4906 = vunpack.c.h.b16 %v1162
        %v4907 = vunpack.c.l.b16 %v1163
        %v4908 = vunpack.c.h.b16 %v1163
        %v4909 = vunpack.c.l.b16 %v1164
        %v4910 = vunpack.c.h.b16 %v1164
        %v4911 = vunpack.c.l.b16 %v1165
        %v4912 = vunpack.c.h.b16 %v1165
        %v4913 = vunpack.c.l.b16 %v1166
        %v4914 = vunpack.c.h.b16 %v1166
        %v4915 = vunpack.c.l.b16 %v1167
        %v4916 = vunpack.c.h.b16 %v1167
        %v4917 = vunpack.c.l.b16 %v1168
        %v4918 = vunpack.c.h.b16 %v1168
        %v4919 = vunpack.c.l.b16 %v1169
        %v4920 = vunpack.c.h.b16 %v1169
        %v4921 = vunpack.c.l.b16 %v1170
        %v4922 = vunpack.c.h.b16 %v1170
        %v4923 = vunpack.c.l.b16 %v1171
        %v4924 = vunpack.c.h.b16 %v1171
        %v4925 = vunpack.c.l.b16 %v1172
        %v4926 = vunpack.c.h.b16 %v1172
        %v4927 = vunpack.c.l.b16 %v1173
        %v4928 = vunpack.c.h.b16 %v1173
        %v4929 = vunpack.c.l.b16 %v1174
        %v4930 = vunpack.c.h.b16 %v1174
        %v4931 = vunpack.c.l.b16 %v1175
        %v4932 = vunpack.c.h.b16 %v1175
        %v4933 = vunpack.c.l.b16 %v1176
        %v4934 = vunpack.c.h.b16 %v1176
        %v4935 = vunpack.c.l.b16 %v1177
        %v4936 = vunpack.c.h.b16 %v1177
        %v4937 = vunpack.c.l.b16 %v1178
        %v4938 = vunpack.c.h.b16 %v1178
        %v4939 = vunpack.c.l.b16 %v1179
        %v4940 = vunpack.c.h.b16 %v1179
        %v4941 = vunpack.c.l.b16 %v1180
        %v4942 = vunpack.c.h.b16 %v1180
        %v4943 = vunpack.c.l.b16 %v1181
        %v4944 = vunpack.c.h.b16 %v1181
        %v4945 = vunpack.c.l.b16 %v1182
        %v4946 = vunpack.c.h.b16 %v1182
        %v4947 = vunpack.c.l.b16 %v1183
        %v4948 = vunpack.c.h.b16 %v1183
        %v4949 = vunpack.c.l.b16 %v1184
        %v4950 = vunpack.c.h.b16 %v1184
        %v4951 = vunpack.c.l.b16 %v1185
        %v4952 = vunpack.c.h.b16 %v1185
        %v4953 = vunpack.c.l.b16 %v1186
        %v4954 = vunpack.c.h.b16 %v1186
        %v4955 = vunpack.c.l.b16 %v1187
        %v4956 = vunpack.c.h.b16 %v1187
        %v4957 = vunpack.c.l.b16 %v1188
        %v4958 = vunpack.c.h.b16 %v1188
        %v4959 = vunpack.c.l.b16 %v1189
        %v4960 = vunpack.c.h.b16 %v1189
        %v4961 = vunpack.c.l.b16 %v1190
        %v4962 = vunpack.c.h.b16 %v1190
        %v4963 = vunpack.c.l.b16 %v1191
        %v4964 = vunpack.c.h.b16 %v1191
        %v4965 = vunpack.c.l.b16 %v1192
        %v4966 = vunpack.c.h.b16 %v1192
        %v4967 = vunpack.c.l.b16 %v1193
        %v4968 = vunpack.c.h.b16 %v1193
        %v4969 = vunpack.c.l.b16 %v1194
        %v4970 = vunpack.c.h.b16 %v1194
        %v4971 = vunpack.c.l.b16 %v1195
        %v4972 = vunpack.c.h.b16 %v1195
        %v4973 = vunpack.c.l.b16 %v1196
        %v4974 = vunpack.c.h.b16 %v1196
        %v4975 = vunpack.c.l.b16 %v1197
        %v4976 = vunpack.c.h.b16 %v1197
        %v4977 = vunpack.c.l.b16 %v1198
        %v4978 = vunpack.c.h.b16 %v1198
        %v4979 = vunpack.c.l.b16 %v1199
        %v4980 = vunpack.c.h.b16 %v1199
        %v4981 = vunpack.c.l.b16 %v1200
        %v4982 = vunpack.c.h.b16 %v1200
        %v4983 = vunpack.c.l.b16 %v1201
        %v4984 = vunpack.c.h.b16 %v1201
        %v4985 = vunpack.c.l.b16 %v1202
        %v4986 = vunpack.c.h.b16 %v1202
        %v4987 = vunpack.c.l.b16 %v1203
        %v4988 = vunpack.c.h.b16 %v1203
        %v4989 = vunpack.c.l.b16 %v1204
        %v4990 = vunpack.c.h.b16 %v1204
        %v4991 = vunpack.c.l.b16 %v1205
        %v4992 = vunpack.c.h.b16 %v1205
        %v4993 = vunpack.c.l.b16 %v1206
        %v4994 = vunpack.c.h.b16 %v1206
        %v4995 = vunpack.c.l.b16 %v1207
        %v4996 = vunpack.c.h.b16 %v1207
        %v4997 = vunpack.c.l.b16 %v1208
        %v4998 = vunpack.c.h.b16 %v1208
        %v4999 = vunpack.c.l.b16 %v1209
        %v5000 = vunpack.c.h.b16 %v1209
        %v5001 = vunpack.c.l.b16 %v1210
        %v5002 = vunpack.c.h.b16 %v1210
        %v5003 = vunpack.c.l.b16 %v1211
        %v5004 = vunpack.c.h.b16 %v1211
        %v5005 = vunpack.c.l.b16 %v1212
        %v5006 = vunpack.c.h.b16 %v1212
        %v5007 = vunpack.c.l.b16 %v1213
        %v5008 = vunpack.c.h.b16 %v1213
        %v5009 = vunpack.c.l.b16 %v1214
        %v5010 = vunpack.c.h.b16 %v1214
        %v5011 = vunpack.c.l.b16 %v1215
        %v5012 = vunpack.c.h.b16 %v1215
        %v5013 = vunpack.c.l.b16 %v1216
        %v5014 = vunpack.c.h.b16 %v1216
        %v5015 = vunpack.c.l.b16 %v1217
        %v5016 = vunpack.c.h.b16 %v1217
        %v5017 = vunpack.c.l.b16 %v1218
        %v5018 = vunpack.c.h.b16 %v1218
        %v5019 = vunpack.c.l.b16 %v1219
        %v5020 = vunpack.c.h.b16 %v1219
        %v5021 = vunpack.c.l.b16 %v1220
        %v5022 = vunpack.c.h.b16 %v1220
        %v5023 = vunpack.c.l.b16 %v1221
        %v5024 = vunpack.c.h.b16 %v1221
        %v5025 = vunpack.c.l.b16 %v1222
        %v5026 = vunpack.c.h.b16 %v1222
        %v5027 = vunpack.c.l.b16 %v1223
        %v5028 = vunpack.c.h.b16 %v1223
        %v5029 = vunpack.c.l.b16 %v1224
        %v5030 = vunpack.c.h.b16 %v1224
        %v5031 = vunpack.c.l.b16 %v1225
        %v5032 = vunpack.c.h.b16 %v1225
        %v5033 = vunpack.c.l.b16 %v1226
        %v5034 = vunpack.c.h.b16 %v1226
        %v5035 = vunpack.c.l.b16 %v1227
        %v5036 = vunpack.c.h.b16 %v1227
        %v5037 = vunpack.c.l.b16 %v1228
        %v5038 = vunpack.c.h.b16 %v1228
        %v5039 = vunpack.c.l.b16 %v1229
        %v5040 = vunpack.c.h.b16 %v1229
        %v5041 = vunpack.c.l.b16 %v1230
        %v5042 = vunpack.c.h.b16 %v1230
        %v5043 = vunpack.c.l.b16 %v1231
        %v5044 = vunpack.c.h.b16 %v1231
        %v5045 = vunpack.c.l.b16 %v1232
        %v5046 = vunpack.c.h.b16 %v1232
        %v5047 = vunpack.c.l.b16 %v1233
        %v5048 = vunpack.c.h.b16 %v1233
        %v5049 = vunpack.c.l.b16 %v1234
        %v5050 = vunpack.c.h.b16 %v1234
        %v5051 = vunpack.c.l.b16 %v1235
        %v5052 = vunpack.c.h.b16 %v1235
        %v5053 = vunpack.c.l.b16 %v1236
        %v5054 = vunpack.c.h.b16 %v1236
        %v5055 = vunpack.c.l.b16 %v1237
        %v5056 = vunpack.c.h.b16 %v1237
        %v5057 = vunpack.c.l.b16 %v1238
        %v5058 = vunpack.c.h.b16 %v1238
        %v5059 = vunpack.c.l.b16 %v1239
        %v5060 = vunpack.c.h.b16 %v1239
        %v5061 = vunpack.c.l.b16 %v1240
        %v5062 = vunpack.c.h.b16 %v1240
        %v5063 = vunpack.c.l.b16 %v1241
        %v5064 = vunpack.c.h.b16 %v1241
        %v5065 = vunpack.c.l.b16 %v1242
        %v5066 = vunpack.c.h.b16 %v1242
        %v5067 = vunpack.c.l.b16 %v1243
        %v5068 = vunpack.c.h.b16 %v1243
        %v5069 = vunpack.c.l.b16 %v1244
        %v5070 = vunpack.c.h.b16 %v1244
        %v5071 = vunpack.c.l.b16 %v1245
        %v5072 = vunpack.c.h.b16 %v1245
        %v5073 = vunpack.c.l.b16 %v1246
        %v5074 = vunpack.c.h.b16 %v1246
        %v5075 = vunpack.c.l.b16 %v1247
        %v5076 = vunpack.c.h.b16 %v1247
        %v5077 = vunpack.c.l.b16 %v1248
        %v5078 = vunpack.c.h.b16 %v1248
        %v5079 = vunpack.c.l.b16 %v1249
        %v5080 = vunpack.c.h.b16 %v1249
        %v5081 = vunpack.c.l.b16 %v1250
        %v5082 = vunpack.c.h.b16 %v1250
        %v5083 = vunpack.c.l.b16 %v1251
        %v5084 = vunpack.c.h.b16 %v1251
        %v5085 = vunpack.c.l.b16 %v1252
        %v5086 = vunpack.c.h.b16 %v1252
        %v5087 = vunpack.c.l.b16 %v1253
        %v5088 = vunpack.c.h.b16 %v1253
        %v5089 = vunpack.c.l.b16 %v1254
        %v5090 = vunpack.c.h.b16 %v1254
        %v5091 = vunpack.c.l.b16 %v1255
        %v5092 = vunpack.c.h.b16 %v1255
        %v5093 = vunpack.c.l.b16 %v1256
        %v5094 = vunpack.c.h.b16 %v1256
        %v5095 = vunpack.c.l.b16 %v1257
        %v5096 = vunpack.c.h.b16 %v1257
        %v5097 = vunpack.c.l.b16 %v1258
        %v5098 = vunpack.c.h.b16 %v1258
        %v5099 = vunpack.c.l.b16 %v1259
        %v5100 = vunpack.c.h.b16 %v1259
        %v5101 = vunpack.c.l.b16 %v1260
        %v5102 = vunpack.c.h.b16 %v1260
        %v5103 = vunpack.c.l.b16 %v1261
        %v5104 = vunpack.c.h.b16 %v1261
        %v5105 = vunpack.c.l.b16 %v1262
        %v5106 = vunpack.c.h.b16 %v1262
        %v5107 = vunpack.c.l.b16 %v1263
        %v5108 = vunpack.c.h.b16 %v1263
        %v5109 = vunpack.c.l.b16 %v1264
        %v5110 = vunpack.c.h.b16 %v1264
        %v5111 = vunpack.c.l.b16 %v1265
        %v5112 = vunpack.c.h.b16 %v1265
        %v5113 = vunpack.c.l.b16 %v1266
        %v5114 = vunpack.c.h.b16 %v1266
        %v5115 = vunpack.c.l.b16 %v1267
        %v5116 = vunpack.c.h.b16 %v1267
        %v5117 = vunpack.c.l.b16 %v1268
        %v5118 = vunpack.c.h.b16 %v1268
        %v5119 = vunpack.c.l.b16 %v1269
        %v5120 = vunpack.c.h.b16 %v1269
        %v5121 = vunpack.c.l.b16 %v1270
        %v5122 = vunpack.c.h.b16 %v1270
        %v5123 = vunpack.c.l.b16 %v1271
        %v5124 = vunpack.c.h.b16 %v1271
        %v5125 = vunpack.c.l.b16 %v1272
        %v5126 = vunpack.c.h.b16 %v1272
        %v5127 = vunpack.c.l.b16 %v1273
        %v5128 = vunpack.c.h.b16 %v1273
        %v5129 = vunpack.c.l.b16 %v1274
        %v5130 = vunpack.c.h.b16 %v1274
        %v5131 = vunpack.c.l.b16 %v1275
        %v5132 = vunpack.c.h.b16 %v1275
        %v5133 = vunpack.c.l.b16 %v1276
        %v5134 = vunpack.c.h.b16 %v1276
        %v5135 = vunpack.c.l.b16 %v1277
        %v5136 = vunpack.c.h.b16 %v1277
        %v5137 = vunpack.c.l.b16 %v1278
        %v5138 = vunpack.c.h.b16 %v1278
        %v5139 = vunpack.c.l.b16 %v1279
        %v5140 = vunpack.c.h.b16 %v1279
        %v5141 = vunpack.c.l.b16 %v1280
        %v5142 = vunpack.c.h.b16 %v1280
        %v5143 = vunpack.c.l.b16 %v1281
        %v5144 = vunpack.c.h.b16 %v1281
        %v5145 = vunpack.c.l.b16 %v1282
        %v5146 = vunpack.c.h.b16 %v1282
        %v5147 = vunpack.c.l.b16 %v1283
        %v5148 = vunpack.c.h.b16 %v1283
        %v5149 = vunpack.c.l.b16 %v1284
        %v5150 = vunpack.c.h.b16 %v1284
        %v5151 = vunpack.c.l.b16 %v1285
        %v5152 = vunpack.c.h.b16 %v1285
        %v5153 = vunpack.c.l.b16 %v1286
        %v5154 = vunpack.c.h.b16 %v1286
        %v5155 = vunpack.c.l.b16 %v1287
        %v5156 = vunpack.c.h.b16 %v1287
        %v5157 = vunpack.c.l.b16 %v1288
        %v5158 = vunpack.c.h.b16 %v1288
        %v5159 = vunpack.c.l.b16 %v1289
        %v5160 = vunpack.c.h.b16 %v1289
        %v5161 = vunpack.c.l.b16 %v1290
        %v5162 = vunpack.c.h.b16 %v1290
        %v5163 = vunpack.c.l.b16 %v1291
        %v5164 = vunpack.c.h.b16 %v1291
        %v5165 = vunpack.c.l.b16 %v1292
        %v5166 = vunpack.c.h.b16 %v1292
        %v5167 = vunpack.c.l.b16 %v1293
        %v5168 = vunpack.c.h.b16 %v1293
        %v5169 = vunpack.c.l.b16 %v1294
        %v5170 = vunpack.c.h.b16 %v1294
        %v5171 = vunpack.c.l.b16 %v1295
        %v5172 = vunpack.c.h.b16 %v1295
        %v5173 = vunpack.c.l.b16 %v1296
        %v5174 = vunpack.c.h.b16 %v1296
        %v5175 = vunpack.c.l.b16 %v1297
        %v5176 = vunpack.c.h.b16 %v1297
        %v5177 = vunpack.c.l.b16 %v1298
        %v5178 = vunpack.c.h.b16 %v1298
        %v5179 = vunpack.c.l.b16 %v1299
        %v5180 = vunpack.c.h.b16 %v1299
        %v5181 = vunpack.c.l.b16 %v1300
        %v5182 = vunpack.c.h.b16 %v1300
        %v5183 = vunpack.c.l.b16 %v1301
        %v5184 = vunpack.c.h.b16 %v1301
        %v5185 = vunpack.c.l.b16 %v1302
        %v5186 = vunpack.c.h.b16 %v1302
        %v5187 = vunpack.c.l.b16 %v1303
        %v5188 = vunpack.c.h.b16 %v1303
        %v5189 = vunpack.c.l.b16 %v1304
        %v5190 = vunpack.c.h.b16 %v1304
        %v5191 = vunpack.c.l.b16 %v1305
        %v5192 = vunpack.c.h.b16 %v1305
        %v5193 = vunpack.c.l.b16 %v1306
        %v5194 = vunpack.c.h.b16 %v1306
        %v5195 = vunpack.c.l.b16 %v1307
        %v5196 = vunpack.c.h.b16 %v1307
        %v5197 = vunpack.c.l.b16 %v1308
        %v5198 = vunpack.c.h.b16 %v1308
        %v5199 = vunpack.c.l.b16 %v1309
        %v5200 = vunpack.c.h.b16 %v1309
        %v5201 = vunpack.c.l.b16 %v1310
        %v5202 = vunpack.c.h.b16 %v1310
        %v5203 = vunpack.c.l.b16 %v1311
        %v5204 = vunpack.c.h.b16 %v1311
        %v5205 = vunpack.c.l.b16 %v1312
        %v5206 = vunpack.c.h.b16 %v1312
        %v5207 = vunpack.c.l.b16 %v1313
        %v5208 = vunpack.c.h.b16 %v1313
        %v5209 = vunpack.c.l.b16 %v1314
        %v5210 = vunpack.c.h.b16 %v1314
        %v5211 = vunpack.c.l.b16 %v1315
        %v5212 = vunpack.c.h.b16 %v1315
        %v5213 = vunpack.c.l.b16 %v1316
        %v5214 = vunpack.c.h.b16 %v1316
        %v5215 = vunpack.c.l.b16 %v1317
        %v5216 = vunpack.c.h.b16 %v1317
        %v5217 = vunpack.c.l.b16 %v1318
        %v5218 = vunpack.c.h.b16 %v1318
        %v5219 = vunpack.c.l.b16 %v1319
        %v5220 = vunpack.c.h.b16 %v1319
        %v5221 = vunpack.c.l.b16 %v1320
        %v5222 = vunpack.c.h.b16 %v1320
        %v5223 = vunpack.c.l.b16 %v1321
        %v5224 = vunpack.c.h.b16 %v1321
        %v5225 = vunpack.c.l.b16 %v1322
        %v5226 = vunpack.c.h.b16 %v1322
        %v5227 = vunpack.c.l.b16 %v1323
        %v5228 = vunpack.c.h.b16 %v1323
        %v5229 = vunpack.c.l.b16 %v1324
        %v5230 = vunpack.c.h.b16 %v1324
        %v5231 = vunpack.c.l.b16 %v1325
        %v5232 = vunpack.c.h.b16 %v1325
        %v5233 = vunpack.c.l.b16 %v1326
        %v5234 = vunpack.c.h.b16 %v1326
        %v5235 = vunpack.c.l.b16 %v1327
        %v5236 = vunpack.c.h.b16 %v1327
        %v5237 = vunpack.c.l.b16 %v1328
        %v5238 = vunpack.c.h.b16 %v1328
        %v5239 = vunpack.c.l.b16 %v1329
        %v5240 = vunpack.c.h.b16 %v1329
        %v5241 = vunpack.c.l.b16 %v1330
        %v5242 = vunpack.c.h.b16 %v1330
        %v5243 = vunpack.c.l.b16 %v1331
        %v5244 = vunpack.c.h.b16 %v1331
        %v5245 = vunpack.c.l.b16 %v1332
        %v5246 = vunpack.c.h.b16 %v1332
        %v5247 = vunpack.c.l.b16 %v1333
        %v5248 = vunpack.c.h.b16 %v1333
        %v5249 = vunpack.c.l.b16 %v1334
        %v5250 = vunpack.c.h.b16 %v1334
        %v5251 = vunpack.c.l.b16 %v1335
        %v5252 = vunpack.c.h.b16 %v1335
        %v5253 = vunpack.c.l.b16 %v1336
        %v5254 = vunpack.c.h.b16 %v1336
        %v5255 = vunpack.c.l.b16 %v1337
        %v5256 = vunpack.c.h.b16 %v1337
        %v5257 = vunpack.c.l.b16 %v1338
        %v5258 = vunpack.c.h.b16 %v1338
        %v5259 = vunpack.c.l.b16 %v1339
        %v5260 = vunpack.c.h.b16 %v1339
        %v5261 = vunpack.c.l.b16 %v1340
        %v5262 = vunpack.c.h.b16 %v1340
        %v5263 = vunpack.c.l.b16 %v1341
        %v5264 = vunpack.c.h.b16 %v1341
        %v5265 = vunpack.c.l.b16 %v1342
        %v5266 = vunpack.c.h.b16 %v1342
        %v5267 = vunpack.c.l.b16 %v1343
        %v5268 = vunpack.c.h.b16 %v1343
        %v5269 = vunpack.c.l.b16 %v1344
        %v5270 = vunpack.c.h.b16 %v1344
        %v5271 = vunpack.c.l.b16 %v1345
        %v5272 = vunpack.c.h.b16 %v1345
        %v5273 = vunpack.c.l.b16 %v1346
        %v5274 = vunpack.c.h.b16 %v1346
        %v5275 = vunpack.c.l.b16 %v1347
        %v5276 = vunpack.c.h.b16 %v1347
        %v5277 = vunpack.c.l.b16 %v1348
        %v5278 = vunpack.c.h.b16 %v1348
        %v5279 = vunpack.c.l.b16 %v1349
        %v5280 = vunpack.c.h.b16 %v1349
        %v5281 = vunpack.c.l.b16 %v1350
        %v5282 = vunpack.c.h.b16 %v1350
        %v5283 = vunpack.c.l.b16 %v1351
        %v5284 = vunpack.c.h.b16 %v1351
        %v5285 = vunpack.c.l.b16 %v1352
        %v5286 = vunpack.c.h.b16 %v1352
        %v5287 = vunpack.c.l.b16 %v1353
        %v5288 = vunpack.c.h.b16 %v1353
        %v5289 = vunpack.c.l.b16 %v1354
        %v5290 = vunpack.c.h.b16 %v1354
        %v5291 = vunpack.c.l.b16 %v1355
        %v5292 = vunpack.c.h.b16 %v1355
        %v5293 = vunpack.c.l.b16 %v1356
        %v5294 = vunpack.c.h.b16 %v1356
        %v5295 = vunpack.c.l.b16 %v1357
        %v5296 = vunpack.c.h.b16 %v1357
        %v5297 = vunpack.c.l.b16 %v1358
        %v5298 = vunpack.c.h.b16 %v1358
        %v5299 = vunpack.c.l.b16 %v1359
        %v5300 = vunpack.c.h.b16 %v1359
        %v5301 = vunpack.c.l.b16 %v1360
        %v5302 = vunpack.c.h.b16 %v1360
        %v5303 = vunpack.c.l.b16 %v1361
        %v5304 = vunpack.c.h.b16 %v1361
        %v5305 = vunpack.c.l.b16 %v1362
        %v5306 = vunpack.c.h.b16 %v1362
        %v5307 = vunpack.c.l.b16 %v1363
        %v5308 = vunpack.c.h.b16 %v1363
        %v5309 = vunpack.c.l.b16 %v1364
        %v5310 = vunpack.c.h.b16 %v1364
        %v5311 = vunpack.c.l.b16 %v1365
        %v5312 = vunpack.c.h.b16 %v1365
        %v5313 = vunpack.c.l.b16 %v1366
        %v5314 = vunpack.c.h.b16 %v1366
        %v5315 = vunpack.c.l.b16 %v1367
        %v5316 = vunpack.c.h.b16 %v1367
        %v5317 = vunpack.c.l.b16 %v1368
        %v5318 = vunpack.c.h.b16 %v1368
        %v5319 = vunpack.c.l.b16 %v1369
        %v5320 = vunpack.c.h.b16 %v1369
        %v5321 = vunpack.c.l.b16 %v1370
        %v5322 = vunpack.c.h.b16 %v1370
        %v5323 = vunpack.c.l.b16 %v1371
        %v5324 = vunpack.c.h.b16 %v1371
        %v5325 = vunpack.c.l.b16 %v1372
        %v5326 = vunpack.c.h.b16 %v1372
        %v5327 = vunpack.c.l.b16 %v1373
        %v5328 = vunpack.c.h.b16 %v1373
        %v5329 = vunpack.c.l.b16 %v1374
        %v5330 = vunpack.c.h.b16 %v1374
        %v5331 = vunpack.c.l.b16 %v1375
        %v5332 = vunpack.c.h.b16 %v1375
        %v5333 = vunpack.c.l.b16 %v1376
        %v5334 = vunpack.c.h.b16 %v1376
        %v5335 = vunpack.c.l.b16 %v1377
        %v5336 = vunpack.c.h.b16 %v1377
        %v5337 = vunpack.c.l.b16 %v1378
        %v5338 = vunpack.c.h.b16 %v1378
        %v5339 = vunpack.c.l.b16 %v1379
        %v5340 = vunpack.c.h.b16 %v1379
        %v5341 = vunpack.c.l.b16 %v1380
        %v5342 = vunpack.c.h.b16 %v1380
        %v5343 = vunpack.c.l.b16 %v1381
        %v5344 = vunpack.c.h.b16 %v1381
        %v5345 = vunpack.c.l.b16 %v1382
        %v5346 = vunpack.c.h.b16 %v1382
        %v5347 = vunpack.c.l.b16 %v1383
        %v5348 = vunpack.c.h.b16 %v1383
        %v5349 = vunpack.c.l.b16 %v1384
        %v5350 = vunpack.c.h.b16 %v1384
        %v5351 = vunpack.c.l.b16 %v1385
        %v5352 = vunpack.c.h.b16 %v1385
        %v5353 = vunpack.c.l.b16 %v1386
        %v5354 = vunpack.c.h.b16 %v1386
        %v5355 = vunpack.c.l.b16 %v1387
        %v5356 = vunpack.c.h.b16 %v1387
        %v5357 = vunpack.c.l.b16 %v1388
        %v5358 = vunpack.c.h.b16 %v1388
        %v5359 = vunpack.c.l.b16 %v1389
        %v5360 = vunpack.c.h.b16 %v1389
        %v5361 = vunpack.c.l.b16 %v1390
        %v5362 = vunpack.c.h.b16 %v1390
        %v5363 = vunpack.c.l.b16 %v1391
        %v5364 = vunpack.c.h.b16 %v1391
        %v5365 = vunpack.c.l.b16 %v1392
        %v5366 = vunpack.c.h.b16 %v1392
        %v5367 = vunpack.c.l.b16 %v1393
        %v5368 = vunpack.c.h.b16 %v1393
        %v5369 = vunpack.c.l.b16 %v1394
        %v5370 = vunpack.c.h.b16 %v1394
        %v5371 = vunpack.c.l.b16 %v1395
        %v5372 = vunpack.c.h.b16 %v1395
        %v5373 = vunpack.c.l.b16 %v1396
        %v5374 = vunpack.c.h.b16 %v1396
        %v5375 = vunpack.c.l.b16 %v1397
        %v5376 = vunpack.c.h.b16 %v1397
        %v5377 = vunpack.c.l.b16 %v1398
        %v5378 = vunpack.c.h.b16 %v1398
        %v5379 = vunpack.c.l.b16 %v1399
        %v5380 = vunpack.c.h.b16 %v1399
        %v5381 = vunpack.c.l.b16 %v1400
        %v5382 = vunpack.c.h.b16 %v1400
        %v5383 = vunpack.c.l.b16 %v1401
        %v5384 = vunpack.c.h.b16 %v1401
        %v5385 = vunpack.c.l.b16 %v1402
        %v5386 = vunpack.c.h.b16 %v1402
        %v5387 = vunpack.c.l.b16 %v1403
        %v5388 = vunpack.c.h.b16 %v1403
        %v5389 = vunpack.c.l.b16 %v1404
        %v5390 = vunpack.c.h.b16 %v1404
        %v5391 = vunpack.c.l.b16 %v1405
        %v5392 = vunpack.c.h.b16 %v1405
        %v5393 = vunpack.c.l.b16 %v1406
        %v5394 = vunpack.c.h.b16 %v1406
        %v5395 = vunpack.c.l.b16 %v1407
        %v5396 = vunpack.c.h.b16 %v1407
        %v5397 = vunpack.c.l.b16 %v1408
        %v5398 = vunpack.c.h.b16 %v1408
        %v5399 = vunpack.c.l.b16 %v1409
        %v5400 = vunpack.c.h.b16 %v1409
        %v5401 = vunpack.c.l.b16 %v1410
        %v5402 = vunpack.c.h.b16 %v1410
        %v5403 = vunpack.c.l.b16 %v1411
        %v5404 = vunpack.c.h.b16 %v1411
        %v5405 = vunpack.c.l.b16 %v1412
        %v5406 = vunpack.c.h.b16 %v1412
        %v5407 = vunpack.c.l.b16 %v1413
        %v5408 = vunpack.c.h.b16 %v1413
        %v5409 = vunpack.c.l.b16 %v1414
        %v5410 = vunpack.c.h.b16 %v1414
        %v5411 = vunpack.c.l.b16 %v1415
        %v5412 = vunpack.c.h.b16 %v1415
        %v5413 = vunpack.c.l.b16 %v1416
        %v5414 = vunpack.c.h.b16 %v1416
        %v5415 = vunpack.c.l.b16 %v1417
        %v5416 = vunpack.c.h.b16 %v1417
        %v5417 = vunpack.c.l.b16 %v1418
        %v5418 = vunpack.c.h.b16 %v1418
        %v5419 = vunpack.c.l.b16 %v1419
        %v5420 = vunpack.c.h.b16 %v1419
        %v5421 = vunpack.c.l.b16 %v1420
        %v5422 = vunpack.c.h.b16 %v1420
        %v5423 = vunpack.c.l.b16 %v1421
        %v5424 = vunpack.c.h.b16 %v1421
        %v5425 = vunpack.c.l.b16 %v1422
        %v5426 = vunpack.c.h.b16 %v1422
        %v5427 = vunpack.c.l.b16 %v1423
        %v5428 = vunpack.c.h.b16 %v1423
        %v5429 = vunpack.c.l.b16 %v1424
        %v5430 = vunpack.c.h.b16 %v1424
        %v5431 = vunpack.c.l.b16 %v1425
        %v5432 = vunpack.c.h.b16 %v1425
        %v5433 = vunpack.c.l.b16 %v1426
        %v5434 = vunpack.c.h.b16 %v1426
        %v5435 = vunpack.c.l.b16 %v1427
        %v5436 = vunpack.c.h.b16 %v1427
        %v5437 = vunpack.c.l.b16 %v1428
        %v5438 = vunpack.c.h.b16 %v1428
        %v5439 = vunpack.c.l.b16 %v1429
        %v5440 = vunpack.c.h.b16 %v1429
        %v5441 = vunpack.c.l.b16 %v1430
        %v5442 = vunpack.c.h.b16 %v1430
        %v5443 = vunpack.c.l.b16 %v1431
        %v5444 = vunpack.c.h.b16 %v1431
        %v5445 = vunpack.c.l.b16 %v1432
        %v5446 = vunpack.c.h.b16 %v1432
        %v5447 = vunpack.c.l.b16 %v1433
        %v5448 = vunpack.c.h.b16 %v1433
        %v5449 = vunpack.c.l.b16 %v1434
        %v5450 = vunpack.c.h.b16 %v1434
        %v5451 = vunpack.c.l.b16 %v1435
        %v5452 = vunpack.c.h.b16 %v1435
        %v5453 = vunpack.c.l.b16 %v1436
        %v5454 = vunpack.c.h.b16 %v1436
        %v5455 = vunpack.c.l.b16 %v1437
        %v5456 = vunpack.c.h.b16 %v1437
        %v5457 = vunpack.c.l.b16 %v1438
        %v5458 = vunpack.c.h.b16 %v1438
        %v5459 = vunpack.c.l.b16 %v1439
        %v5460 = vunpack.c.h.b16 %v1439
        %v5461 = vunpack.c.l.b16 %v1440
        %v5462 = vunpack.c.h.b16 %v1440
        %v5463 = vunpack.c.l.b16 %v1441
        %v5464 = vunpack.c.h.b16 %v1441
        %v5465 = vunpack.c.l.b16 %v1442
        %v5466 = vunpack.c.h.b16 %v1442
        %v5467 = vunpack.c.l.b16 %v1443
        %v5468 = vunpack.c.h.b16 %v1443
        %v5469 = vunpack.c.l.b16 %v1444
        %v5470 = vunpack.c.h.b16 %v1444
        %v5471 = vunpack.c.l.b16 %v1445
        %v5472 = vunpack.c.h.b16 %v1445
        %v5473 = vunpack.c.l.b16 %v1446
        %v5474 = vunpack.c.h.b16 %v1446
        %v5475 = vunpack.c.l.b16 %v1447
        %v5476 = vunpack.c.h.b16 %v1447
        %v5477 = vunpack.c.l.b16 %v1448
        %v5478 = vunpack.c.h.b16 %v1448
        %v5479 = vunpack.c.l.b16 %v1449
        %v5480 = vunpack.c.h.b16 %v1449
        %v5481 = vunpack.c.l.b16 %v1450
        %v5482 = vunpack.c.h.b16 %v1450
        %v5483 = vunpack.c.l.b16 %v1451
        %v5484 = vunpack.c.h.b16 %v1451
        %v5485 = vunpack.c.l.b16 %v1452
        %v5486 = vunpack.c.h.b16 %v1452
        %v5487 = vunpack.c.l.b16 %v1453
        %v5488 = vunpack.c.h.b16 %v1453
        %v5489 = vunpack.c.l.b16 %v1454
        %v5490 = vunpack.c.h.b16 %v1454
        %v5491 = vunpack.c.l.b16 %v1455
        %v5492 = vunpack.c.h.b16 %v1455
        %v5493 = vunpack.c.l.b16 %v1456
        %v5494 = vunpack.c.h.b16 %v1456
        %v5495 = vunpack.c.l.b16 %v1457
        %v5496 = vunpack.c.h.b16 %v1457
        %v5497 = vunpack.c.l.b16 %v1458
        %v5498 = vunpack.c.h.b16 %v1458
        %v5499 = vunpack.c.l.b16 %v1459
        %v5500 = vunpack.c.h.b16 %v1459
        %v5501 = vunpack.c.l.b16 %v1460
        %v5502 = vunpack.c.h.b16 %v1460
        %v5503 = vunpack.c.l.b16 %v1461
        %v5504 = vunpack.c.h.b16 %v1461
        %v5505 = vunpack.c.l.b16 %v1462
        %v5506 = vunpack.c.h.b16 %v1462
        %v5507 = vunpack.c.l.b16 %v1463
        %v5508 = vunpack.c.h.b16 %v1463
        %v5509 = vunpack.c.l.b16 %v1464
        %v5510 = vunpack.c.h.b16 %v1464
        %v5511 = vunpack.c.l.b16 %v1465
        %v5512 = vunpack.c.h.b16 %v1465
        %v5513 = vunpack.c.l.b16 %v1466
        %v5514 = vunpack.c.h.b16 %v1466
        %v5515 = vunpack.c.l.b16 %v1467
        %v5516 = vunpack.c.h.b16 %v1467
        %v5517 = vunpack.c.l.b16 %v1468
        %v5518 = vunpack.c.h.b16 %v1468
        %v5519 = vunpack.c.l.b16 %v1469
        %v5520 = vunpack.c.h.b16 %v1469
        %v5521 = vunpack.c.l.b16 %v1470
        %v5522 = vunpack.c.h.b16 %v1470
        %v5523 = vunpack.c.l.b16 %v1471
        %v5524 = vunpack.c.h.b16 %v1471
        %v5525 = vunpack.c.l.b16 %v1472
        %v5526 = vunpack.c.h.b16 %v1472
        %v5527 = vunpack.c.l.b16 %v1473
        %v5528 = vunpack.c.h.b16 %v1473
        %v5529 = vunpack.c.l.b16 %v1474
        %v5530 = vunpack.c.h.b16 %v1474
        %v5531 = vunpack.c.l.b16 %v1475
        %v5532 = vunpack.c.h.b16 %v1475
        %v5533 = vunpack.c.l.b16 %v1476
        %v5534 = vunpack.c.h.b16 %v1476
        %v5535 = vunpack.c.l.b16 %v1477
        %v5536 = vunpack.c.h.b16 %v1477
        %v5537 = vunpack.c.l.b16 %v1478
        %v5538 = vunpack.c.h.b16 %v1478
        %v5539 = vunpack.c.l.b16 %v1479
        %v5540 = vunpack.c.h.b16 %v1479
        %v5541 = vunpack.c.l.b16 %v1480
        %v5542 = vunpack.c.h.b16 %v1480
        %v5543 = vunpack.c.l.b16 %v1481
        %v5544 = vunpack.c.h.b16 %v1481
        %v5545 = vunpack.c.l.b16 %v1482
        %v5546 = vunpack.c.h.b16 %v1482
        %v5547 = vunpack.c.l.b16 %v1483
        %v5548 = vunpack.c.h.b16 %v1483
        %v5549 = vunpack.c.l.b16 %v1484
        %v5550 = vunpack.c.h.b16 %v1484
        %v5551 = vunpack.c.l.b16 %v1485
        %v5552 = vunpack.c.h.b16 %v1485
        %v5553 = vunpack.c.l.b16 %v1486
        %v5554 = vunpack.c.h.b16 %v1486
        %v5555 = vunpack.c.l.b16 %v1487
        %v5556 = vunpack.c.h.b16 %v1487
        %v5557 = vunpack.c.l.b16 %v1488
        %v5558 = vunpack.c.h.b16 %v1488
        %v5559 = vunpack.c.l.b16 %v1489
        %v5560 = vunpack.c.h.b16 %v1489
        %v5561 = vunpack.c.l.b16 %v1490
        %v5562 = vunpack.c.h.b16 %v1490
        %v5563 = vunpack.c.l.b16 %v1491
        %v5564 = vunpack.c.h.b16 %v1491
        %v5565 = vunpack.c.l.b16 %v1492
        %v5566 = vunpack.c.h.b16 %v1492
        %v5567 = vunpack.c.l.b16 %v1493
        %v5568 = vunpack.c.h.b16 %v1493
        %v5569 = vunpack.c.l.b16 %v1494
        %v5570 = vunpack.c.h.b16 %v1494
        %v5571 = vunpack.c.l.b16 %v1495
        %v5572 = vunpack.c.h.b16 %v1495
        %v5573 = vunpack.c.l.b16 %v1496
        %v5574 = vunpack.c.h.b16 %v1496
        %v5575 = vunpack.c.l.b16 %v1497
        %v5576 = vunpack.c.h.b16 %v1497
        %v5577 = vunpack.c.l.b16 %v1498
        %v5578 = vunpack.c.h.b16 %v1498
        %v5579 = vunpack.c.l.b16 %v1499
        %v5580 = vunpack.c.h.b16 %v1499
        %v5581 = vunpack.c.l.b16 %v1500
        %v5582 = vunpack.c.h.b16 %v1500
        %v5583 = vunpack.c.l.b16 %v1501
        %v5584 = vunpack.c.h.b16 %v1501
        %v5585 = vunpack.c.l.b16 %v1502
        %v5586 = vunpack.c.h.b16 %v1502
        %v5587 = vunpack.c.l.b16 %v1503
        %v5588 = vunpack.c.h.b16 %v1503
        %v5589 = vunpack.c.l.b16 %v1504
        %v5590 = vunpack.c.h.b16 %v1504
        %v5591 = vunpack.c.l.b16 %v1505
        %v5592 = vunpack.c.h.b16 %v1505
        %v5593 = vunpack.c.l.b16 %v1506
        %v5594 = vunpack.c.h.b16 %v1506
        %v5595 = vunpack.c.l.b16 %v1507
        %v5596 = vunpack.c.h.b16 %v1507
        %v5597 = vunpack.c.l.b16 %v1508
        %v5598 = vunpack.c.h.b16 %v1508
        %v5599 = vunpack.c.l.b16 %v1509
        %v5600 = vunpack.c.h.b16 %v1509
        %v5601 = vunpack.c.l.b16 %v1510
        %v5602 = vunpack.c.h.b16 %v1510
        %v5603 = vunpack.c.l.b16 %v1511
        %v5604 = vunpack.c.h.b16 %v1511
        %v5605 = vunpack.c.l.b16 %v1512
        %v5606 = vunpack.c.h.b16 %v1512
        %v5607 = vunpack.c.l.b16 %v1513
        %v5608 = vunpack.c.h.b16 %v1513
        %v5609 = vunpack.c.l.b16 %v1514
        %v5610 = vunpack.c.h.b16 %v1514
        %v5611 = vunpack.c.l.b16 %v1515
        %v5612 = vunpack.c.h.b16 %v1515
        %v5613 = vunpack.c.l.b16 %v1516
        %v5614 = vunpack.c.h.b16 %v1516
        %v5615 = vunpack.c.l.b16 %v1517
        %v5616 = vunpack.c.h.b16 %v1517
        %v5617 = vunpack.c.l.b16 %v1518
        %v5618 = vunpack.c.h.b16 %v1518
        %v5619 = vunpack.c.l.b16 %v1519
        %v5620 = vunpack.c.h.b16 %v1519
        %v5621 = vunpack.c.l.b16 %v1520
        %v5622 = vunpack.c.h.b16 %v1520
        %v5623 = vunpack.c.l.b16 %v1521
        %v5624 = vunpack.c.h.b16 %v1521
        %v5625 = vunpack.c.l.b16 %v1522
        %v5626 = vunpack.c.h.b16 %v1522
        %v5627 = vunpack.c.l.b16 %v1523
        %v5628 = vunpack.c.h.b16 %v1523
        %v5629 = vunpack.c.l.b16 %v1524
        %v5630 = vunpack.c.h.b16 %v1524
        %v5631 = vunpack.c.l.b16 %v1525
        %v5632 = vunpack.c.h.b16 %v1525
        %v5633 = vunpack.c.l.b16 %v1526
        %v5634 = vunpack.c.h.b16 %v1526
        %v5635 = vunpack.c.l.b16 %v1527
        %v5636 = vunpack.c.h.b16 %v1527
        %v5637 = vunpack.c.l.b16 %v1528
        %v5638 = vunpack.c.h.b16 %v1528
        %v5639 = vunpack.c.l.b16 %v1529
        %v5640 = vunpack.c.h.b16 %v1529
        %v5641 = vunpack.c.l.b16 %v1530
        %v5642 = vunpack.c.h.b16 %v1530
        %v5643 = vunpack.c.l.b16 %v1531
        %v5644 = vunpack.c.h.b16 %v1531
        %v5645 = vunpack.c.l.b16 %v1532
        %v5646 = vunpack.c.h.b16 %v1532
        %v5647 = vunpack.c.l.b16 %v1533
        %v5648 = vunpack.c.h.b16 %v1533
        %v5649 = vunpack.c.l.b16 %v1534
        %v5650 = vunpack.c.h.b16 %v1534
        %v5651 = vunpack.c.l.b16 %v1535
        %v5652 = vunpack.c.h.b16 %v1535
        %v5653 = vunpack.c.l.b16 %v1536
        %v5654 = vunpack.c.h.b16 %v1536
        %v5655 = vunpack.c.l.b16 %v1537
        %v5656 = vunpack.c.h.b16 %v1537
        %v5657 = vunpack.c.l.b16 %v1538
        %v5658 = vunpack.c.h.b16 %v1538
        %v5659 = vunpack.c.l.b16 %v1539
        %v5660 = vunpack.c.h.b16 %v1539
        %v5661 = vunpack.c.l.b16 %v1540
        %v5662 = vunpack.c.h.b16 %v1540
        %v5663 = vunpack.c.l.b16 %v1541
        %v5664 = vunpack.c.h.b16 %v1541
        %v5665 = vunpack.c.l.b16 %v1542
        %v5666 = vunpack.c.h.b16 %v1542
        %v5667 = vunpack.c.l.b16 %v1543
        %v5668 = vunpack.c.h.b16 %v1543
        %v5669 = vunpack.c.l.b16 %v1544
        %v5670 = vunpack.c.h.b16 %v1544
        %v5671 = vunpack.c.l.b16 %v1545
        %v5672 = vunpack.c.h.b16 %v1545
        %v5673 = vunpack.c.l.b16 %v1546
        %v5674 = vunpack.c.h.b16 %v1546
        %v5675 = vunpack.c.l.b16 %v1547
        %v5676 = vunpack.c.h.b16 %v1547
        %v5677 = vunpack.c.l.b16 %v1548
        %v5678 = vunpack.c.h.b16 %v1548
        %v5679 = vunpack.c.l.b16 %v1549
        %v5680 = vunpack.c.h.b16 %v1549
        %v5681 = vunpack.c.l.b16 %v1550
        %v5682 = vunpack.c.h.b16 %v1550
        %v5683 = vunpack.c.l.b16 %v1551
        %v5684 = vunpack.c.h.b16 %v1551
        %v5685 = vunpack.c.l.b16 %v1552
        %v5686 = vunpack.c.h.b16 %v1552
        %v5687 = vunpack.c.l.b16 %v1553
        %v5688 = vunpack.c.h.b16 %v1553
        %v5689 = vunpack.c.l.b16 %v1554
        %v5690 = vunpack.c.h.b16 %v1554
        %v5691 = vunpack.c.l.b16 %v1555
        %v5692 = vunpack.c.h.b16 %v1555
        %v5693 = vunpack.c.l.b16 %v1556
        %v5694 = vunpack.c.h.b16 %v1556
        %v5695 = vunpack.c.l.b16 %v1557
        %v5696 = vunpack.c.h.b16 %v1557
        %v5697 = vunpack.c.l.b16 %v1558
        %v5698 = vunpack.c.h.b16 %v1558
        %v5699 = vunpack.c.l.b16 %v1559
        %v5700 = vunpack.c.h.b16 %v1559
        %v5701 = vunpack.c.l.b16 %v1560
        %v5702 = vunpack.c.h.b16 %v1560
        %v5703 = vunpack.c.l.b16 %v1561
        %v5704 = vunpack.c.h.b16 %v1561
        %v5705 = vunpack.c.l.b16 %v1562
        %v5706 = vunpack.c.h.b16 %v1562
        %v5707 = vunpack.c.l.b16 %v1563
        %v5708 = vunpack.c.h.b16 %v1563
        %v5709 = vunpack.c.l.b16 %v1564
        %v5710 = vunpack.c.h.b16 %v1564
        %v5711 = vunpack.c.l.b16 %v1565
        %v5712 = vunpack.c.h.b16 %v1565
        %v5713 = vunpack.c.l.b16 %v1566
        %v5714 = vunpack.c.h.b16 %v1566
        %v5715 = vunpack.c.l.b16 %v1567
        %v5716 = vunpack.c.h.b16 %v1567
        %v5717 = vunpack.c.l.b16 %v1568
        %v5718 = vunpack.c.h.b16 %v1568
        %v5719 = vunpack.c.l.b16 %v1569
        %v5720 = vunpack.c.h.b16 %v1569
        %v5721 = vunpack.c.l.b16 %v1570
        %v5722 = vunpack.c.h.b16 %v1570
        %v5723 = vunpack.c.l.b16 %v1571
        %v5724 = vunpack.c.h.b16 %v1571
        %v5725 = vunpack.c.l.b16 %v1572
        %v5726 = vunpack.c.h.b16 %v1572
        %v5727 = vunpack.c.l.b16 %v1573
        %v5728 = vunpack.c.h.b16 %v1573
        %v5729 = vunpack.c.l.b16 %v1574
        %v5730 = vunpack.c.h.b16 %v1574
        %v5731 = vunpack.c.l.b16 %v1575
        %v5732 = vunpack.c.h.b16 %v1575
        %v5733 = vunpack.c.l.b16 %v1576
        %v5734 = vunpack.c.h.b16 %v1576
        %v5735 = vunpack.c.l.b16 %v1577
        %v5736 = vunpack.c.h.b16 %v1577
        %v5737 = vunpack.c.l.b16 %v1578
        %v5738 = vunpack.c.h.b16 %v1578
        %v5739 = vunpack.c.l.b16 %v1579
        %v5740 = vunpack.c.h.b16 %v1579
        %v5741 = vunpack.c.l.b16 %v1580
        %v5742 = vunpack.c.h.b16 %v1580
        %v5743 = vunpack.c.l.b16 %v1581
        %v5744 = vunpack.c.h.b16 %v1581
        %v5745 = vunpack.c.l.b16 %v1582
        %v5746 = vunpack.c.h.b16 %v1582
        %v5747 = vunpack.c.l.b16 %v1583
        %v5748 = vunpack.c.h.b16 %v1583
        %v5749 = vunpack.c.l.b16 %v1584
        %v5750 = vunpack.c.h.b16 %v1584
        %v5751 = vunpack.c.l.b16 %v1585
        %v5752 = vunpack.c.h.b16 %v1585
        %v5753 = vunpack.c.l.b16 %v1586
        %v5754 = vunpack.c.h.b16 %v1586
        %v5755 = vunpack.c.l.b16 %v1587
        %v5756 = vunpack.c.h.b16 %v1587
        %v5757 = vunpack.c.l.b16 %v1588
        %v5758 = vunpack.c.h.b16 %v1588
        %v5759 = vunpack.c.l.b16 %v1589
        %v5760 = vunpack.c.h.b16 %v1589
        %v5761 = vunpack.c.l.b16 %v1590
        %v5762 = vunpack.c.h.b16 %v1590
        %v5763 = vunpack.c.l.b16 %v1591
        %v5764 = vunpack.c.h.b16 %v1591
        %v5765 = vunpack.c.l.b16 %v1592
        %v5766 = vunpack.c.h.b16 %v1592
        %v5767 = vunpack.c.l.b16 %v1593
        %v5768 = vunpack.c.h.b16 %v1593
        %v5769 = vunpack.c.l.b16 %v1594
        %v5770 = vunpack.c.h.b16 %v1594
        %v5771 = vunpack.c.l.b16 %v1595
        %v5772 = vunpack.c.h.b16 %v1595
        %v5773 = vunpack.c.l.b16 %v1596
        %v5774 = vunpack.c.h.b16 %v1596
        %v5775 = vunpack.c.l.b16 %v1597
        %v5776 = vunpack.c.h.b16 %v1597
        %v5777 = vunpack.c.l.b16 %v1598
        %v5778 = vunpack.c.h.b16 %v1598
        %v5779 = vunpack.c.l.b16 %v1599
        %v5780 = vunpack.c.h.b16 %v1599
        %v5781 = vunpack.c.l.b16 %v1600
        %v5782 = vunpack.c.h.b16 %v1600
        %v5783 = vunpack.c.l.b16 %v1601
        %v5784 = vunpack.c.h.b16 %v1601
        %v5785 = vunpack.c.l.b16 %v1602
        %v5786 = vunpack.c.h.b16 %v1602
        %v5787 = vunpack.c.l.b16 %v1603
        %v5788 = vunpack.c.h.b16 %v1603
        %v5789 = vunpack.c.l.b16 %v1604
        %v5790 = vunpack.c.h.b16 %v1604
        %v5791 = vunpack.c.l.b16 %v1605
        %v5792 = vunpack.c.h.b16 %v1605
        %v5793 = vunpack.c.l.b16 %v1606
        %v5794 = vunpack.c.h.b16 %v1606
        %v5795 = vunpack.c.l.b16 %v1607
        %v5796 = vunpack.c.h.b16 %v1607
        %v5797 = vunpack.c.l.b16 %v1608
        %v5798 = vunpack.c.h.b16 %v1608
        %v5799 = vunpack.c.l.b16 %v1609
        %v5800 = vunpack.c.h.b16 %v1609
        %v5801 = vunpack.c.l.b16 %v1610
        %v5802 = vunpack.c.h.b16 %v1610
        %v5803 = vunpack.c.l.b16 %v1611
        %v5804 = vunpack.c.h.b16 %v1611
        %v5805 = vunpack.c.l.b16 %v1612
        %v5806 = vunpack.c.h.b16 %v1612
        %v5807 = vunpack.c.l.b16 %v1613
        %v5808 = vunpack.c.h.b16 %v1613
        %v5809 = vunpack.c.l.b16 %v1614
        %v5810 = vunpack.c.h.b16 %v1614
        %v5811 = vunpack.c.l.b16 %v1615
        %v5812 = vunpack.c.h.b16 %v1615
        %v5813 = vunpack.c.l.b16 %v1616
        %v5814 = vunpack.c.h.b16 %v1616
        %v5815 = vunpack.c.l.b16 %v1617
        %v5816 = vunpack.c.h.b16 %v1617
        %v5817 = vunpack.c.l.b16 %v1618
        %v5818 = vunpack.c.h.b16 %v1618
        %v5819 = vunpack.c.l.b16 %v1619
        %v5820 = vunpack.c.h.b16 %v1619
        %v5821 = vunpack.c.l.b16 %v1620
        %v5822 = vunpack.c.h.b16 %v1620
        %v5823 = vunpack.c.l.b16 %v1621
        %v5824 = vunpack.c.h.b16 %v1621
        %v5825 = vunpack.c.l.b16 %v1622
        %v5826 = vunpack.c.h.b16 %v1622
        %v5827 = vunpack.c.l.b16 %v1623
        %v5828 = vunpack.c.h.b16 %v1623
        %v5829 = vunpack.c.l.b16 %v1624
        %v5830 = vunpack.c.h.b16 %v1624
        %v5831 = vunpack.c.l.b16 %v1625
        %v5832 = vunpack.c.h.b16 %v1625
        %v5833 = vunpack.c.l.b16 %v1626
        %v5834 = vunpack.c.h.b16 %v1626
        %v5835 = vunpack.c.l.b16 %v1627
        %v5836 = vunpack.c.h.b16 %v1627
        %v5837 = vunpack.c.l.b16 %v1628
        %v5838 = vunpack.c.h.b16 %v1628
        %v5839 = vunpack.c.l.b16 %v1629
        %v5840 = vunpack.c.h.b16 %v1629
        %v5841 = vunpack.c.l.b16 %v1630
        %v5842 = vunpack.c.h.b16 %v1630
        %v5843 = vunpack.c.l.b16 %v1631
        %v5844 = vunpack.c.h.b16 %v1631
        %v5845 = vunpack.c.l.b16 %v1632
        %v5846 = vunpack.c.h.b16 %v1632
        %v5847 = vunpack.c.l.b16 %v1633
        %v5848 = vunpack.c.h.b16 %v1633
        %v5849 = vunpack.c.l.b16 %v1634
        %v5850 = vunpack.c.h.b16 %v1634
        %v5851 = vunpack.c.l.b16 %v1635
        %v5852 = vunpack.c.h.b16 %v1635
        %v5853 = vunpack.c.l.b16 %v1636
        %v5854 = vunpack.c.h.b16 %v1636
        %v5855 = vunpack.c.l.b16 %v1637
        %v5856 = vunpack.c.h.b16 %v1637
        %v5857 = vunpack.c.l.b16 %v1638
        %v5858 = vunpack.c.h.b16 %v1638
        %v5859 = vunpack.c.l.b16 %v1639
        %v5860 = vunpack.c.h.b16 %v1639
        %v5861 = vunpack.c.l.b16 %v1640
        %v5862 = vunpack.c.h.b16 %v1640
        %v5863 = vunpack.c.l.b16 %v1641
        %v5864 = vunpack.c.h.b16 %v1641
        %v5865 = vunpack.c.l.b16 %v1642
        %v5866 = vunpack.c.h.b16 %v1642
        %v5867 = vunpack.c.l.b16 %v1643
        %v5868 = vunpack.c.h.b16 %v1643
        %v5869 = vunpack.c.l.b16 %v1644
        %v5870 = vunpack.c.h.b16 %v1644
        %v5871 = vunpack.c.l.b16 %v1645
        %v5872 = vunpack.c.h.b16 %v1645
        %v5873 = vunpack.c.l.b16 %v1646
        %v5874 = vunpack.c.h.b16 %v1646
        %v5875 = vunpack.c.l.b16 %v1647
        %v5876 = vunpack.c.h.b16 %v1647
        %v5877 = vunpack.c.l.b16 %v1648
        %v5878 = vunpack.c.h.b16 %v1648
        %v5879 = vunpack.c.l.b16 %v1649
        %v5880 = vunpack.c.h.b16 %v1649
        %v5881 = vunpack.c.l.b16 %v1650
        %v5882 = vunpack.c.h.b16 %v1650
        %v5883 = vunpack.c.l.b16 %v1651
        %v5884 = vunpack.c.h.b16 %v1651
        %v5885 = vunpack.c.l.b16 %v1652
        %v5886 = vunpack.c.h.b16 %v1652
        %v5887 = vunpack.c.l.b16 %v1653
        %v5888 = vunpack.c.h.b16 %v1653
        %v5889 = vunpack.c.l.b16 %v1654
        %v5890 = vunpack.c.h.b16 %v1654
        %v5891 = vunpack.c.l.b16 %v1655
        %v5892 = vunpack.c.h.b16 %v1655
        %v5893 = vunpack.c.l.b16 %v1656
        %v5894 = vunpack.c.h.b16 %v1656
        %v5895 = vunpack.c.l.b16 %v1657
        %v5896 = vunpack.c.h.b16 %v1657
        %v5897 = vunpack.c.l.b16 %v1658
        %v5898 = vunpack.c.h.b16 %v1658
        %v5899 = vunpack.c.l.b16 %v1659
        %v5900 = vunpack.c.h.b16 %v1659
        %v5901 = vunpack.c.l.b16 %v1660
        %v5902 = vunpack.c.h.b16 %v1660
        %v5903 = vunpack.c.l.b16 %v1661
        %v5904 = vunpack.c.h.b16 %v1661
        %v5905 = vunpack.c.l.b16 %v1662
        %v5906 = vunpack.c.h.b16 %v1662
        %v5907 = vunpack.c.l.b16 %v1663
        %v5908 = vunpack.c.h.b16 %v1663
        %v5909 = vunpack.c.l.b16 %v1664
        %v5910 = vunpack.c.h.b16 %v1664
        %v5911 = vunpack.c.l.b16 %v1665
        %v5912 = vunpack.c.h.b16 %v1665
        %v5913 = vunpack.c.l.b16 %v1666
        %v5914 = vunpack.c.h.b16 %v1666
        %v5915 = vunpack.c.l.b16 %v1667
        %v5916 = vunpack.c.h.b16 %v1667
        %v5917 = vunpack.c.l.b16 %v1668
        %v5918 = vunpack.c.h.b16 %v1668
        %v5919 = vunpack.c.l.b16 %v1669
        %v5920 = vunpack.c.h.b16 %v1669
        %v5921 = vunpack.c.l.b16 %v1670
        %v5922 = vunpack.c.h.b16 %v1670
        %v5923 = vunpack.c.l.b16 %v1671
        %v5924 = vunpack.c.h.b16 %v1671
        %v5925 = vunpack.c.l.b16 %v1672
        %v5926 = vunpack.c.h.b16 %v1672
        %v5927 = vunpack.c.l.b16 %v1673
        %v5928 = vunpack.c.h.b16 %v1673
        %v5929 = vunpack.c.l.b16 %v1674
        %v5930 = vunpack.c.h.b16 %v1674
        %v5931 = vunpack.c.l.b16 %v1675
        %v5932 = vunpack.c.h.b16 %v1675
        %v5933 = vunpack.c.l.b16 %v1676
        %v5934 = vunpack.c.h.b16 %v1676
        %v5935 = vunpack.c.l.b16 %v1677
        %v5936 = vunpack.c.h.b16 %v1677
        %v5937 = vunpack.c.l.b16 %v1678
        %v5938 = vunpack.c.h.b16 %v1678
        %v5939 = vunpack.c.l.b16 %v1679
        %v5940 = vunpack.c.h.b16 %v1679
        %v5941 = vunpack.c.l.b16 %v1680
        %v5942 = vunpack.c.h.b16 %v1680
        %v5943 = vunpack.c.l.b16 %v1681
        %v5944 = vunpack.c.h.b16 %v1681
        %v5945 = vunpack.c.l.b16 %v1682
        %v5946 = vunpack.c.h.b16 %v1682
        %v5947 = vunpack.c.l.b16 %v1683
        %v5948 = vunpack.c.h.b16 %v1683
        %v5949 = vunpack.c.l.b16 %v1684
        %v5950 = vunpack.c.h.b16 %v1684
        %v5951 = vunpack.c.l.b16 %v1685
        %v5952 = vunpack.c.h.b16 %v1685
        %v5953 = vunpack.c.l.b16 %v1686
        %v5954 = vunpack.c.h.b16 %v1686
        %v5955 = vunpack.c.l.b16 %v1687
        %v5956 = vunpack.c.h.b16 %v1687
        %v5957 = vunpack.c.l.b16 %v1688
        %v5958 = vunpack.c.h.b16 %v1688
        %v5959 = vunpack.c.l.b16 %v1689
        %v5960 = vunpack.c.h.b16 %v1689
        %v5961 = vunpack.c.l.b16 %v1690
        %v5962 = vunpack.c.h.b16 %v1690
        %v5963 = vunpack.c.l.b16 %v1691
        %v5964 = vunpack.c.h.b16 %v1691
        %v5965 = vunpack.c.l.b16 %v1692
        %v5966 = vunpack.c.h.b16 %v1692
        %v5967 = vunpack.c.l.b16 %v1693
        %v5968 = vunpack.c.h.b16 %v1693
        %v5969 = vunpack.c.l.b16 %v1694
        %v5970 = vunpack.c.h.b16 %v1694
        %v5971 = vunpack.c.l.b16 %v1695
        %v5972 = vunpack.c.h.b16 %v1695
        %v5973 = vunpack.c.l.b16 %v1696
        %v5974 = vunpack.c.h.b16 %v1696
        %v5975 = vunpack.c.l.b16 %v1697
        %v5976 = vunpack.c.h.b16 %v1697
        %v5977 = vunpack.c.l.b16 %v1698
        %v5978 = vunpack.c.h.b16 %v1698
        %v5979 = vunpack.c.l.b16 %v1699
        %v5980 = vunpack.c.h.b16 %v1699
        %v5981 = vunpack.c.l.b16 %v1700
        %v5982 = vunpack.c.h.b16 %v1700
        %v5983 = vunpack.c.l.b16 %v1701
        %v5984 = vunpack.c.h.b16 %v1701
        %v5985 = vunpack.c.l.b16 %v1702
        %v5986 = vunpack.c.h.b16 %v1702
        %v5987 = vunpack.c.l.b16 %v1703
        %v5988 = vunpack.c.h.b16 %v1703
        %v5989 = vunpack.c.l.b16 %v1704
        %v5990 = vunpack.c.h.b16 %v1704
        %v5991 = vunpack.c.l.b16 %v1705
        %v5992 = vunpack.c.h.b16 %v1705
        %v5993 = vunpack.c.l.b16 %v1706
        %v5994 = vunpack.c.h.b16 %v1706
        %v5995 = vunpack.c.l.b16 %v1707
        %v5996 = vunpack.c.h.b16 %v1707
        %v5997 = vunpack.c.l.b16 %v1708
        %v5998 = vunpack.c.h.b16 %v1708
        %v5999 = vunpack.c.l.b16 %v1709
        %v6000 = vunpack.c.h.b16 %v1709
        %v6001 = vunpack.c.l.b16 %v1710
        %v6002 = vunpack.c.h.b16 %v1710
        %v6003 = vunpack.c.l.b16 %v1711
        %v6004 = vunpack.c.h.b16 %v1711
        %v6005 = vunpack.c.l.b16 %v1712
        %v6006 = vunpack.c.h.b16 %v1712
        %v6007 = vunpack.c.l.b16 %v1713
        %v6008 = vunpack.c.h.b16 %v1713
        %v6009 = vunpack.c.l.b16 %v1714
        %v6010 = vunpack.c.h.b16 %v1714
        %v6011 = vunpack.c.l.b16 %v1715
        %v6012 = vunpack.c.h.b16 %v1715
        %v6013 = vunpack.c.l.b16 %v1716
        %v6014 = vunpack.c.h.b16 %v1716
        %v6015 = vunpack.c.l.b16 %v1717
        %v6016 = vunpack.c.h.b16 %v1717
        %v6017 = vunpack.c.l.b16 %v1718
        %v6018 = vunpack.c.h.b16 %v1718
        %v6019 = vunpack.c.l.b16 %v1719
        %v6020 = vunpack.c.h.b16 %v1719
        %v6021 = vunpack.c.l.b16 %v1720
        %v6022 = vunpack.c.h.b16 %v1720
        %v6023 = vunpack.c.l.b16 %v1721
        %v6024 = vunpack.c.h.b16 %v1721
        %v6025 = vunpack.c.l.b16 %v1722
        %v6026 = vunpack.c.h.b16 %v1722
        %v6027 = vunpack.c.l.b16 %v1723
        %v6028 = vunpack.c.h.b16 %v1723
        %v6029 = vunpack.c.l.b16 %v1724
        %v6030 = vunpack.c.h.b16 %v1724
        %v6031 = vunpack.c.l.b16 %v1725
        %v6032 = vunpack.c.h.b16 %v1725
        %v6033 = vunpack.c.l.b16 %v1726
        %v6034 = vunpack.c.h.b16 %v1726
        %v6035 = vunpack.c.l.b16 %v1727
        %v6036 = vunpack.c.h.b16 %v1727
        %v6037 = vunpack.c.l.b16 %v1728
        %v6038 = vunpack.c.h.b16 %v1728
        %v6039 = vunpack.c.l.b16 %v1729
        %v6040 = vunpack.c.h.b16 %v1729
        %v6041 = vunpack.c.l.b16 %v1730
        %v6042 = vunpack.c.h.b16 %v1730
        %v6043 = vunpack.c.l.b16 %v1731
        %v6044 = vunpack.c.h.b16 %v1731
        %v6045 = vunpack.c.l.b16 %v1732
        %v6046 = vunpack.c.h.b16 %v1732
        %v6047 = vunpack.c.l.b16 %v1733
        %v6048 = vunpack.c.h.b16 %v1733
        %v6049 = vunpack.c.l.b16 %v1734
        %v6050 = vunpack.c.h.b16 %v1734
        %v6051 = vunpack.c.l.b16 %v1735
        %v6052 = vunpack.c.h.b16 %v1735
        %v6053 = vunpack.c.l.b16 %v1736
        %v6054 = vunpack.c.h.b16 %v1736
        %v6055 = vunpack.c.l.b16 %v1737
        %v6056 = vunpack.c.h.b16 %v1737
        %v6057 = vunpack.c.l.b16 %v1738
        %v6058 = vunpack.c.h.b16 %v1738
        %v6059 = vunpack.c.l.b16 %v1739
        %v6060 = vunpack.c.h.b16 %v1739
        %v6061 = vunpack.c.l.b16 %v1740
        %v6062 = vunpack.c.h.b16 %v1740
        %v6063 = vunpack.c.l.b16 %v1741
        %v6064 = vunpack.c.h.b16 %v1741
        %v6065 = vunpack.c.l.b16 %v1742
        %v6066 = vunpack.c.h.b16 %v1742
        %v6067 = vunpack.c.l.b16 %v1743
        %v6068 = vunpack.c.h.b16 %v1743
        %v6069 = vunpack.c.l.b16 %v1744
        %v6070 = vunpack.c.h.b16 %v1744
        %v6071 = vunpack.c.l.b16 %v1745
        %v6072 = vunpack.c.h.b16 %v1745
        %v6073 = vunpack.c.l.b16 %v1746
        %v6074 = vunpack.c.h.b16 %v1746
        %v6075 = vunpack.c.l.b16 %v1747
        %v6076 = vunpack.c.h.b16 %v1747
        %v6077 = vunpack.c.l.b16 %v1748
        %v6078 = vunpack.c.h.b16 %v1748
        %v6079 = vunpack.c.l.b16 %v1749
        %v6080 = vunpack.c.h.b16 %v1749
        %v6081 = vunpack.c.l.b16 %v1750
        %v6082 = vunpack.c.h.b16 %v1750
        %v6083 = vunpack.c.l.b16 %v1751
        %v6084 = vunpack.c.h.b16 %v1751
        %v6085 = vunpack.c.l.b16 %v1752
        %v6086 = vunpack.c.h.b16 %v1752
        %v6087 = vunpack.c.l.b16 %v1753
        %v6088 = vunpack.c.h.b16 %v1753
        %v6089 = vunpack.c.l.b16 %v1754
        %v6090 = vunpack.c.h.b16 %v1754
        %v6091 = vunpack.c.l.b16 %v1755
        %v6092 = vunpack.c.h.b16 %v1755
        %v6093 = vunpack.c.l.b16 %v1756
        %v6094 = vunpack.c.h.b16 %v1756
        %v6095 = vunpack.c.l.b16 %v1757
        %v6096 = vunpack.c.h.b16 %v1757
        %v6097 = vunpack.c.l.b16 %v1758
        %v6098 = vunpack.c.h.b16 %v1758
        %v6099 = vunpack.c.l.b16 %v1759
        %v6100 = vunpack.c.h.b16 %v1759
        %v6101 = vunpack.c.l.b16 %v1760
        %v6102 = vunpack.c.h.b16 %v1760
        %v6103 = vunpack.c.l.b16 %v1761
        %v6104 = vunpack.c.h.b16 %v1761
        %v6105 = vunpack.c.l.b16 %v1762
        %v6106 = vunpack.c.h.b16 %v1762
        %v6107 = vunpack.c.l.b16 %v1763
        %v6108 = vunpack.c.h.b16 %v1763
        %v6109 = vunpack.c.l.b16 %v1764
        %v6110 = vunpack.c.h.b16 %v1764
        %v6111 = vunpack.c.l.b16 %v1765
        %v6112 = vunpack.c.h.b16 %v1765
        %v6113 = vunpack.c.l.b16 %v1766
        %v6114 = vunpack.c.h.b16 %v1766
        %v6115 = vunpack.c.l.b16 %v1767
        %v6116 = vunpack.c.h.b16 %v1767
        %v6117 = vunpack.c.l.b16 %v1768
        %v6118 = vunpack.c.h.b16 %v1768
        %v6119 = vunpack.c.l.b16 %v1769
        %v6120 = vunpack.c.h.b16 %v1769
        %v6121 = vunpack.c.l.b16 %v1770
        %v6122 = vunpack.c.h.b16 %v1770
        %v6123 = vunpack.c.l.b16 %v1771
        %v6124 = vunpack.c.h.b16 %v1771
        %v6125 = vunpack.c.l.b16 %v1772
        %v6126 = vunpack.c.h.b16 %v1772
        %v6127 = vunpack.c.l.b16 %v1773
        %v6128 = vunpack.c.h.b16 %v1773
        %v6129 = vunpack.c.l.b16 %v1774
        %v6130 = vunpack.c.h.b16 %v1774
        %v6131 = vunpack.c.l.b16 %v1775
        %v6132 = vunpack.c.h.b16 %v1775
        %v6133 = vunpack.c.l.b16 %v1776
        %v6134 = vunpack.c.h.b16 %v1776
        %v6135 = vunpack.c.l.b16 %v1777
        %v6136 = vunpack.c.h.b16 %v1777
        %v6137 = vunpack.c.l.b16 %v1778
        %v6138 = vunpack.c.h.b16 %v1778
        %v6139 = vunpack.c.l.b16 %v1779
        %v6140 = vunpack.c.h.b16 %v1779
        %v6141 = vunpack.c.l.b16 %v1780
        %v6142 = vunpack.c.h.b16 %v1780
        %v6143 = vunpack.c.l.b16 %v1781
        %v6144 = vunpack.c.h.b16 %v1781
        %v6145 = vunpack.c.l.b16 %v1782
        %v6146 = vunpack.c.h.b16 %v1782
        %v6147 = vunpack.c.l.b16 %v1783
        %v6148 = vunpack.c.h.b16 %v1783
        %v6149 = vunpack.c.l.b16 %v1784
        %v6150 = vunpack.c.h.b16 %v1784
        %v6151 = vunpack.c.l.b16 %v1785
        %v6152 = vunpack.c.h.b16 %v1785
        %v6153 = vunpack.c.l.b16 %v1786
        %v6154 = vunpack.c.h.b16 %v1786
        %v6155 = vunpack.c.l.b16 %v1787
        %v6156 = vunpack.c.h.b16 %v1787
        %v6157 = vunpack.c.l.b16 %v1788
        %v6158 = vunpack.c.h.b16 %v1788
        %v6159 = vunpack.c.l.b16 %v1789
        %v6160 = vunpack.c.h.b16 %v1789
        %v6161 = vunpack.c.l.b16 %v1790
        %v6162 = vunpack.c.h.b16 %v1790
        %v6163 = vunpack.c.l.b16 %v1791
        %v6164 = vunpack.c.h.b16 %v1791
        %v6165 = vunpack.c.l.b16 %v1792
        %v6166 = vunpack.c.h.b16 %v1792
        %v6167 = vunpack.c.l.b16 %v1793
        %v6168 = vunpack.c.h.b16 %v1793
        %v6169 = vunpack.c.l.b16 %v1794
        %v6170 = vunpack.c.h.b16 %v1794
        %v6171 = vunpack.c.l.b16 %v1795
        %v6172 = vunpack.c.h.b16 %v1795
        %v6173 = vunpack.c.l.b16 %v1796
        %v6174 = vunpack.c.h.b16 %v1796
        %v6175 = vunpack.c.l.b16 %v1797
        %v6176 = vunpack.c.h.b16 %v1797
        %v6177 = vunpack.c.l.b16 %v1798
        %v6178 = vunpack.c.h.b16 %v1798
        %v6179 = vunpack.c.l.b16 %v1799
        %v6180 = vunpack.c.h.b16 %v1799
        %v6181 = vunpack.c.l.b16 %v1800
        %v6182 = vunpack.c.h.b16 %v1800
        %v6183 = vunpack.c.l.b16 %v1801
        %v6184 = vunpack.c.h.b16 %v1801
        %v6185 = vunpack.c.l.b16 %v1802
        %v6186 = vunpack.c.h.b16 %v1802
        %v6187 = vunpack.c.l.b16 %v1803
        %v6188 = vunpack.c.h.b16 %v1803
        %v6189 = vunpack.c.l.b16 %v1804
        %v6190 = vunpack.c.h.b16 %v1804
        %v6191 = vunpack.c.l.b16 %v1805
        %v6192 = vunpack.c.h.b16 %v1805
        %v6193 = vunpack.c.l.b16 %v1806
        %v6194 = vunpack.c.h.b16 %v1806
        %v6195 = vunpack.c.l.b16 %v1807
        %v6196 = vunpack.c.h.b16 %v1807
        %v6197 = vunpack.c.l.b16 %v1808
        %v6198 = vunpack.c.h.b16 %v1808
        %v6199 = vunpack.c.l.b16 %v1809
        %v6200 = vunpack.c.h.b16 %v1809
        %v6201 = vunpack.c.l.b16 %v1810
        %v6202 = vunpack.c.h.b16 %v1810
        %v6203 = vunpack.c.l.b16 %v1811
        %v6204 = vunpack.c.h.b16 %v1811
        %v6205 = vunpack.c.l.b16 %v1812
        %v6206 = vunpack.c.h.b16 %v1812
        %v6207 = vunpack.c.l.b16 %v1813
        %v6208 = vunpack.c.h.b16 %v1813
        %v6209 = vunpack.c.l.b16 %v1814
        %v6210 = vunpack.c.h.b16 %v1814
        %v6211 = vunpack.c.l.b16 %v1815
        %v6212 = vunpack.c.h.b16 %v1815
        %v6213 = vunpack.c.l.b16 %v1816
        %v6214 = vunpack.c.h.b16 %v1816
        %v6215 = vunpack.c.l.b16 %v1817
        %v6216 = vunpack.c.h.b16 %v1817
        %v6217 = vunpack.c.l.b16 %v1818
        %v6218 = vunpack.c.h.b16 %v1818
        %v6219 = vunpack.c.l.b16 %v1819
        %v6220 = vunpack.c.h.b16 %v1819
        %v6221 = vunpack.c.l.b16 %v1820
        %v6222 = vunpack.c.h.b16 %v1820
        %v6223 = vunpack.c.l.b16 %v1821
        %v6224 = vunpack.c.h.b16 %v1821
        %v6225 = vunpack.c.l.b16 %v1822
        %v6226 = vunpack.c.h.b16 %v1822
        %v6227 = vunpack.c.l.b16 %v1823
        %v6228 = vunpack.c.h.b16 %v1823
        %v6229 = vunpack.c.l.b16 %v1824
        %v6230 = vunpack.c.h.b16 %v1824
        %v6231 = vunpack.c.l.b16 %v1825
        %v6232 = vunpack.c.h.b16 %v1825
        %v6233 = vunpack.c.l.b16 %v1826
        %v6234 = vunpack.c.h.b16 %v1826
        %v6235 = vunpack.c.l.b16 %v1827
        %v6236 = vunpack.c.h.b16 %v1827
        %v6237 = vunpack.c.l.b16 %v1828
        %v6238 = vunpack.c.h.b16 %v1828
        %v6239 = vunpack.c.l.b16 %v1829
        %v6240 = vunpack.c.h.b16 %v1829
        %v6241 = vunpack.c.l.b16 %v1830
        %v6242 = vunpack.c.h.b16 %v1830
        %v6243 = vunpack.c.l.b16 %v1831
        %v6244 = vunpack.c.h.b16 %v1831
        %v6245 = vunpack.c.l.b16 %v1832
        %v6246 = vunpack.c.h.b16 %v1832
        %v6247 = vunpack.c.l.b16 %v1833
        %v6248 = vunpack.c.h.b16 %v1833
        %v6249 = vunpack.c.l.b16 %v1834
        %v6250 = vunpack.c.h.b16 %v1834
        %v6251 = vunpack.c.l.b16 %v1835
        %v6252 = vunpack.c.h.b16 %v1835
        %v6253 = vunpack.c.l.b16 %v1836
        %v6254 = vunpack.c.h.b16 %v1836
        %v6255 = vunpack.c.l.b16 %v1837
        %v6256 = vunpack.c.h.b16 %v1837
        %v6257 = vunpack.c.l.b16 %v1838
        %v6258 = vunpack.c.h.b16 %v1838
        %v6259 = vunpack.c.l.b16 %v1839
        %v6260 = vunpack.c.h.b16 %v1839
        %v6261 = vunpack.c.l.b16 %v1840
        %v6262 = vunpack.c.h.b16 %v1840
        %v6263 = vunpack.c.l.b16 %v1841
        %v6264 = vunpack.c.h.b16 %v1841
        %v6265 = vunpack.c.l.b16 %v1842
        %v6266 = vunpack.c.h.b16 %v1842
        %v6267 = vunpack.c.l.b16 %v1843
        %v6268 = vunpack.c.h.b16 %v1843
        %v6269 = vunpack.c.l.b16 %v1844
        %v6270 = vunpack.c.h.b16 %v1844
        %v6271 = vunpack.c.l.b16 %v1845
        %v6272 = vunpack.c.h.b16 %v1845
        %v6273 = vunpack.c.l.b16 %v1846
        %v6274 = vunpack.c.h.b16 %v1846
        %v6275 = vunpack.c.l.b16 %v1847
        %v6276 = vunpack.c.h.b16 %v1847
        %v6277 = vunpack.c.l.b16 %v1848
        %v6278 = vunpack.c.h.b16 %v1848
        %v6279 = vunpack.c.l.b16 %v1849
        %v6280 = vunpack.c.h.b16 %v1849
        %v6281 = vunpack.c.l.b16 %v1850
        %v6282 = vunpack.c.h.b16 %v1850
        %v6283 = vunpack.c.l.b16 %v1851
        %v6284 = vunpack.c.h.b16 %v1851
        %v6285 = vunpack.c.l.b16 %v1852
        %v6286 = vunpack.c.h.b16 %v1852
        %v6287 = vunpack.c.l.b16 %v1853
        %v6288 = vunpack.c.h.b16 %v1853
        %v6289 = vunpack.c.l.b16 %v1854
        %v6290 = vunpack.c.h.b16 %v1854
        %v6291 = vunpack.c.l.b16 %v1855
        %v6292 = vunpack.c.h.b16 %v1855
        %v6293 = vunpack.c.l.b16 %v1856
        %v6294 = vunpack.c.h.b16 %v1856
        %v6295 = vunpack.c.l.b16 %v1857
        %v6296 = vunpack.c.h.b16 %v1857
        %v6297 = vunpack.c.l.b16 %v1858
        %v6298 = vunpack.c.h.b16 %v1858
        %v6299 = vunpack.c.l.b16 %v1859
        %v6300 = vunpack.c.h.b16 %v1859
        %v6301 = vunpack.c.l.b16 %v1860
        %v6302 = vunpack.c.h.b16 %v1860
        %v6303 = vunpack.c.l.b16 %v1861
        %v6304 = vunpack.c.h.b16 %v1861
        %v6305 = vunpack.c.l.b16 %v1862
        %v6306 = vunpack.c.h.b16 %v1862
        %v6307 = vunpack.c.l.b16 %v1863
        %v6308 = vunpack.c.h.b16 %v1863
        %v6309 = vunpack.c.l.b16 %v1864
        %v6310 = vunpack.c.h.b16 %v1864
        %v6311 = vunpack.c.l.b16 %v1865
        %v6312 = vunpack.c.h.b16 %v1865
        %v6313 = vunpack.c.l.b16 %v1866
        %v6314 = vunpack.c.h.b16 %v1866
        %v6315 = vunpack.c.l.b16 %v1867
        %v6316 = vunpack.c.h.b16 %v1867
        %v6317 = vunpack.c.l.b16 %v1868
        %v6318 = vunpack.c.h.b16 %v1868
        %v6319 = vunpack.c.l.b16 %v1869
        %v6320 = vunpack.c.h.b16 %v1869
        %v6321 = vunpack.c.l.b16 %v1870
        %v6322 = vunpack.c.h.b16 %v1870
        %v6323 = vpack.c.b16 %v3719, %v3635
        %v6324 = vpack.c.b16 %v3720, %v3636
        %v6325 = vpack.c.b16 %v3721, %v3637
        %v6326 = vpack.c.b16 %v3722, %v3638
        %v6327 = vpack.c.b16 %v3723, %v3639
        %v6328 = vpack.c.b16 %v3724, %v3640
        %v6329 = vpack.c.b16 %v3725, %v3641
        %v6330 = vpack.c.b16 %v3726, %v3642
        %v6331 = vpack.c.b16 %v3727, %v3643
        %v6332 = vpack.c.b16 %v3728, %v3644
        %v6333 = vpack.c.b16 %v3729, %v3645
        %v6334 = vpack.c.b16 %v3730, %v3646
        %v6335 = vpack.c.b16 %v3731, %v3647
        %v6336 = vpack.c.b16 %v3732, %v3648
        %v6337 = vpack.c.b16 %v3733, %v3649
        %v6338 = vpack.c.b16 %v3734, %v3650
        %v6339 = vpack.c.b16 %v3735, %v3651
        %v6340 = vpack.c.b16 %v3736, %v3652
        %v6341 = vpack.c.b16 %v3737, %v3653
        %v6342 = vpack.c.b16 %v3738, %v3654
        %v6343 = vpack.c.b16 %v3739, %v3655
        %v6344 = vpack.c.b16 %v3740, %v3656
        %v6345 = vpack.c.b16 %v3741, %v3657
        %v6346 = vpack.c.b16 %v3742, %v3658
        %v6347 = vpack.c.b16 %v3743, %v3659
        %v6348 = vpack.c.b16 %v3744, %v3660
        %v6349 = vpack.c.b16 %v3745, %v3661
        %v6350 = vpack.c.b16 %v3746, %v3662
        %v6351 = vpack.c.b16 %v3747, %v3663
        %v6352 = vpack.c.b16 %v3748, %v3664
        %v6353 = vpack.c.b16 %v3749, %v3665
        %v6354 = vpack.c.b16 %v3750, %v3666
        %v6355 = vpack.c.b16 %v3751, %v3667
        %v6356 = vpack.c.b16 %v3752, %v3668
        %v6357 = vpack.c.b16 %v3753, %v3669
        %v6358 = vpack.c.b16 %v3754, %v3670
        %v6359 = vpack.c.b16 %v3755, %v3671
        %v6360 = vpack.c.b16 %v3756, %v3672
        %v6361 = vpack.c.b16 %v3757, %v3673
        %v6362 = vpack.c.b16 %v3758, %v3674
        %v6363 = vpack.c.b16 %v3759, %v3675
        %v6364 = vpack.c.b16 %v3760, %v3676
        %v6365 = vpack.c.b16 %v3761, %v3677
        %v6366 = vpack.c.b16 %v3762, %v3678
        %v6367 = vpack.c.b16 %v3763, %v3679
        %v6368 = vpack.c.b16 %v3764, %v3680
        %v6369 = vpack.c.b16 %v3765, %v3681
        %v6370 = vpack.c.b16 %v3766, %v3682
        %v6371 = vpack.c.b16 %v3767, %v3683
        %v6372 = vpack.c.b16 %v3768, %v3684
        %v6373 = vpack.c.b16 %v3769, %v3685
        %v6374 = vpack.c.b16 %v3770, %v3686
        %v6375 = vpack.c.b16 %v3771, %v3687
        %v6376 = vpack.c.b16 %v3772, %v3688
        %v6377 = vpack.c.b16 %v3773, %v3689
        %v6378 = vpack.c.b16 %v3774, %v3690
        %v6379 = vpack.c.b16 %v3775, %v3691
        %v6380 = vpack.c.b16 %v3776, %v3692
        %v6381 = vpack.c.b16 %v3777, %v3693
        %v6382 = vpack.c.b16 %v3778, %v3694
        %v6383 = vpack.c.b16 %v3779, %v3695
        %v6384 = vpack.c.b16 %v3780, %v3696
        %v6385 = vpack.c.b16 %v3781, %v3697
        %v6386 = vpack.c.b16 %v3782, %v3698
        %v6387 = vpack.c.b16 %v3783, %v3699
        %v6388 = vpack.c.b16 %v3784, %v3700
        %v6389 = vpack.c.b16 %v3785, %v3701
        %v6390 = vpack.c.b16 %v3786, %v3702
        %v6391 = vpack.c.b16 %v3787, %v3703
        %v6392 = vpack.c.b16 %v3788, %v3704
        %v6393 = vpack.c.b16 %v3789, %v3705
        %v6394 = vpack.c.b16 %v3790, %v3706
        %v6395 = vpack.c.b16 %v3791, %v3707
        %v6396 = vpack.c.b16 %v3792, %v3708
        %v6397 = vpack.c.b16 %v3793, %v3709
        %v6398 = vpack.c.b16 %v3794, %v3710
        %v6399 = vpack.c.b16 %v3795, %v3711
        %v6400 = vpack.c.b16 %v3796, %v3712
        %v6401 = vpack.c.b16 %v3797, %v3713
        %v6402 = vpack.c.b16 %v3798, %v3714
        %v6403 = vpack.c.b16 %v3799, %v3715
        %v6404 = vpack.c.b16 %v3800, %v3716
        %v6405 = vpack.c.b16 %v3801, %v3717
        %v6406 = vpack.c.b16 %v3802, %v3718
        %v6407 = vpack.c.b16 %v3887, %v3803
        %v6408 = vpack.c.b16 %v3888, %v3804
        %v6409 = vpack.c.b16 %v3889, %v3805
        %v6410 = vpack.c.b16 %v3890, %v3806
        %v6411 = vpack.c.b16 %v3891, %v3807
        %v6412 = vpack.c.b16 %v3892, %v3808
        %v6413 = vpack.c.b16 %v3893, %v3809
        %v6414 = vpack.c.b16 %v3894, %v3810
        %v6415 = vpack.c.b16 %v3895, %v3811
        %v6416 = vpack.c.b16 %v3896, %v3812
        %v6417 = vpack.c.b16 %v3897, %v3813
        %v6418 = vpack.c.b16 %v3898, %v3814
        %v6419 = vpack.c.b16 %v3899, %v3815
        %v6420 = vpack.c.b16 %v3900, %v3816
        %v6421 = vpack.c.b16 %v3901, %v3817
        %v6422 = vpack.c.b16 %v3902, %v3818
        %v6423 = vpack.c.b16 %v3903, %v3819
        %v6424 = vpack.c.b16 %v3904, %v3820
        %v6425 = vpack.c.b16 %v3905, %v3821
        %v6426 = vpack.c.b16 %v3906, %v3822
        %v6427 = vpack.c.b16 %v3907, %v3823
        %v6428 = vpack.c.b16 %v3908, %v3824
        %v6429 = vpack.c.b16 %v3909, %v3825
        %v6430 = vpack.c.b16 %v3910, %v3826
        %v6431 = vpack.c.b16 %v3911, %v3827
        %v6432 = vpack.c.b16 %v3912, %v3828
        %v6433 = vpack.c.b16 %v3913, %v3829
        %v6434 = vpack.c.b16 %v3914, %v3830
        %v6435 = vpack.c.b16 %v3915, %v3831
        %v6436 = vpack.c.b16 %v3916, %v3832
        %v6437 = vpack.c.b16 %v3917, %v3833
        %v6438 = vpack.c.b16 %v3918, %v3834
        %v6439 = vpack.c.b16 %v3919, %v3835
        %v6440 = vpack.c.b16 %v3920, %v3836
        %v6441 = vpack.c.b16 %v3921, %v3837
        %v6442 = vpack.c.b16 %v3922, %v3838
        %v6443 = vpack.c.b16 %v3923, %v3839
        %v6444 = vpack.c.b16 %v3924, %v3840
        %v6445 = vpack.c.b16 %v3925, %v3841
        %v6446 = vpack.c.b16 %v3926, %v3842
        %v6447 = vpack.c.b16 %v3927, %v3843
        %v6448 = vpack.c.b16 %v3928, %v3844
        %v6449 = vpack.c.b16 %v3929, %v3845
        %v6450 = vpack.c.b16 %v3930, %v3846
        %v6451 = vpack.c.b16 %v3931, %v3847
        %v6452 = vpack.c.b16 %v3932, %v3848
        %v6453 = vpack.c.b16 %v3933, %v3849
        %v6454 = vpack.c.b16 %v3934, %v3850
        %v6455 = vpack.c.b16 %v3935, %v3851
        %v6456 = vpack.c.b16 %v3936, %v3852
        %v6457 = vpack.c.b16 %v3937, %v3853
        %v6458 = vpack.c.b16 %v3938, %v3854
        %v6459 = vpack.c.b16 %v3939, %v3855
        %v6460 = vpack.c.b16 %v3940, %v3856
        %v6461 = vpack.c.b16 %v3941, %v3857
        %v6462 = vpack.c.b16 %v3942, %v3858
        %v6463 = vpack.c.b16 %v3943, %v3859
        %v6464 = vpack.c.b16 %v3944, %v3860
        %v6465 = vpack.c.b16 %v3945, %v3861
        %v6466 = vpack.c.b16 %v3946, %v3862
        %v6467 = vpack.c.b16 %v3947, %v3863
        %v6468 = vpack.c.b16 %v3948, %v3864
        %v6469 = vpack.c.b16 %v3949, %v3865
        %v6470 = vpack.c.b16 %v3950, %v3866
        %v6471 = vpack.c.b16 %v3951, %v3867
        %v6472 = vpack.c.b16 %v3952, %v3868
        %v6473 = vpack.c.b16 %v3953, %v3869
        %v6474 = vpack.c.b16 %v3954, %v3870
        %v6475 = vpack.c.b16 %v3955, %v3871
        %v6476 = vpack.c.b16 %v3956, %v3872
        %v6477 = vpack.c.b16 %v3957, %v3873
        %v6478 = vpack.c.b16 %v3958, %v3874
        %v6479 = vpack.c.b16 %v3959, %v3875
        %v6480 = vpack.c.b16 %v3960, %v3876
        %v6481 = vpack.c.b16 %v3961, %v3877
        %v6482 = vpack.c.b16 %v3962, %v3878
        %v6483 = vpack.c.b16 %v3963, %v3879
        %v6484 = vpack.c.b16 %v3964, %v3880
        %v6485 = vpack.c.b16 %v3965, %v3881
        %v6486 = vpack.c.b16 %v3966, %v3882
        %v6487 = vpack.c.b16 %v3967, %v3883
        %v6488 = vpack.c.b16 %v3968, %v3884
        %v6489 = vpack.c.b16 %v3969, %v3885
        %v6490 = vpack.c.b16 %v3970, %v3886
        %v6491 = vpack.c.b16 %v4055, %v3971
        %v6492 = vpack.c.b16 %v4056, %v3972
        %v6493 = vpack.c.b16 %v4057, %v3973
        %v6494 = vpack.c.b16 %v4058, %v3974
        %v6495 = vpack.c.b16 %v4059, %v3975
        %v6496 = vpack.c.b16 %v4060, %v3976
        %v6497 = vpack.c.b16 %v4061, %v3977
        %v6498 = vpack.c.b16 %v4062, %v3978
        %v6499 = vpack.c.b16 %v4063, %v3979
        %v6500 = vpack.c.b16 %v4064, %v3980
        %v6501 = vpack.c.b16 %v4065, %v3981
        %v6502 = vpack.c.b16 %v4066, %v3982
        %v6503 = vpack.c.b16 %v4067, %v3983
        %v6504 = vpack.c.b16 %v4068, %v3984
        %v6505 = vpack.c.b16 %v4069, %v3985
        %v6506 = vpack.c.b16 %v4070, %v3986
        %v6507 = vpack.c.b16 %v4071, %v3987
        %v6508 = vpack.c.b16 %v4072, %v3988
        %v6509 = vpack.c.b16 %v4073, %v3989
        %v6510 = vpack.c.b16 %v4074, %v3990
        %v6511 = vpack.c.b16 %v4075, %v3991
        %v6512 = vpack.c.b16 %v4076, %v3992
        %v6513 = vpack.c.b16 %v4077, %v3993
        %v6514 = vpack.c.b16 %v4078, %v3994
        %v6515 = vpack.c.b16 %v4079, %v3995
        %v6516 = vpack.c.b16 %v4080, %v3996
        %v6517 = vpack.c.b16 %v4081, %v3997
        %v6518 = vpack.c.b16 %v4082, %v3998
        %v6519 = vpack.c.b16 %v4083, %v3999
        %v6520 = vpack.c.b16 %v4084, %v4000
        %v6521 = vpack.c.b16 %v4085, %v4001
        %v6522 = vpack.c.b16 %v4086, %v4002
        %v6523 = vpack.c.b16 %v4087, %v4003
        %v6524 = vpack.c.b16 %v4088, %v4004
        %v6525 = vpack.c.b16 %v4089, %v4005
        %v6526 = vpack.c.b16 %v4090, %v4006
        %v6527 = vpack.c.b16 %v4091, %v4007
        %v6528 = vpack.c.b16 %v4092, %v4008
        %v6529 = vpack.c.b16 %v4093, %v4009
        %v6530 = vpack.c.b16 %v4094, %v4010
        %v6531 = vpack.c.b16 %v4095, %v4011
        %v6532 = vpack.c.b16 %v4096, %v4012
        %v6533 = vpack.c.b16 %v4097, %v4013
        %v6534 = vpack.c.b16 %v4098, %v4014
        %v6535 = vpack.c.b16 %v4099, %v4015
        %v6536 = vpack.c.b16 %v4100, %v4016
        %v6537 = vpack.c.b16 %v4101, %v4017
        %v6538 = vpack.c.b16 %v4102, %v4018
        %v6539 = vpack.c.b16 %v4103, %v4019
        %v6540 = vpack.c.b16 %v4104, %v4020
        %v6541 = vpack.c.b16 %v4105, %v4021
        %v6542 = vpack.c.b16 %v4106, %v4022
        %v6543 = vpack.c.b16 %v4107, %v4023
        %v6544 = vpack.c.b16 %v4108, %v4024
        %v6545 = vpack.c.b16 %v4109, %v4025
        %v6546 = vpack.c.b16 %v4110, %v4026
        %v6547 = vpack.c.b16 %v4111, %v4027
        %v6548 = vpack.c.b16 %v4112, %v4028
        %v6549 = vpack.c.b16 %v4113, %v4029
        %v6550 = vpack.c.b16 %v4114, %v4030
        %v6551 = vpack.c.b16 %v4115, %v4031
        %v6552 = vpack.c.b16 %v4116, %v4032
        %v6553 = vpack.c.b16 %v4117, %v4033
        %v6554 = vpack.c.b16 %v4118, %v4034
        %v6555 = vpack.c.b16 %v4119, %v4035
        %v6556 = vpack.c.b16 %v4120, %v4036
        %v6557 = vpack.c.b16 %v4121, %v4037
        %v6558 = vpack.c.b16 %v4122, %v4038
        %v6559 = vpack.c.b16 %v4123, %v4039
        %v6560 = vpack.c.b16 %v4124, %v4040
        %v6561 = vpack.c.b16 %v4125, %v4041
        %v6562 = vpack.c.b16 %v4126, %v4042
        %v6563 = vpack.c.b16 %v4127, %v4043
        %v6564 = vpack.c.b16 %v4128, %v4044
        %v6565 = vpack.c.b16 %v4129, %v4045
        %v6566 = vpack.c.b16 %v4130, %v4046
        %v6567 = vpack.c.b16 %v4131, %v4047
        %v6568 = vpack.c.b16 %v4132, %v4048
        %v6569 = vpack.c.b16 %v4133, %v4049
        %v6570 = vpack.c.b16 %v4134, %v4050
        %v6571 = vpack.c.b16 %v4135, %v4051
        %v6572 = vpack.c.b16 %v4136, %v4052
        %v6573 = vpack.c.b16 %v4137, %v4053
        %v6574 = vpack.c.b16 %v4138, %v4054
        %v6575 = vpack.c.b16 %v4223, %v4139
        %v6576 = vpack.c.b16 %v4224, %v4140
        %v6577 = vpack.c.b16 %v4225, %v4141
        %v6578 = vpack.c.b16 %v4226, %v4142
        %v6579 = vpack.c.b16 %v4227, %v4143
        %v6580 = vpack.c.b16 %v4228, %v4144
        %v6581 = vpack.c.b16 %v4229, %v4145
        %v6582 = vpack.c.b16 %v4230, %v4146
        %v6583 = vpack.c.b16 %v4231, %v4147
        %v6584 = vpack.c.b16 %v4232, %v4148
        %v6585 = vpack.c.b16 %v4233, %v4149
        %v6586 = vpack.c.b16 %v4234, %v4150
        %v6587 = vpack.c.b16 %v4235, %v4151
        %v6588 = vpack.c.b16 %v4236, %v4152
        %v6589 = vpack.c.b16 %v4237, %v4153
        %v6590 = vpack.c.b16 %v4238, %v4154
        %v6591 = vpack.c.b16 %v4239, %v4155
        %v6592 = vpack.c.b16 %v4240, %v4156
        %v6593 = vpack.c.b16 %v4241, %v4157
        %v6594 = vpack.c.b16 %v4242, %v4158
        %v6595 = vpack.c.b16 %v4243, %v4159
        %v6596 = vpack.c.b16 %v4244, %v4160
        %v6597 = vpack.c.b16 %v4245, %v4161
        %v6598 = vpack.c.b16 %v4246, %v4162
        %v6599 = vpack.c.b16 %v4247, %v4163
        %v6600 = vpack.c.b16 %v4248, %v4164
        %v6601 = vpack.c.b16 %v4249, %v4165
        %v6602 = vpack.c.b16 %v4250, %v4166
        %v6603 = vpack.c.b16 %v4251, %v4167
        %v6604 = vpack.c.b16 %v4252, %v4168
        %v6605 = vpack.c.b16 %v4253, %v4169
        %v6606 = vpack.c.b16 %v4254, %v4170
        %v6607 = vpack.c.b16 %v4255, %v4171
        %v6608 = vpack.c.b16 %v4256, %v4172
        %v6609 = vpack.c.b16 %v4257, %v4173
        %v6610 = vpack.c.b16 %v4258, %v4174
        %v6611 = vpack.c.b16 %v4259, %v4175
        %v6612 = vpack.c.b16 %v4260, %v4176
        %v6613 = vpack.c.b16 %v4261, %v4177
        %v6614 = vpack.c.b16 %v4262, %v4178
        %v6615 = vpack.c.b16 %v4263, %v4179
        %v6616 = vpack.c.b16 %v4264, %v4180
        %v6617 = vpack.c.b16 %v4265, %v4181
        %v6618 = vpack.c.b16 %v4266, %v4182
        %v6619 = vpack.c.b16 %v4267, %v4183
        %v6620 = vpack.c.b16 %v4268, %v4184
        %v6621 = vpack.c.b16 %v4269, %v4185
        %v6622 = vpack.c.b16 %v4270, %v4186
        %v6623 = vpack.c.b16 %v4271, %v4187
        %v6624 = vpack.c.b16 %v4272, %v4188
        %v6625 = vpack.c.b16 %v4273, %v4189
        %v6626 = vpack.c.b16 %v4274, %v4190
        %v6627 = vpack.c.b16 %v4275, %v4191
        %v6628 = vpack.c.b16 %v4276, %v4192
        %v6629 = vpack.c.b16 %v4277, %v4193
        %v6630 = vpack.c.b16 %v4278, %v4194
        %v6631 = vpack.c.b16 %v4279, %v4195
        %v6632 = vpack.c.b16 %v4280, %v4196
        %v6633 = vpack.c.b16 %v4281, %v4197
        %v6634 = vpack.c.b16 %v4282, %v4198
        %v6635 = vpack.c.b16 %v4283, %v4199
        %v6636 = vpack.c.b16 %v4284, %v4200
        %v6637 = vpack.c.b16 %v4285, %v4201
        %v6638 = vpack.c.b16 %v4286, %v4202
        %v6639 = vpack.c.b16 %v4287, %v4203
        %v6640 = vpack.c.b16 %v4288, %v4204
        %v6641 = vpack.c.b16 %v4289, %v4205
        %v6642 = vpack.c.b16 %v4290, %v4206
        %v6643 = vpack.c.b16 %v4291, %v4207
        %v6644 = vpack.c.b16 %v4292, %v4208
        %v6645 = vpack.c.b16 %v4293, %v4209
        %v6646 = vpack.c.b16 %v4294, %v4210
        %v6647 = vpack.c.b16 %v4295, %v4211
        %v6648 = vpack.c.b16 %v4296, %v4212
        %v6649 = vpack.c.b16 %v4297, %v4213
        %v6650 = vpack.c.b16 %v4298, %v4214
        %v6651 = vpack.c.b16 %v4299, %v4215
        %v6652 = vpack.c.b16 %v4300, %v4216
        %v6653 = vpack.c.b16 %v4301, %v4217
        %v6654 = vpack.c.b16 %v4302, %v4218
        %v6655 = vpack.c.b16 %v4303, %v4219
        %v6656 = vpack.c.b16 %v4304, %v4220
        %v6657 = vpack.c.b16 %v4305, %v4221
        %v6658 = vpack.c.b16 %v4306, %v4222
        %v6659 = vpack.c.b16 %v4391, %v4307
        %v6660 = vpack.c.b16 %v4392, %v4308
        %v6661 = vpack.c.b16 %v4393, %v4309
        %v6662 = vpack.c.b16 %v4394, %v4310
        %v6663 = vpack.c.b16 %v4395, %v4311
        %v6664 = vpack.c.b16 %v4396, %v4312
        %v6665 = vpack.c.b16 %v4397, %v4313
        %v6666 = vpack.c.b16 %v4398, %v4314
        %v6667 = vpack.c.b16 %v4399, %v4315
        %v6668 = vpack.c.b16 %v4400, %v4316
        %v6669 = vpack.c.b16 %v4401, %v4317
        %v6670 = vpack.c.b16 %v4402, %v4318
        %v6671 = vpack.c.b16 %v4403, %v4319
        %v6672 = vpack.c.b16 %v4404, %v4320
        %v6673 = vpack.c.b16 %v4405, %v4321
        %v6674 = vpack.c.b16 %v4406, %v4322
        %v6675 = vpack.c.b16 %v4407, %v4323
        %v6676 = vpack.c.b16 %v4408, %v4324
        %v6677 = vpack.c.b16 %v4409, %v4325
        %v6678 = vpack.c.b16 %v4410, %v4326
        %v6679 = vpack.c.b16 %v4411, %v4327
        %v6680 = vpack.c.b16 %v4412, %v4328
        %v6681 = vpack.c.b16 %v4413, %v4329
        %v6682 = vpack.c.b16 %v4414, %v4330
        %v6683 = vpack.c.b16 %v4415, %v4331
        %v6684 = vpack.c.b16 %v4416, %v4332
        %v6685 = vpack.c.b16 %v4417, %v4333
        %v6686 = vpack.c.b16 %v4418, %v4334
        %v6687 = vpack.c.b16 %v4419, %v4335
        %v6688 = vpack.c.b16 %v4420, %v4336
        %v6689 = vpack.c.b16 %v4421, %v4337
        %v6690 = vpack.c.b16 %v4422, %v4338
        %v6691 = vpack.c.b16 %v4423, %v4339
        %v6692 = vpack.c.b16 %v4424, %v4340
        %v6693 = vpack.c.b16 %v4425, %v4341
        %v6694 = vpack.c.b16 %v4426, %v4342
        %v6695 = vpack.c.b16 %v4427, %v4343
        %v6696 = vpack.c.b16 %v4428, %v4344
        %v6697 = vpack.c.b16 %v4429, %v4345
        %v6698 = vpack.c.b16 %v4430, %v4346
        %v6699 = vpack.c.b16 %v4431, %v4347
        %v6700 = vpack.c.b16 %v4432, %v4348
        %v6701 = vpack.c.b16 %v4433, %v4349
        %v6702 = vpack.c.b16 %v4434, %v4350
        %v6703 = vpack.c.b16 %v4435, %v4351
        %v6704 = vpack.c.b16 %v4436, %v4352
        %v6705 = vpack.c.b16 %v4437, %v4353
        %v6706 = vpack.c.b16 %v4438, %v4354
        %v6707 = vpack.c.b16 %v4439, %v4355
        %v6708 = vpack.c.b16 %v4440, %v4356
        %v6709 = vpack.c.b16 %v4441, %v4357
        %v6710 = vpack.c.b16 %v4442, %v4358
        %v6711 = vpack.c.b16 %v4443, %v4359
        %v6712 = vpack.c.b16 %v4444, %v4360
        %v6713 = vpack.c.b16 %v4445, %v4361
        %v6714 = vpack.c.b16 %v4446, %v4362
        %v6715 = vpack.c.b16 %v4447, %v4363
        %v6716 = vpack.c.b16 %v4448, %v4364
        %v6717 = vpack.c.b16 %v4449, %v4365
        %v6718 = vpack.c.b16 %v4450, %v4366
        %v6719 = vpack.c.b16 %v4451, %v4367
        %v6720 = vpack.c.b16 %v4452, %v4368
        %v6721 = vpack.c.b16 %v4453, %v4369
        %v6722 = vpack.c.b16 %v4454, %v4370
        %v6723 = vpack.c.b16 %v4455, %v4371
        %v6724 = vpack.c.b16 %v4456, %v4372
        %v6725 = vpack.c.b16 %v4457, %v4373
        %v6726 = vpack.c.b16 %v4458, %v4374
        %v6727 = vpack.c.b16 %v4459, %v4375
        %v6728 = vpack.c.b16 %v4460, %v4376
        %v6729 = vpack.c.b16 %v4461, %v4377
        %v6730 = vpack.c.b16 %v4462, %v4378
        %v6731 = vpack.c.b16 %v4463, %v4379
        %v6732 = vpack.c.b16 %v4464, %v4380
        %v6733 = vpack.c.b16 %v4465, %v4381
        %v6734 = vpack.c.b16 %v4466, %v4382
        %v6735 = vpack.c.b16 %v4467, %v4383
        %v6736 = vpack.c.b16 %v4468, %v4384
        %v6737 = vpack.c.b16 %v4469, %v4385
        %v6738 = vpack.c.b16 %v4470, %v4386
        %v6739 = vpack.c.b16 %v4471, %v4387
        %v6740 = vpack.c.b16 %v4472, %v4388
        %v6741 = vpack.c.b16 %v4473, %v4389
        %v6742 = vpack.c.b16 %v4474, %v4390
        %v6743 = vpack.c.b16 %v4559, %v4475
        %v6744 = vpack.c.b16 %v4560, %v4476
        %v6745 = vpack.c.b16 %v4561, %v4477
        %v6746 = vpack.c.b16 %v4562, %v4478
        %v6747 = vpack.c.b16 %v4563, %v4479
        %v6748 = vpack.c.b16 %v4564, %v4480
        %v6749 = vpack.c.b16 %v4565, %v4481
        %v6750 = vpack.c.b16 %v4566, %v4482
        %v6751 = vpack.c.b16 %v4567, %v4483
        %v6752 = vpack.c.b16 %v4568, %v4484
        %v6753 = vpack.c.b16 %v4569, %v4485
        %v6754 = vpack.c.b16 %v4570, %v4486
        %v6755 = vpack.c.b16 %v4571, %v4487
        %v6756 = vpack.c.b16 %v4572, %v4488
        %v6757 = vpack.c.b16 %v4573, %v4489
        %v6758 = vpack.c.b16 %v4574, %v4490
        %v6759 = vpack.c.b16 %v4575, %v4491
        %v6760 = vpack.c.b16 %v4576, %v4492
        %v6761 = vpack.c.b16 %v4577, %v4493
        %v6762 = vpack.c.b16 %v4578, %v4494
        %v6763 = vpack.c.b16 %v4579, %v4495
        %v6764 = vpack.c.b16 %v4580, %v4496
        %v6765 = vpack.c.b16 %v4581, %v4497
        %v6766 = vpack.c.b16 %v4582, %v4498
        %v6767 = vpack.c.b16 %v4583, %v4499
        %v6768 = vpack.c.b16 %v4584, %v4500
        %v6769 = vpack.c.b16 %v4585, %v4501
        %v6770 = vpack.c.b16 %v4586, %v4502
        %v6771 = vpack.c.b16 %v4587, %v4503
        %v6772 = vpack.c.b16 %v4588, %v4504
        %v6773 = vpack.c.b16 %v4589, %v4505
        %v6774 = vpack.c.b16 %v4590, %v4506
        %v6775 = vpack.c.b16 %v4591, %v4507
        %v6776 = vpack.c.b16 %v4592, %v4508
        %v6777 = vpack.c.b16 %v4593, %v4509
        %v6778 = vpack.c.b16 %v4594, %v4510
        %v6779 = vpack.c.b16 %v4595, %v4511
        %v6780 = vpack.c.b16 %v4596, %v4512
        %v6781 = vpack.c.b16 %v4597, %v4513
        %v6782 = vpack.c.b16 %v4598, %v4514
        %v6783 = vpack.c.b16 %v4599, %v4515
        %v6784 = vpack.c.b16 %v4600, %v4516
        %v6785 = vpack.c.b16 %v4601, %v4517
        %v6786 = vpack.c.b16 %v4602, %v4518
        %v6787 = vpack.c.b16 %v4603, %v4519
        %v6788 = vpack.c.b16 %v4604, %v4520
        %v6789 = vpack.c.b16 %v4605, %v4521
        %v6790 = vpack.c.b16 %v4606, %v4522
        %v6791 = vpack.c.b16 %v4607, %v4523
        %v6792 = vpack.c.b16 %v4608, %v4524
        %v6793 = vpack.c.b16 %v4609, %v4525
        %v6794 = vpack.c.b16 %v4610, %v4526
        %v6795 = vpack.c.b16 %v4611, %v4527
        %v6796 = vpack.c.b16 %v4612, %v4528
        %v6797 = vpack.c.b16 %v4613, %v4529
        %v6798 = vpack.c.b16 %v4614, %v4530
        %v6799 = vpack.c.b16 %v4615, %v4531
        %v6800 = vpack.c.b16 %v4616, %v4532
        %v6801 = vpack.c.b16 %v4617, %v4533
        %v6802 = vpack.c.b16 %v4618, %v4534
        %v6803 = vpack.c.b16 %v4619, %v4535
        %v6804 = vpack.c.b16 %v4620, %v4536
        %v6805 = vpack.c.b16 %v4621, %v4537
        %v6806 = vpack.c.b16 %v4622, %v4538
        %v6807 = vpack.c.b16 %v4623, %v4539
        %v6808 = vpack.c.b16 %v4624, %v4540
        %v6809 = vpack.c.b16 %v4625, %v4541
        %v6810 = vpack.c.b16 %v4626, %v4542
        %v6811 = vpack.c.b16 %v4627, %v4543
        %v6812 = vpack.c.b16 %v4628, %v4544
        %v6813 = vpack.c.b16 %v4629, %v4545
        %v6814 = vpack.c.b16 %v4630, %v4546
        %v6815 = vpack.c.b16 %v4631, %v4547
        %v6816 = vpack.c.b16 %v4632, %v4548
        %v6817 = vpack.c.b16 %v4633, %v4549
        %v6818 = vpack.c.b16 %v4634, %v4550
        %v6819 = vpack.c.b16 %v4635, %v4551
        %v6820 = vpack.c.b16 %v4636, %v4552
        %v6821 = vpack.c.b16 %v4637, %v4553
        %v6822 = vpack.c.b16 %v4638, %v4554
        %v6823 = vpack.c.b16 %v4639, %v4555
        %v6824 = vpack.c.b16 %v4640, %v4556
        %v6825 = vpack.c.b16 %v4641, %v4557
        %v6826 = vpack.c.b16 %v4642, %v4558
        %v6827 = vpack.c.b16 %v4727, %v4643
        %v6828 = vpack.c.b16 %v4728, %v4644
        %v6829 = vpack.c.b16 %v4729, %v4645
        %v6830 = vpack.c.b16 %v4730, %v4646
        %v6831 = vpack.c.b16 %v4731, %v4647
        %v6832 = vpack.c.b16 %v4732, %v4648
        %v6833 = vpack.c.b16 %v4733, %v4649
        %v6834 = vpack.c.b16 %v4734, %v4650
        %v6835 = vpack.c.b16 %v4735, %v4651
        %v6836 = vpack.c.b16 %v4736, %v4652
        %v6837 = vpack.c.b16 %v4737, %v4653
        %v6838 = vpack.c.b16 %v4738, %v4654
        %v6839 = vpack.c.b16 %v4739, %v4655
        %v6840 = vpack.c.b16 %v4740, %v4656
        %v6841 = vpack.c.b16 %v4741, %v4657
        %v6842 = vpack.c.b16 %v4742, %v4658
        %v6843 = vpack.c.b16 %v4743, %v4659
        %v6844 = vpack.c.b16 %v4744, %v4660
        %v6845 = vpack.c.b16 %v4745, %v4661
        %v6846 = vpack.c.b16 %v4746, %v4662
        %v6847 = vpack.c.b16 %v4747, %v4663
        %v6848 = vpack.c.b16 %v4748, %v4664
        %v6849 = vpack.c.b16 %v4749, %v4665
        %v6850 = vpack.c.b16 %v4750, %v4666
        %v6851 = vpack.c.b16 %v4751, %v4667
        %v6852 = vpack.c.b16 %v4752, %v4668
        %v6853 = vpack.c.b16 %v4753, %v4669
        %v6854 = vpack.c.b16 %v4754, %v4670
        %v6855 = vpack.c.b16 %v4755, %v4671
        %v6856 = vpack.c.b16 %v4756, %v4672
        %v6857 = vpack.c.b16 %v4757, %v4673
        %v6858 = vpack.c.b16 %v4758, %v4674
        %v6859 = vpack.c.b16 %v4759, %v4675
        %v6860 = vpack.c.b16 %v4760, %v4676
        %v6861 = vpack.c.b16 %v4761, %v4677
        %v6862 = vpack.c.b16 %v4762, %v4678
        %v6863 = vpack.c.b16 %v4763, %v4679
        %v6864 = vpack.c.b16 %v4764, %v4680
        %v6865 = vpack.c.b16 %v4765, %v4681
        %v6866 = vpack.c.b16 %v4766, %v4682
        %v6867 = vpack.c.b16 %v4767, %v4683
        %v6868 = vpack.c.b16 %v4768, %v4684
        %v6869 = vpack.c.b16 %v4769, %v4685
        %v6870 = vpack.c.b16 %v4770, %v4686
        %v6871 = vpack.c.b16 %v4771, %v4687
        %v6872 = vpack.c.b16 %v4772, %v4688
        %v6873 = vpack.c.b16 %v4773, %v4689
        %v6874 = vpack.c.b16 %v4774, %v4690
        %v6875 = vpack.c.b16 %v4775, %v4691
        %v6876 = vpack.c.b16 %v4776, %v4692
        %v6877 = vpack.c.b16 %v4777, %v4693
        %v6878 = vpack.c.b16 %v4778, %v4694
        %v6879 = vpack.c.b16 %v4779, %v4695
        %v6880 = vpack.c.b16 %v4780, %v4696
        %v6881 = vpack.c.b16 %v4781, %v4697
        %v6882 = vpack.c.b16 %v4782, %v4698
        %v6883 = vpack.c.b16 %v4783, %v4699
        %v6884 = vpack.c.b16 %v4784, %v4700
        %v6885 = vpack.c.b16 %v4785, %v4701
        %v6886 = vpack.c.b16 %v4786, %v4702
        %v6887 = vpack.c.b16 %v4787, %v4703
        %v6888 = vpack.c.b16 %v4788, %v4704
        %v6889 = vpack.c.b16 %v4789, %v4705
        %v6890 = vpack.c.b16 %v4790, %v4706
        %v6891 = vpack.c.b16 %v4791, %v4707
        %v6892 = vpack.c.b16 %v4792, %v4708
        %v6893 = vpack.c.b16 %v4793, %v4709
        %v6894 = vpack.c.b16 %v4794, %v4710
        %v6895 = vpack.c.b16 %v4795, %v4711
        %v6896 = vpack.c.b16 %v4796, %v4712
        %v6897 = vpack.c.b16 %v4797, %v4713
        %v6898 = vpack.c.b16 %v4798, %v4714
        %v6899 = vpack.c.b16 %v4799, %v4715
        %v6900 = vpack.c.b16 %v4800, %v4716
        %v6901 = vpack.c.b16 %v4801, %v4717
        %v6902 = vpack.c.b16 %v4802, %v4718
        %v6903 = vpack.c.b16 %v4803, %v4719
        %v6904 = vpack.c.b16 %v4804, %v4720
        %v6905 = vpack.c.b16 %v4805, %v4721
        %v6906 = vpack.c.b16 %v4806, %v4722
        %v6907 = vpack.c.b16 %v4807, %v4723
        %v6908 = vpack.c.b16 %v4808, %v4724
        %v6909 = vpack.c.b16 %v4809, %v4725
        %v6910 = vpack.c.b16 %v4810, %v4726
        %v6911 = vpack.c.b16 %v4895, %v4811
        %v6912 = vpack.c.b16 %v4896, %v4812
        %v6913 = vpack.c.b16 %v4897, %v4813
        %v6914 = vpack.c.b16 %v4898, %v4814
        %v6915 = vpack.c.b16 %v4899, %v4815
        %v6916 = vpack.c.b16 %v4900, %v4816
        %v6917 = vpack.c.b16 %v4901, %v4817
        %v6918 = vpack.c.b16 %v4902, %v4818
        %v6919 = vpack.c.b16 %v4903, %v4819
        %v6920 = vpack.c.b16 %v4904, %v4820
        %v6921 = vpack.c.b16 %v4905, %v4821
        %v6922 = vpack.c.b16 %v4906, %v4822
        %v6923 = vpack.c.b16 %v4907, %v4823
        %v6924 = vpack.c.b16 %v4908, %v4824
        %v6925 = vpack.c.b16 %v4909, %v4825
        %v6926 = vpack.c.b16 %v4910, %v4826
        %v6927 = vpack.c.b16 %v4911, %v4827
        %v6928 = vpack.c.b16 %v4912, %v4828
        %v6929 = vpack.c.b16 %v4913, %v4829
        %v6930 = vpack.c.b16 %v4914, %v4830
        %v6931 = vpack.c.b16 %v4915, %v4831
        %v6932 = vpack.c.b16 %v4916, %v4832
        %v6933 = vpack.c.b16 %v4917, %v4833
        %v6934 = vpack.c.b16 %v4918, %v4834
        %v6935 = vpack.c.b16 %v4919, %v4835
        %v6936 = vpack.c.b16 %v4920, %v4836
        %v6937 = vpack.c.b16 %v4921, %v4837
        %v6938 = vpack.c.b16 %v4922, %v4838
        %v6939 = vpack.c.b16 %v4923, %v4839
        %v6940 = vpack.c.b16 %v4924, %v4840
        %v6941 = vpack.c.b16 %v4925, %v4841
        %v6942 = vpack.c.b16 %v4926, %v4842
        %v6943 = vpack.c.b16 %v4927, %v4843
        %v6944 = vpack.c.b16 %v4928, %v4844
        %v6945 = vpack.c.b16 %v4929, %v4845
        %v6946 = vpack.c.b16 %v4930, %v4846
        %v6947 = vpack.c.b16 %v4931, %v4847
        %v6948 = vpack.c.b16 %v4932, %v4848
        %v6949 = vpack.c.b16 %v4933, %v4849
        %v6950 = vpack.c.b16 %v4934, %v4850
        %v6951 = vpack.c.b16 %v4935, %v4851
        %v6952 = vpack.c.b16 %v4936, %v4852
        %v6953 = vpack.c.b16 %v4937, %v4853
        %v6954 = vpack.c.b16 %v4938, %v4854
        %v6955 = vpack.c.b16 %v4939, %v4855
        %v6956 = vpack.c.b16 %v4940, %v4856
        %v6957 = vpack.c.b16 %v4941, %v4857
        %v6958 = vpack.c.b16 %v4942, %v4858
        %v6959 = vpack.c.b16 %v4943, %v4859
        %v6960 = vpack.c.b16 %v4944, %v4860
        %v6961 = vpack.c.b16 %v4945, %v4861
        %v6962 = vpack.c.b16 %v4946, %v4862
        %v6963 = vpack.c.b16 %v4947, %v4863
        %v6964 = vpack.c.b16 %v4948, %v4864
        %v6965 = vpack.c.b16 %v4949, %v4865
        %v6966 = vpack.c.b16 %v4950, %v4866
        %v6967 = vpack.c.b16 %v4951, %v4867
        %v6968 = vpack.c.b16 %v4952, %v4868
        %v6969 = vpack.c.b16 %v4953, %v4869
        %v6970 = vpack.c.b16 %v4954, %v4870
        %v6971 = vpack.c.b16 %v4955, %v4871
        %v6972 = vpack.c.b16 %v4956, %v4872
        %v6973 = vpack.c.b16 %v4957, %v4873
        %v6974 = vpack.c.b16 %v4958, %v4874
        %v6975 = vpack.c.b16 %v4959, %v4875
        %v6976 = vpack.c.b16 %v4960, %v4876
        %v6977 = vpack.c.b16 %v4961, %v4877
        %v6978 = vpack.c.b16 %v4962, %v4878
        %v6979 = vpack.c.b16 %v4963, %v4879
        %v6980 = vpack.c.b16 %v4964, %v4880
        %v6981 = vpack.c.b16 %v4965, %v4881
        %v6982 = vpack.c.b16 %v4966, %v4882
        %v6983 = vpack.c.b16 %v4967, %v4883
        %v6984 = vpack.c.b16 %v4968, %v4884
        %v6985 = vpack.c.b16 %v4969, %v4885
        %v6986 = vpack.c.b16 %v4970, %v4886
        %v6987 = vpack.c.b16 %v4971, %v4887
        %v6988 = vpack.c.b16 %v4972, %v4888
        %v6989 = vpack.c.b16 %v4973, %v4889
        %v6990 = vpack.c.b16 %v4974, %v4890
        %v6991 = vpack.c.b16 %v4975, %v4891
        %v6992 = vpack.c.b16 %v4976, %v4892
        %v6993 = vpack.c.b16 %v4977, %v4893
        %v6994 = vpack.c.b16 %v4978, %v4894
        %v6995 = vpack.c.b16 %v5063, %v4979
        %v6996 = vpack.c.b16 %v5064, %v4980
        %v6997 = vpack.c.b16 %v5065, %v4981
        %v6998 = vpack.c.b16 %v5066, %v4982
        %v6999 = vpack.c.b16 %v5067, %v4983
        %v7000 = vpack.c.b16 %v5068, %v4984
        %v7001 = vpack.c.b16 %v5069, %v4985
        %v7002 = vpack.c.b16 %v5070, %v4986
        %v7003 = vpack.c.b16 %v5071, %v4987
        %v7004 = vpack.c.b16 %v5072, %v4988
        %v7005 = vpack.c.b16 %v5073, %v4989
        %v7006 = vpack.c.b16 %v5074, %v4990
        %v7007 = vpack.c.b16 %v5075, %v4991
        %v7008 = vpack.c.b16 %v5076, %v4992
        %v7009 = vpack.c.b16 %v5077, %v4993
        %v7010 = vpack.c.b16 %v5078, %v4994
        %v7011 = vpack.c.b16 %v5079, %v4995
        %v7012 = vpack.c.b16 %v5080, %v4996
        %v7013 = vpack.c.b16 %v5081, %v4997
        %v7014 = vpack.c.b16 %v5082, %v4998
        %v7015 = vpack.c.b16 %v5083, %v4999
        %v7016 = vpack.c.b16 %v5084, %v5000
        %v7017 = vpack.c.b16 %v5085, %v5001
        %v7018 = vpack.c.b16 %v5086, %v5002
        %v7019 = vpack.c.b16 %v5087, %v5003
        %v7020 = vpack.c.b16 %v5088, %v5004
        %v7021 = vpack.c.b16 %v5089, %v5005
        %v7022 = vpack.c.b16 %v5090, %v5006
        %v7023 = vpack.c.b16 %v5091, %v5007
        %v7024 = vpack.c.b16 %v5092, %v5008
        %v7025 = vpack.c.b16 %v5093, %v5009
        %v7026 = vpack.c.b16 %v5094, %v5010
        %v7027 = vpack.c.b16 %v5095, %v5011
        %v7028 = vpack.c.b16 %v5096, %v5012
        %v7029 = vpack.c.b16 %v5097, %v5013
        %v7030 = vpack.c.b16 %v5098, %v5014
        %v7031 = vpack.c.b16 %v5099, %v5015
        %v7032 = vpack.c.b16 %v5100, %v5016
        %v7033 = vpack.c.b16 %v5101, %v5017
        %v7034 = vpack.c.b16 %v5102, %v5018
        %v7035 = vpack.c.b16 %v5103, %v5019
        %v7036 = vpack.c.b16 %v5104, %v5020
        %v7037 = vpack.c.b16 %v5105, %v5021
        %v7038 = vpack.c.b16 %v5106, %v5022
        %v7039 = vpack.c.b16 %v5107, %v5023
        %v7040 = vpack.c.b16 %v5108, %v5024
        %v7041 = vpack.c.b16 %v5109, %v5025
        %v7042 = vpack.c.b16 %v5110, %v5026
        %v7043 = vpack.c.b16 %v5111, %v5027
        %v7044 = vpack.c.b16 %v5112, %v5028
        %v7045 = vpack.c.b16 %v5113, %v5029
        %v7046 = vpack.c.b16 %v5114, %v5030
        %v7047 = vpack.c.b16 %v5115, %v5031
        %v7048 = vpack.c.b16 %v5116, %v5032
        %v7049 = vpack.c.b16 %v5117, %v5033
        %v7050 = vpack.c.b16 %v5118, %v5034
        %v7051 = vpack.c.b16 %v5119, %v5035
        %v7052 = vpack.c.b16 %v5120, %v5036
        %v7053 = vpack.c.b16 %v5121, %v5037
        %v7054 = vpack.c.b16 %v5122, %v5038
        %v7055 = vpack.c.b16 %v5123, %v5039
        %v7056 = vpack.c.b16 %v5124, %v5040
        %v7057 = vpack.c.b16 %v5125, %v5041
        %v7058 = vpack.c.b16 %v5126, %v5042
        %v7059 = vpack.c.b16 %v5127, %v5043
        %v7060 = vpack.c.b16 %v5128, %v5044
        %v7061 = vpack.c.b16 %v5129, %v5045
        %v7062 = vpack.c.b16 %v5130, %v5046
        %v7063 = vpack.c.b16 %v5131, %v5047
        %v7064 = vpack.c.b16 %v5132, %v5048
        %v7065 = vpack.c.b16 %v5133, %v5049
        %v7066 = vpack.c.b16 %v5134, %v5050
        %v7067 = vpack.c.b16 %v5135, %v5051
        %v7068 = vpack.c.b16 %v5136, %v5052
        %v7069 = vpack.c.b16 %v5137, %v5053
        %v7070 = vpack.c.b16 %v5138, %v5054
        %v7071 = vpack.c.b16 %v5139, %v5055
        %v7072 = vpack.c.b16 %v5140, %v5056
        %v7073 = vpack.c.b16 %v5141, %v5057
        %v7074 = vpack.c.b16 %v5142, %v5058
        %v7075 = vpack.c.b16 %v5143, %v5059
        %v7076 = vpack.c.b16 %v5144, %v5060
        %v7077 = vpack.c.b16 %v5145, %v5061
        %v7078 = vpack.c.b16 %v5146, %v5062
        %v7079 = vpack.c.b16 %v5231, %v5147
        %v7080 = vpack.c.b16 %v5232, %v5148
        %v7081 = vpack.c.b16 %v5233, %v5149
        %v7082 = vpack.c.b16 %v5234, %v5150
        %v7083 = vpack.c.b16 %v5235, %v5151
        %v7084 = vpack.c.b16 %v5236, %v5152
        %v7085 = vpack.c.b16 %v5237, %v5153
        %v7086 = vpack.c.b16 %v5238, %v5154
        %v7087 = vpack.c.b16 %v5239, %v5155
        %v7088 = vpack.c.b16 %v5240, %v5156
        %v7089 = vpack.c.b16 %v5241, %v5157
        %v7090 = vpack.c.b16 %v5242, %v5158
        %v7091 = vpack.c.b16 %v5243, %v5159
        %v7092 = vpack.c.b16 %v5244, %v5160
        %v7093 = vpack.c.b16 %v5245, %v5161
        %v7094 = vpack.c.b16 %v5246, %v5162
        %v7095 = vpack.c.b16 %v5247, %v5163
        %v7096 = vpack.c.b16 %v5248, %v5164
        %v7097 = vpack.c.b16 %v5249, %v5165
        %v7098 = vpack.c.b16 %v5250, %v5166
        %v7099 = vpack.c.b16 %v5251, %v5167
        %v7100 = vpack.c.b16 %v5252, %v5168
        %v7101 = vpack.c.b16 %v5253, %v5169
        %v7102 = vpack.c.b16 %v5254, %v5170
        %v7103 = vpack.c.b16 %v5255, %v5171
        %v7104 = vpack.c.b16 %v5256, %v5172
        %v7105 = vpack.c.b16 %v5257, %v5173
        %v7106 = vpack.c.b16 %v5258, %v5174
        %v7107 = vpack.c.b16 %v5259, %v5175
        %v7108 = vpack.c.b16 %v5260, %v5176
        %v7109 = vpack.c.b16 %v5261, %v5177
        %v7110 = vpack.c.b16 %v5262, %v5178
        %v7111 = vpack.c.b16 %v5263, %v5179
        %v7112 = vpack.c.b16 %v5264, %v5180
        %v7113 = vpack.c.b16 %v5265, %v5181
        %v7114 = vpack.c.b16 %v5266, %v5182
        %v7115 = vpack.c.b16 %v5267, %v5183
        %v7116 = vpack.c.b16 %v5268, %v5184
        %v7117 = vpack.c.b16 %v5269, %v5185
        %v7118 = vpack.c.b16 %v5270, %v5186
        %v7119 = vpack.c.b16 %v5271, %v5187
        %v7120 = vpack.c.b16 %v5272, %v5188
        %v7121 = vpack.c.b16 %v5273, %v5189
        %v7122 = vpack.c.b16 %v5274, %v5190
        %v7123 = vpack.c.b16 %v5275, %v5191
        %v7124 = vpack.c.b16 %v5276, %v5192
        %v7125 = vpack.c.b16 %v5277, %v5193
        %v7126 = vpack.c.b16 %v5278, %v5194
        %v7127 = vpack.c.b16 %v5279, %v5195
        %v7128 = vpack.c.b16 %v5280, %v5196
        %v7129 = vpack.c.b16 %v5281, %v5197
        %v7130 = vpack.c.b16 %v5282, %v5198
        %v7131 = vpack.c.b16 %v5283, %v5199
        %v7132 = vpack.c.b16 %v5284, %v5200
        %v7133 = vpack.c.b16 %v5285, %v5201
        %v7134 = vpack.c.b16 %v5286, %v5202
        %v7135 = vpack.c.b16 %v5287, %v5203
        %v7136 = vpack.c.b16 %v5288, %v5204
        %v7137 = vpack.c.b16 %v5289, %v5205
        %v7138 = vpack.c.b16 %v5290, %v5206
        %v7139 = vpack.c.b16 %v5291, %v5207
        %v7140 = vpack.c.b16 %v5292, %v5208
        %v7141 = vpack.c.b16 %v5293, %v5209
        %v7142 = vpack.c.b16 %v5294, %v5210
        %v7143 = vpack.c.b16 %v5295, %v5211
        %v7144 = vpack.c.b16 %v5296, %v5212
        %v7145 = vpack.c.b16 %v5297, %v5213
        %v7146 = vpack.c.b16 %v5298, %v5214
        %v7147 = vpack.c.b16 %v5299, %v5215
        %v7148 = vpack.c.b16 %v5300, %v5216
        %v7149 = vpack.c.b16 %v5301, %v5217
        %v7150 = vpack.c.b16 %v5302, %v5218
        %v7151 = vpack.c.b16 %v5303, %v5219
        %v7152 = vpack.c.b16 %v5304, %v5220
        %v7153 = vpack.c.b16 %v5305, %v5221
        %v7154 = vpack.c.b16 %v5306, %v5222
        %v7155 = vpack.c.b16 %v5307, %v5223
        %v7156 = vpack.c.b16 %v5308, %v5224
        %v7157 = vpack.c.b16 %v5309, %v5225
        %v7158 = vpack.c.b16 %v5310, %v5226
        %v7159 = vpack.c.b16 %v5311, %v5227
        %v7160 = vpack.c.b16 %v5312, %v5228
        %v7161 = vpack.c.b16 %v5313, %v5229
        %v7162 = vpack.c.b16 %v5314, %v5230
        %v7163 = vpack.c.b16 %v5399, %v5315
        %v7164 = vpack.c.b16 %v5400, %v5316
        %v7165 = vpack.c.b16 %v5401, %v5317
        %v7166 = vpack.c.b16 %v5402, %v5318
        %v7167 = vpack.c.b16 %v5403, %v5319
        %v7168 = vpack.c.b16 %v5404, %v5320
        %v7169 = vpack.c.b16 %v5405, %v5321
        %v7170 = vpack.c.b16 %v5406, %v5322
        %v7171 = vpack.c.b16 %v5407, %v5323
        %v7172 = vpack.c.b16 %v5408, %v5324
        %v7173 = vpack.c.b16 %v5409, %v5325
        %v7174 = vpack.c.b16 %v5410, %v5326
        %v7175 = vpack.c.b16 %v5411, %v5327
        %v7176 = vpack.c.b16 %v5412, %v5328
        %v7177 = vpack.c.b16 %v5413, %v5329
        %v7178 = vpack.c.b16 %v5414, %v5330
        %v7179 = vpack.c.b16 %v5415, %v5331
        %v7180 = vpack.c.b16 %v5416, %v5332
        %v7181 = vpack.c.b16 %v5417, %v5333
        %v7182 = vpack.c.b16 %v5418, %v5334
        %v7183 = vpack.c.b16 %v5419, %v5335
        %v7184 = vpack.c.b16 %v5420, %v5336
        %v7185 = vpack.c.b16 %v5421, %v5337
        %v7186 = vpack.c.b16 %v5422, %v5338
        %v7187 = vpack.c.b16 %v5423, %v5339
        %v7188 = vpack.c.b16 %v5424, %v5340
        %v7189 = vpack.c.b16 %v5425, %v5341
        %v7190 = vpack.c.b16 %v5426, %v5342
        %v7191 = vpack.c.b16 %v5427, %v5343
        %v7192 = vpack.c.b16 %v5428, %v5344
        %v7193 = vpack.c.b16 %v5429, %v5345
        %v7194 = vpack.c.b16 %v5430, %v5346
        %v7195 = vpack.c.b16 %v5431, %v5347
        %v7196 = vpack.c.b16 %v5432, %v5348
        %v7197 = vpack.c.b16 %v5433, %v5349
        %v7198 = vpack.c.b16 %v5434, %v5350
        %v7199 = vpack.c.b16 %v5435, %v5351
        %v7200 = vpack.c.b16 %v5436, %v5352
        %v7201 = vpack.c.b16 %v5437, %v5353
        %v7202 = vpack.c.b16 %v5438, %v5354
        %v7203 = vpack.c.b16 %v5439, %v5355
        %v7204 = vpack.c.b16 %v5440, %v5356
        %v7205 = vpack.c.b16 %v5441, %v5357
        %v7206 = vpack.c.b16 %v5442, %v5358
        %v7207 = vpack.c.b16 %v5443, %v5359
        %v7208 = vpack.c.b16 %v5444, %v5360
        %v7209 = vpack.c.b16 %v5445, %v5361
        %v7210 = vpack.c.b16 %v5446, %v5362
        %v7211 = vpack.c.b16 %v5447, %v5363
        %v7212 = vpack.c.b16 %v5448, %v5364
        %v7213 = vpack.c.b16 %v5449, %v5365
        %v7214 = vpack.c.b16 %v5450, %v5366
        %v7215 = vpack.c.b16 %v5451, %v5367
        %v7216 = vpack.c.b16 %v5452, %v5368
        %v7217 = vpack.c.b16 %v5453, %v5369
        %v7218 = vpack.c.b16 %v5454, %v5370
        %v7219 = vpack.c.b16 %v5455, %v5371
        %v7220 = vpack.c.b16 %v5456, %v5372
        %v7221 = vpack.c.b16 %v5457, %v5373
        %v7222 = vpack.c.b16 %v5458, %v5374
        %v7223 = vpack.c.b16 %v5459, %v5375
        %v7224 = vpack.c.b16 %v5460, %v5376
        %v7225 = vpack.c.b16 %v5461, %v5377
        %v7226 = vpack.c.b16 %v5462, %v5378
        %v7227 = vpack.c.b16 %v5463, %v5379
        %v7228 = vpack.c.b16 %v5464, %v5380
        %v7229 = vpack.c.b16 %v5465, %v5381
        %v7230 = vpack.c.b16 %v5466, %v5382
        %v7231 = vpack.c.b16 %v5467, %v5383
        %v7232 = vpack.c.b16 %v5468, %v5384
        %v7233 = vpack.c.b16 %v5469, %v5385
        %v7234 = vpack.c.b16 %v5470, %v5386
        %v7235 = vpack.c.b16 %v5471, %v5387
        %v7236 = vpack.c.b16 %v5472, %v5388
        %v7237 = vpack.c.b16 %v5473, %v5389
        %v7238 = vpack.c.b16 %v5474, %v5390
        %v7239 = vpack.c.b16 %v5475, %v5391
        %v7240 = vpack.c.b16 %v5476, %v5392
        %v7241 = vpack.c.b16 %v5477, %v5393
        %v7242 = vpack.c.b16 %v5478, %v5394
        %v7243 = vpack.c.b16 %v5479, %v5395
        %v7244 = vpack.c.b16 %v5480, %v5396
        %v7245 = vpack.c.b16 %v5481, %v5397
        %v7246 = vpack.c.b16 %v5482, %v5398
        %v7247 = vpack.c.b16 %v5567, %v5483
        %v7248 = vpack.c.b16 %v5568, %v5484
        %v7249 = vpack.c.b16 %v5569, %v5485
        %v7250 = vpack.c.b16 %v5570, %v5486
        %v7251 = vpack.c.b16 %v5571, %v5487
        %v7252 = vpack.c.b16 %v5572, %v5488
        %v7253 = vpack.c.b16 %v5573, %v5489
        %v7254 = vpack.c.b16 %v5574, %v5490
        %v7255 = vpack.c.b16 %v5575, %v5491
        %v7256 = vpack.c.b16 %v5576, %v5492
        %v7257 = vpack.c.b16 %v5577, %v5493
        %v7258 = vpack.c.b16 %v5578, %v5494
        %v7259 = vpack.c.b16 %v5579, %v5495
        %v7260 = vpack.c.b16 %v5580, %v5496
        %v7261 = vpack.c.b16 %v5581, %v5497
        %v7262 = vpack.c.b16 %v5582, %v5498
        %v7263 = vpack.c.b16 %v5583, %v5499
        %v7264 = vpack.c.b16 %v5584, %v5500
        %v7265 = vpack.c.b16 %v5585, %v5501
        %v7266 = vpack.c.b16 %v5586, %v5502
        %v7267 = vpack.c.b16 %v5587, %v5503
        %v7268 = vpack.c.b16 %v5588, %v5504
        %v7269 = vpack.c.b16 %v5589, %v5505
        %v7270 = vpack.c.b16 %v5590, %v5506
        %v7271 = vpack.c.b16 %v5591, %v5507
        %v7272 = vpack.c.b16 %v5592, %v5508
        %v7273 = vpack.c.b16 %v5593, %v5509
        %v7274 = vpack.c.b16 %v5594, %v5510
        %v7275 = vpack.c.b16 %v5595, %v5511
        %v7276 = vpack.c.b16 %v5596, %v5512
        %v7277 = vpack.c.b16 %v5597, %v5513
        %v7278 = vpack.c.b16 %v5598, %v5514
        %v7279 = vpack.c.b16 %v5599, %v5515
        %v7280 = vpack.c.b16 %v5600, %v5516
        %v7281 = vpack.c.b16 %v5601, %v5517
        %v7282 = vpack.c.b16 %v5602, %v5518
        %v7283 = vpack.c.b16 %v5603, %v5519
        %v7284 = vpack.c.b16 %v5604, %v5520
        %v7285 = vpack.c.b16 %v5605, %v5521
        %v7286 = vpack.c.b16 %v5606, %v5522
        %v7287 = vpack.c.b16 %v5607, %v5523
        %v7288 = vpack.c.b16 %v5608, %v5524
        %v7289 = vpack.c.b16 %v5609, %v5525
        %v7290 = vpack.c.b16 %v5610, %v5526
        %v7291 = vpack.c.b16 %v5611, %v5527
        %v7292 = vpack.c.b16 %v5612, %v5528
        %v7293 = vpack.c.b16 %v5613, %v5529
        %v7294 = vpack.c.b16 %v5614, %v5530
        %v7295 = vpack.c.b16 %v5615, %v5531
        %v7296 = vpack.c.b16 %v5616, %v5532
        %v7297 = vpack.c.b16 %v5617, %v5533
        %v7298 = vpack.c.b16 %v5618, %v5534
        %v7299 = vpack.c.b16 %v5619, %v5535
        %v7300 = vpack.c.b16 %v5620, %v5536
        %v7301 = vpack.c.b16 %v5621, %v5537
        %v7302 = vpack.c.b16 %v5622, %v5538
        %v7303 = vpack.c.b16 %v5623, %v5539
        %v7304 = vpack.c.b16 %v5624, %v5540
        %v7305 = vpack.c.b16 %v5625, %v5541
        %v7306 = vpack.c.b16 %v5626, %v5542
        %v7307 = vpack.c.b16 %v5627, %v5543
        %v7308 = vpack.c.b16 %v5628, %v5544
        %v7309 = vpack.c.b16 %v5629, %v5545
        %v7310 = vpack.c.b16 %v5630, %v5546
        %v7311 = vpack.c.b16 %v5631, %v5547
        %v7312 = vpack.c.b16 %v5632, %v5548
        %v7313 = vpack.c.b16 %v5633, %v5549
        %v7314 = vpack.c.b16 %v5634, %v5550
        %v7315 = vpack.c.b16 %v5635, %v5551
        %v7316 = vpack.c.b16 %v5636, %v5552
        %v7317 = vpack.c.b16 %v5637, %v5553
        %v7318 = vpack.c.b16 %v5638, %v5554
        %v7319 = vpack.c.b16 %v5639, %v5555
        %v7320 = vpack.c.b16 %v5640, %v5556
        %v7321 = vpack.c.b16 %v5641, %v5557
        %v7322 = vpack.c.b16 %v5642, %v5558
        %v7323 = vpack.c.b16 %v5643, %v5559
        %v7324 = vpack.c.b16 %v5644, %v5560
        %v7325 = vpack.c.b16 %v5645, %v5561
        %v7326 = vpack.c.b16 %v5646, %v5562
        %v7327 = vpack.c.b16 %v5647, %v5563
        %v7328 = vpack.c.b16 %v5648, %v5564
        %v7329 = vpack.c.b16 %v5649, %v5565
        %v7330 = vpack.c.b16 %v5650, %v5566
        %v7331 = vpack.c.b16 %v5735, %v5651
        %v7332 = vpack.c.b16 %v5736, %v5652
        %v7333 = vpack.c.b16 %v5737, %v5653
        %v7334 = vpack.c.b16 %v5738, %v5654
        %v7335 = vpack.c.b16 %v5739, %v5655
        %v7336 = vpack.c.b16 %v5740, %v5656
        %v7337 = vpack.c.b16 %v5741, %v5657
        %v7338 = vpack.c.b16 %v5742, %v5658
        %v7339 = vpack.c.b16 %v5743, %v5659
        %v7340 = vpack.c.b16 %v5744, %v5660
        %v7341 = vpack.c.b16 %v5745, %v5661
        %v7342 = vpack.c.b16 %v5746, %v5662
        %v7343 = vpack.c.b16 %v5747, %v5663
        %v7344 = vpack.c.b16 %v5748, %v5664
        %v7345 = vpack.c.b16 %v5749, %v5665
        %v7346 = vpack.c.b16 %v5750, %v5666
        %v7347 = vpack.c.b16 %v5751, %v5667
        %v7348 = vpack.c.b16 %v5752, %v5668
        %v7349 = vpack.c.b16 %v5753, %v5669
        %v7350 = vpack.c.b16 %v5754, %v5670
        %v7351 = vpack.c.b16 %v5755, %v5671
        %v7352 = vpack.c.b16 %v5756, %v5672
        %v7353 = vpack.c.b16 %v5757, %v5673
        %v7354 = vpack.c.b16 %v5758, %v5674
        %v7355 = vpack.c.b16 %v5759, %v5675
        %v7356 = vpack.c.b16 %v5760, %v5676
        %v7357 = vpack.c.b16 %v5761, %v5677
        %v7358 = vpack.c.b16 %v5762, %v5678
        %v7359 = vpack.c.b16 %v5763, %v5679
        %v7360 = vpack.c.b16 %v5764, %v5680
        %v7361 = vpack.c.b16 %v5765, %v5681
        %v7362 = vpack.c.b16 %v5766, %v5682
        %v7363 = vpack.c.b16 %v5767, %v5683
        %v7364 = vpack.c.b16 %v5768, %v5684
        %v7365 = vpack.c.b16 %v5769, %v5685
        %v7366 = vpack.c.b16 %v5770, %v5686
        %v7367 = vpack.c.b16 %v5771, %v5687
        %v7368 = vpack.c.b16 %v5772, %v5688
        %v7369 = vpack.c.b16 %v5773, %v5689
        %v7370 = vpack.c.b16 %v5774, %v5690
        %v7371 = vpack.c.b16 %v5775, %v5691
        %v7372 = vpack.c.b16 %v5776, %v5692
        %v7373 = vpack.c.b16 %v5777, %v5693
        %v7374 = vpack.c.b16 %v5778, %v5694
        %v7375 = vpack.c.b16 %v5779, %v5695
        %v7376 = vpack.c.b16 %v5780, %v5696
        %v7377 = vpack.c.b16 %v5781, %v5697
        %v7378 = vpack.c.b16 %v5782, %v5698
        %v7379 = vpack.c.b16 %v5783, %v5699
        %v7380 = vpack.c.b16 %v5784, %v5700
        %v7381 = vpack.c.b16 %v5785, %v5701
        %v7382 = vpack.c.b16 %v5786, %v5702
        %v7383 = vpack.c.b16 %v5787, %v5703
        %v7384 = vpack.c.b16 %v5788, %v5704
        %v7385 = vpack.c.b16 %v5789, %v5705
        %v7386 = vpack.c.b16 %v5790, %v5706
        %v7387 = vpack.c.b16 %v5791, %v5707
        %v7388 = vpack.c.b16 %v5792, %v5708
        %v7389 = vpack.c.b16 %v5793, %v5709
        %v7390 = vpack.c.b16 %v5794, %v5710
        %v7391 = vpack.c.b16 %v5795, %v5711
        %v7392 = vpack.c.b16 %v5796, %v5712
        %v7393 = vpack.c.b16 %v5797, %v5713
        %v7394 = vpack.c.b16 %v5798, %v5714
        %v7395 = vpack.c.b16 %v5799, %v5715
        %v7396 = vpack.c.b16 %v5800, %v5716
        %v7397 = vpack.c.b16 %v5801, %v5717
        %v7398 = vpack.c.b16 %v5802, %v5718
        %v7399 = vpack.c.b16 %v5803, %v5719
        %v7400 = vpack.c.b16 %v5804, %v5720
        %v7401 = vpack.c.b16 %v5805, %v5721
        %v7402 = vpack.c.b16 %v5806, %v5722
        %v7403 = vpack.c.b16 %v5807, %v5723
        %v7404 = vpack.c.b16 %v5808, %v5724
        %v7405 = vpack.c.b16 %v5809, %v5725
        %v7406 = vpack.c.b16 %v5810, %v5726
        %v7407 = vpack.c.b16 %v5811, %v5727
        %v7408 = vpack.c.b16 %v5812, %v5728
        %v7409 = vpack.c.b16 %v5813, %v5729
        %v7410 = vpack.c.b16 %v5814, %v5730
        %v7411 = vpack.c.b16 %v5815, %v5731
        %v7412 = vpack.c.b16 %v5816, %v5732
        %v7413 = vpack.c.b16 %v5817, %v5733
        %v7414 = vpack.c.b16 %v5818, %v5734
        %v7415 = vpack.c.b16 %v5903, %v5819
        %v7416 = vpack.c.b16 %v5904, %v5820
        %v7417 = vpack.c.b16 %v5905, %v5821
        %v7418 = vpack.c.b16 %v5906, %v5822
        %v7419 = vpack.c.b16 %v5907, %v5823
        %v7420 = vpack.c.b16 %v5908, %v5824
        %v7421 = vpack.c.b16 %v5909, %v5825
        %v7422 = vpack.c.b16 %v5910, %v5826
        %v7423 = vpack.c.b16 %v5911, %v5827
        %v7424 = vpack.c.b16 %v5912, %v5828
        %v7425 = vpack.c.b16 %v5913, %v5829
        %v7426 = vpack.c.b16 %v5914, %v5830
        %v7427 = vpack.c.b16 %v5915, %v5831
        %v7428 = vpack.c.b16 %v5916, %v5832
        %v7429 = vpack.c.b16 %v5917, %v5833
        %v7430 = vpack.c.b16 %v5918, %v5834
        %v7431 = vpack.c.b16 %v5919, %v5835
        %v7432 = vpack.c.b16 %v5920, %v5836
        %v7433 = vpack.c.b16 %v5921, %v5837
        %v7434 = vpack.c.b16 %v5922, %v5838
        %v7435 = vpack.c.b16 %v5923, %v5839
        %v7436 = vpack.c.b16 %v5924, %v5840
        %v7437 = vpack.c.b16 %v5925, %v5841
        %v7438 = vpack.c.b16 %v5926, %v5842
        %v7439 = vpack.c.b16 %v5927, %v5843
        %v7440 = vpack.c.b16 %v5928, %v5844
        %v7441 = vpack.c.b16 %v5929, %v5845
        %v7442 = vpack.c.b16 %v5930, %v5846
        %v7443 = vpack.c.b16 %v5931, %v5847
        %v7444 = vpack.c.b16 %v5932, %v5848
        %v7445 = vpack.c.b16 %v5933, %v5849
        %v7446 = vpack.c.b16 %v5934, %v5850
        %v7447 = vpack.c.b16 %v5935, %v5851
        %v7448 = vpack.c.b16 %v5936, %v5852
        %v7449 = vpack.c.b16 %v5937, %v5853
        %v7450 = vpack.c.b16 %v5938, %v5854
        %v7451 = vpack.c.b16 %v5939, %v5855
        %v7452 = vpack.c.b16 %v5940, %v5856
        %v7453 = vpack.c.b16 %v5941, %v5857
        %v7454 = vpack.c.b16 %v5942, %v5858
        %v7455 = vpack.c.b16 %v5943, %v5859
        %v7456 = vpack.c.b16 %v5944, %v5860
        %v7457 = vpack.c.b16 %v5945, %v5861
        %v7458 = vpack.c.b16 %v5946, %v5862
        %v7459 = vpack.c.b16 %v5947, %v5863
        %v7460 = vpack.c.b16 %v5948, %v5864
        %v7461 = vpack.c.b16 %v5949, %v5865
        %v7462 = vpack.c.b16 %v5950, %v5866
        %v7463 = vpack.c.b16 %v5951, %v5867
        %v7464 = vpack.c.b16 %v5952, %v5868
        %v7465 = vpack.c.b16 %v5953, %v5869
        %v7466 = vpack.c.b16 %v5954, %v5870
        %v7467 = vpack.c.b16 %v5955, %v5871
        %v7468 = vpack.c.b16 %v5956, %v5872
        %v7469 = vpack.c.b16 %v5957, %v5873
        %v7470 = vpack.c.b16 %v5958, %v5874
        %v7471 = vpack.c.b16 %v5959, %v5875
        %v7472 = vpack.c.b16 %v5960, %v5876
        %v7473 = vpack.c.b16 %v5961, %v5877
        %v7474 = vpack.c.b16 %v5962, %v5878
        %v7475 = vpack.c.b16 %v5963, %v5879
        %v7476 = vpack.c.b16 %v5964, %v5880
        %v7477 = vpack.c.b16 %v5965, %v5881
        %v7478 = vpack.c.b16 %v5966, %v5882
        %v7479 = vpack.c.b16 %v5967, %v5883
        %v7480 = vpack.c.b16 %v5968, %v5884
        %v7481 = vpack.c.b16 %v5969, %v5885
        %v7482 = vpack.c.b16 %v5970, %v5886
        %v7483 = vpack.c.b16 %v5971, %v5887
        %v7484 = vpack.c.b16 %v5972, %v5888
        %v7485 = vpack.c.b16 %v5973, %v5889
        %v7486 = vpack.c.b16 %v5974, %v5890
        %v7487 = vpack.c.b16 %v5975, %v5891
        %v7488 = vpack.c.b16 %v5976, %v5892
        %v7489 = vpack.c.b16 %v5977, %v5893
        %v7490 = vpack.c.b16 %v5978, %v5894
        %v7491 = vpack.c.b16 %v5979, %v5895
        %v7492 = vpack.c.b16 %v5980, %v5896
        %v7493 = vpack.c.b16 %v5981, %v5897
        %v7494 = vpack.c.b16 %v5982, %v5898
        %v7495 = vpack.c.b16 %v5983, %v5899
        %v7496 = vpack.c.b16 %v5984, %v5900
        %v7497 = vpack.c.b16 %v5985, %v5901
        %v7498 = vpack.c.b16 %v5986, %v5902
        %v7499 = vpack.c.b16 %v6071, %v5987
        %v7500 = vpack.c.b16 %v6072, %v5988
        %v7501 = vpack.c.b16 %v6073, %v5989
        %v7502 = vpack.c.b16 %v6074, %v5990
        %v7503 = vpack.c.b16 %v6075, %v5991
        %v7504 = vpack.c.b16 %v6076, %v5992
        %v7505 = vpack.c.b16 %v6077, %v5993
        %v7506 = vpack.c.b16 %v6078, %v5994
        %v7507 = vpack.c.b16 %v6079, %v5995
        %v7508 = vpack.c.b16 %v6080, %v5996
        %v7509 = vpack.c.b16 %v6081, %v5997
        %v7510 = vpack.c.b16 %v6082, %v5998
        %v7511 = vpack.c.b16 %v6083, %v5999
        %v7512 = vpack.c.b16 %v6084, %v6000
        %v7513 = vpack.c.b16 %v6085, %v6001
        %v7514 = vpack.c.b16 %v6086, %v6002
        %v7515 = vpack.c.b16 %v6087, %v6003
        %v7516 = vpack.c.b16 %v6088, %v6004
        %v7517 = vpack.c.b16 %v6089, %v6005
        %v7518 = vpack.c.b16 %v6090, %v6006
        %v7519 = vpack.c.b16 %v6091, %v6007
        %v7520 = vpack.c.b16 %v6092, %v6008
        %v7521 = vpack.c.b16 %v6093, %v6009
        %v7522 = vpack.c.b16 %v6094, %v6010
        %v7523 = vpack.c.b16 %v6095, %v6011
        %v7524 = vpack.c.b16 %v6096, %v6012
        %v7525 = vpack.c.b16 %v6097, %v6013
        %v7526 = vpack.c.b16 %v6098, %v6014
        %v7527 = vpack.c.b16 %v6099, %v6015
        %v7528 = vpack.c.b16 %v6100, %v6016
        %v7529 = vpack.c.b16 %v6101, %v6017
        %v7530 = vpack.c.b16 %v6102, %v6018
        %v7531 = vpack.c.b16 %v6103, %v6019
        %v7532 = vpack.c.b16 %v6104, %v6020
        %v7533 = vpack.c.b16 %v6105, %v6021
        %v7534 = vpack.c.b16 %v6106, %v6022
        %v7535 = vpack.c.b16 %v6107, %v6023
        %v7536 = vpack.c.b16 %v6108, %v6024
        %v7537 = vpack.c.b16 %v6109, %v6025
        %v7538 = vpack.c.b16 %v6110, %v6026
        %v7539 = vpack.c.b16 %v6111, %v6027
        %v7540 = vpack.c.b16 %v6112, %v6028
        %v7541 = vpack.c.b16 %v6113, %v6029
        %v7542 = vpack.c.b16 %v6114, %v6030
        %v7543 = vpack.c.b16 %v6115, %v6031
        %v7544 = vpack.c.b16 %v6116, %v6032
        %v7545 = vpack.c.b16 %v6117, %v6033
        %v7546 = vpack.c.b16 %v6118, %v6034
        %v7547 = vpack.c.b16 %v6119, %v6035
        %v7548 = vpack.c.b16 %v6120, %v6036
        %v7549 = vpack.c.b16 %v6121, %v6037
        %v7550 = vpack.c.b16 %v6122, %v6038
        %v7551 = vpack.c.b16 %v6123, %v6039
        %v7552 = vpack.c.b16 %v6124, %v6040
        %v7553 = vpack.c.b16 %v6125, %v6041
        %v7554 = vpack.c.b16 %v6126, %v6042
        %v7555 = vpack.c.b16 %v6127, %v6043
        %v7556 = vpack.c.b16 %v6128, %v6044
        %v7557 = vpack.c.b16 %v6129, %v6045
        %v7558 = vpack.c.b16 %v6130, %v6046
        %v7559 = vpack.c.b16 %v6131, %v6047
        %v7560 = vpack.c.b16 %v6132, %v6048
        %v7561 = vpack.c.b16 %v6133, %v6049
        %v7562 = vpack.c.b16 %v6134, %v6050
        %v7563 = vpack.c.b16 %v6135, %v6051
        %v7564 = vpack.c.b16 %v6136, %v6052
        %v7565 = vpack.c.b16 %v6137, %v6053
        %v7566 = vpack.c.b16 %v6138, %v6054
        %v7567 = vpack.c.b16 %v6139, %v6055
        %v7568 = vpack.c.b16 %v6140, %v6056
        %v7569 = vpack.c.b16 %v6141, %v6057
        %v7570 = vpack.c.b16 %v6142, %v6058
        %v7571 = vpack.c.b16 %v6143, %v6059
        %v7572 = vpack.c.b16 %v6144, %v6060
        %v7573 = vpack.c.b16 %v6145, %v6061
        %v7574 = vpack.c.b16 %v6146, %v6062
        %v7575 = vpack.c.b16 %v6147, %v6063
        %v7576 = vpack.c.b16 %v6148, %v6064
        %v7577 = vpack.c.b16 %v6149, %v6065
        %v7578 = vpack.c.b16 %v6150, %v6066
        %v7579 = vpack.c.b16 %v6151, %v6067
        %v7580 = vpack.c.b16 %v6152, %v6068
        %v7581 = vpack.c.b16 %v6153, %v6069
        %v7582 = vpack.c.b16 %v6154, %v6070
        %v7583 = vpack.c.b16 %v6239, %v6155
        %v7584 = vpack.c.b16 %v6240, %v6156
        %v7585 = vpack.c.b16 %v6241, %v6157
        %v7586 = vpack.c.b16 %v6242, %v6158
        %v7587 = vpack.c.b16 %v6243, %v6159
        %v7588 = vpack.c.b16 %v6244, %v6160
        %v7589 = vpack.c.b16 %v6245, %v6161
        %v7590 = vpack.c.b16 %v6246, %v6162
        %v7591 = vpack.c.b16 %v6247, %v6163
        %v7592 = vpack.c.b16 %v6248, %v6164
        %v7593 = vpack.c.b16 %v6249, %v6165
        %v7594 = vpack.c.b16 %v6250, %v6166
        %v7595 = vpack.c.b16 %v6251, %v6167
        %v7596 = vpack.c.b16 %v6252, %v6168
        %v7597 = vpack.c.b16 %v6253, %v6169
        %v7598 = vpack.c.b16 %v6254, %v6170
        %v7599 = vpack.c.b16 %v6255, %v6171
        %v7600 = vpack.c.b16 %v6256, %v6172
        %v7601 = vpack.c.b16 %v6257, %v6173
        %v7602 = vpack.c.b16 %v6258, %v6174
        %v7603 = vpack.c.b16 %v6259, %v6175
        %v7604 = vpack.c.b16 %v6260, %v6176
        %v7605 = vpack.c.b16 %v6261, %v6177
        %v7606 = vpack.c.b16 %v6262, %v6178
        %v7607 = vpack.c.b16 %v6263, %v6179
        %v7608 = vpack.c.b16 %v6264, %v6180
        %v7609 = vpack.c.b16 %v6265, %v6181
        %v7610 = vpack.c.b16 %v6266, %v6182
        %v7611 = vpack.c.b16 %v6267, %v6183
        %v7612 = vpack.c.b16 %v6268, %v6184
        %v7613 = vpack.c.b16 %v6269, %v6185
        %v7614 = vpack.c.b16 %v6270, %v6186
        %v7615 = vpack.c.b16 %v6271, %v6187
        %v7616 = vpack.c.b16 %v6272, %v6188
        %v7617 = vpack.c.b16 %v6273, %v6189
        %v7618 = vpack.c.b16 %v6274, %v6190
        %v7619 = vpack.c.b16 %v6275, %v6191
        %v7620 = vpack.c.b16 %v6276, %v6192
        %v7621 = vpack.c.b16 %v6277, %v6193
        %v7622 = vpack.c.b16 %v6278, %v6194
        %v7623 = vpack.c.b16 %v6279, %v6195
        %v7624 = vpack.c.b16 %v6280, %v6196
        %v7625 = vpack.c.b16 %v6281, %v6197
        %v7626 = vpack.c.b16 %v6282, %v6198
        %v7627 = vpack.c.b16 %v6283, %v6199
        %v7628 = vpack.c.b16 %v6284, %v6200
        %v7629 = vpack.c.b16 %v6285, %v6201
        %v7630 = vpack.c.b16 %v6286, %v6202
        %v7631 = vpack.c.b16 %v6287, %v6203
        %v7632 = vpack.c.b16 %v6288, %v6204
        %v7633 = vpack.c.b16 %v6289, %v6205
        %v7634 = vpack.c.b16 %v6290, %v6206
        %v7635 = vpack.c.b16 %v6291, %v6207
        %v7636 = vpack.c.b16 %v6292, %v6208
        %v7637 = vpack.c.b16 %v6293, %v6209
        %v7638 = vpack.c.b16 %v6294, %v6210
        %v7639 = vpack.c.b16 %v6295, %v6211
        %v7640 = vpack.c.b16 %v6296, %v6212
        %v7641 = vpack.c.b16 %v6297, %v6213
        %v7642 = vpack.c.b16 %v6298, %v6214
        %v7643 = vpack.c.b16 %v6299, %v6215
        %v7644 = vpack.c.b16 %v6300, %v6216
        %v7645 = vpack.c.b16 %v6301, %v6217
        %v7646 = vpack.c.b16 %v6302, %v6218
        %v7647 = vpack.c.b16 %v6303, %v6219
        %v7648 = vpack.c.b16 %v6304, %v6220
        %v7649 = vpack.c.b16 %v6305, %v6221
        %v7650 = vpack.c.b16 %v6306, %v6222
        %v7651 = vpack.c.b16 %v6307, %v6223
        %v7652 = vpack.c.b16 %v6308, %v6224
        %v7653 = vpack.c.b16 %v6309, %v6225
        %v7654 = vpack.c.b16 %v6310, %v6226
        %v7655 = vpack.c.b16 %v6311, %v6227
        %v7656 = vpack.c.b16 %v6312, %v6228
        %v7657 = vpack.c.b16 %v6313, %v6229
        %v7658 = vpack.c.b16 %v6314, %v6230
        %v7659 = vpack.c.b16 %v6315, %v6231
        %v7660 = vpack.c.b16 %v6316, %v6232
        %v7661 = vpack.c.b16 %v6317, %v6233
        %v7662 = vpack.c.b16 %v6318, %v6234
        %v7663 = vpack.c.b16 %v6319, %v6235
        %v7664 = vpack.c.b16 %v6320, %v6236
        %v7665 = vpack.c.b16 %v6321, %v6237
        %v7666 = vpack.c.b16 %v6322, %v6238
        %9011 = vmatprep.subr.bf16.mxu0 %v6324
        %9012 = vmatpush1.bf16.xpose.msra.mxu0 %v6323
        %9013 = vmatprep.subr.bf16.mxu0 %v6408
        %9014 = vmatpush1.bf16.xpose.msra.mxu0 %v6407
        %9015 = vmatprep.subr.bf16.mxu0 %v6492
        %9016 = vmatpush1.bf16.xpose.msra.mxu0 %v6491
        %9017 = vmatprep.subr.bf16.mxu0 %v6576
        %9018 = vmatpush1.bf16.xpose.msra.mxu0 %v6575
        %9019 = vmatprep.subr.bf16.mxu0 %v6660
        %9020 = vmatpush1.bf16.xpose.msra.mxu0 %v6659
        %9021 = vmatprep.subr.bf16.mxu0 %v6744
        %9022 = vmatpush1.bf16.xpose.msra.mxu0 %v6743
        %9023 = vmatprep.subr.bf16.mxu0 %v6828
        %9024 = vmatpush1.bf16.xpose.msra.mxu0 %v6827
        %9025 = vmatprep.subr.bf16.mxu0 %v6912
        %9026 = vmatpush1.bf16.xpose.msra.mxu0 %v6911
        %9027 = vmatprep.subr.bf16.mxu0 %v6996
        %9028 = vmatpush1.bf16.xpose.msra.mxu0 %v6995
        %9029 = vmatprep.subr.bf16.mxu0 %v7080
        %9030 = vmatpush1.bf16.xpose.msra.mxu0 %v7079
        %9031 = vmatprep.subr.bf16.mxu0 %v7164
        %9032 = vmatpush1.bf16.xpose.msra.mxu0 %v7163
        %9033 = vmatprep.subr.bf16.mxu0 %v7248
        %9034 = vmatpush1.bf16.xpose.msra.mxu0 %v7247
        %9035 = vmatprep.subr.bf16.mxu0 %v7332
        %9036 = vmatpush1.bf16.xpose.msra.mxu0 %v7331
        %9037 = vmatprep.subr.bf16.mxu0 %v7416
        %9038 = vmatpush1.bf16.xpose.msra.mxu0 %v7415
        %9039 = vmatprep.subr.bf16.mxu0 %v7500
        %9040 = vmatpush1.bf16.xpose.msra.mxu0 %v7499
        %9041 = vmatprep.subr.bf16.mxu0 %v7584
        %9042 = vmatpush1.bf16.xpose.msra.mxu0 %v7583
        %9043 = vmatprep.mubr.bf16.mxu0 %v2124
        %9044 = vmatmul.mubr.bf16.gmra.mrb[0].mxu0 %v2123
        %v9045 = vpop.f32.mrb[0].mxu0
        %v9046 = vadd.f32 0.0, %v9045
        %v9047 = vpop.f32.mrb[0].mxu0
        %v9048 = vadd.f32 0.0, %v9047
        %v9049 = vpop.f32.mrb[0].mxu0
        %v9050 = vadd.f32 0.0, %v9049
        %v9051 = vpop.f32.mrb[0].mxu0
        %v9052 = vadd.f32 0.0, %v9051
        %9053 = vdwg.mxu0
        %9054 = vmatprep.subr.bf16.mxu0 %v6326
        %9055 = vmatpush1.bf16.xpose.msra.mxu0 %v6325
        %9056 = vmatprep.subr.bf16.mxu0 %v6410
        %9057 = vmatpush1.bf16.xpose.msra.mxu0 %v6409
        %9058 = vmatprep.subr.bf16.mxu0 %v6494
        %9059 = vmatpush1.bf16.xpose.msra.mxu0 %v6493
        %9060 = vmatprep.subr.bf16.mxu0 %v6578
        %9061 = vmatpush1.bf16.xpose.msra.mxu0 %v6577
        %9062 = vmatprep.subr.bf16.mxu0 %v6662
        %9063 = vmatpush1.bf16.xpose.msra.mxu0 %v6661
        %9064 = vmatprep.subr.bf16.mxu0 %v6746
        %9065 = vmatpush1.bf16.xpose.msra.mxu0 %v6745
        %9066 = vmatprep.subr.bf16.mxu0 %v6830
        %9067 = vmatpush1.bf16.xpose.msra.mxu0 %v6829
        %9068 = vmatprep.subr.bf16.mxu0 %v6914
        %9069 = vmatpush1.bf16.xpose.msra.mxu0 %v6913
        %9070 = vmatprep.subr.bf16.mxu0 %v6998
        %9071 = vmatpush1.bf16.xpose.msra.mxu0 %v6997
        %9072 = vmatprep.subr.bf16.mxu0 %v7082
        %9073 = vmatpush1.bf16.xpose.msra.mxu0 %v7081
        %9074 = vmatprep.subr.bf16.mxu0 %v7166
        %9075 = vmatpush1.bf16.xpose.msra.mxu0 %v7165
        %9076 = vmatprep.subr.bf16.mxu0 %v7250
        %9077 = vmatpush1.bf16.xpose.msra.mxu0 %v7249
        %9078 = vmatprep.subr.bf16.mxu0 %v7334
        %9079 = vmatpush1.bf16.xpose.msra.mxu0 %v7333
        %9080 = vmatprep.subr.bf16.mxu0 %v7418
        %9081 = vmatpush1.bf16.xpose.msra.mxu0 %v7417
        %9082 = vmatprep.subr.bf16.mxu0 %v7502
        %9083 = vmatpush1.bf16.xpose.msra.mxu0 %v7501
        %9084 = vmatprep.subr.bf16.mxu0 %v7586
        %9085 = vmatpush1.bf16.xpose.msra.mxu0 %v7585
        %9086 = vmatprep.mubr.bf16.mxu0 %v2126
        %9087 = vmatmul.mubr.bf16.gmra.mrb[0].mxu0 %v2125
        %v9088 = vpop.f32.mrb[0].mxu0
        %v9089 = vadd.f32 %v9046, %v9088
        %v9090 = vpop.f32.mrb[0].mxu0
        %v9091 = vadd.f32 %v9048, %v9090
        %v9092 = vpop.f32.mrb[0].mxu0
        %v9093 = vadd.f32 %v9050, %v9092
        %v9094 = vpop.f32.mrb[0].mxu0
        %v9095 = vadd.f32 %v9052, %v9094
        %9096 = vdwg.mxu0
        %9097 = vmatprep.subr.bf16.mxu0 %v6328
        %9098 = vmatpush1.bf16.xpose.msra.mxu0 %v6327
        %9099 = vmatprep.subr.bf16.mxu0 %v6412
        %9100 = vmatpush1.bf16.xpose.msra.mxu0 %v6411
        %9101 = vmatprep.subr.bf16.mxu0 %v6496
        %9102 = vmatpush1.bf16.xpose.msra.mxu0 %v6495
        %9103 = vmatprep.subr.bf16.mxu0 %v6580
        %9104 = vmatpush1.bf16.xpose.msra.mxu0 %v6579
        %9105 = vmatprep.subr.bf16.mxu0 %v6664
        %9106 = vmatpush1.bf16.xpose.msra.mxu0 %v6663
        %9107 = vmatprep.subr.bf16.mxu0 %v6748
        %9108 = vmatpush1.bf16.xpose.msra.mxu0 %v6747
        %9109 = vmatprep.subr.bf16.mxu0 %v6832
        %9110 = vmatpush1.bf16.xpose.msra.mxu0 %v6831
        %9111 = vmatprep.subr.bf16.mxu0 %v6916
        %9112 = vmatpush1.bf16.xpose.msra.mxu0 %v6915
        %9113 = vmatprep.subr.bf16.mxu0 %v7000
        %9114 = vmatpush1.bf16.xpose.msra.mxu0 %v6999
        %9115 = vmatprep.subr.bf16.mxu0 %v7084
        %9116 = vmatpush1.bf16.xpose.msra.mxu0 %v7083
        %9117 = vmatprep.subr.bf16.mxu0 %v7168
        %9118 = vmatpush1.bf16.xpose.msra.mxu0 %v7167
        %9119 = vmatprep.subr.bf16.mxu0 %v7252
        %9120 = vmatpush1.bf16.xpose.msra.mxu0 %v7251
        %9121 = vmatprep.subr.bf16.mxu0 %v7336
        %9122 = vmatpush1.bf16.xpose.msra.mxu0 %v7335
        %9123 = vmatprep.subr.bf16.mxu0 %v7420
        %9124 = vmatpush1.bf16.xpose.msra.mxu0 %v7419
        %9125 = vmatprep.subr.bf16.mxu0 %v7504
        %9126 = vmatpush1.bf16.xpose.msra.mxu0 %v7503
        %9127 = vmatprep.subr.bf16.mxu0 %v7588
        %9128 = vmatpush1.bf16.xpose.msra.mxu0 %v7587
        %9129 = vmatprep.mubr.bf16.mxu0 %v2128
        %9130 = vmatmul.mubr.bf16.gmra.mrb[0].mxu0 %v2127
        %v9131 = vpop.f32.mrb[0].mxu0
        %v9132 = vadd.f32 %v9089, %v9131
        %v9133 = vpop.f32.mrb[0].mxu0
        %v9134 = vadd.f32 %v9091, %v9133
        %v9135 = vpop.f32.mrb[0].mxu0
        %v9136 = vadd.f32 %v9093, %v9135
        %v9137 = vpop.f32.mrb[0].mxu0
        %v9138 = vadd.f32 %v9095, %v9137
        %9139 = vdwg.mxu0
        %9140 = vmatprep.subr.bf16.mxu0 %v6330
        %9141 = vmatpush1.bf16.xpose.msra.mxu0 %v6329
        %9142 = vmatprep.subr.bf16.mxu0 %v6414
        %9143 = vmatpush1.bf16.xpose.msra.mxu0 %v6413
        %9144 = vmatprep.subr.bf16.mxu0 %v6498
        %9145 = vmatpush1.bf16.xpose.msra.mxu0 %v6497
        %9146 = vmatprep.subr.bf16.mxu0 %v6582
        %9147 = vmatpush1.bf16.xpose.msra.mxu0 %v6581
        %9148 = vmatprep.subr.bf16.mxu0 %v6666
        %9149 = vmatpush1.bf16.xpose.msra.mxu0 %v6665
        %9150 = vmatprep.subr.bf16.mxu0 %v6750
        %9151 = vmatpush1.bf16.xpose.msra.mxu0 %v6749
        %9152 = vmatprep.subr.bf16.mxu0 %v6834
        %9153 = vmatpush1.bf16.xpose.msra.mxu0 %v6833
        %9154 = vmatprep.subr.bf16.mxu0 %v6918
        %9155 = vmatpush1.bf16.xpose.msra.mxu0 %v6917
        %9156 = vmatprep.subr.bf16.mxu0 %v7002
        %9157 = vmatpush1.bf16.xpose.msra.mxu0 %v7001
        %9158 = vmatprep.subr.bf16.mxu0 %v7086
        %9159 = vmatpush1.bf16.xpose.msra.mxu0 %v7085
        %9160 = vmatprep.subr.bf16.mxu0 %v7170
        %9161 = vmatpush1.bf16.xpose.msra.mxu0 %v7169
        %9162 = vmatprep.subr.bf16.mxu0 %v7254
        %9163 = vmatpush1.bf16.xpose.msra.mxu0 %v7253
        %9164 = vmatprep.subr.bf16.mxu0 %v7338
        %9165 = vmatpush1.bf16.xpose.msra.mxu0 %v7337
        %9166 = vmatprep.subr.bf16.mxu0 %v7422
        %9167 = vmatpush1.bf16.xpose.msra.mxu0 %v7421
        %9168 = vmatprep.subr.bf16.mxu0 %v7506
        %9169 = vmatpush1.bf16.xpose.msra.mxu0 %v7505
        %9170 = vmatprep.subr.bf16.mxu0 %v7590
        %9171 = vmatpush1.bf16.xpose.msra.mxu0 %v7589
        %9172 = vmatprep.mubr.bf16.mxu0 %v2130
        %9173 = vmatmul.mubr.bf16.gmra.mrb[0].mxu0 %v2129
        %v9174 = vpop.f32.mrb[0].mxu0
        %v9175 = vadd.f32 %v9132, %v9174
        %v9176 = vpop.f32.mrb[0].mxu0
        %v9177 = vadd.f32 %v9134, %v9176
        %v9178 = vpop.f32.mrb[0].mxu0
        %v9179 = vadd.f32 %v9136, %v9178
        %v9180 = vpop.f32.mrb[0].mxu0
        %v9181 = vadd.f32 %v9138, %v9180
        %9182 = vdwg.mxu0
        %9183 = vmatprep.subr.bf16.mxu0 %v6332
        %9184 = vmatpush1.bf16.xpose.msra.mxu0 %v6331
        %9185 = vmatprep.subr.bf16.mxu0 %v6416
        %9186 = vmatpush1.bf16.xpose.msra.mxu0 %v6415
        %9187 = vmatprep.subr.bf16.mxu0 %v6500
        %9188 = vmatpush1.bf16.xpose.msra.mxu0 %v6499
        %9189 = vmatprep.subr.bf16.mxu0 %v6584
        %9190 = vmatpush1.bf16.xpose.msra.mxu0 %v6583
        %9191 = vmatprep.subr.bf16.mxu0 %v6668
        %9192 = vmatpush1.bf16.xpose.msra.mxu0 %v6667
        %9193 = vmatprep.subr.bf16.mxu0 %v6752
        %9194 = vmatpush1.bf16.xpose.msra.mxu0 %v6751
        %9195 = vmatprep.subr.bf16.mxu0 %v6836
        %9196 = vmatpush1.bf16.xpose.msra.mxu0 %v6835
        %9197 = vmatprep.subr.bf16.mxu0 %v6920
        %9198 = vmatpush1.bf16.xpose.msra.mxu0 %v6919
        %9199 = vmatprep.subr.bf16.mxu0 %v7004
        %9200 = vmatpush1.bf16.xpose.msra.mxu0 %v7003
        %9201 = vmatprep.subr.bf16.mxu0 %v7088
        %9202 = vmatpush1.bf16.xpose.msra.mxu0 %v7087
        %9203 = vmatprep.subr.bf16.mxu0 %v7172
        %9204 = vmatpush1.bf16.xpose.msra.mxu0 %v7171
        %9205 = vmatprep.subr.bf16.mxu0 %v7256
        %9206 = vmatpush1.bf16.xpose.msra.mxu0 %v7255
        %9207 = vmatprep.subr.bf16.mxu0 %v7340
        %9208 = vmatpush1.bf16.xpose.msra.mxu0 %v7339
        %9209 = vmatprep.subr.bf16.mxu0 %v7424
        %9210 = vmatpush1.bf16.xpose.msra.mxu0 %v7423
        %9211 = vmatprep.subr.bf16.mxu0 %v7508
        %9212 = vmatpush1.bf16.xpose.msra.mxu0 %v7507
        %9213 = vmatprep.subr.bf16.mxu0 %v7592
        %9214 = vmatpush1.bf16.xpose.msra.mxu0 %v7591
        %9215 = vmatprep.mubr.bf16.mxu0 %v2132
        %9216 = vmatmul.mubr.bf16.gmra.mrb[0].mxu0 %v2131
        %v9217 = vpop.f32.mrb[0].mxu0
        %v9218 = vadd.f32 %v9175, %v9217
        %v9219 = vpop.f32.mrb[0].mxu0
        %v9220 = vadd.f32 %v9177, %v9219
        %v9221 = vpop.f32.mrb[0].mxu0
        %v9222 = vadd.f32 %v9179, %v9221
        %v9223 = vpop.f32.mrb[0].mxu0
        %v9224 = vadd.f32 %v9181, %v9223
        %9225 = vdwg.mxu0
        %9226 = vmatprep.subr.bf16.mxu0 %v6334
        %9227 = vmatpush1.bf16.xpose.msra.mxu0 %v6333
        %9228 = vmatprep.subr.bf16.mxu0 %v6418
        %9229 = vmatpush1.bf16.xpose.msra.mxu0 %v6417
        %9230 = vmatprep.subr.bf16.mxu0 %v6502
        %9231 = vmatpush1.bf16.xpose.msra.mxu0 %v6501
        %9232 = vmatprep.subr.bf16.mxu0 %v6586
        %9233 = vmatpush1.bf16.xpose.msra.mxu0 %v6585
        %9234 = vmatprep.subr.bf16.mxu0 %v6670
        %9235 = vmatpush1.bf16.xpose.msra.mxu0 %v6669
        %9236 = vmatprep.subr.bf16.mxu0 %v6754
        %9237 = vmatpush1.bf16.xpose.msra.mxu0 %v6753
        %9238 = vmatprep.subr.bf16.mxu0 %v6838
        %9239 = vmatpush1.bf16.xpose.msra.mxu0 %v6837
        %9240 = vmatprep.subr.bf16.mxu0 %v6922
        %9241 = vmatpush1.bf16.xpose.msra.mxu0 %v6921
        %9242 = vmatprep.subr.bf16.mxu0 %v7006
        %9243 = vmatpush1.bf16.xpose.msra.mxu0 %v7005
        %9244 = vmatprep.subr.bf16.mxu0 %v7090
        %9245 = vmatpush1.bf16.xpose.msra.mxu0 %v7089
        %9246 = vmatprep.subr.bf16.mxu0 %v7174
        %9247 = vmatpush1.bf16.xpose.msra.mxu0 %v7173
        %9248 = vmatprep.subr.bf16.mxu0 %v7258
        %9249 = vmatpush1.bf16.xpose.msra.mxu0 %v7257
        %9250 = vmatprep.subr.bf16.mxu0 %v7342
        %9251 = vmatpush1.bf16.xpose.msra.mxu0 %v7341
        %9252 = vmatprep.subr.bf16.mxu0 %v7426
        %9253 = vmatpush1.bf16.xpose.msra.mxu0 %v7425
        %9254 = vmatprep.subr.bf16.mxu0 %v7510
        %9255 = vmatpush1.bf16.xpose.msra.mxu0 %v7509
        %9256 = vmatprep.subr.bf16.mxu0 %v7594
        %9257 = vmatpush1.bf16.xpose.msra.mxu0 %v7593
        %9258 = vmatprep.mubr.bf16.mxu0 %v2134
        %9259 = vmatmul.mubr.bf16.gmra.mrb[0].mxu0 %v2133
        %v9260 = vpop.f32.mrb[0].mxu0
        %v9261 = vadd.f32 %v9218, %v9260
        %v9262 = vpop.f32.mrb[0].mxu0
        %v9263 = vadd.f32 %v9220, %v9262
        %v9264 = vpop.f32.mrb[0].mxu0
        %v9265 = vadd.f32 %v9222, %v9264
        %v9266 = vpop.f32.mrb[0].mxu0
        %v9267 = vadd.f32 %v9224, %v9266
        %9268 = vdwg.mxu0
        %9269 = vmatprep.subr.bf16.mxu0 %v6336
        %9270 = vmatpush1.bf16.xpose.msra.mxu0 %v6335
        %9271 = vmatprep.subr.bf16.mxu0 %v6420
        %9272 = vmatpush1.bf16.xpose.msra.mxu0 %v6419
        %9273 = vmatprep.subr.bf16.mxu0 %v6504
        %9274 = vmatpush1.bf16.xpose.msra.mxu0 %v6503
        %9275 = vmatprep.subr.bf16.mxu0 %v6588
        %9276 = vmatpush1.bf16.xpose.msra.mxu0 %v6587
        %9277 = vmatprep.subr.bf16.mxu0 %v6672
        %9278 = vmatpush1.bf16.xpose.msra.mxu0 %v6671
        %9279 = vmatprep.subr.bf16.mxu0 %v6756
        %9280 = vmatpush1.bf16.xpose.msra.mxu0 %v6755
        %9281 = vmatprep.subr.bf16.mxu0 %v6840
        %9282 = vmatpush1.bf16.xpose.msra.mxu0 %v6839
        %9283 = vmatprep.subr.bf16.mxu0 %v6924
        %9284 = vmatpush1.bf16.xpose.msra.mxu0 %v6923
        %9285 = vmatprep.subr.bf16.mxu0 %v7008
        %9286 = vmatpush1.bf16.xpose.msra.mxu0 %v7007
        %9287 = vmatprep.subr.bf16.mxu0 %v7092
        %9288 = vmatpush1.bf16.xpose.msra.mxu0 %v7091
        %9289 = vmatprep.subr.bf16.mxu0 %v7176
        %9290 = vmatpush1.bf16.xpose.msra.mxu0 %v7175
        %9291 = vmatprep.subr.bf16.mxu0 %v7260
        %9292 = vmatpush1.bf16.xpose.msra.mxu0 %v7259
        %9293 = vmatprep.subr.bf16.mxu0 %v7344
        %9294 = vmatpush1.bf16.xpose.msra.mxu0 %v7343
        %9295 = vmatprep.subr.bf16.mxu0 %v7428
        %9296 = vmatpush1.bf16.xpose.msra.mxu0 %v7427
        %9297 = vmatprep.subr.bf16.mxu0 %v7512
        %9298 = vmatpush1.bf16.xpose.msra.mxu0 %v7511
        %9299 = vmatprep.subr.bf16.mxu0 %v7596
        %9300 = vmatpush1.bf16.xpose.msra.mxu0 %v7595
        %9301 = vmatprep.mubr.bf16.mxu0 %v2136
        %9302 = vmatmul.mubr.bf16.gmra.mrb[0].mxu0 %v2135
        %v9303 = vpop.f32.mrb[0].mxu0
        %v9304 = vadd.f32 %v9261, %v9303
        %v9305 = vpop.f32.mrb[0].mxu0
        %v9306 = vadd.f32 %v9263, %v9305
        %v9307 = vpop.f32.mrb[0].mxu0
        %v9308 = vadd.f32 %v9265, %v9307
        %v9309 = vpop.f32.mrb[0].mxu0
        %v9310 = vadd.f32 %v9267, %v9309
        %9311 = vdwg.mxu0
        %9312 = vmatprep.subr.bf16.mxu0 %v6338
        %9313 = vmatpush1.bf16.xpose.msra.mxu0 %v6337
        %9314 = vmatprep.subr.bf16.mxu0 %v6422
        %9315 = vmatpush1.bf16.xpose.msra.mxu0 %v6421
        %9316 = vmatprep.subr.bf16.mxu0 %v6506
        %9317 = vmatpush1.bf16.xpose.msra.mxu0 %v6505
        %9318 = vmatprep.subr.bf16.mxu0 %v6590
        %9319 = vmatpush1.bf16.xpose.msra.mxu0 %v6589
        %9320 = vmatprep.subr.bf16.mxu0 %v6674
        %9321 = vmatpush1.bf16.xpose.msra.mxu0 %v6673
        %9322 = vmatprep.subr.bf16.mxu0 %v6758
        %9323 = vmatpush1.bf16.xpose.msra.mxu0 %v6757
        %9324 = vmatprep.subr.bf16.mxu0 %v6842
        %9325 = vmatpush1.bf16.xpose.msra.mxu0 %v6841
        %9326 = vmatprep.subr.bf16.mxu0 %v6926
        %9327 = vmatpush1.bf16.xpose.msra.mxu0 %v6925
        %9328 = vmatprep.subr.bf16.mxu0 %v7010
        %9329 = vmatpush1.bf16.xpose.msra.mxu0 %v7009
        %9330 = vmatprep.subr.bf16.mxu0 %v7094
        %9331 = vmatpush1.bf16.xpose.msra.mxu0 %v7093
        %9332 = vmatprep.subr.bf16.mxu0 %v7178
        %9333 = vmatpush1.bf16.xpose.msra.mxu0 %v7177
        %9334 = vmatprep.subr.bf16.mxu0 %v7262
        %9335 = vmatpush1.bf16.xpose.msra.mxu0 %v7261
        %9336 = vmatprep.subr.bf16.mxu0 %v7346
        %9337 = vmatpush1.bf16.xpose.msra.mxu0 %v7345
        %9338 = vmatprep.subr.bf16.mxu0 %v7430
        %9339 = vmatpush1.bf16.xpose.msra.mxu0 %v7429
        %9340 = vmatprep.subr.bf16.mxu0 %v7514
        %9341 = vmatpush1.bf16.xpose.msra.mxu0 %v7513
        %9342 = vmatprep.subr.bf16.mxu0 %v7598
        %9343 = vmatpush1.bf16.xpose.msra.mxu0 %v7597
        %9344 = vmatprep.mubr.bf16.mxu0 %v2138
        %9345 = vmatmul.mubr.bf16.gmra.mrb[0].mxu0 %v2137
        %v9346 = vpop.f32.mrb[0].mxu0
        %v9347 = vadd.f32 %v9304, %v9346
        %v9348 = vpop.f32.mrb[0].mxu0
        %v9349 = vadd.f32 %v9306, %v9348
        %v9350 = vpop.f32.mrb[0].mxu0
        %v9351 = vadd.f32 %v9308, %v9350
        %v9352 = vpop.f32.mrb[0].mxu0
        %v9353 = vadd.f32 %v9310, %v9352
        %9354 = vdwg.mxu0
        %9355 = vmatprep.subr.bf16.mxu0 %v6340
        %9356 = vmatpush1.bf16.xpose.msra.mxu0 %v6339
        %9357 = vmatprep.subr.bf16.mxu0 %v6424
        %9358 = vmatpush1.bf16.xpose.msra.mxu0 %v6423
        %9359 = vmatprep.subr.bf16.mxu0 %v6508
        %9360 = vmatpush1.bf16.xpose.msra.mxu0 %v6507
        %9361 = vmatprep.subr.bf16.mxu0 %v6592
        %9362 = vmatpush1.bf16.xpose.msra.mxu0 %v6591
        %9363 = vmatprep.subr.bf16.mxu0 %v6676
        %9364 = vmatpush1.bf16.xpose.msra.mxu0 %v6675
        %9365 = vmatprep.subr.bf16.mxu0 %v6760
        %9366 = vmatpush1.bf16.xpose.msra.mxu0 %v6759
        %9367 = vmatprep.subr.bf16.mxu0 %v6844
        %9368 = vmatpush1.bf16.xpose.msra.mxu0 %v6843
        %9369 = vmatprep.subr.bf16.mxu0 %v6928
        %9370 = vmatpush1.bf16.xpose.msra.mxu0 %v6927
        %9371 = vmatprep.subr.bf16.mxu0 %v7012
        %9372 = vmatpush1.bf16.xpose.msra.mxu0 %v7011
        %9373 = vmatprep.subr.bf16.mxu0 %v7096
        %9374 = vmatpush1.bf16.xpose.msra.mxu0 %v7095
        %9375 = vmatprep.subr.bf16.mxu0 %v7180
        %9376 = vmatpush1.bf16.xpose.msra.mxu0 %v7179
        %9377 = vmatprep.subr.bf16.mxu0 %v7264
        %9378 = vmatpush1.bf16.xpose.msra.mxu0 %v7263
        %9379 = vmatprep.subr.bf16.mxu0 %v7348
        %9380 = vmatpush1.bf16.xpose.msra.mxu0 %v7347
        %9381 = vmatprep.subr.bf16.mxu0 %v7432
        %9382 = vmatpush1.bf16.xpose.msra.mxu0 %v7431
        %9383 = vmatprep.subr.bf16.mxu0 %v7516
        %9384 = vmatpush1.bf16.xpose.msra.mxu0 %v7515
        %9385 = vmatprep.subr.bf16.mxu0 %v7600
        %9386 = vmatpush1.bf16.xpose.msra.mxu0 %v7599
        %9387 = vmatprep.mubr.bf16.mxu0 %v2140
        %9388 = vmatmul.mubr.bf16.gmra.mrb[0].mxu0 %v2139
        %v9389 = vpop.f32.mrb[0].mxu0
        %v9390 = vadd.f32 %v9347, %v9389
        %v9391 = vpop.f32.mrb[0].mxu0
        %v9392 = vadd.f32 %v9349, %v9391
        %v9393 = vpop.f32.mrb[0].mxu0
        %v9394 = vadd.f32 %v9351, %v9393
        %v9395 = vpop.f32.mrb[0].mxu0
        %v9396 = vadd.f32 %v9353, %v9395
        %9397 = vdwg.mxu0
        %9398 = vmatprep.subr.bf16.mxu0 %v6342
        %9399 = vmatpush1.bf16.xpose.msra.mxu0 %v6341
        %9400 = vmatprep.subr.bf16.mxu0 %v6426
        %9401 = vmatpush1.bf16.xpose.msra.mxu0 %v6425
        %9402 = vmatprep.subr.bf16.mxu0 %v6510
        %9403 = vmatpush1.bf16.xpose.msra.mxu0 %v6509
        %9404 = vmatprep.subr.bf16.mxu0 %v6594
        %9405 = vmatpush1.bf16.xpose.msra.mxu0 %v6593
        %9406 = vmatprep.subr.bf16.mxu0 %v6678
        %9407 = vmatpush1.bf16.xpose.msra.mxu0 %v6677
        %9408 = vmatprep.subr.bf16.mxu0 %v6762
        %9409 = vmatpush1.bf16.xpose.msra.mxu0 %v6761
        %9410 = vmatprep.subr.bf16.mxu0 %v6846
        %9411 = vmatpush1.bf16.xpose.msra.mxu0 %v6845
        %9412 = vmatprep.subr.bf16.mxu0 %v6930
        %9413 = vmatpush1.bf16.xpose.msra.mxu0 %v6929
        %9414 = vmatprep.subr.bf16.mxu0 %v7014
        %9415 = vmatpush1.bf16.xpose.msra.mxu0 %v7013
        %9416 = vmatprep.subr.bf16.mxu0 %v7098
        %9417 = vmatpush1.bf16.xpose.msra.mxu0 %v7097
        %9418 = vmatprep.subr.bf16.mxu0 %v7182
        %9419 = vmatpush1.bf16.xpose.msra.mxu0 %v7181
        %9420 = vmatprep.subr.bf16.mxu0 %v7266
        %9421 = vmatpush1.bf16.xpose.msra.mxu0 %v7265
        %9422 = vmatprep.subr.bf16.mxu0 %v7350
        %9423 = vmatpush1.bf16.xpose.msra.mxu0 %v7349
        %9424 = vmatprep.subr.bf16.mxu0 %v7434
        %9425 = vmatpush1.bf16.xpose.msra.mxu0 %v7433
        %9426 = vmatprep.subr.bf16.mxu0 %v7518
        %9427 = vmatpush1.bf16.xpose.msra.mxu0 %v7517
        %9428 = vmatprep.subr.bf16.mxu0 %v7602
        %9429 = vmatpush1.bf16.xpose.msra.mxu0 %v7601
        %9430 = vmatprep.mubr.bf16.mxu0 %v2142
        %9431 = vmatmul.mubr.bf16.gmra.mrb[0].mxu0 %v2141
        %v9432 = vpop.f32.mrb[0].mxu0
        %v9433 = vadd.f32 %v9390, %v9432
        %v9434 = vpop.f32.mrb[0].mxu0
        %v9435 = vadd.f32 %v9392, %v9434
        %v9436 = vpop.f32.mrb[0].mxu0
        %v9437 = vadd.f32 %v9394, %v9436
        %v9438 = vpop.f32.mrb[0].mxu0
        %v9439 = vadd.f32 %v9396, %v9438
        %9440 = vdwg.mxu0
        %9441 = vmatprep.subr.bf16.mxu0 %v6344
        %9442 = vmatpush1.bf16.xpose.msra.mxu0 %v6343
        %9443 = vmatprep.subr.bf16.mxu0 %v6428
        %9444 = vmatpush1.bf16.xpose.msra.mxu0 %v6427
        %9445 = vmatprep.subr.bf16.mxu0 %v6512
        %9446 = vmatpush1.bf16.xpose.msra.mxu0 %v6511
        %9447 = vmatprep.subr.bf16.mxu0 %v6596
        %9448 = vmatpush1.bf16.xpose.msra.mxu0 %v6595
        %9449 = vmatprep.subr.bf16.mxu0 %v6680
        %9450 = vmatpush1.bf16.xpose.msra.mxu0 %v6679
        %9451 = vmatprep.subr.bf16.mxu0 %v6764
        %9452 = vmatpush1.bf16.xpose.msra.mxu0 %v6763
        %9453 = vmatprep.subr.bf16.mxu0 %v6848
        %9454 = vmatpush1.bf16.xpose.msra.mxu0 %v6847
        %9455 = vmatprep.subr.bf16.mxu0 %v6932
        %9456 = vmatpush1.bf16.xpose.msra.mxu0 %v6931
        %9457 = vmatprep.subr.bf16.mxu0 %v7016
        %9458 = vmatpush1.bf16.xpose.msra.mxu0 %v7015
        %9459 = vmatprep.subr.bf16.mxu0 %v7100
        %9460 = vmatpush1.bf16.xpose.msra.mxu0 %v7099
        %9461 = vmatprep.subr.bf16.mxu0 %v7184
        %9462 = vmatpush1.bf16.xpose.msra.mxu0 %v7183
        %9463 = vmatprep.subr.bf16.mxu0 %v7268
        %9464 = vmatpush1.bf16.xpose.msra.mxu0 %v7267
        %9465 = vmatprep.subr.bf16.mxu0 %v7352
        %9466 = vmatpush1.bf16.xpose.msra.mxu0 %v7351
        %9467 = vmatprep.subr.bf16.mxu0 %v7436
        %9468 = vmatpush1.bf16.xpose.msra.mxu0 %v7435
        %9469 = vmatprep.subr.bf16.mxu0 %v7520
        %9470 = vmatpush1.bf16.xpose.msra.mxu0 %v7519
        %9471 = vmatprep.subr.bf16.mxu0 %v7604
        %9472 = vmatpush1.bf16.xpose.msra.mxu0 %v7603
        %9473 = vmatprep.mubr.bf16.mxu0 %v2144
        %9474 = vmatmul.mubr.bf16.gmra.mrb[0].mxu0 %v2143
        %v9475 = vpop.f32.mrb[0].mxu0
        %v9476 = vadd.f32 %v9433, %v9475
        %v9477 = vpop.f32.mrb[0].mxu0
        %v9478 = vadd.f32 %v9435, %v9477
        %v9479 = vpop.f32.mrb[0].mxu0
        %v9480 = vadd.f32 %v9437, %v9479
        %v9481 = vpop.f32.mrb[0].mxu0
        %v9482 = vadd.f32 %v9439, %v9481
        %9483 = vdwg.mxu0
        %9484 = vmatprep.subr.bf16.mxu0 %v6346
        %9485 = vmatpush1.bf16.xpose.msra.mxu0 %v6345
        %9486 = vmatprep.subr.bf16.mxu0 %v6430
        %9487 = vmatpush1.bf16.xpose.msra.mxu0 %v6429
        %9488 = vmatprep.subr.bf16.mxu0 %v6514
        %9489 = vmatpush1.bf16.xpose.msra.mxu0 %v6513
        %9490 = vmatprep.subr.bf16.mxu0 %v6598
        %9491 = vmatpush1.bf16.xpose.msra.mxu0 %v6597
        %9492 = vmatprep.subr.bf16.mxu0 %v6682
        %9493 = vmatpush1.bf16.xpose.msra.mxu0 %v6681
        %9494 = vmatprep.subr.bf16.mxu0 %v6766
        %9495 = vmatpush1.bf16.xpose.msra.mxu0 %v6765
        %9496 = vmatprep.subr.bf16.mxu0 %v6850
        %9497 = vmatpush1.bf16.xpose.msra.mxu0 %v6849
        %9498 = vmatprep.subr.bf16.mxu0 %v6934
        %9499 = vmatpush1.bf16.xpose.msra.mxu0 %v6933
        %9500 = vmatprep.subr.bf16.mxu0 %v7018
        %9501 = vmatpush1.bf16.xpose.msra.mxu0 %v7017
        %9502 = vmatprep.subr.bf16.mxu0 %v7102
        %9503 = vmatpush1.bf16.xpose.msra.mxu0 %v7101
        %9504 = vmatprep.subr.bf16.mxu0 %v7186
        %9505 = vmatpush1.bf16.xpose.msra.mxu0 %v7185
        %9506 = vmatprep.subr.bf16.mxu0 %v7270
        %9507 = vmatpush1.bf16.xpose.msra.mxu0 %v7269
        %9508 = vmatprep.subr.bf16.mxu0 %v7354
        %9509 = vmatpush1.bf16.xpose.msra.mxu0 %v7353
        %9510 = vmatprep.subr.bf16.mxu0 %v7438
        %9511 = vmatpush1.bf16.xpose.msra.mxu0 %v7437
        %9512 = vmatprep.subr.bf16.mxu0 %v7522
        %9513 = vmatpush1.bf16.xpose.msra.mxu0 %v7521
        %9514 = vmatprep.subr.bf16.mxu0 %v7606
        %9515 = vmatpush1.bf16.xpose.msra.mxu0 %v7605
        %9516 = vmatprep.mubr.bf16.mxu0 %v2146
        %9517 = vmatmul.mubr.bf16.gmra.mrb[0].mxu0 %v2145
        %v9518 = vpop.f32.mrb[0].mxu0
        %v9519 = vadd.f32 %v9476, %v9518
        %v9520 = vpop.f32.mrb[0].mxu0
        %v9521 = vadd.f32 %v9478, %v9520
        %v9522 = vpop.f32.mrb[0].mxu0
        %v9523 = vadd.f32 %v9480, %v9522
        %v9524 = vpop.f32.mrb[0].mxu0
        %v9525 = vadd.f32 %v9482, %v9524
        %9526 = vdwg.mxu0
        %9527 = vmatprep.subr.bf16.mxu0 %v6348
        %9528 = vmatpush1.bf16.xpose.msra.mxu0 %v6347
        %9529 = vmatprep.subr.bf16.mxu0 %v6432
        %9530 = vmatpush1.bf16.xpose.msra.mxu0 %v6431
        %9531 = vmatprep.subr.bf16.mxu0 %v6516
        %9532 = vmatpush1.bf16.xpose.msra.mxu0 %v6515
        %9533 = vmatprep.subr.bf16.mxu0 %v6600
        %9534 = vmatpush1.bf16.xpose.msra.mxu0 %v6599
        %9535 = vmatprep.subr.bf16.mxu0 %v6684
        %9536 = vmatpush1.bf16.xpose.msra.mxu0 %v6683
        %9537 = vmatprep.subr.bf16.mxu0 %v6768
        %9538 = vmatpush1.bf16.xpose.msra.mxu0 %v6767
        %9539 = vmatprep.subr.bf16.mxu0 %v6852
        %9540 = vmatpush1.bf16.xpose.msra.mxu0 %v6851
        %9541 = vmatprep.subr.bf16.mxu0 %v6936
        %9542 = vmatpush1.bf16.xpose.msra.mxu0 %v6935
        %9543 = vmatprep.subr.bf16.mxu0 %v7020
        %9544 = vmatpush1.bf16.xpose.msra.mxu0 %v7019
        %9545 = vmatprep.subr.bf16.mxu0 %v7104
        %9546 = vmatpush1.bf16.xpose.msra.mxu0 %v7103
        %9547 = vmatprep.subr.bf16.mxu0 %v7188
        %9548 = vmatpush1.bf16.xpose.msra.mxu0 %v7187
        %9549 = vmatprep.subr.bf16.mxu0 %v7272
        %9550 = vmatpush1.bf16.xpose.msra.mxu0 %v7271
        %9551 = vmatprep.subr.bf16.mxu0 %v7356
        %9552 = vmatpush1.bf16.xpose.msra.mxu0 %v7355
        %9553 = vmatprep.subr.bf16.mxu0 %v7440
        %9554 = vmatpush1.bf16.xpose.msra.mxu0 %v7439
        %9555 = vmatprep.subr.bf16.mxu0 %v7524
        %9556 = vmatpush1.bf16.xpose.msra.mxu0 %v7523
        %9557 = vmatprep.subr.bf16.mxu0 %v7608
        %9558 = vmatpush1.bf16.xpose.msra.mxu0 %v7607
        %9559 = vmatprep.mubr.bf16.mxu0 %v2148
        %9560 = vmatmul.mubr.bf16.gmra.mrb[0].mxu0 %v2147
        %v9561 = vpop.f32.mrb[0].mxu0
        %v9562 = vadd.f32 %v9519, %v9561
        %v9563 = vpop.f32.mrb[0].mxu0
        %v9564 = vadd.f32 %v9521, %v9563
        %v9565 = vpop.f32.mrb[0].mxu0
        %v9566 = vadd.f32 %v9523, %v9565
        %v9567 = vpop.f32.mrb[0].mxu0
        %v9568 = vadd.f32 %v9525, %v9567
        %9569 = vdwg.mxu0
        %9570 = vmatprep.subr.bf16.mxu0 %v6350
        %9571 = vmatpush1.bf16.xpose.msra.mxu0 %v6349
        %9572 = vmatprep.subr.bf16.mxu0 %v6434
        %9573 = vmatpush1.bf16.xpose.msra.mxu0 %v6433
        %9574 = vmatprep.subr.bf16.mxu0 %v6518
        %9575 = vmatpush1.bf16.xpose.msra.mxu0 %v6517
        %9576 = vmatprep.subr.bf16.mxu0 %v6602
        %9577 = vmatpush1.bf16.xpose.msra.mxu0 %v6601
        %9578 = vmatprep.subr.bf16.mxu0 %v6686
        %9579 = vmatpush1.bf16.xpose.msra.mxu0 %v6685
        %9580 = vmatprep.subr.bf16.mxu0 %v6770
        %9581 = vmatpush1.bf16.xpose.msra.mxu0 %v6769
        %9582 = vmatprep.subr.bf16.mxu0 %v6854
        %9583 = vmatpush1.bf16.xpose.msra.mxu0 %v6853
        %9584 = vmatprep.subr.bf16.mxu0 %v6938
        %9585 = vmatpush1.bf16.xpose.msra.mxu0 %v6937
        %9586 = vmatprep.subr.bf16.mxu0 %v7022
        %9587 = vmatpush1.bf16.xpose.msra.mxu0 %v7021
        %9588 = vmatprep.subr.bf16.mxu0 %v7106
        %9589 = vmatpush1.bf16.xpose.msra.mxu0 %v7105
        %9590 = vmatprep.subr.bf16.mxu0 %v7190
        %9591 = vmatpush1.bf16.xpose.msra.mxu0 %v7189
        %9592 = vmatprep.subr.bf16.mxu0 %v7274
        %9593 = vmatpush1.bf16.xpose.msra.mxu0 %v7273
        %9594 = vmatprep.subr.bf16.mxu0 %v7358
        %9595 = vmatpush1.bf16.xpose.msra.mxu0 %v7357
        %9596 = vmatprep.subr.bf16.mxu0 %v7442
        %9597 = vmatpush1.bf16.xpose.msra.mxu0 %v7441
        %9598 = vmatprep.subr.bf16.mxu0 %v7526
        %9599 = vmatpush1.bf16.xpose.msra.mxu0 %v7525
        %9600 = vmatprep.subr.bf16.mxu0 %v7610
        %9601 = vmatpush1.bf16.xpose.msra.mxu0 %v7609
        %9602 = vmatprep.mubr.bf16.mxu0 %v2150
        %9603 = vmatmul.mubr.bf16.gmra.mrb[0].mxu0 %v2149
        %v9604 = vpop.f32.mrb[0].mxu0
        %v9605 = vadd.f32 %v9562, %v9604
        %v9606 = vpop.f32.mrb[0].mxu0
        %v9607 = vadd.f32 %v9564, %v9606
        %v9608 = vpop.f32.mrb[0].mxu0
        %v9609 = vadd.f32 %v9566, %v9608
        %v9610 = vpop.f32.mrb[0].mxu0
        %v9611 = vadd.f32 %v9568, %v9610
        %9612 = vdwg.mxu0
        %9613 = vmatprep.subr.bf16.mxu0 %v6352
        %9614 = vmatpush1.bf16.xpose.msra.mxu0 %v6351
        %9615 = vmatprep.subr.bf16.mxu0 %v6436
        %9616 = vmatpush1.bf16.xpose.msra.mxu0 %v6435
        %9617 = vmatprep.subr.bf16.mxu0 %v6520
        %9618 = vmatpush1.bf16.xpose.msra.mxu0 %v6519
        %9619 = vmatprep.subr.bf16.mxu0 %v6604
        %9620 = vmatpush1.bf16.xpose.msra.mxu0 %v6603
        %9621 = vmatprep.subr.bf16.mxu0 %v6688
        %9622 = vmatpush1.bf16.xpose.msra.mxu0 %v6687
        %9623 = vmatprep.subr.bf16.mxu0 %v6772
        %9624 = vmatpush1.bf16.xpose.msra.mxu0 %v6771
        %9625 = vmatprep.subr.bf16.mxu0 %v6856
        %9626 = vmatpush1.bf16.xpose.msra.mxu0 %v6855
        %9627 = vmatprep.subr.bf16.mxu0 %v6940
        %9628 = vmatpush1.bf16.xpose.msra.mxu0 %v6939
        %9629 = vmatprep.subr.bf16.mxu0 %v7024
        %9630 = vmatpush1.bf16.xpose.msra.mxu0 %v7023
        %9631 = vmatprep.subr.bf16.mxu0 %v7108
        %9632 = vmatpush1.bf16.xpose.msra.mxu0 %v7107
        %9633 = vmatprep.subr.bf16.mxu0 %v7192
        %9634 = vmatpush1.bf16.xpose.msra.mxu0 %v7191
        %9635 = vmatprep.subr.bf16.mxu0 %v7276
        %9636 = vmatpush1.bf16.xpose.msra.mxu0 %v7275
        %9637 = vmatprep.subr.bf16.mxu0 %v7360
        %9638 = vmatpush1.bf16.xpose.msra.mxu0 %v7359
        %9639 = vmatprep.subr.bf16.mxu0 %v7444
        %9640 = vmatpush1.bf16.xpose.msra.mxu0 %v7443
        %9641 = vmatprep.subr.bf16.mxu0 %v7528
        %9642 = vmatpush1.bf16.xpose.msra.mxu0 %v7527
        %9643 = vmatprep.subr.bf16.mxu0 %v7612
        %9644 = vmatpush1.bf16.xpose.msra.mxu0 %v7611
        %9645 = vmatprep.mubr.bf16.mxu0 %v2152
        %9646 = vmatmul.mubr.bf16.gmra.mrb[0].mxu0 %v2151
        %v9647 = vpop.f32.mrb[0].mxu0
        %v9648 = vadd.f32 %v9605, %v9647
        %v9649 = vpop.f32.mrb[0].mxu0
        %v9650 = vadd.f32 %v9607, %v9649
        %v9651 = vpop.f32.mrb[0].mxu0
        %v9652 = vadd.f32 %v9609, %v9651
        %v9653 = vpop.f32.mrb[0].mxu0
        %v9654 = vadd.f32 %v9611, %v9653
        %9655 = vdwg.mxu0
        %9656 = vmatprep.subr.bf16.mxu0 %v6354
        %9657 = vmatpush1.bf16.xpose.msra.mxu0 %v6353
        %9658 = vmatprep.subr.bf16.mxu0 %v6438
        %9659 = vmatpush1.bf16.xpose.msra.mxu0 %v6437
        %9660 = vmatprep.subr.bf16.mxu0 %v6522
        %9661 = vmatpush1.bf16.xpose.msra.mxu0 %v6521
        %9662 = vmatprep.subr.bf16.mxu0 %v6606
        %9663 = vmatpush1.bf16.xpose.msra.mxu0 %v6605
        %9664 = vmatprep.subr.bf16.mxu0 %v6690
        %9665 = vmatpush1.bf16.xpose.msra.mxu0 %v6689
        %9666 = vmatprep.subr.bf16.mxu0 %v6774
        %9667 = vmatpush1.bf16.xpose.msra.mxu0 %v6773
        %9668 = vmatprep.subr.bf16.mxu0 %v6858
        %9669 = vmatpush1.bf16.xpose.msra.mxu0 %v6857
        %9670 = vmatprep.subr.bf16.mxu0 %v6942
        %9671 = vmatpush1.bf16.xpose.msra.mxu0 %v6941
        %9672 = vmatprep.subr.bf16.mxu0 %v7026
        %9673 = vmatpush1.bf16.xpose.msra.mxu0 %v7025
        %9674 = vmatprep.subr.bf16.mxu0 %v7110
        %9675 = vmatpush1.bf16.xpose.msra.mxu0 %v7109
        %9676 = vmatprep.subr.bf16.mxu0 %v7194
        %9677 = vmatpush1.bf16.xpose.msra.mxu0 %v7193
        %9678 = vmatprep.subr.bf16.mxu0 %v7278
        %9679 = vmatpush1.bf16.xpose.msra.mxu0 %v7277
        %9680 = vmatprep.subr.bf16.mxu0 %v7362
        %9681 = vmatpush1.bf16.xpose.msra.mxu0 %v7361
        %9682 = vmatprep.subr.bf16.mxu0 %v7446
        %9683 = vmatpush1.bf16.xpose.msra.mxu0 %v7445
        %9684 = vmatprep.subr.bf16.mxu0 %v7530
        %9685 = vmatpush1.bf16.xpose.msra.mxu0 %v7529
        %9686 = vmatprep.subr.bf16.mxu0 %v7614
        %9687 = vmatpush1.bf16.xpose.msra.mxu0 %v7613
        %9688 = vmatprep.mubr.bf16.mxu0 %v2154
        %9689 = vmatmul.mubr.bf16.gmra.mrb[0].mxu0 %v2153
        %v9690 = vpop.f32.mrb[0].mxu0
        %v9691 = vadd.f32 %v9648, %v9690
        %v9692 = vpop.f32.mrb[0].mxu0
        %v9693 = vadd.f32 %v9650, %v9692
        %v9694 = vpop.f32.mrb[0].mxu0
        %v9695 = vadd.f32 %v9652, %v9694
        %v9696 = vpop.f32.mrb[0].mxu0
        %v9697 = vadd.f32 %v9654, %v9696
        %9698 = vdwg.mxu0
        %9699 = vmatprep.subr.bf16.mxu0 %v6356
        %9700 = vmatpush1.bf16.xpose.msra.mxu0 %v6355
        %9701 = vmatprep.subr.bf16.mxu0 %v6440
        %9702 = vmatpush1.bf16.xpose.msra.mxu0 %v6439
        %9703 = vmatprep.subr.bf16.mxu0 %v6524
        %9704 = vmatpush1.bf16.xpose.msra.mxu0 %v6523
        %9705 = vmatprep.subr.bf16.mxu0 %v6608
        %9706 = vmatpush1.bf16.xpose.msra.mxu0 %v6607
        %9707 = vmatprep.subr.bf16.mxu0 %v6692
        %9708 = vmatpush1.bf16.xpose.msra.mxu0 %v6691
        %9709 = vmatprep.subr.bf16.mxu0 %v6776
        %9710 = vmatpush1.bf16.xpose.msra.mxu0 %v6775
        %9711 = vmatprep.subr.bf16.mxu0 %v6860
        %9712 = vmatpush1.bf16.xpose.msra.mxu0 %v6859
        %9713 = vmatprep.subr.bf16.mxu0 %v6944
        %9714 = vmatpush1.bf16.xpose.msra.mxu0 %v6943
        %9715 = vmatprep.subr.bf16.mxu0 %v7028
        %9716 = vmatpush1.bf16.xpose.msra.mxu0 %v7027
        %9717 = vmatprep.subr.bf16.mxu0 %v7112
        %9718 = vmatpush1.bf16.xpose.msra.mxu0 %v7111
        %9719 = vmatprep.subr.bf16.mxu0 %v7196
        %9720 = vmatpush1.bf16.xpose.msra.mxu0 %v7195
        %9721 = vmatprep.subr.bf16.mxu0 %v7280
        %9722 = vmatpush1.bf16.xpose.msra.mxu0 %v7279
        %9723 = vmatprep.subr.bf16.mxu0 %v7364
        %9724 = vmatpush1.bf16.xpose.msra.mxu0 %v7363
        %9725 = vmatprep.subr.bf16.mxu0 %v7448
        %9726 = vmatpush1.bf16.xpose.msra.mxu0 %v7447
        %9727 = vmatprep.subr.bf16.mxu0 %v7532
        %9728 = vmatpush1.bf16.xpose.msra.mxu0 %v7531
        %9729 = vmatprep.subr.bf16.mxu0 %v7616
        %9730 = vmatpush1.bf16.xpose.msra.mxu0 %v7615
        %9731 = vmatprep.mubr.bf16.mxu0 %v2156
        %9732 = vmatmul.mubr.bf16.gmra.mrb[0].mxu0 %v2155
        %v9733 = vpop.f32.mrb[0].mxu0
        %v9734 = vadd.f32 %v9691, %v9733
        %v9735 = vpop.f32.mrb[0].mxu0
        %v9736 = vadd.f32 %v9693, %v9735
        %v9737 = vpop.f32.mrb[0].mxu0
        %v9738 = vadd.f32 %v9695, %v9737
        %v9739 = vpop.f32.mrb[0].mxu0
        %v9740 = vadd.f32 %v9697, %v9739
        %9741 = vdwg.mxu0
        %9742 = vmatprep.subr.bf16.mxu0 %v6358
        %9743 = vmatpush1.bf16.xpose.msra.mxu0 %v6357
        %9744 = vmatprep.subr.bf16.mxu0 %v6442
        %9745 = vmatpush1.bf16.xpose.msra.mxu0 %v6441
        %9746 = vmatprep.subr.bf16.mxu0 %v6526
        %9747 = vmatpush1.bf16.xpose.msra.mxu0 %v6525
        %9748 = vmatprep.subr.bf16.mxu0 %v6610
        %9749 = vmatpush1.bf16.xpose.msra.mxu0 %v6609
        %9750 = vmatprep.subr.bf16.mxu0 %v6694
        %9751 = vmatpush1.bf16.xpose.msra.mxu0 %v6693
        %9752 = vmatprep.subr.bf16.mxu0 %v6778
        %9753 = vmatpush1.bf16.xpose.msra.mxu0 %v6777
        %9754 = vmatprep.subr.bf16.mxu0 %v6862
        %9755 = vmatpush1.bf16.xpose.msra.mxu0 %v6861
        %9756 = vmatprep.subr.bf16.mxu0 %v6946
        %9757 = vmatpush1.bf16.xpose.msra.mxu0 %v6945
        %9758 = vmatprep.subr.bf16.mxu0 %v7030
        %9759 = vmatpush1.bf16.xpose.msra.mxu0 %v7029
        %9760 = vmatprep.subr.bf16.mxu0 %v7114
        %9761 = vmatpush1.bf16.xpose.msra.mxu0 %v7113
        %9762 = vmatprep.subr.bf16.mxu0 %v7198
        %9763 = vmatpush1.bf16.xpose.msra.mxu0 %v7197
        %9764 = vmatprep.subr.bf16.mxu0 %v7282
        %9765 = vmatpush1.bf16.xpose.msra.mxu0 %v7281
        %9766 = vmatprep.subr.bf16.mxu0 %v7366
        %9767 = vmatpush1.bf16.xpose.msra.mxu0 %v7365
        %9768 = vmatprep.subr.bf16.mxu0 %v7450
        %9769 = vmatpush1.bf16.xpose.msra.mxu0 %v7449
        %9770 = vmatprep.subr.bf16.mxu0 %v7534
        %9771 = vmatpush1.bf16.xpose.msra.mxu0 %v7533
        %9772 = vmatprep.subr.bf16.mxu0 %v7618
        %9773 = vmatpush1.bf16.xpose.msra.mxu0 %v7617
        %9774 = vmatprep.mubr.bf16.mxu0 %v2158
        %9775 = vmatmul.mubr.bf16.gmra.mrb[0].mxu0 %v2157
        %v9776 = vpop.f32.mrb[0].mxu0
        %v9777 = vadd.f32 %v9734, %v9776
        %v9778 = vpop.f32.mrb[0].mxu0
        %v9779 = vadd.f32 %v9736, %v9778
        %v9780 = vpop.f32.mrb[0].mxu0
        %v9781 = vadd.f32 %v9738, %v9780
        %v9782 = vpop.f32.mrb[0].mxu0
        %v9783 = vadd.f32 %v9740, %v9782
        %9784 = vdwg.mxu0
        %9785 = vmatprep.subr.bf16.mxu0 %v6360
        %9786 = vmatpush1.bf16.xpose.msra.mxu0 %v6359
        %9787 = vmatprep.subr.bf16.mxu0 %v6444
        %9788 = vmatpush1.bf16.xpose.msra.mxu0 %v6443
        %9789 = vmatprep.subr.bf16.mxu0 %v6528
        %9790 = vmatpush1.bf16.xpose.msra.mxu0 %v6527
        %9791 = vmatprep.subr.bf16.mxu0 %v6612
        %9792 = vmatpush1.bf16.xpose.msra.mxu0 %v6611
        %9793 = vmatprep.subr.bf16.mxu0 %v6696
        %9794 = vmatpush1.bf16.xpose.msra.mxu0 %v6695
        %9795 = vmatprep.subr.bf16.mxu0 %v6780
        %9796 = vmatpush1.bf16.xpose.msra.mxu0 %v6779
        %9797 = vmatprep.subr.bf16.mxu0 %v6864
        %9798 = vmatpush1.bf16.xpose.msra.mxu0 %v6863
        %9799 = vmatprep.subr.bf16.mxu0 %v6948
        %9800 = vmatpush1.bf16.xpose.msra.mxu0 %v6947
        %9801 = vmatprep.subr.bf16.mxu0 %v7032
        %9802 = vmatpush1.bf16.xpose.msra.mxu0 %v7031
        %9803 = vmatprep.subr.bf16.mxu0 %v7116
        %9804 = vmatpush1.bf16.xpose.msra.mxu0 %v7115
        %9805 = vmatprep.subr.bf16.mxu0 %v7200
        %9806 = vmatpush1.bf16.xpose.msra.mxu0 %v7199
        %9807 = vmatprep.subr.bf16.mxu0 %v7284
        %9808 = vmatpush1.bf16.xpose.msra.mxu0 %v7283
        %9809 = vmatprep.subr.bf16.mxu0 %v7368
        %9810 = vmatpush1.bf16.xpose.msra.mxu0 %v7367
        %9811 = vmatprep.subr.bf16.mxu0 %v7452
        %9812 = vmatpush1.bf16.xpose.msra.mxu0 %v7451
        %9813 = vmatprep.subr.bf16.mxu0 %v7536
        %9814 = vmatpush1.bf16.xpose.msra.mxu0 %v7535
        %9815 = vmatprep.subr.bf16.mxu0 %v7620
        %9816 = vmatpush1.bf16.xpose.msra.mxu0 %v7619
        %9817 = vmatprep.mubr.bf16.mxu0 %v2160
        %9818 = vmatmul.mubr.bf16.gmra.mrb[0].mxu0 %v2159
        %v9819 = vpop.f32.mrb[0].mxu0
        %v9820 = vadd.f32 %v9777, %v9819
        %v9821 = vpop.f32.mrb[0].mxu0
        %v9822 = vadd.f32 %v9779, %v9821
        %v9823 = vpop.f32.mrb[0].mxu0
        %v9824 = vadd.f32 %v9781, %v9823
        %v9825 = vpop.f32.mrb[0].mxu0
        %v9826 = vadd.f32 %v9783, %v9825
        %9827 = vdwg.mxu0
        %9828 = vmatprep.subr.bf16.mxu0 %v6362
        %9829 = vmatpush1.bf16.xpose.msra.mxu0 %v6361
        %9830 = vmatprep.subr.bf16.mxu0 %v6446
        %9831 = vmatpush1.bf16.xpose.msra.mxu0 %v6445
        %9832 = vmatprep.subr.bf16.mxu0 %v6530
        %9833 = vmatpush1.bf16.xpose.msra.mxu0 %v6529
        %9834 = vmatprep.subr.bf16.mxu0 %v6614
        %9835 = vmatpush1.bf16.xpose.msra.mxu0 %v6613
        %9836 = vmatprep.subr.bf16.mxu0 %v6698
        %9837 = vmatpush1.bf16.xpose.msra.mxu0 %v6697
        %9838 = vmatprep.subr.bf16.mxu0 %v6782
        %9839 = vmatpush1.bf16.xpose.msra.mxu0 %v6781
        %9840 = vmatprep.subr.bf16.mxu0 %v6866
        %9841 = vmatpush1.bf16.xpose.msra.mxu0 %v6865
        %9842 = vmatprep.subr.bf16.mxu0 %v6950
        %9843 = vmatpush1.bf16.xpose.msra.mxu0 %v6949
        %9844 = vmatprep.subr.bf16.mxu0 %v7034
        %9845 = vmatpush1.bf16.xpose.msra.mxu0 %v7033
        %9846 = vmatprep.subr.bf16.mxu0 %v7118
        %9847 = vmatpush1.bf16.xpose.msra.mxu0 %v7117
        %9848 = vmatprep.subr.bf16.mxu0 %v7202
        %9849 = vmatpush1.bf16.xpose.msra.mxu0 %v7201
        %9850 = vmatprep.subr.bf16.mxu0 %v7286
        %9851 = vmatpush1.bf16.xpose.msra.mxu0 %v7285
        %9852 = vmatprep.subr.bf16.mxu0 %v7370
        %9853 = vmatpush1.bf16.xpose.msra.mxu0 %v7369
        %9854 = vmatprep.subr.bf16.mxu0 %v7454
        %9855 = vmatpush1.bf16.xpose.msra.mxu0 %v7453
        %9856 = vmatprep.subr.bf16.mxu0 %v7538
        %9857 = vmatpush1.bf16.xpose.msra.mxu0 %v7537
        %9858 = vmatprep.subr.bf16.mxu0 %v7622
        %9859 = vmatpush1.bf16.xpose.msra.mxu0 %v7621
        %9860 = vmatprep.mubr.bf16.mxu0 %v2162
        %9861 = vmatmul.mubr.bf16.gmra.mrb[0].mxu0 %v2161
        %v9862 = vpop.f32.mrb[0].mxu0
        %v9863 = vadd.f32 %v9820, %v9862
        %v9864 = vpop.f32.mrb[0].mxu0
        %v9865 = vadd.f32 %v9822, %v9864
        %v9866 = vpop.f32.mrb[0].mxu0
        %v9867 = vadd.f32 %v9824, %v9866
        %v9868 = vpop.f32.mrb[0].mxu0
        %v9869 = vadd.f32 %v9826, %v9868
        %9870 = vdwg.mxu0
        %9871 = vmatprep.subr.bf16.mxu0 %v6364
        %9872 = vmatpush1.bf16.xpose.msra.mxu0 %v6363
        %9873 = vmatprep.subr.bf16.mxu0 %v6448
        %9874 = vmatpush1.bf16.xpose.msra.mxu0 %v6447
        %9875 = vmatprep.subr.bf16.mxu0 %v6532
        %9876 = vmatpush1.bf16.xpose.msra.mxu0 %v6531
        %9877 = vmatprep.subr.bf16.mxu0 %v6616
        %9878 = vmatpush1.bf16.xpose.msra.mxu0 %v6615
        %9879 = vmatprep.subr.bf16.mxu0 %v6700
        %9880 = vmatpush1.bf16.xpose.msra.mxu0 %v6699
        %9881 = vmatprep.subr.bf16.mxu0 %v6784
        %9882 = vmatpush1.bf16.xpose.msra.mxu0 %v6783
        %9883 = vmatprep.subr.bf16.mxu0 %v6868
        %9884 = vmatpush1.bf16.xpose.msra.mxu0 %v6867
        %9885 = vmatprep.subr.bf16.mxu0 %v6952
        %9886 = vmatpush1.bf16.xpose.msra.mxu0 %v6951
        %9887 = vmatprep.subr.bf16.mxu0 %v7036
        %9888 = vmatpush1.bf16.xpose.msra.mxu0 %v7035
        %9889 = vmatprep.subr.bf16.mxu0 %v7120
        %9890 = vmatpush1.bf16.xpose.msra.mxu0 %v7119
        %9891 = vmatprep.subr.bf16.mxu0 %v7204
        %9892 = vmatpush1.bf16.xpose.msra.mxu0 %v7203
        %9893 = vmatprep.subr.bf16.mxu0 %v7288
        %9894 = vmatpush1.bf16.xpose.msra.mxu0 %v7287
        %9895 = vmatprep.subr.bf16.mxu0 %v7372
        %9896 = vmatpush1.bf16.xpose.msra.mxu0 %v7371
        %9897 = vmatprep.subr.bf16.mxu0 %v7456
        %9898 = vmatpush1.bf16.xpose.msra.mxu0 %v7455
        %9899 = vmatprep.subr.bf16.mxu0 %v7540
        %9900 = vmatpush1.bf16.xpose.msra.mxu0 %v7539
        %9901 = vmatprep.subr.bf16.mxu0 %v7624
        %9902 = vmatpush1.bf16.xpose.msra.mxu0 %v7623
        %9903 = vmatprep.mubr.bf16.mxu0 %v2164
        %9904 = vmatmul.mubr.bf16.gmra.mrb[0].mxu0 %v2163
        %v9905 = vpop.f32.mrb[0].mxu0
        %v9906 = vadd.f32 %v9863, %v9905
        %v9907 = vpop.f32.mrb[0].mxu0
        %v9908 = vadd.f32 %v9865, %v9907
        %v9909 = vpop.f32.mrb[0].mxu0
        %v9910 = vadd.f32 %v9867, %v9909
        %v9911 = vpop.f32.mrb[0].mxu0
        %v9912 = vadd.f32 %v9869, %v9911
        %9913 = vdwg.mxu0
        %9914 = vmatprep.subr.bf16.mxu0 %v6366
        %9915 = vmatpush1.bf16.xpose.msra.mxu0 %v6365
        %9916 = vmatprep.subr.bf16.mxu0 %v6450
        %9917 = vmatpush1.bf16.xpose.msra.mxu0 %v6449
        %9918 = vmatprep.subr.bf16.mxu0 %v6534
        %9919 = vmatpush1.bf16.xpose.msra.mxu0 %v6533
        %9920 = vmatprep.subr.bf16.mxu0 %v6618
        %9921 = vmatpush1.bf16.xpose.msra.mxu0 %v6617
        %9922 = vmatprep.subr.bf16.mxu0 %v6702
        %9923 = vmatpush1.bf16.xpose.msra.mxu0 %v6701
        %9924 = vmatprep.subr.bf16.mxu0 %v6786
        %9925 = vmatpush1.bf16.xpose.msra.mxu0 %v6785
        %9926 = vmatprep.subr.bf16.mxu0 %v6870
        %9927 = vmatpush1.bf16.xpose.msra.mxu0 %v6869
        %9928 = vmatprep.subr.bf16.mxu0 %v6954
        %9929 = vmatpush1.bf16.xpose.msra.mxu0 %v6953
        %9930 = vmatprep.subr.bf16.mxu0 %v7038
        %9931 = vmatpush1.bf16.xpose.msra.mxu0 %v7037
        %9932 = vmatprep.subr.bf16.mxu0 %v7122
        %9933 = vmatpush1.bf16.xpose.msra.mxu0 %v7121
        %9934 = vmatprep.subr.bf16.mxu0 %v7206
        %9935 = vmatpush1.bf16.xpose.msra.mxu0 %v7205
        %9936 = vmatprep.subr.bf16.mxu0 %v7290
        %9937 = vmatpush1.bf16.xpose.msra.mxu0 %v7289
        %9938 = vmatprep.subr.bf16.mxu0 %v7374
        %9939 = vmatpush1.bf16.xpose.msra.mxu0 %v7373
        %9940 = vmatprep.subr.bf16.mxu0 %v7458
        %9941 = vmatpush1.bf16.xpose.msra.mxu0 %v7457
        %9942 = vmatprep.subr.bf16.mxu0 %v7542
        %9943 = vmatpush1.bf16.xpose.msra.mxu0 %v7541
        %9944 = vmatprep.subr.bf16.mxu0 %v7626
        %9945 = vmatpush1.bf16.xpose.msra.mxu0 %v7625
        %9946 = vmatprep.mubr.bf16.mxu0 %v2166
        %9947 = vmatmul.mubr.bf16.gmra.mrb[0].mxu0 %v2165
        %v9948 = vpop.f32.mrb[0].mxu0
        %v9949 = vadd.f32 %v9906, %v9948
        %v9950 = vpop.f32.mrb[0].mxu0
        %v9951 = vadd.f32 %v9908, %v9950
        %v9952 = vpop.f32.mrb[0].mxu0
        %v9953 = vadd.f32 %v9910, %v9952
        %v9954 = vpop.f32.mrb[0].mxu0
        %v9955 = vadd.f32 %v9912, %v9954
        %9956 = vdwg.mxu0
        %9957 = vmatprep.subr.bf16.mxu0 %v6368
        %9958 = vmatpush1.bf16.xpose.msra.mxu0 %v6367
        %9959 = vmatprep.subr.bf16.mxu0 %v6452
        %9960 = vmatpush1.bf16.xpose.msra.mxu0 %v6451
        %9961 = vmatprep.subr.bf16.mxu0 %v6536
        %9962 = vmatpush1.bf16.xpose.msra.mxu0 %v6535
        %9963 = vmatprep.subr.bf16.mxu0 %v6620
        %9964 = vmatpush1.bf16.xpose.msra.mxu0 %v6619
        %9965 = vmatprep.subr.bf16.mxu0 %v6704
        %9966 = vmatpush1.bf16.xpose.msra.mxu0 %v6703
        %9967 = vmatprep.subr.bf16.mxu0 %v6788
        %9968 = vmatpush1.bf16.xpose.msra.mxu0 %v6787
        %9969 = vmatprep.subr.bf16.mxu0 %v6872
        %9970 = vmatpush1.bf16.xpose.msra.mxu0 %v6871
        %9971 = vmatprep.subr.bf16.mxu0 %v6956
        %9972 = vmatpush1.bf16.xpose.msra.mxu0 %v6955
        %9973 = vmatprep.subr.bf16.mxu0 %v7040
        %9974 = vmatpush1.bf16.xpose.msra.mxu0 %v7039
        %9975 = vmatprep.subr.bf16.mxu0 %v7124
        %9976 = vmatpush1.bf16.xpose.msra.mxu0 %v7123
        %9977 = vmatprep.subr.bf16.mxu0 %v7208
        %9978 = vmatpush1.bf16.xpose.msra.mxu0 %v7207
        %9979 = vmatprep.subr.bf16.mxu0 %v7292
        %9980 = vmatpush1.bf16.xpose.msra.mxu0 %v7291
        %9981 = vmatprep.subr.bf16.mxu0 %v7376
        %9982 = vmatpush1.bf16.xpose.msra.mxu0 %v7375
        %9983 = vmatprep.subr.bf16.mxu0 %v7460
        %9984 = vmatpush1.bf16.xpose.msra.mxu0 %v7459
        %9985 = vmatprep.subr.bf16.mxu0 %v7544
        %9986 = vmatpush1.bf16.xpose.msra.mxu0 %v7543
        %9987 = vmatprep.subr.bf16.mxu0 %v7628
        %9988 = vmatpush1.bf16.xpose.msra.mxu0 %v7627
        %9989 = vmatprep.mubr.bf16.mxu0 %v2168
        %9990 = vmatmul.mubr.bf16.gmra.mrb[0].mxu0 %v2167
        %v9991 = vpop.f32.mrb[0].mxu0
        %v9992 = vadd.f32 %v9949, %v9991
        %v9993 = vpop.f32.mrb[0].mxu0
        %v9994 = vadd.f32 %v9951, %v9993
        %v9995 = vpop.f32.mrb[0].mxu0
        %v9996 = vadd.f32 %v9953, %v9995
        %v9997 = vpop.f32.mrb[0].mxu0
        %v9998 = vadd.f32 %v9955, %v9997
        %9999 = vdwg.mxu0
        %10000 = vmatprep.subr.bf16.mxu0 %v6370
        %10001 = vmatpush1.bf16.xpose.msra.mxu0 %v6369
        %10002 = vmatprep.subr.bf16.mxu0 %v6454
        %10003 = vmatpush1.bf16.xpose.msra.mxu0 %v6453
        %10004 = vmatprep.subr.bf16.mxu0 %v6538
        %10005 = vmatpush1.bf16.xpose.msra.mxu0 %v6537
        %10006 = vmatprep.subr.bf16.mxu0 %v6622
        %10007 = vmatpush1.bf16.xpose.msra.mxu0 %v6621
        %10008 = vmatprep.subr.bf16.mxu0 %v6706
        %10009 = vmatpush1.bf16.xpose.msra.mxu0 %v6705
        %10010 = vmatprep.subr.bf16.mxu0 %v6790
        %10011 = vmatpush1.bf16.xpose.msra.mxu0 %v6789
        %10012 = vmatprep.subr.bf16.mxu0 %v6874
        %10013 = vmatpush1.bf16.xpose.msra.mxu0 %v6873
        %10014 = vmatprep.subr.bf16.mxu0 %v6958
        %10015 = vmatpush1.bf16.xpose.msra.mxu0 %v6957
        %10016 = vmatprep.subr.bf16.mxu0 %v7042
        %10017 = vmatpush1.bf16.xpose.msra.mxu0 %v7041
        %10018 = vmatprep.subr.bf16.mxu0 %v7126
        %10019 = vmatpush1.bf16.xpose.msra.mxu0 %v7125
        %10020 = vmatprep.subr.bf16.mxu0 %v7210
        %10021 = vmatpush1.bf16.xpose.msra.mxu0 %v7209
        %10022 = vmatprep.subr.bf16.mxu0 %v7294
        %10023 = vmatpush1.bf16.xpose.msra.mxu0 %v7293
        %10024 = vmatprep.subr.bf16.mxu0 %v7378
        %10025 = vmatpush1.bf16.xpose.msra.mxu0 %v7377
        %10026 = vmatprep.subr.bf16.mxu0 %v7462
        %10027 = vmatpush1.bf16.xpose.msra.mxu0 %v7461
        %10028 = vmatprep.subr.bf16.mxu0 %v7546
        %10029 = vmatpush1.bf16.xpose.msra.mxu0 %v7545
        %10030 = vmatprep.subr.bf16.mxu0 %v7630
        %10031 = vmatpush1.bf16.xpose.msra.mxu0 %v7629
        %10032 = vmatprep.mubr.bf16.mxu0 %v2170
        %10033 = vmatmul.mubr.bf16.gmra.mrb[0].mxu0 %v2169
        %v10034 = vpop.f32.mrb[0].mxu0
        %v10035 = vadd.f32 %v9992, %v10034
        %v10036 = vpop.f32.mrb[0].mxu0
        %v10037 = vadd.f32 %v9994, %v10036
        %v10038 = vpop.f32.mrb[0].mxu0
        %v10039 = vadd.f32 %v9996, %v10038
        %v10040 = vpop.f32.mrb[0].mxu0
        %v10041 = vadd.f32 %v9998, %v10040
        %10042 = vdwg.mxu0
        %10043 = vmatprep.subr.bf16.mxu0 %v6372
        %10044 = vmatpush1.bf16.xpose.msra.mxu0 %v6371
        %10045 = vmatprep.subr.bf16.mxu0 %v6456
        %10046 = vmatpush1.bf16.xpose.msra.mxu0 %v6455
        %10047 = vmatprep.subr.bf16.mxu0 %v6540
        %10048 = vmatpush1.bf16.xpose.msra.mxu0 %v6539
        %10049 = vmatprep.subr.bf16.mxu0 %v6624
        %10050 = vmatpush1.bf16.xpose.msra.mxu0 %v6623
        %10051 = vmatprep.subr.bf16.mxu0 %v6708
        %10052 = vmatpush1.bf16.xpose.msra.mxu0 %v6707
        %10053 = vmatprep.subr.bf16.mxu0 %v6792
        %10054 = vmatpush1.bf16.xpose.msra.mxu0 %v6791
        %10055 = vmatprep.subr.bf16.mxu0 %v6876
        %10056 = vmatpush1.bf16.xpose.msra.mxu0 %v6875
        %10057 = vmatprep.subr.bf16.mxu0 %v6960
        %10058 = vmatpush1.bf16.xpose.msra.mxu0 %v6959
        %10059 = vmatprep.subr.bf16.mxu0 %v7044
        %10060 = vmatpush1.bf16.xpose.msra.mxu0 %v7043
        %10061 = vmatprep.subr.bf16.mxu0 %v7128
        %10062 = vmatpush1.bf16.xpose.msra.mxu0 %v7127
        %10063 = vmatprep.subr.bf16.mxu0 %v7212
        %10064 = vmatpush1.bf16.xpose.msra.mxu0 %v7211
        %10065 = vmatprep.subr.bf16.mxu0 %v7296
        %10066 = vmatpush1.bf16.xpose.msra.mxu0 %v7295
        %10067 = vmatprep.subr.bf16.mxu0 %v7380
        %10068 = vmatpush1.bf16.xpose.msra.mxu0 %v7379
        %10069 = vmatprep.subr.bf16.mxu0 %v7464
        %10070 = vmatpush1.bf16.xpose.msra.mxu0 %v7463
        %10071 = vmatprep.subr.bf16.mxu0 %v7548
        %10072 = vmatpush1.bf16.xpose.msra.mxu0 %v7547
        %10073 = vmatprep.subr.bf16.mxu0 %v7632
        %10074 = vmatpush1.bf16.xpose.msra.mxu0 %v7631
        %10075 = vmatprep.mubr.bf16.mxu0 %v2172
        %10076 = vmatmul.mubr.bf16.gmra.mrb[0].mxu0 %v2171
        %v10077 = vpop.f32.mrb[0].mxu0
        %v10078 = vadd.f32 %v10035, %v10077
        %v10079 = vpop.f32.mrb[0].mxu0
        %v10080 = vadd.f32 %v10037, %v10079
        %v10081 = vpop.f32.mrb[0].mxu0
        %v10082 = vadd.f32 %v10039, %v10081
        %v10083 = vpop.f32.mrb[0].mxu0
        %v10084 = vadd.f32 %v10041, %v10083
        %10085 = vdwg.mxu0
        %10086 = vmatprep.subr.bf16.mxu0 %v6374
        %10087 = vmatpush1.bf16.xpose.msra.mxu0 %v6373
        %10088 = vmatprep.subr.bf16.mxu0 %v6458
        %10089 = vmatpush1.bf16.xpose.msra.mxu0 %v6457
        %10090 = vmatprep.subr.bf16.mxu0 %v6542
        %10091 = vmatpush1.bf16.xpose.msra.mxu0 %v6541
        %10092 = vmatprep.subr.bf16.mxu0 %v6626
        %10093 = vmatpush1.bf16.xpose.msra.mxu0 %v6625
        %10094 = vmatprep.subr.bf16.mxu0 %v6710
        %10095 = vmatpush1.bf16.xpose.msra.mxu0 %v6709
        %10096 = vmatprep.subr.bf16.mxu0 %v6794
        %10097 = vmatpush1.bf16.xpose.msra.mxu0 %v6793
        %10098 = vmatprep.subr.bf16.mxu0 %v6878
        %10099 = vmatpush1.bf16.xpose.msra.mxu0 %v6877
        %10100 = vmatprep.subr.bf16.mxu0 %v6962
        %10101 = vmatpush1.bf16.xpose.msra.mxu0 %v6961
        %10102 = vmatprep.subr.bf16.mxu0 %v7046
        %10103 = vmatpush1.bf16.xpose.msra.mxu0 %v7045
        %10104 = vmatprep.subr.bf16.mxu0 %v7130
        %10105 = vmatpush1.bf16.xpose.msra.mxu0 %v7129
        %10106 = vmatprep.subr.bf16.mxu0 %v7214
        %10107 = vmatpush1.bf16.xpose.msra.mxu0 %v7213
        %10108 = vmatprep.subr.bf16.mxu0 %v7298
        %10109 = vmatpush1.bf16.xpose.msra.mxu0 %v7297
        %10110 = vmatprep.subr.bf16.mxu0 %v7382
        %10111 = vmatpush1.bf16.xpose.msra.mxu0 %v7381
        %10112 = vmatprep.subr.bf16.mxu0 %v7466
        %10113 = vmatpush1.bf16.xpose.msra.mxu0 %v7465
        %10114 = vmatprep.subr.bf16.mxu0 %v7550
        %10115 = vmatpush1.bf16.xpose.msra.mxu0 %v7549
        %10116 = vmatprep.subr.bf16.mxu0 %v7634
        %10117 = vmatpush1.bf16.xpose.msra.mxu0 %v7633
        %10118 = vmatprep.mubr.bf16.mxu0 %v2174
        %10119 = vmatmul.mubr.bf16.gmra.mrb[0].mxu0 %v2173
        %v10120 = vpop.f32.mrb[0].mxu0
        %v10121 = vadd.f32 %v10078, %v10120
        %v10122 = vpop.f32.mrb[0].mxu0
        %v10123 = vadd.f32 %v10080, %v10122
        %v10124 = vpop.f32.mrb[0].mxu0
        %v10125 = vadd.f32 %v10082, %v10124
        %v10126 = vpop.f32.mrb[0].mxu0
        %v10127 = vadd.f32 %v10084, %v10126
        %10128 = vdwg.mxu0
        %10129 = vmatprep.subr.bf16.mxu0 %v6376
        %10130 = vmatpush1.bf16.xpose.msra.mxu0 %v6375
        %10131 = vmatprep.subr.bf16.mxu0 %v6460
        %10132 = vmatpush1.bf16.xpose.msra.mxu0 %v6459
        %10133 = vmatprep.subr.bf16.mxu0 %v6544
        %10134 = vmatpush1.bf16.xpose.msra.mxu0 %v6543
        %10135 = vmatprep.subr.bf16.mxu0 %v6628
        %10136 = vmatpush1.bf16.xpose.msra.mxu0 %v6627
        %10137 = vmatprep.subr.bf16.mxu0 %v6712
        %10138 = vmatpush1.bf16.xpose.msra.mxu0 %v6711
        %10139 = vmatprep.subr.bf16.mxu0 %v6796
        %10140 = vmatpush1.bf16.xpose.msra.mxu0 %v6795
        %10141 = vmatprep.subr.bf16.mxu0 %v6880
        %10142 = vmatpush1.bf16.xpose.msra.mxu0 %v6879
        %10143 = vmatprep.subr.bf16.mxu0 %v6964
        %10144 = vmatpush1.bf16.xpose.msra.mxu0 %v6963
        %10145 = vmatprep.subr.bf16.mxu0 %v7048
        %10146 = vmatpush1.bf16.xpose.msra.mxu0 %v7047
        %10147 = vmatprep.subr.bf16.mxu0 %v7132
        %10148 = vmatpush1.bf16.xpose.msra.mxu0 %v7131
        %10149 = vmatprep.subr.bf16.mxu0 %v7216
        %10150 = vmatpush1.bf16.xpose.msra.mxu0 %v7215
        %10151 = vmatprep.subr.bf16.mxu0 %v7300
        %10152 = vmatpush1.bf16.xpose.msra.mxu0 %v7299
        %10153 = vmatprep.subr.bf16.mxu0 %v7384
        %10154 = vmatpush1.bf16.xpose.msra.mxu0 %v7383
        %10155 = vmatprep.subr.bf16.mxu0 %v7468
        %10156 = vmatpush1.bf16.xpose.msra.mxu0 %v7467
        %10157 = vmatprep.subr.bf16.mxu0 %v7552
        %10158 = vmatpush1.bf16.xpose.msra.mxu0 %v7551
        %10159 = vmatprep.subr.bf16.mxu0 %v7636
        %10160 = vmatpush1.bf16.xpose.msra.mxu0 %v7635
        %10161 = vmatprep.mubr.bf16.mxu0 %v2176
        %10162 = vmatmul.mubr.bf16.gmra.mrb[0].mxu0 %v2175
        %v10163 = vpop.f32.mrb[0].mxu0
        %v10164 = vadd.f32 %v10121, %v10163
        %v10165 = vpop.f32.mrb[0].mxu0
        %v10166 = vadd.f32 %v10123, %v10165
        %v10167 = vpop.f32.mrb[0].mxu0
        %v10168 = vadd.f32 %v10125, %v10167
        %v10169 = vpop.f32.mrb[0].mxu0
        %v10170 = vadd.f32 %v10127, %v10169
        %10171 = vdwg.mxu0
        %10172 = vmatprep.subr.bf16.mxu0 %v6378
        %10173 = vmatpush1.bf16.xpose.msra.mxu0 %v6377
        %10174 = vmatprep.subr.bf16.mxu0 %v6462
        %10175 = vmatpush1.bf16.xpose.msra.mxu0 %v6461
        %10176 = vmatprep.subr.bf16.mxu0 %v6546
        %10177 = vmatpush1.bf16.xpose.msra.mxu0 %v6545
        %10178 = vmatprep.subr.bf16.mxu0 %v6630
        %10179 = vmatpush1.bf16.xpose.msra.mxu0 %v6629
        %10180 = vmatprep.subr.bf16.mxu0 %v6714
        %10181 = vmatpush1.bf16.xpose.msra.mxu0 %v6713
        %10182 = vmatprep.subr.bf16.mxu0 %v6798
        %10183 = vmatpush1.bf16.xpose.msra.mxu0 %v6797
        %10184 = vmatprep.subr.bf16.mxu0 %v6882
        %10185 = vmatpush1.bf16.xpose.msra.mxu0 %v6881
        %10186 = vmatprep.subr.bf16.mxu0 %v6966
        %10187 = vmatpush1.bf16.xpose.msra.mxu0 %v6965
        %10188 = vmatprep.subr.bf16.mxu0 %v7050
        %10189 = vmatpush1.bf16.xpose.msra.mxu0 %v7049
        %10190 = vmatprep.subr.bf16.mxu0 %v7134
        %10191 = vmatpush1.bf16.xpose.msra.mxu0 %v7133
        %10192 = vmatprep.subr.bf16.mxu0 %v7218
        %10193 = vmatpush1.bf16.xpose.msra.mxu0 %v7217
        %10194 = vmatprep.subr.bf16.mxu0 %v7302
        %10195 = vmatpush1.bf16.xpose.msra.mxu0 %v7301
        %10196 = vmatprep.subr.bf16.mxu0 %v7386
        %10197 = vmatpush1.bf16.xpose.msra.mxu0 %v7385
        %10198 = vmatprep.subr.bf16.mxu0 %v7470
        %10199 = vmatpush1.bf16.xpose.msra.mxu0 %v7469
        %10200 = vmatprep.subr.bf16.mxu0 %v7554
        %10201 = vmatpush1.bf16.xpose.msra.mxu0 %v7553
        %10202 = vmatprep.subr.bf16.mxu0 %v7638
        %10203 = vmatpush1.bf16.xpose.msra.mxu0 %v7637
        %10204 = vmatprep.mubr.bf16.mxu0 %v2178
        %10205 = vmatmul.mubr.bf16.gmra.mrb[0].mxu0 %v2177
        %v10206 = vpop.f32.mrb[0].mxu0
        %v10207 = vadd.f32 %v10164, %v10206
        %v10208 = vpop.f32.mrb[0].mxu0
        %v10209 = vadd.f32 %v10166, %v10208
        %v10210 = vpop.f32.mrb[0].mxu0
        %v10211 = vadd.f32 %v10168, %v10210
        %v10212 = vpop.f32.mrb[0].mxu0
        %v10213 = vadd.f32 %v10170, %v10212
        %10214 = vdwg.mxu0
        %10215 = vmatprep.subr.bf16.mxu0 %v6380
        %10216 = vmatpush1.bf16.xpose.msra.mxu0 %v6379
        %10217 = vmatprep.subr.bf16.mxu0 %v6464
        %10218 = vmatpush1.bf16.xpose.msra.mxu0 %v6463
        %10219 = vmatprep.subr.bf16.mxu0 %v6548
        %10220 = vmatpush1.bf16.xpose.msra.mxu0 %v6547
        %10221 = vmatprep.subr.bf16.mxu0 %v6632
        %10222 = vmatpush1.bf16.xpose.msra.mxu0 %v6631
        %10223 = vmatprep.subr.bf16.mxu0 %v6716
        %10224 = vmatpush1.bf16.xpose.msra.mxu0 %v6715
        %10225 = vmatprep.subr.bf16.mxu0 %v6800
        %10226 = vmatpush1.bf16.xpose.msra.mxu0 %v6799
        %10227 = vmatprep.subr.bf16.mxu0 %v6884
        %10228 = vmatpush1.bf16.xpose.msra.mxu0 %v6883
        %10229 = vmatprep.subr.bf16.mxu0 %v6968
        %10230 = vmatpush1.bf16.xpose.msra.mxu0 %v6967
        %10231 = vmatprep.subr.bf16.mxu0 %v7052
        %10232 = vmatpush1.bf16.xpose.msra.mxu0 %v7051
        %10233 = vmatprep.subr.bf16.mxu0 %v7136
        %10234 = vmatpush1.bf16.xpose.msra.mxu0 %v7135
        %10235 = vmatprep.subr.bf16.mxu0 %v7220
        %10236 = vmatpush1.bf16.xpose.msra.mxu0 %v7219
        %10237 = vmatprep.subr.bf16.mxu0 %v7304
        %10238 = vmatpush1.bf16.xpose.msra.mxu0 %v7303
        %10239 = vmatprep.subr.bf16.mxu0 %v7388
        %10240 = vmatpush1.bf16.xpose.msra.mxu0 %v7387
        %10241 = vmatprep.subr.bf16.mxu0 %v7472
        %10242 = vmatpush1.bf16.xpose.msra.mxu0 %v7471
        %10243 = vmatprep.subr.bf16.mxu0 %v7556
        %10244 = vmatpush1.bf16.xpose.msra.mxu0 %v7555
        %10245 = vmatprep.subr.bf16.mxu0 %v7640
        %10246 = vmatpush1.bf16.xpose.msra.mxu0 %v7639
        %10247 = vmatprep.mubr.bf16.mxu0 %v2180
        %10248 = vmatmul.mubr.bf16.gmra.mrb[0].mxu0 %v2179
        %v10249 = vpop.f32.mrb[0].mxu0
        %v10250 = vadd.f32 %v10207, %v10249
        %v10251 = vpop.f32.mrb[0].mxu0
        %v10252 = vadd.f32 %v10209, %v10251
        %v10253 = vpop.f32.mrb[0].mxu0
        %v10254 = vadd.f32 %v10211, %v10253
        %v10255 = vpop.f32.mrb[0].mxu0
        %v10256 = vadd.f32 %v10213, %v10255
        %10257 = vdwg.mxu0
        %10258 = vmatprep.subr.bf16.mxu0 %v6382
        %10259 = vmatpush1.bf16.xpose.msra.mxu0 %v6381
        %10260 = vmatprep.subr.bf16.mxu0 %v6466
        %10261 = vmatpush1.bf16.xpose.msra.mxu0 %v6465
        %10262 = vmatprep.subr.bf16.mxu0 %v6550
        %10263 = vmatpush1.bf16.xpose.msra.mxu0 %v6549
        %10264 = vmatprep.subr.bf16.mxu0 %v6634
        %10265 = vmatpush1.bf16.xpose.msra.mxu0 %v6633
        %10266 = vmatprep.subr.bf16.mxu0 %v6718
        %10267 = vmatpush1.bf16.xpose.msra.mxu0 %v6717
        %10268 = vmatprep.subr.bf16.mxu0 %v6802
        %10269 = vmatpush1.bf16.xpose.msra.mxu0 %v6801
        %10270 = vmatprep.subr.bf16.mxu0 %v6886
        %10271 = vmatpush1.bf16.xpose.msra.mxu0 %v6885
        %10272 = vmatprep.subr.bf16.mxu0 %v6970
        %10273 = vmatpush1.bf16.xpose.msra.mxu0 %v6969
        %10274 = vmatprep.subr.bf16.mxu0 %v7054
        %10275 = vmatpush1.bf16.xpose.msra.mxu0 %v7053
        %10276 = vmatprep.subr.bf16.mxu0 %v7138
        %10277 = vmatpush1.bf16.xpose.msra.mxu0 %v7137
        %10278 = vmatprep.subr.bf16.mxu0 %v7222
        %10279 = vmatpush1.bf16.xpose.msra.mxu0 %v7221
        %10280 = vmatprep.subr.bf16.mxu0 %v7306
        %10281 = vmatpush1.bf16.xpose.msra.mxu0 %v7305
        %10282 = vmatprep.subr.bf16.mxu0 %v7390
        %10283 = vmatpush1.bf16.xpose.msra.mxu0 %v7389
        %10284 = vmatprep.subr.bf16.mxu0 %v7474
        %10285 = vmatpush1.bf16.xpose.msra.mxu0 %v7473
        %10286 = vmatprep.subr.bf16.mxu0 %v7558
        %10287 = vmatpush1.bf16.xpose.msra.mxu0 %v7557
        %10288 = vmatprep.subr.bf16.mxu0 %v7642
        %10289 = vmatpush1.bf16.xpose.msra.mxu0 %v7641
        %10290 = vmatprep.mubr.bf16.mxu0 %v2182
        %10291 = vmatmul.mubr.bf16.gmra.mrb[0].mxu0 %v2181
        %v10292 = vpop.f32.mrb[0].mxu0
        %v10293 = vadd.f32 %v10250, %v10292
        %v10294 = vpop.f32.mrb[0].mxu0
        %v10295 = vadd.f32 %v10252, %v10294
        %v10296 = vpop.f32.mrb[0].mxu0
        %v10297 = vadd.f32 %v10254, %v10296
        %v10298 = vpop.f32.mrb[0].mxu0
        %v10299 = vadd.f32 %v10256, %v10298
        %10300 = vdwg.mxu0
        %10301 = vmatprep.subr.bf16.mxu0 %v6384
        %10302 = vmatpush1.bf16.xpose.msra.mxu0 %v6383
        %10303 = vmatprep.subr.bf16.mxu0 %v6468
        %10304 = vmatpush1.bf16.xpose.msra.mxu0 %v6467
        %10305 = vmatprep.subr.bf16.mxu0 %v6552
        %10306 = vmatpush1.bf16.xpose.msra.mxu0 %v6551
        %10307 = vmatprep.subr.bf16.mxu0 %v6636
        %10308 = vmatpush1.bf16.xpose.msra.mxu0 %v6635
        %10309 = vmatprep.subr.bf16.mxu0 %v6720
        %10310 = vmatpush1.bf16.xpose.msra.mxu0 %v6719
        %10311 = vmatprep.subr.bf16.mxu0 %v6804
        %10312 = vmatpush1.bf16.xpose.msra.mxu0 %v6803
        %10313 = vmatprep.subr.bf16.mxu0 %v6888
        %10314 = vmatpush1.bf16.xpose.msra.mxu0 %v6887
        %10315 = vmatprep.subr.bf16.mxu0 %v6972
        %10316 = vmatpush1.bf16.xpose.msra.mxu0 %v6971
        %10317 = vmatprep.subr.bf16.mxu0 %v7056
        %10318 = vmatpush1.bf16.xpose.msra.mxu0 %v7055
        %10319 = vmatprep.subr.bf16.mxu0 %v7140
        %10320 = vmatpush1.bf16.xpose.msra.mxu0 %v7139
        %10321 = vmatprep.subr.bf16.mxu0 %v7224
        %10322 = vmatpush1.bf16.xpose.msra.mxu0 %v7223
        %10323 = vmatprep.subr.bf16.mxu0 %v7308
        %10324 = vmatpush1.bf16.xpose.msra.mxu0 %v7307
        %10325 = vmatprep.subr.bf16.mxu0 %v7392
        %10326 = vmatpush1.bf16.xpose.msra.mxu0 %v7391
        %10327 = vmatprep.subr.bf16.mxu0 %v7476
        %10328 = vmatpush1.bf16.xpose.msra.mxu0 %v7475
        %10329 = vmatprep.subr.bf16.mxu0 %v7560
        %10330 = vmatpush1.bf16.xpose.msra.mxu0 %v7559
        %10331 = vmatprep.subr.bf16.mxu0 %v7644
        %10332 = vmatpush1.bf16.xpose.msra.mxu0 %v7643
        %10333 = vmatprep.mubr.bf16.mxu0 %v2184
        %10334 = vmatmul.mubr.bf16.gmra.mrb[0].mxu0 %v2183
        %v10335 = vpop.f32.mrb[0].mxu0
        %v10336 = vadd.f32 %v10293, %v10335
        %v10337 = vpop.f32.mrb[0].mxu0
        %v10338 = vadd.f32 %v10295, %v10337
        %v10339 = vpop.f32.mrb[0].mxu0
        %v10340 = vadd.f32 %v10297, %v10339
        %v10341 = vpop.f32.mrb[0].mxu0
        %v10342 = vadd.f32 %v10299, %v10341
        %10343 = vdwg.mxu0
        %10344 = vmatprep.subr.bf16.mxu0 %v6386
        %10345 = vmatpush1.bf16.xpose.msra.mxu0 %v6385
        %10346 = vmatprep.subr.bf16.mxu0 %v6470
        %10347 = vmatpush1.bf16.xpose.msra.mxu0 %v6469
        %10348 = vmatprep.subr.bf16.mxu0 %v6554
        %10349 = vmatpush1.bf16.xpose.msra.mxu0 %v6553
        %10350 = vmatprep.subr.bf16.mxu0 %v6638
        %10351 = vmatpush1.bf16.xpose.msra.mxu0 %v6637
        %10352 = vmatprep.subr.bf16.mxu0 %v6722
        %10353 = vmatpush1.bf16.xpose.msra.mxu0 %v6721
        %10354 = vmatprep.subr.bf16.mxu0 %v6806
        %10355 = vmatpush1.bf16.xpose.msra.mxu0 %v6805
        %10356 = vmatprep.subr.bf16.mxu0 %v6890
        %10357 = vmatpush1.bf16.xpose.msra.mxu0 %v6889
        %10358 = vmatprep.subr.bf16.mxu0 %v6974
        %10359 = vmatpush1.bf16.xpose.msra.mxu0 %v6973
        %10360 = vmatprep.subr.bf16.mxu0 %v7058
        %10361 = vmatpush1.bf16.xpose.msra.mxu0 %v7057
        %10362 = vmatprep.subr.bf16.mxu0 %v7142
        %10363 = vmatpush1.bf16.xpose.msra.mxu0 %v7141
        %10364 = vmatprep.subr.bf16.mxu0 %v7226
        %10365 = vmatpush1.bf16.xpose.msra.mxu0 %v7225
        %10366 = vmatprep.subr.bf16.mxu0 %v7310
        %10367 = vmatpush1.bf16.xpose.msra.mxu0 %v7309
        %10368 = vmatprep.subr.bf16.mxu0 %v7394
        %10369 = vmatpush1.bf16.xpose.msra.mxu0 %v7393
        %10370 = vmatprep.subr.bf16.mxu0 %v7478
        %10371 = vmatpush1.bf16.xpose.msra.mxu0 %v7477
        %10372 = vmatprep.subr.bf16.mxu0 %v7562
        %10373 = vmatpush1.bf16.xpose.msra.mxu0 %v7561
        %10374 = vmatprep.subr.bf16.mxu0 %v7646
        %10375 = vmatpush1.bf16.xpose.msra.mxu0 %v7645
        %10376 = vmatprep.mubr.bf16.mxu0 %v2186
        %10377 = vmatmul.mubr.bf16.gmra.mrb[0].mxu0 %v2185
        %v10378 = vpop.f32.mrb[0].mxu0
        %v10379 = vadd.f32 %v10336, %v10378
        %v10380 = vpop.f32.mrb[0].mxu0
        %v10381 = vadd.f32 %v10338, %v10380
        %v10382 = vpop.f32.mrb[0].mxu0
        %v10383 = vadd.f32 %v10340, %v10382
        %v10384 = vpop.f32.mrb[0].mxu0
        %v10385 = vadd.f32 %v10342, %v10384
        %10386 = vdwg.mxu0
        %10387 = vmatprep.subr.bf16.mxu0 %v6388
        %10388 = vmatpush1.bf16.xpose.msra.mxu0 %v6387
        %10389 = vmatprep.subr.bf16.mxu0 %v6472
        %10390 = vmatpush1.bf16.xpose.msra.mxu0 %v6471
        %10391 = vmatprep.subr.bf16.mxu0 %v6556
        %10392 = vmatpush1.bf16.xpose.msra.mxu0 %v6555
        %10393 = vmatprep.subr.bf16.mxu0 %v6640
        %10394 = vmatpush1.bf16.xpose.msra.mxu0 %v6639
        %10395 = vmatprep.subr.bf16.mxu0 %v6724
        %10396 = vmatpush1.bf16.xpose.msra.mxu0 %v6723
        %10397 = vmatprep.subr.bf16.mxu0 %v6808
        %10398 = vmatpush1.bf16.xpose.msra.mxu0 %v6807
        %10399 = vmatprep.subr.bf16.mxu0 %v6892
        %10400 = vmatpush1.bf16.xpose.msra.mxu0 %v6891
        %10401 = vmatprep.subr.bf16.mxu0 %v6976
        %10402 = vmatpush1.bf16.xpose.msra.mxu0 %v6975
        %10403 = vmatprep.subr.bf16.mxu0 %v7060
        %10404 = vmatpush1.bf16.xpose.msra.mxu0 %v7059
        %10405 = vmatprep.subr.bf16.mxu0 %v7144
        %10406 = vmatpush1.bf16.xpose.msra.mxu0 %v7143
        %10407 = vmatprep.subr.bf16.mxu0 %v7228
        %10408 = vmatpush1.bf16.xpose.msra.mxu0 %v7227
        %10409 = vmatprep.subr.bf16.mxu0 %v7312
        %10410 = vmatpush1.bf16.xpose.msra.mxu0 %v7311
        %10411 = vmatprep.subr.bf16.mxu0 %v7396
        %10412 = vmatpush1.bf16.xpose.msra.mxu0 %v7395
        %10413 = vmatprep.subr.bf16.mxu0 %v7480
        %10414 = vmatpush1.bf16.xpose.msra.mxu0 %v7479
        %10415 = vmatprep.subr.bf16.mxu0 %v7564
        %10416 = vmatpush1.bf16.xpose.msra.mxu0 %v7563
        %10417 = vmatprep.subr.bf16.mxu0 %v7648
        %10418 = vmatpush1.bf16.xpose.msra.mxu0 %v7647
        %10419 = vmatprep.mubr.bf16.mxu0 %v2188
        %10420 = vmatmul.mubr.bf16.gmra.mrb[0].mxu0 %v2187
        %v10421 = vpop.f32.mrb[0].mxu0
        %v10422 = vadd.f32 %v10379, %v10421
        %v10423 = vpop.f32.mrb[0].mxu0
        %v10424 = vadd.f32 %v10381, %v10423
        %v10425 = vpop.f32.mrb[0].mxu0
        %v10426 = vadd.f32 %v10383, %v10425
        %v10427 = vpop.f32.mrb[0].mxu0
        %v10428 = vadd.f32 %v10385, %v10427
        %10429 = vdwg.mxu0
        %10430 = vmatprep.subr.bf16.mxu0 %v6390
        %10431 = vmatpush1.bf16.xpose.msra.mxu0 %v6389
        %10432 = vmatprep.subr.bf16.mxu0 %v6474
        %10433 = vmatpush1.bf16.xpose.msra.mxu0 %v6473
        %10434 = vmatprep.subr.bf16.mxu0 %v6558
        %10435 = vmatpush1.bf16.xpose.msra.mxu0 %v6557
        %10436 = vmatprep.subr.bf16.mxu0 %v6642
        %10437 = vmatpush1.bf16.xpose.msra.mxu0 %v6641
        %10438 = vmatprep.subr.bf16.mxu0 %v6726
        %10439 = vmatpush1.bf16.xpose.msra.mxu0 %v6725
        %10440 = vmatprep.subr.bf16.mxu0 %v6810
        %10441 = vmatpush1.bf16.xpose.msra.mxu0 %v6809
        %10442 = vmatprep.subr.bf16.mxu0 %v6894
        %10443 = vmatpush1.bf16.xpose.msra.mxu0 %v6893
        %10444 = vmatprep.subr.bf16.mxu0 %v6978
        %10445 = vmatpush1.bf16.xpose.msra.mxu0 %v6977
        %10446 = vmatprep.subr.bf16.mxu0 %v7062
        %10447 = vmatpush1.bf16.xpose.msra.mxu0 %v7061
        %10448 = vmatprep.subr.bf16.mxu0 %v7146
        %10449 = vmatpush1.bf16.xpose.msra.mxu0 %v7145
        %10450 = vmatprep.subr.bf16.mxu0 %v7230
        %10451 = vmatpush1.bf16.xpose.msra.mxu0 %v7229
        %10452 = vmatprep.subr.bf16.mxu0 %v7314
        %10453 = vmatpush1.bf16.xpose.msra.mxu0 %v7313
        %10454 = vmatprep.subr.bf16.mxu0 %v7398
        %10455 = vmatpush1.bf16.xpose.msra.mxu0 %v7397
        %10456 = vmatprep.subr.bf16.mxu0 %v7482
        %10457 = vmatpush1.bf16.xpose.msra.mxu0 %v7481
        %10458 = vmatprep.subr.bf16.mxu0 %v7566
        %10459 = vmatpush1.bf16.xpose.msra.mxu0 %v7565
        %10460 = vmatprep.subr.bf16.mxu0 %v7650
        %10461 = vmatpush1.bf16.xpose.msra.mxu0 %v7649
        %10462 = vmatprep.mubr.bf16.mxu0 %v2190
        %10463 = vmatmul.mubr.bf16.gmra.mrb[0].mxu0 %v2189
        %v10464 = vpop.f32.mrb[0].mxu0
        %v10465 = vadd.f32 %v10422, %v10464
        %v10466 = vpop.f32.mrb[0].mxu0
        %v10467 = vadd.f32 %v10424, %v10466
        %v10468 = vpop.f32.mrb[0].mxu0
        %v10469 = vadd.f32 %v10426, %v10468
        %v10470 = vpop.f32.mrb[0].mxu0
        %v10471 = vadd.f32 %v10428, %v10470
        %10472 = vdwg.mxu0
        %10473 = vmatprep.subr.bf16.mxu0 %v6392
        %10474 = vmatpush1.bf16.xpose.msra.mxu0 %v6391
        %10475 = vmatprep.subr.bf16.mxu0 %v6476
        %10476 = vmatpush1.bf16.xpose.msra.mxu0 %v6475
        %10477 = vmatprep.subr.bf16.mxu0 %v6560
        %10478 = vmatpush1.bf16.xpose.msra.mxu0 %v6559
        %10479 = vmatprep.subr.bf16.mxu0 %v6644
        %10480 = vmatpush1.bf16.xpose.msra.mxu0 %v6643
        %10481 = vmatprep.subr.bf16.mxu0 %v6728
        %10482 = vmatpush1.bf16.xpose.msra.mxu0 %v6727
        %10483 = vmatprep.subr.bf16.mxu0 %v6812
        %10484 = vmatpush1.bf16.xpose.msra.mxu0 %v6811
        %10485 = vmatprep.subr.bf16.mxu0 %v6896
        %10486 = vmatpush1.bf16.xpose.msra.mxu0 %v6895
        %10487 = vmatprep.subr.bf16.mxu0 %v6980
        %10488 = vmatpush1.bf16.xpose.msra.mxu0 %v6979
        %10489 = vmatprep.subr.bf16.mxu0 %v7064
        %10490 = vmatpush1.bf16.xpose.msra.mxu0 %v7063
        %10491 = vmatprep.subr.bf16.mxu0 %v7148
        %10492 = vmatpush1.bf16.xpose.msra.mxu0 %v7147
        %10493 = vmatprep.subr.bf16.mxu0 %v7232
        %10494 = vmatpush1.bf16.xpose.msra.mxu0 %v7231
        %10495 = vmatprep.subr.bf16.mxu0 %v7316
        %10496 = vmatpush1.bf16.xpose.msra.mxu0 %v7315
        %10497 = vmatprep.subr.bf16.mxu0 %v7400
        %10498 = vmatpush1.bf16.xpose.msra.mxu0 %v7399
        %10499 = vmatprep.subr.bf16.mxu0 %v7484
        %10500 = vmatpush1.bf16.xpose.msra.mxu0 %v7483
        %10501 = vmatprep.subr.bf16.mxu0 %v7568
        %10502 = vmatpush1.bf16.xpose.msra.mxu0 %v7567
        %10503 = vmatprep.subr.bf16.mxu0 %v7652
        %10504 = vmatpush1.bf16.xpose.msra.mxu0 %v7651
        %10505 = vmatprep.mubr.bf16.mxu0 %v2192
        %10506 = vmatmul.mubr.bf16.gmra.mrb[0].mxu0 %v2191
        %v10507 = vpop.f32.mrb[0].mxu0
        %v10508 = vadd.f32 %v10465, %v10507
        %v10509 = vpop.f32.mrb[0].mxu0
        %v10510 = vadd.f32 %v10467, %v10509
        %v10511 = vpop.f32.mrb[0].mxu0
        %v10512 = vadd.f32 %v10469, %v10511
        %v10513 = vpop.f32.mrb[0].mxu0
        %v10514 = vadd.f32 %v10471, %v10513
        %10515 = vdwg.mxu0
        %10516 = vmatprep.subr.bf16.mxu0 %v6394
        %10517 = vmatpush1.bf16.xpose.msra.mxu0 %v6393
        %10518 = vmatprep.subr.bf16.mxu0 %v6478
        %10519 = vmatpush1.bf16.xpose.msra.mxu0 %v6477
        %10520 = vmatprep.subr.bf16.mxu0 %v6562
        %10521 = vmatpush1.bf16.xpose.msra.mxu0 %v6561
        %10522 = vmatprep.subr.bf16.mxu0 %v6646
        %10523 = vmatpush1.bf16.xpose.msra.mxu0 %v6645
        %10524 = vmatprep.subr.bf16.mxu0 %v6730
        %10525 = vmatpush1.bf16.xpose.msra.mxu0 %v6729
        %10526 = vmatprep.subr.bf16.mxu0 %v6814
        %10527 = vmatpush1.bf16.xpose.msra.mxu0 %v6813
        %10528 = vmatprep.subr.bf16.mxu0 %v6898
        %10529 = vmatpush1.bf16.xpose.msra.mxu0 %v6897
        %10530 = vmatprep.subr.bf16.mxu0 %v6982
        %10531 = vmatpush1.bf16.xpose.msra.mxu0 %v6981
        %10532 = vmatprep.subr.bf16.mxu0 %v7066
        %10533 = vmatpush1.bf16.xpose.msra.mxu0 %v7065
        %10534 = vmatprep.subr.bf16.mxu0 %v7150
        %10535 = vmatpush1.bf16.xpose.msra.mxu0 %v7149
        %10536 = vmatprep.subr.bf16.mxu0 %v7234
        %10537 = vmatpush1.bf16.xpose.msra.mxu0 %v7233
        %10538 = vmatprep.subr.bf16.mxu0 %v7318
        %10539 = vmatpush1.bf16.xpose.msra.mxu0 %v7317
        %10540 = vmatprep.subr.bf16.mxu0 %v7402
        %10541 = vmatpush1.bf16.xpose.msra.mxu0 %v7401
        %10542 = vmatprep.subr.bf16.mxu0 %v7486
        %10543 = vmatpush1.bf16.xpose.msra.mxu0 %v7485
        %10544 = vmatprep.subr.bf16.mxu0 %v7570
        %10545 = vmatpush1.bf16.xpose.msra.mxu0 %v7569
        %10546 = vmatprep.subr.bf16.mxu0 %v7654
        %10547 = vmatpush1.bf16.xpose.msra.mxu0 %v7653
        %10548 = vmatprep.mubr.bf16.mxu0 %v2194
        %10549 = vmatmul.mubr.bf16.gmra.mrb[0].mxu0 %v2193
        %v10550 = vpop.f32.mrb[0].mxu0
        %v10551 = vadd.f32 %v10508, %v10550
        %v10552 = vpop.f32.mrb[0].mxu0
        %v10553 = vadd.f32 %v10510, %v10552
        %v10554 = vpop.f32.mrb[0].mxu0
        %v10555 = vadd.f32 %v10512, %v10554
        %v10556 = vpop.f32.mrb[0].mxu0
        %v10557 = vadd.f32 %v10514, %v10556
        %10558 = vdwg.mxu0
        %10559 = vmatprep.subr.bf16.mxu0 %v6396
        %10560 = vmatpush1.bf16.xpose.msra.mxu0 %v6395
        %10561 = vmatprep.subr.bf16.mxu0 %v6480
        %10562 = vmatpush1.bf16.xpose.msra.mxu0 %v6479
        %10563 = vmatprep.subr.bf16.mxu0 %v6564
        %10564 = vmatpush1.bf16.xpose.msra.mxu0 %v6563
        %10565 = vmatprep.subr.bf16.mxu0 %v6648
        %10566 = vmatpush1.bf16.xpose.msra.mxu0 %v6647
        %10567 = vmatprep.subr.bf16.mxu0 %v6732
        %10568 = vmatpush1.bf16.xpose.msra.mxu0 %v6731
        %10569 = vmatprep.subr.bf16.mxu0 %v6816
        %10570 = vmatpush1.bf16.xpose.msra.mxu0 %v6815
        %10571 = vmatprep.subr.bf16.mxu0 %v6900
        %10572 = vmatpush1.bf16.xpose.msra.mxu0 %v6899
        %10573 = vmatprep.subr.bf16.mxu0 %v6984
        %10574 = vmatpush1.bf16.xpose.msra.mxu0 %v6983
        %10575 = vmatprep.subr.bf16.mxu0 %v7068
        %10576 = vmatpush1.bf16.xpose.msra.mxu0 %v7067
        %10577 = vmatprep.subr.bf16.mxu0 %v7152
        %10578 = vmatpush1.bf16.xpose.msra.mxu0 %v7151
        %10579 = vmatprep.subr.bf16.mxu0 %v7236
        %10580 = vmatpush1.bf16.xpose.msra.mxu0 %v7235
        %10581 = vmatprep.subr.bf16.mxu0 %v7320
        %10582 = vmatpush1.bf16.xpose.msra.mxu0 %v7319
        %10583 = vmatprep.subr.bf16.mxu0 %v7404
        %10584 = vmatpush1.bf16.xpose.msra.mxu0 %v7403
        %10585 = vmatprep.subr.bf16.mxu0 %v7488
        %10586 = vmatpush1.bf16.xpose.msra.mxu0 %v7487
        %10587 = vmatprep.subr.bf16.mxu0 %v7572
        %10588 = vmatpush1.bf16.xpose.msra.mxu0 %v7571
        %10589 = vmatprep.subr.bf16.mxu0 %v7656
        %10590 = vmatpush1.bf16.xpose.msra.mxu0 %v7655
        %10591 = vmatprep.mubr.bf16.mxu0 %v2196
        %10592 = vmatmul.mubr.bf16.gmra.mrb[0].mxu0 %v2195
        %v10593 = vpop.f32.mrb[0].mxu0
        %v10594 = vadd.f32 %v10551, %v10593
        %v10595 = vpop.f32.mrb[0].mxu0
        %v10596 = vadd.f32 %v10553, %v10595
        %v10597 = vpop.f32.mrb[0].mxu0
        %v10598 = vadd.f32 %v10555, %v10597
        %v10599 = vpop.f32.mrb[0].mxu0
        %v10600 = vadd.f32 %v10557, %v10599
        %10601 = vdwg.mxu0
        %10602 = vmatprep.subr.bf16.mxu0 %v6398
        %10603 = vmatpush1.bf16.xpose.msra.mxu0 %v6397
        %10604 = vmatprep.subr.bf16.mxu0 %v6482
        %10605 = vmatpush1.bf16.xpose.msra.mxu0 %v6481
        %10606 = vmatprep.subr.bf16.mxu0 %v6566
        %10607 = vmatpush1.bf16.xpose.msra.mxu0 %v6565
        %10608 = vmatprep.subr.bf16.mxu0 %v6650
        %10609 = vmatpush1.bf16.xpose.msra.mxu0 %v6649
        %10610 = vmatprep.subr.bf16.mxu0 %v6734
        %10611 = vmatpush1.bf16.xpose.msra.mxu0 %v6733
        %10612 = vmatprep.subr.bf16.mxu0 %v6818
        %10613 = vmatpush1.bf16.xpose.msra.mxu0 %v6817
        %10614 = vmatprep.subr.bf16.mxu0 %v6902
        %10615 = vmatpush1.bf16.xpose.msra.mxu0 %v6901
        %10616 = vmatprep.subr.bf16.mxu0 %v6986
        %10617 = vmatpush1.bf16.xpose.msra.mxu0 %v6985
        %10618 = vmatprep.subr.bf16.mxu0 %v7070
        %10619 = vmatpush1.bf16.xpose.msra.mxu0 %v7069
        %10620 = vmatprep.subr.bf16.mxu0 %v7154
        %10621 = vmatpush1.bf16.xpose.msra.mxu0 %v7153
        %10622 = vmatprep.subr.bf16.mxu0 %v7238
        %10623 = vmatpush1.bf16.xpose.msra.mxu0 %v7237
        %10624 = vmatprep.subr.bf16.mxu0 %v7322
        %10625 = vmatpush1.bf16.xpose.msra.mxu0 %v7321
        %10626 = vmatprep.subr.bf16.mxu0 %v7406
        %10627 = vmatpush1.bf16.xpose.msra.mxu0 %v7405
        %10628 = vmatprep.subr.bf16.mxu0 %v7490
        %10629 = vmatpush1.bf16.xpose.msra.mxu0 %v7489
        %10630 = vmatprep.subr.bf16.mxu0 %v7574
        %10631 = vmatpush1.bf16.xpose.msra.mxu0 %v7573
        %10632 = vmatprep.subr.bf16.mxu0 %v7658
        %10633 = vmatpush1.bf16.xpose.msra.mxu0 %v7657
        %10634 = vmatprep.mubr.bf16.mxu0 %v2198
        %10635 = vmatmul.mubr.bf16.gmra.mrb[0].mxu0 %v2197
        %v10636 = vpop.f32.mrb[0].mxu0
        %v10637 = vadd.f32 %v10594, %v10636
        %v10638 = vpop.f32.mrb[0].mxu0
        %v10639 = vadd.f32 %v10596, %v10638
        %v10640 = vpop.f32.mrb[0].mxu0
        %v10641 = vadd.f32 %v10598, %v10640
        %v10642 = vpop.f32.mrb[0].mxu0
        %v10643 = vadd.f32 %v10600, %v10642
        %10644 = vdwg.mxu0
        %10645 = vmatprep.subr.bf16.mxu0 %v6400
        %10646 = vmatpush1.bf16.xpose.msra.mxu0 %v6399
        %10647 = vmatprep.subr.bf16.mxu0 %v6484
        %10648 = vmatpush1.bf16.xpose.msra.mxu0 %v6483
        %10649 = vmatprep.subr.bf16.mxu0 %v6568
        %10650 = vmatpush1.bf16.xpose.msra.mxu0 %v6567
        %10651 = vmatprep.subr.bf16.mxu0 %v6652
        %10652 = vmatpush1.bf16.xpose.msra.mxu0 %v6651
        %10653 = vmatprep.subr.bf16.mxu0 %v6736
        %10654 = vmatpush1.bf16.xpose.msra.mxu0 %v6735
        %10655 = vmatprep.subr.bf16.mxu0 %v6820
        %10656 = vmatpush1.bf16.xpose.msra.mxu0 %v6819
        %10657 = vmatprep.subr.bf16.mxu0 %v6904
        %10658 = vmatpush1.bf16.xpose.msra.mxu0 %v6903
        %10659 = vmatprep.subr.bf16.mxu0 %v6988
        %10660 = vmatpush1.bf16.xpose.msra.mxu0 %v6987
        %10661 = vmatprep.subr.bf16.mxu0 %v7072
        %10662 = vmatpush1.bf16.xpose.msra.mxu0 %v7071
        %10663 = vmatprep.subr.bf16.mxu0 %v7156
        %10664 = vmatpush1.bf16.xpose.msra.mxu0 %v7155
        %10665 = vmatprep.subr.bf16.mxu0 %v7240
        %10666 = vmatpush1.bf16.xpose.msra.mxu0 %v7239
        %10667 = vmatprep.subr.bf16.mxu0 %v7324
        %10668 = vmatpush1.bf16.xpose.msra.mxu0 %v7323
        %10669 = vmatprep.subr.bf16.mxu0 %v7408
        %10670 = vmatpush1.bf16.xpose.msra.mxu0 %v7407
        %10671 = vmatprep.subr.bf16.mxu0 %v7492
        %10672 = vmatpush1.bf16.xpose.msra.mxu0 %v7491
        %10673 = vmatprep.subr.bf16.mxu0 %v7576
        %10674 = vmatpush1.bf16.xpose.msra.mxu0 %v7575
        %10675 = vmatprep.subr.bf16.mxu0 %v7660
        %10676 = vmatpush1.bf16.xpose.msra.mxu0 %v7659
        %10677 = vmatprep.mubr.bf16.mxu0 %v2200
        %10678 = vmatmul.mubr.bf16.gmra.mrb[0].mxu0 %v2199
        %v10679 = vpop.f32.mrb[0].mxu0
        %v10680 = vadd.f32 %v10637, %v10679
        %v10681 = vpop.f32.mrb[0].mxu0
        %v10682 = vadd.f32 %v10639, %v10681
        %v10683 = vpop.f32.mrb[0].mxu0
        %v10684 = vadd.f32 %v10641, %v10683
        %v10685 = vpop.f32.mrb[0].mxu0
        %v10686 = vadd.f32 %v10643, %v10685
        %10687 = vdwg.mxu0
        %10688 = vmatprep.subr.bf16.mxu0 %v6402
        %10689 = vmatpush1.bf16.xpose.msra.mxu0 %v6401
        %10690 = vmatprep.subr.bf16.mxu0 %v6486
        %10691 = vmatpush1.bf16.xpose.msra.mxu0 %v6485
        %10692 = vmatprep.subr.bf16.mxu0 %v6570
        %10693 = vmatpush1.bf16.xpose.msra.mxu0 %v6569
        %10694 = vmatprep.subr.bf16.mxu0 %v6654
        %10695 = vmatpush1.bf16.xpose.msra.mxu0 %v6653
        %10696 = vmatprep.subr.bf16.mxu0 %v6738
        %10697 = vmatpush1.bf16.xpose.msra.mxu0 %v6737
        %10698 = vmatprep.subr.bf16.mxu0 %v6822
        %10699 = vmatpush1.bf16.xpose.msra.mxu0 %v6821
        %10700 = vmatprep.subr.bf16.mxu0 %v6906
        %10701 = vmatpush1.bf16.xpose.msra.mxu0 %v6905
        %10702 = vmatprep.subr.bf16.mxu0 %v6990
        %10703 = vmatpush1.bf16.xpose.msra.mxu0 %v6989
        %10704 = vmatprep.subr.bf16.mxu0 %v7074
        %10705 = vmatpush1.bf16.xpose.msra.mxu0 %v7073
        %10706 = vmatprep.subr.bf16.mxu0 %v7158
        %10707 = vmatpush1.bf16.xpose.msra.mxu0 %v7157
        %10708 = vmatprep.subr.bf16.mxu0 %v7242
        %10709 = vmatpush1.bf16.xpose.msra.mxu0 %v7241
        %10710 = vmatprep.subr.bf16.mxu0 %v7326
        %10711 = vmatpush1.bf16.xpose.msra.mxu0 %v7325
        %10712 = vmatprep.subr.bf16.mxu0 %v7410
        %10713 = vmatpush1.bf16.xpose.msra.mxu0 %v7409
        %10714 = vmatprep.subr.bf16.mxu0 %v7494
        %10715 = vmatpush1.bf16.xpose.msra.mxu0 %v7493
        %10716 = vmatprep.subr.bf16.mxu0 %v7578
        %10717 = vmatpush1.bf16.xpose.msra.mxu0 %v7577
        %10718 = vmatprep.subr.bf16.mxu0 %v7662
        %10719 = vmatpush1.bf16.xpose.msra.mxu0 %v7661
        %10720 = vmatprep.mubr.bf16.mxu0 %v2202
        %10721 = vmatmul.mubr.bf16.gmra.mrb[0].mxu0 %v2201
        %v10722 = vpop.f32.mrb[0].mxu0
        %v10723 = vadd.f32 %v10680, %v10722
        %v10724 = vpop.f32.mrb[0].mxu0
        %v10725 = vadd.f32 %v10682, %v10724
        %v10726 = vpop.f32.mrb[0].mxu0
        %v10727 = vadd.f32 %v10684, %v10726
        %v10728 = vpop.f32.mrb[0].mxu0
        %v10729 = vadd.f32 %v10686, %v10728
        %10730 = vdwg.mxu0
        %10731 = vmatprep.subr.bf16.mxu0 %v6404
        %10732 = vmatpush1.bf16.xpose.msra.mxu0 %v6403
        %10733 = vmatprep.subr.bf16.mxu0 %v6488
        %10734 = vmatpush1.bf16.xpose.msra.mxu0 %v6487
        %10735 = vmatprep.subr.bf16.mxu0 %v6572
        %10736 = vmatpush1.bf16.xpose.msra.mxu0 %v6571
        %10737 = vmatprep.subr.bf16.mxu0 %v6656
        %10738 = vmatpush1.bf16.xpose.msra.mxu0 %v6655
        %10739 = vmatprep.subr.bf16.mxu0 %v6740
        %10740 = vmatpush1.bf16.xpose.msra.mxu0 %v6739
        %10741 = vmatprep.subr.bf16.mxu0 %v6824
        %10742 = vmatpush1.bf16.xpose.msra.mxu0 %v6823
        %10743 = vmatprep.subr.bf16.mxu0 %v6908
        %10744 = vmatpush1.bf16.xpose.msra.mxu0 %v6907
        %10745 = vmatprep.subr.bf16.mxu0 %v6992
        %10746 = vmatpush1.bf16.xpose.msra.mxu0 %v6991
        %10747 = vmatprep.subr.bf16.mxu0 %v7076
        %10748 = vmatpush1.bf16.xpose.msra.mxu0 %v7075
        %10749 = vmatprep.subr.bf16.mxu0 %v7160
        %10750 = vmatpush1.bf16.xpose.msra.mxu0 %v7159
        %10751 = vmatprep.subr.bf16.mxu0 %v7244
        %10752 = vmatpush1.bf16.xpose.msra.mxu0 %v7243
        %10753 = vmatprep.subr.bf16.mxu0 %v7328
        %10754 = vmatpush1.bf16.xpose.msra.mxu0 %v7327
        %10755 = vmatprep.subr.bf16.mxu0 %v7412
        %10756 = vmatpush1.bf16.xpose.msra.mxu0 %v7411
        %10757 = vmatprep.subr.bf16.mxu0 %v7496
        %10758 = vmatpush1.bf16.xpose.msra.mxu0 %v7495
        %10759 = vmatprep.subr.bf16.mxu0 %v7580
        %10760 = vmatpush1.bf16.xpose.msra.mxu0 %v7579
        %10761 = vmatprep.subr.bf16.mxu0 %v7664
        %10762 = vmatpush1.bf16.xpose.msra.mxu0 %v7663
        %10763 = vmatprep.mubr.bf16.mxu0 %v2204
        %10764 = vmatmul.mubr.bf16.gmra.mrb[0].mxu0 %v2203
        %v10765 = vpop.f32.mrb[0].mxu0
        %v10766 = vadd.f32 %v10723, %v10765
        %v10767 = vpop.f32.mrb[0].mxu0
        %v10768 = vadd.f32 %v10725, %v10767
        %v10769 = vpop.f32.mrb[0].mxu0
        %v10770 = vadd.f32 %v10727, %v10769
        %v10771 = vpop.f32.mrb[0].mxu0
        %v10772 = vadd.f32 %v10729, %v10771
        %10773 = vdwg.mxu0
        %10774 = vmatprep.subr.bf16.mxu0 %v6406
        %10775 = vmatpush1.bf16.xpose.msra.mxu0 %v6405
        %10776 = vmatprep.subr.bf16.mxu0 %v6490
        %10777 = vmatpush1.bf16.xpose.msra.mxu0 %v6489
        %10778 = vmatprep.subr.bf16.mxu0 %v6574
        %10779 = vmatpush1.bf16.xpose.msra.mxu0 %v6573
        %10780 = vmatprep.subr.bf16.mxu0 %v6658
        %10781 = vmatpush1.bf16.xpose.msra.mxu0 %v6657
        %10782 = vmatprep.subr.bf16.mxu0 %v6742
        %10783 = vmatpush1.bf16.xpose.msra.mxu0 %v6741
        %10784 = vmatprep.subr.bf16.mxu0 %v6826
        %10785 = vmatpush1.bf16.xpose.msra.mxu0 %v6825
        %10786 = vmatprep.subr.bf16.mxu0 %v6910
        %10787 = vmatpush1.bf16.xpose.msra.mxu0 %v6909
        %10788 = vmatprep.subr.bf16.mxu0 %v6994
        %10789 = vmatpush1.bf16.xpose.msra.mxu0 %v6993
        %10790 = vmatprep.subr.bf16.mxu0 %v7078
        %10791 = vmatpush1.bf16.xpose.msra.mxu0 %v7077
        %10792 = vmatprep.subr.bf16.mxu0 %v7162
        %10793 = vmatpush1.bf16.xpose.msra.mxu0 %v7161
        %10794 = vmatprep.subr.bf16.mxu0 %v7246
        %10795 = vmatpush1.bf16.xpose.msra.mxu0 %v7245
        %10796 = vmatprep.subr.bf16.mxu0 %v7330
        %10797 = vmatpush1.bf16.xpose.msra.mxu0 %v7329
        %10798 = vmatprep.subr.bf16.mxu0 %v7414
        %10799 = vmatpush1.bf16.xpose.msra.mxu0 %v7413
        %10800 = vmatprep.subr.bf16.mxu0 %v7498
        %10801 = vmatpush1.bf16.xpose.msra.mxu0 %v7497
        %10802 = vmatprep.subr.bf16.mxu0 %v7582
        %10803 = vmatpush1.bf16.xpose.msra.mxu0 %v7581
        %10804 = vmatprep.subr.bf16.mxu0 %v7666
        %10805 = vmatpush1.bf16.xpose.msra.mxu0 %v7665
        %10806 = vmatprep.mubr.bf16.mxu0 %v2206
        %10807 = vmatmul.mubr.bf16.gmra.mrb[0].mxu0 %v2205
        %v10808 = vpop.f32.mrb[0].mxu0
        %v10809 = vadd.f32 %v10766, %v10808
        %v10810 = vpop.f32.mrb[0].mxu0
        %v10811 = vadd.f32 %v10768, %v10810
        %v10812 = vpop.f32.mrb[0].mxu0
        %v10813 = vadd.f32 %v10770, %v10812
        %v10814 = vpop.f32.mrb[0].mxu0
        %v10815 = vadd.f32 %v10772, %v10814
        %10816 = vdwg.mxu0
        %v10817 = vadd.f32 %v439, %v10809
        %v10818 = vadd.f32 %v440, %v10811
        %v10819 = vadd.f32 %v441, %v10813
        %v10820 = vadd.f32 %v442, %v10815
        %10821 = vst [vmem:[#allocation2] sm:$0xff] %v10817
        %10822 = vst [vmem:[#allocation2 + $0x8] sm:$0xff] %v10818
        %10823 = vst [vmem:[#allocation2 + $0x10] sm:$0xff] %v10819
        %10824 = vst [vmem:[#allocation2 + $0x18] sm:$0xff] %v10820
        %p10825 = scmp.eq.s32.totalorder %s22, 13
        // Predicated region
        $region64: #{custom_mlp_forward.2} parent=50 // pred_check
          %p10826 = pneg %p10825
        $region65: #{custom_mlp_forward.2} parent=50 // pred_check_branch
          %10828 = sbr.rel (%p10826) target = $region67
        $region66: #{custom_mlp_forward.2} parent=50 // pred_region
          %v10829 = vld [vmem:[#allocation2] sm:$0xff]
          %v10830 = vld [vmem:[#allocation2 + $0x8] sm:$0xff]
          %v10831 = vld [vmem:[#allocation2 + $0x10] sm:$0xff]
          %v10832 = vld [vmem:[#allocation2 + $0x18] sm:$0xff]
          %v10833 = vld [vmem:[%s428] sm:$0x3]
          %v10835 = vlaneseq
          %v10836 = vshrl.u32 %v10835, 7
          %v10837 = vsub.s32 0, %v10836
          %v10838 = vrot.slane %v10833, %v10837
          %v10839 = vlaneseq
          %v10840 = vshrl.u32 %v10839, 7
          %v10841 = vsub.s32 1, %v10840
          %v10842 = vrot.slane %v10833, %v10841
          %v10845 = vadd.f32 %v10829, %v10838
          %v10846 = vadd.f32 %v10830, %v10842
          %v10847 = vadd.f32 %v10831, %v10838
          %v10848 = vadd.f32 %v10832, %v10842
          %v10849 = vmax.f32 %v10845, 0.0
          %v10850 = vmax.f32 %v10846, 0.0
          %v10851 = vmax.f32 %v10847, 0.0
          %v10852 = vmax.f32 %v10848, 0.0
          %10853 = vst [vmem:[%s421] sm:$0xff] %v10849
          %10854 = vst [vmem:[%s421 + $0x8] sm:$0xff] %v10850
          %10855 = vst [vmem:[%s421 + $0x10] sm:$0xff] %v10851
          %10856 = vst [vmem:[%s421 + $0x18] sm:$0xff] %v10852
        $region67: #{custom_mlp_forward.2} parent=50 // pred_fallthru
          _
        %s10857 = sand.u32 %s117, 1
        %s10858 = sand.u32 %s117, 1
        %s10859 = smul.addr %s10858, 32
        %s10860 = scalar_lea.vmem [#allocation6], %s10859
        // Predicated region
        $region68: #{custom_mlp_forward.2} parent=50 // pred_check
          %p10861 = pneg %p127
        $region69: #{custom_mlp_forward.2} parent=50 // pred_check_branch
          %10863 = sbr.rel (%p10861) target = $region71
        $region70: #{custom_mlp_forward.2} parent=50 // pred_region
          %s10864 = smul.u32 2, %s21
          %s10865 = smul.addr %s10864, 8
          %s10866 = scalar_lea.vmem %s3, %s10865
          // Predicated region
          $region72: #{custom_mlp_forward.2} parent=70 // pred_check
            _
          $region73: #{custom_mlp_forward.2} parent=70 // pred_check_branch
            %10868 = sbr.rel (0) target = $region75
          $region74: #{custom_mlp_forward.2} parent=70 // pred_region
            // Predicated region
            $region76: #{custom_mlp_forward.2} parent=74 // pred_check
              _
            $region77: #{custom_mlp_forward.2} parent=74 // pred_check_branch
              %10870 = sbr.rel (0) target = $region79
            $region78: #{custom_mlp_forward.2} parent=74 // pred_region
              loop: start=0, step=1, limit=1
              $region80: #{custom_mlp_forward.2} parent=78 // loop_pre_header
                _
              $region81: #{custom_mlp_forward.2} parent=78 // loop_header
                %s10872 = sphi 0, %s10876
                %p10873 = scmp.ge.s32.totalorder %s10872, 1
                %s10877 = sphi %s10860, %s10860
                %s10878 = sphi %s10866, %s10866
              $region82: #{custom_mlp_forward.2} parent=78 // loop_header_branch
                %10875 = sbr.rel (%p10873) target = $region86
              $region83: #{custom_mlp_forward.2} parent=78 // loop_body
                %v10879 = vld [vmem:[%s10877] sm:$0xff]
                %10880 = vst [vmem:[%s10878] sm:$0xff] %v10879
                %v10881 = vld [vmem:[%s10877 + $0x8] sm:$0xff]
                %10882 = vst [vmem:[%s10878 + $0x8] sm:$0xff] %v10881
                %v10883 = vld [vmem:[%s10877 + $0x10] sm:$0xff]
                %10884 = vst [vmem:[%s10878 + $0x20] sm:$0xff] %v10883
                %v10885 = vld [vmem:[%s10877 + $0x18] sm:$0xff]
                %10886 = vst [vmem:[%s10878 + $0x28] sm:$0xff] %v10885
              $region84: #{custom_mlp_forward.2} parent=78 // loop_footer
                %s10876 = sadd.s32 1, %s10872
              $region85: #{custom_mlp_forward.2} parent=78 // loop_footer_branch
                %10871 = sbr.rel target = $region81
              $region86: #{custom_mlp_forward.2} parent=78 // loop_exit
                _
            $region79: #{custom_mlp_forward.2} parent=74 // pred_fallthru
              _
            // Predicated region
            $region87: #{custom_mlp_forward.2} parent=74 // pred_check
              _
            $region88: #{custom_mlp_forward.2} parent=74 // pred_check_branch
              %10888 = sbr.rel target = $region90
            $region89: #{custom_mlp_forward.2} parent=74 // pred_region
              _
            $region90: #{custom_mlp_forward.2} parent=74 // pred_fallthru
              _
          $region75: #{custom_mlp_forward.2} parent=70 // pred_fallthru
            _
          %10889 = vnop
        $region71: #{custom_mlp_forward.2} parent=50 // pred_fallthru
          _
      $region51: #{custom_mlp_forward.2} parent=5 // pred_fallthru
        _
      %p10890 = scmp.le.s32.totalorder 2, %s12
      // Predicated region
      $region91: #{custom_mlp_forward.2} parent=5 // pred_check
        %p10891 = pneg %p10890
      $region92: #{custom_mlp_forward.2} parent=5 // pred_check_branch
        %10893 = sbr.rel (%p10891) target = $region94
      $region93: #{custom_mlp_forward.2} parent=5 // pred_region
        %s10894 = ssub.s32 %s12, 2
        // Predicated region
        $region95: #{custom_mlp_forward.2} parent=93 // pred_check
          %p10895 = pneg %p133
        $region96: #{custom_mlp_forward.2} parent=93 // pred_check_branch
          %10897 = sbr.rel (%p10895) target = $region98
        $region97: #{custom_mlp_forward.2} parent=93 // pred_region
          %s10898 = sand.u32 %s118, 1
          %s10899 = sand.u32 %s118, 1
          %s10900 = smul.addr %s10899, 32
          %s10901 = scalar_lea.vmem [#allocation6], %s10900
        $region98: #{custom_mlp_forward.2} parent=93 // pred_fallthru
          _
      $region94: #{custom_mlp_forward.2} parent=5 // pred_fallthru
        _
    $region6: #{custom_mlp_forward.2} parent=1 // loop_footer
      %s16 = sadd.s32 1, %s12
    $region7: #{custom_mlp_forward.2} parent=1 // loop_footer_branch
      %11 = sbr.rel target = $region3
    $region8: #{custom_mlp_forward.2} parent=1 // loop_exit
      _
    %10902 = vsyncpa [#allocation5], 1
    %s10903 = scalar_lea.sflag [#allocation5], 1
    %10904 = vsyncpa %s10903, 1

</llo_original>
